<compile_context>
chip_gen: v6e
topology: v6e:2x2x1
jax: 0.10.0
libtpu: 0.0.40
codegen_flags: <defaults>
</compile_context>

<pallas_src>
import functools

import numpy as np

import jax
import jax.numpy as jnp
from jax.experimental import pallas as pl
from jax.experimental.pallas import tpu as pltpu

_INV_SQRT2 = 0.7071067811865476


def _round_up(x, m):
    return (x + m - 1) // m * m


def _erf_poly(z):
    # Abramowitz & Stegun 7.1.26 (|err| <= 1.5e-7): only abs/exp/mul/add/where,
    # all of which lower cleanly in Mosaic. Matches PyTorch's exact-erf GELU.
    a1, a2, a3, a4, a5 = (0.254829592, -0.284496736, 1.421413741,
                          -1.453152027, 1.061405429)
    p = 0.3275911
    az = jnp.abs(z)
    t = 1.0 / (1.0 + p * az)
    poly = t * (a1 + t * (a2 + t * (a3 + t * (a4 + t * a5))))
    e = 1.0 - poly * jnp.exp(-az * az)
    return jnp.where(z >= 0, e, -e)


def _fused_kernel(rc_ref, x_ref, w1_ref, w2_ref, w3_ref, o_ref, col_ref,
                  *, H, W, eps):
    # rc_ref:  (2, Lp) int32   row-id / col-id of every lane of the Hp*Wp plane
    # x_ref:   (1, C0p, Lp)    replicate-padded block-1 plane (zeros beyond L)
    # wX_ref:  (C_out, 9*C_in) im2col weights, column order (tap, c_in)
    # o_ref:   (1, C3, Lp)
    # col_ref: (9*C_max, Lp)   shared im2col scratch
    Wp = W + 2
    Hp = H + 2
    Lp = o_ref.shape[-1]
    inv_hw = 1.0 / float(H * W)

    rc = rc_ref[...]
    row_id = rc[0:1, :]                       # (1, Lp)
    col_id = rc[1:2, :]                       # (1, Lp)
    interior = (row_id < H) & (col_id < W)    # conv-output-valid lanes (H*W of them)
    in_plane = row_id < Hp                    # lanes < Hp*Wp

    def conv_in_gelu(h, w):
        # h: (C_in, Lp) replicate-padded plane (finite everywhere, 0 beyond L)
        # w: (C_out, 9*C_in)
        c_in = h.shape[0]
        kdim = 9 * c_in
        for k in range(9):                    # static unroll: 9 lane-rotated taps
            dy, dx = divmod(k, 3)
            s = dy * Wp + dx                  # tap lane offset
            col_ref[k * c_in:(k + 1) * c_in, :] = (
                h if s == 0 else pltpu.roll(h, shift=Lp - s, axis=1))
        acc = jnp.dot(w, col_ref[:kdim, :],
                      preferred_element_type=jnp.float32,
                      precision=jax.lax.Precision.HIGHEST)
        # InstanceNorm2d (affine=False, biased variance), one masked pass.
        am = jnp.where(interior, acc, 0.0)
        mean = jnp.sum(am, axis=1, keepdims=True) * inv_hw
        m2 = jnp.sum(am * am, axis=1, keepdims=True) * inv_hw
        var = m2 - mean * mean
        xhat = (acc - mean) * jax.lax.rsqrt(var + eps)
        # Exact (erf-based) GELU, as in torch.nn.GELU().
        return 0.5 * xhat * (1.0 + _erf_poly(xhat * _INV_SQRT2))

    def repad(g):
        # Replicate-pad the H x W interior of g back onto the Hp x Wp plane,
        # staying in the flattened lane layout.  Separable clamp:
        #   columns first (shift 0/1/2 selected by col id), then rows
        #   (shift 0/Wp/2*Wp selected by row id); lanes beyond the plane -> 0.
        c1 = pltpu.roll(g, shift=1, axis=1)
        c2 = pltpu.roll(g, shift=2, axis=1)
        tcol = jnp.where(col_id == 0, g,
                         jnp.where(col_id == Wp - 1, c2, c1))
        r1 = pltpu.roll(tcol, shift=Wp, axis=1)
        r2 = pltpu.roll(tcol, shift=2 * Wp, axis=1)
        h = jnp.where(row_id == 0, tcol,
                      jnp.where(row_id == Hp - 1, r2, r1))
        return jnp.where(in_plane, h, 0.0)

    h1 = x_ref[0]                              # (C0p, Lp)
    g1 = conv_in_gelu(h1, w1_ref[...])         # (C1, Lp)
    g2 = conv_in_gelu(repad(g1), w2_ref[...])  # (C2, Lp)
    g3 = conv_in_gelu(repad(g2), w3_ref[...])  # (C3, Lp)
    o_ref[0] = g3.astype(o_ref.dtype)


def _pack_weight(w, c_in_pad):
    # (C_out, C_in, 3, 3) -> (C_out, 9*c_in_pad), column index = 9-tap-major.
    c_out, c_in = w.shape[0], w.shape[1]
    w9 = jnp.transpose(w.reshape(c_out, c_in, 9), (0, 2, 1))   # (C_out, 9, C_in)
    if c_in_pad != c_in:
        w9 = jnp.pad(w9, ((0, 0), (0, 0), (0, c_in_pad - c_in)))
    return w9.reshape(c_out, 9 * c_in_pad).astype(jnp.float32)


def input_conv_forward(x, params, *, eps=1e-5):
    """InputConv.forward: three (conv -> InstanceNorm -> GELU) blocks, fused."""
    # Conv biases are intentionally ignored: a per-channel constant added
    # before InstanceNorm2d(affine=False) is exactly cancelled by the mean
    # subtraction, so the forward output is insensitive to it.
    (w1, _b1), (w2, _b2), (w3, _b3) = params
    N, C0, H, W = x.shape
    C1, C2, C3 = w1.shape[0], w2.shape[0], w3.shape[0]
    Hp, Wp = H + 2, W + 2
    L = Hp * Wp
    Lp = _round_up(L, 128)                 # lane-dense plane width
    C0p = _round_up(C0, 8)                 # sublane-aligned im2col row blocks

    # Glue (once, tiny): replicate-pad block-1 input, flatten spatial onto
    # lanes, zero-extend channels -> C0p and lanes -> Lp.
    xp = jnp.pad(x, ((0, 0), (0, 0), (1, 1), (1, 1)), mode="edge")
    xf = jnp.pad(xp.reshape(N, C0, L).astype(jnp.float32),
                 ((0, 0), (0, C0p - C0), (0, Lp - L)))

    w1p = _pack_weight(w1, C0p)
    w2p = _pack_weight(w2, C1)
    w3p = _pack_weight(w3, C2)

    # Per-lane (row, col) ids of the flattened padded plane (compile-time
    # constants; avoids integer div/mod inside the kernel).
    lane = np.arange(Lp, dtype=np.int32)
    rc = jnp.asarray(np.stack([lane // Wp, lane % Wp], axis=0))   # (2, Lp)

    kmax = 9 * max(C0p, C1, C2)
    kernel = functools.partial(_fused_kernel, H=H, W=W, eps=float(eps))

    flops = 2 * N * Lp * (C1 * 9 * C0p + C2 * 9 * C1 + C3 * 9 * C2)
    bytes_accessed = 4 * (N * C0p * Lp + N * C3 * Lp + 2 * Lp
                          + w1p.size + w2p.size + w3p.size)

    out = pl.pallas_call(
        kernel,
        out_shape=jax.ShapeDtypeStruct((N, C3, Lp), jnp.float32),
        grid_spec=pltpu.PrefetchScalarGridSpec(
            num_scalar_prefetch=0,
            grid=(N,),
            in_specs=[
                pl.BlockSpec((2, Lp), lambda n: (0, 0)),
                pl.BlockSpec((1, C0p, Lp), lambda n: (n, 0, 0)),
                pl.BlockSpec(w1p.shape, lambda n: (0, 0)),
                pl.BlockSpec(w2p.shape, lambda n: (0, 0)),
                pl.BlockSpec(w3p.shape, lambda n: (0, 0)),
            ],
            out_specs=pl.BlockSpec((1, C3, Lp), lambda n: (n, 0, 0)),
            scratch_shapes=[pltpu.VMEM((kmax, Lp), jnp.float32)],
        ),
        compiler_params=pltpu.CompilerParams(
            dimension_semantics=("parallel",),
        ),
        cost_estimate=pl.CostEstimate(
            flops=int(flops),
            transcendentals=int(N * (C1 + C2 + C3) * Lp),
            bytes_accessed=int(bytes_accessed),
        ),
    )(rc, xf, w1p, w2p, w3p)

    # Glue (once): drop the lane extension and the replicate-padding ring.
    return out[:, :, :L].reshape(N, C3, Hp, Wp)[:, :, :H, :W]


# ----------------------------- reference (pure JAX) -------------------------
def _ref_block(x, weight, bias, eps=1e-5):
    xp = jnp.pad(x, ((0, 0), (0, 0), (1, 1), (1, 1)), mode="edge")
    y = jax.lax.conv_general_dilated(
        xp, weight, window_strides=(1, 1), padding="VALID",
        dimension_numbers=("NCHW", "OIHW", "NCHW"),
        precision=jax.lax.Precision.HIGHEST)
    y = y + bias.reshape(1, -1, 1, 1)
    mean = jnp.mean(y, axis=(2, 3), keepdims=True)
    var = jnp.mean((y - mean) ** 2, axis=(2, 3), keepdims=True)
    xhat = (y - mean) / jnp.sqrt(var + eps)
    return jax.nn.gelu(xhat, approximate=False)


def _ref_forward(x, params):
    for w, b in params:
        x = _ref_block(x, w, b)
    return x


if __name__ == "__main__":
    key = jax.random.PRNGKey(0)
    channels = (4, 8, 16, 32)
    N, H, W = 2, 16, 16

    kx, key = jax.random.split(key)
    x = jax.random.normal(kx, (N, channels[0], H, W), dtype=jnp.float32)

    params = []
    for i in range(3):
        kw, kb, key = jax.random.split(key, 3)
        c_in, c_out = channels[i], channels[i + 1]
        fan_in = float(c_in * 9)
        w = jax.random.normal(kw, (c_out, c_in, 3, 3), jnp.float32) / jnp.sqrt(fan_in)
        b = 0.1 * jax.random.normal(kb, (c_out,), jnp.float32)
        params.append((w, b))

    out = jax.jit(input_conv_forward)(x, params)
    jax.block_until_ready(out)

    ref = _ref_forward(x, params)
    assert out.shape == (N, channels[-1], H, W), out.shape
    max_err = float(jnp.max(jnp.abs(out - ref)))
    assert jnp.allclose(out, ref, atol=2e-4, rtol=2e-4), max_err

    print("KERNEL_OK")
</pallas_src>

<mosaic_0001>
module attributes {stable_mosaic.version = 11 : i64} {
  func.func @_fused_kernel(%arg0: i32, %arg1: memref<2x384xi32, #tpu.memory_space<vmem>>, %arg2: memref<1x8x384xf32, #tpu.memory_space<vmem>>, %arg3: memref<8x72xf32, #tpu.memory_space<vmem>>, %arg4: memref<16x72xf32, #tpu.memory_space<vmem>>, %arg5: memref<32x144xf32, #tpu.memory_space<vmem>>, %arg6: memref<1x32x384xf32, #tpu.memory_space<vmem>>, %arg7: memref<144x384xf32, #tpu.memory_space<vmem>>) attributes {dimension_semantics = [#tpu.dimension_semantics<parallel>], iteration_bounds = array<i64: 2>, scalar_prefetch = 0 : i64, scratch_operands = 1 : i64, tpu.core_type = #tpu.core_type<tc>, window_params = [{pipeline_mode = #tpu.pipeline_mode<synchronous>, transform_indices = @transform_0, window_bounds = array<i64: 2, 384>}, {transform_indices = @transform_1, window_bounds = array<i64: 1, 8, 384>}, {pipeline_mode = #tpu.pipeline_mode<synchronous>, transform_indices = @transform_2, window_bounds = array<i64: 8, 72>}, {pipeline_mode = #tpu.pipeline_mode<synchronous>, transform_indices = @transform_3, window_bounds = array<i64: 16, 72>}, {pipeline_mode = #tpu.pipeline_mode<synchronous>, transform_indices = @transform_4, window_bounds = array<i64: 32, 144>}, {transform_indices = @transform_5, window_bounds = array<i64: 1, 32, 384>}]} {
    %c0 = arith.constant 0 : index
    %c0_0 = arith.constant 0 : index
    %0 = vector.load %arg1[%c0, %c0_0] : memref<2x384xi32, #tpu.memory_space<vmem>>, vector<2x384xi32>
    %1 = vector.extract_strided_slice %0 {offsets = [0, 0], sizes = [1, 384], strides = [1, 1]} : vector<2x384xi32> to vector<1x384xi32>
    %2 = vector.extract_strided_slice %0 {offsets = [1, 0], sizes = [1, 384], strides = [1, 1]} : vector<2x384xi32> to vector<1x384xi32>
    %c16_i32 = arith.constant 16 : i32
    %3 = vector.broadcast %c16_i32 : i32 to vector<1x384xi32>
    %4 = arith.cmpi slt, %1, %3 : vector<1x384xi32>
    %c16_i32_1 = arith.constant 16 : i32
    %5 = vector.broadcast %c16_i32_1 : i32 to vector<1x384xi32>
    %6 = arith.cmpi slt, %2, %5 : vector<1x384xi32>
    %7 = arith.andi %4, %6 : vector<1x384xi1>
    %c18_i32 = arith.constant 18 : i32
    %8 = vector.broadcast %c18_i32 : i32 to vector<1x384xi32>
    %9 = arith.cmpi slt, %1, %8 : vector<1x384xi32>
    %c0_2 = arith.constant 0 : index
    %c0_3 = arith.constant 0 : index
    %c0_4 = arith.constant 0 : index
    %10 = vector.load %arg2[%c0_2, %c0_3, %c0_4] : memref<1x8x384xf32, #tpu.memory_space<vmem>>, vector<1x8x384xf32>
    %11 = vector.shape_cast %10 : vector<1x8x384xf32> to vector<8x384xf32>
    %c0_5 = arith.constant 0 : index
    %c0_6 = arith.constant 0 : index
    %12 = vector.load %arg3[%c0_5, %c0_6] : memref<8x72xf32, #tpu.memory_space<vmem>>, vector<8x72xf32>
    %c0_7 = arith.constant 0 : index
    %c0_8 = arith.constant 0 : index
    %13 = vector.load %arg7[%c0_7, %c0_8] : memref<144x384xf32, #tpu.memory_space<vmem>>, vector<8x384xf32>
    tpu.vector_store %arg7[%c0_7, %c0_8], %11 {strides = array<i32>} : memref<144x384xf32, #tpu.memory_space<vmem>>, vector<8x384xf32>,
    %c383_i32 = arith.constant 383 : i32
    %14 = tpu.dynamic_rotate %11 by %c383_i32 dim 1 : vector<8x384xf32>, i32 -> vector<8x384xf32>
    %c8 = arith.constant 8 : index
    %c0_9 = arith.constant 0 : index
    %15 = vector.load %arg7[%c8, %c0_9] : memref<144x384xf32, #tpu.memory_space<vmem>>, vector<8x384xf32>
    tpu.vector_store %arg7[%c8, %c0_9], %14 {strides = array<i32>} : memref<144x384xf32, #tpu.memory_space<vmem>>, vector<8x384xf32>,
    %c382_i32 = arith.constant 382 : i32
    %16 = tpu.dynamic_rotate %11 by %c382_i32 dim 1 : vector<8x384xf32>, i32 -> vector<8x384xf32>
    %c16 = arith.constant 16 : index
    %c0_10 = arith.constant 0 : index
    %17 = vector.load %arg7[%c16, %c0_10] : memref<144x384xf32, #tpu.memory_space<vmem>>, vector<8x384xf32>
    tpu.vector_store %arg7[%c16, %c0_10], %16 {strides = array<i32>} : memref<144x384xf32, #tpu.memory_space<vmem>>, vector<8x384xf32>,
    %c366_i32 = arith.constant 366 : i32
    %18 = tpu.dynamic_rotate %11 by %c366_i32 dim 1 : vector<8x384xf32>, i32 -> vector<8x384xf32>
    %c24 = arith.constant 24 : index
    %c0_11 = arith.constant 0 : index
    %19 = vector.load %arg7[%c24, %c0_11] : memref<144x384xf32, #tpu.memory_space<vmem>>, vector<8x384xf32>
    tpu.vector_store %arg7[%c24, %c0_11], %18 {strides = array<i32>} : memref<144x384xf32, #tpu.memory_space<vmem>>, vector<8x384xf32>,
    %c365_i32 = arith.constant 365 : i32
    %20 = tpu.dynamic_rotate %11 by %c365_i32 dim 1 : vector<8x384xf32>, i32 -> vector<8x384xf32>
    %c32 = arith.constant 32 : index
    %c0_12 = arith.constant 0 : index
    %21 = vector.load %arg7[%c32, %c0_12] : memref<144x384xf32, #tpu.memory_space<vmem>>, vector<8x384xf32>
    tpu.vector_store %arg7[%c32, %c0_12], %20 {strides = array<i32>} : memref<144x384xf32, #tpu.memory_space<vmem>>, vector<8x384xf32>,
    %c364_i32 = arith.constant 364 : i32
    %22 = tpu.dynamic_rotate %11 by %c364_i32 dim 1 : vector<8x384xf32>, i32 -> vector<8x384xf32>
    %c40 = arith.constant 40 : index
    %c0_13 = arith.constant 0 : index
    %23 = vector.load %arg7[%c40, %c0_13] : memref<144x384xf32, #tpu.memory_space<vmem>>, vector<8x384xf32>
    tpu.vector_store %arg7[%c40, %c0_13], %22 {strides = array<i32>} : memref<144x384xf32, #tpu.memory_space<vmem>>, vector<8x384xf32>,
    %c348_i32 = arith.constant 348 : i32
    %24 = tpu.dynamic_rotate %11 by %c348_i32 dim 1 : vector<8x384xf32>, i32 -> vector<8x384xf32>
    %c48 = arith.constant 48 : index
    %c0_14 = arith.constant 0 : index
    %25 = vector.load %arg7[%c48, %c0_14] : memref<144x384xf32, #tpu.memory_space<vmem>>, vector<8x384xf32>
    tpu.vector_store %arg7[%c48, %c0_14], %24 {strides = array<i32>} : memref<144x384xf32, #tpu.memory_space<vmem>>, vector<8x384xf32>,
    %c347_i32 = arith.constant 347 : i32
    %26 = tpu.dynamic_rotate %11 by %c347_i32 dim 1 : vector<8x384xf32>, i32 -> vector<8x384xf32>
    %c56 = arith.constant 56 : index
    %c0_15 = arith.constant 0 : index
    %27 = vector.load %arg7[%c56, %c0_15] : memref<144x384xf32, #tpu.memory_space<vmem>>, vector<8x384xf32>
    tpu.vector_store %arg7[%c56, %c0_15], %26 {strides = array<i32>} : memref<144x384xf32, #tpu.memory_space<vmem>>, vector<8x384xf32>,
    %c346_i32 = arith.constant 346 : i32
    %28 = tpu.dynamic_rotate %11 by %c346_i32 dim 1 : vector<8x384xf32>, i32 -> vector<8x384xf32>
    %c64 = arith.constant 64 : index
    %c0_16 = arith.constant 0 : index
    %29 = vector.load %arg7[%c64, %c0_16] : memref<144x384xf32, #tpu.memory_space<vmem>>, vector<8x384xf32>
    tpu.vector_store %arg7[%c64, %c0_16], %28 {strides = array<i32>} : memref<144x384xf32, #tpu.memory_space<vmem>>, vector<8x384xf32>,
    %c0_17 = arith.constant 0 : index
    %c0_18 = arith.constant 0 : index
    %30 = vector.load %arg7[%c0_17, %c0_18] : memref<144x384xf32, #tpu.memory_space<vmem>>, vector<72x384xf32>
    %cst = arith.constant dense<0.000000e+00> : vector<8x384xf32>
    %31 = tpu.matmul %12, %30, %cst {dimension_numbers = #tpu.dot_dimension_numbers<[1], [0], [0], [1], [0, 0, 1, 1], [], []>, precision = #tpu.contract_precision<fp32>} : vector<8x72xf32>, vector<72x384xf32>, vector<8x384xf32> -> vector<8x384xf32>
    %cst_19 = arith.constant 0.000000e+00 : f32
    %32 = vector.shape_cast %7 : vector<1x384xi1> to vector<1x384xi1>
    %33 = vector.broadcast %32 : vector<1x384xi1> to vector<8x384xi1>
    %34 = vector.broadcast %cst_19 : f32 to vector<8x384xf32>
    %35 = arith.select %33, %31, %34 : vector<8x384xi1>, vector<8x384xf32>
    %cst_20 = arith.constant dense<0.000000e+00> : vector<8xf32>
    %36 = vector.multi_reduction <add>, %35, %cst_20 [1] : vector<8x384xf32> to vector<8xf32>
    %37 = vector.shape_cast %36 : vector<8xf32> to vector<8x1xf32>
    %cst_21 = arith.constant 3.906250e-03 : f32
    %38 = vector.broadcast %cst_21 : f32 to vector<8x1xf32>
    %39 = arith.mulf %37, %38 : vector<8x1xf32>
    %40 = arith.mulf %35, %35 : vector<8x384xf32>
    %cst_22 = arith.constant dense<0.000000e+00> : vector<8xf32>
    %41 = vector.multi_reduction <add>, %40, %cst_22 [1] : vector<8x384xf32> to vector<8xf32>
    %42 = vector.shape_cast %41 : vector<8xf32> to vector<8x1xf32>
    %cst_23 = arith.constant 3.906250e-03 : f32
    %43 = vector.broadcast %cst_23 : f32 to vector<8x1xf32>
    %44 = arith.mulf %42, %43 : vector<8x1xf32>
    %45 = arith.mulf %39, %39 : vector<8x1xf32>
    %46 = arith.subf %44, %45 : vector<8x1xf32>
    %47 = vector.broadcast %39 : vector<8x1xf32> to vector<8x384xf32>
    %48 = arith.subf %31, %47 : vector<8x384xf32>
    %cst_24 = arith.constant 9.99999974E-6 : f32
    %49 = vector.broadcast %cst_24 : f32 to vector<8x1xf32>
    %50 = arith.addf %46, %49 : vector<8x1xf32>
    %51 = math.rsqrt %50 : vector<8x1xf32>
    %52 = vector.broadcast %51 : vector<8x1xf32> to vector<8x384xf32>
    %53 = arith.mulf %48, %52 : vector<8x384xf32>
    %cst_25 = arith.constant 5.000000e-01 : f32
    %54 = vector.broadcast %cst_25 : f32 to vector<8x384xf32>
    %55 = arith.mulf %54, %53 : vector<8x384xf32>
    %cst_26 = arith.constant 0.707106769 : f32
    %56 = vector.broadcast %cst_26 : f32 to vector<8x384xf32>
    %57 = arith.mulf %53, %56 : vector<8x384xf32>
    %58 = math.absf %57 : vector<8x384xf32>
    %cst_27 = arith.constant 0.327591091 : f32
    %59 = vector.broadcast %cst_27 : f32 to vector<8x384xf32>
    %60 = arith.mulf %59, %58 : vector<8x384xf32>
    %cst_28 = arith.constant 1.000000e+00 : f32
    %61 = vector.broadcast %cst_28 : f32 to vector<8x384xf32>
    %62 = arith.addf %61, %60 : vector<8x384xf32>
    %cst_29 = arith.constant 1.000000e+00 : f32
    %63 = vector.broadcast %cst_29 : f32 to vector<8x384xf32>
    %64 = arith.divf %63, %62 : vector<8x384xf32>
    %cst_30 = arith.constant 1.06140542 : f32
    %65 = vector.broadcast %cst_30 : f32 to vector<8x384xf32>
    %66 = arith.mulf %64, %65 : vector<8x384xf32>
    %cst_31 = arith.constant -1.45315206 : f32
    %67 = vector.broadcast %cst_31 : f32 to vector<8x384xf32>
    %68 = arith.addf %67, %66 : vector<8x384xf32>
    %69 = arith.mulf %64, %68 : vector<8x384xf32>
    %cst_32 = arith.constant 1.42141378 : f32
    %70 = vector.broadcast %cst_32 : f32 to vector<8x384xf32>
    %71 = arith.addf %70, %69 : vector<8x384xf32>
    %72 = arith.mulf %64, %71 : vector<8x384xf32>
    %cst_33 = arith.constant -0.284496725 : f32
    %73 = vector.broadcast %cst_33 : f32 to vector<8x384xf32>
    %74 = arith.addf %73, %72 : vector<8x384xf32>
    %75 = arith.mulf %64, %74 : vector<8x384xf32>
    %cst_34 = arith.constant 0.254829586 : f32
    %76 = vector.broadcast %cst_34 : f32 to vector<8x384xf32>
    %77 = arith.addf %76, %75 : vector<8x384xf32>
    %78 = arith.mulf %64, %77 : vector<8x384xf32>
    %cst_35 = arith.constant 0.000000e+00 : f32
    %79 = vector.broadcast %cst_35 : f32 to vector<8x384xf32>
    %80 = arith.subf %79, %58 : vector<8x384xf32>
    %81 = arith.mulf %80, %58 : vector<8x384xf32>
    %82 = math.exp %81 : vector<8x384xf32>
    %83 = arith.mulf %78, %82 : vector<8x384xf32>
    %cst_36 = arith.constant 1.000000e+00 : f32
    %84 = vector.broadcast %cst_36 : f32 to vector<8x384xf32>
    %85 = arith.subf %84, %83 : vector<8x384xf32>
    %cst_37 = arith.constant 0.000000e+00 : f32
    %86 = vector.broadcast %cst_37 : f32 to vector<8x384xf32>
    %87 = arith.cmpf oge, %57, %86 : vector<8x384xf32>
    %cst_38 = arith.constant 0.000000e+00 : f32
    %88 = vector.broadcast %cst_38 : f32 to vector<8x384xf32>
    %89 = arith.subf %88, %85 : vector<8x384xf32>
    %90 = arith.select %87, %85, %89 : vector<8x384xi1>, vector<8x384xf32>
    %cst_39 = arith.constant 1.000000e+00 : f32
    %91 = vector.broadcast %cst_39 : f32 to vector<8x384xf32>
    %92 = arith.addf %91, %90 : vector<8x384xf32>
    %93 = arith.mulf %55, %92 : vector<8x384xf32>
    %c1_i32 = arith.constant 1 : i32
    %94 = tpu.dynamic_rotate %93 by %c1_i32 dim 1 : vector<8x384xf32>, i32 -> vector<8x384xf32>
    %c2_i32 = arith.constant 2 : i32
    %95 = tpu.dynamic_rotate %93 by %c2_i32 dim 1 : vector<8x384xf32>, i32 -> vector<8x384xf32>
    %c0_i32 = arith.constant 0 : i32
    %96 = vector.broadcast %c0_i32 : i32 to vector<1x384xi32>
    %97 = arith.cmpi eq, %2, %96 : vector<1x384xi32>
    %c17_i32 = arith.constant 17 : i32
    %98 = vector.broadcast %c17_i32 : i32 to vector<1x384xi32>
    %99 = arith.cmpi eq, %2, %98 : vector<1x384xi32>
    %100 = vector.shape_cast %99 : vector<1x384xi1> to vector<1x384xi1>
    %101 = vector.broadcast %100 : vector<1x384xi1> to vector<8x384xi1>
    %102 = arith.select %101, %95, %94 : vector<8x384xi1>, vector<8x384xf32>
    %103 = vector.shape_cast %97 : vector<1x384xi1> to vector<1x384xi1>
    %104 = vector.broadcast %103 : vector<1x384xi1> to vector<8x384xi1>
    %105 = arith.select %104, %93, %102 : vector<8x384xi1>, vector<8x384xf32>
    %c18_i32_40 = arith.constant 18 : i32
    %106 = tpu.dynamic_rotate %105 by %c18_i32_40 dim 1 : vector<8x384xf32>, i32 -> vector<8x384xf32>
    %c36_i32 = arith.constant 36 : i32
    %107 = tpu.dynamic_rotate %105 by %c36_i32 dim 1 : vector<8x384xf32>, i32 -> vector<8x384xf32>
    %c0_i32_41 = arith.constant 0 : i32
    %108 = vector.broadcast %c0_i32_41 : i32 to vector<1x384xi32>
    %109 = arith.cmpi eq, %1, %108 : vector<1x384xi32>
    %c17_i32_42 = arith.constant 17 : i32
    %110 = vector.broadcast %c17_i32_42 : i32 to vector<1x384xi32>
    %111 = arith.cmpi eq, %1, %110 : vector<1x384xi32>
    %112 = vector.shape_cast %111 : vector<1x384xi1> to vector<1x384xi1>
    %113 = vector.broadcast %112 : vector<1x384xi1> to vector<8x384xi1>
    %114 = arith.select %113, %107, %106 : vector<8x384xi1>, vector<8x384xf32>
    %115 = vector.shape_cast %109 : vector<1x384xi1> to vector<1x384xi1>
    %116 = vector.broadcast %115 : vector<1x384xi1> to vector<8x384xi1>
    %117 = arith.select %116, %105, %114 : vector<8x384xi1>, vector<8x384xf32>
    %cst_43 = arith.constant 0.000000e+00 : f32
    %118 = vector.shape_cast %9 : vector<1x384xi1> to vector<1x384xi1>
    %119 = vector.broadcast %118 : vector<1x384xi1> to vector<8x384xi1>
    %120 = vector.broadcast %cst_43 : f32 to vector<8x384xf32>
    %121 = arith.select %119, %117, %120 : vector<8x384xi1>, vector<8x384xf32>
    %c0_44 = arith.constant 0 : index
    %c0_45 = arith.constant 0 : index
    %122 = vector.load %arg4[%c0_44, %c0_45] : memref<16x72xf32, #tpu.memory_space<vmem>>, vector<16x72xf32>
    %c0_46 = arith.constant 0 : index
    %c0_47 = arith.constant 0 : index
    %123 = vector.load %arg7[%c0_46, %c0_47] : memref<144x384xf32, #tpu.memory_space<vmem>>, vector<8x384xf32>
    tpu.vector_store %arg7[%c0_46, %c0_47], %121 {strides = array<i32>} : memref<144x384xf32, #tpu.memory_space<vmem>>, vector<8x384xf32>,
    %c383_i32_48 = arith.constant 383 : i32
    %124 = tpu.dynamic_rotate %121 by %c383_i32_48 dim 1 : vector<8x384xf32>, i32 -> vector<8x384xf32>
    %c8_49 = arith.constant 8 : index
    %c0_50 = arith.constant 0 : index
    %125 = vector.load %arg7[%c8_49, %c0_50] : memref<144x384xf32, #tpu.memory_space<vmem>>, vector<8x384xf32>
    tpu.vector_store %arg7[%c8_49, %c0_50], %124 {strides = array<i32>} : memref<144x384xf32, #tpu.memory_space<vmem>>, vector<8x384xf32>,
    %c382_i32_51 = arith.constant 382 : i32
    %126 = tpu.dynamic_rotate %121 by %c382_i32_51 dim 1 : vector<8x384xf32>, i32 -> vector<8x384xf32>
    %c16_52 = arith.constant 16 : index
    %c0_53 = arith.constant 0 : index
    %127 = vector.load %arg7[%c16_52, %c0_53] : memref<144x384xf32, #tpu.memory_space<vmem>>, vector<8x384xf32>
    tpu.vector_store %arg7[%c16_52, %c0_53], %126 {strides = array<i32>} : memref<144x384xf32, #tpu.memory_space<vmem>>, vector<8x384xf32>,
    %c366_i32_54 = arith.constant 366 : i32
    %128 = tpu.dynamic_rotate %121 by %c366_i32_54 dim 1 : vector<8x384xf32>, i32 -> vector<8x384xf32>
    %c24_55 = arith.constant 24 : index
    %c0_56 = arith.constant 0 : index
    %129 = vector.load %arg7[%c24_55, %c0_56] : memref<144x384xf32, #tpu.memory_space<vmem>>, vector<8x384xf32>
    tpu.vector_store %arg7[%c24_55, %c0_56], %128 {strides = array<i32>} : memref<144x384xf32, #tpu.memory_space<vmem>>, vector<8x384xf32>,
    %c365_i32_57 = arith.constant 365 : i32
    %130 = tpu.dynamic_rotate %121 by %c365_i32_57 dim 1 : vector<8x384xf32>, i32 -> vector<8x384xf32>
    %c32_58 = arith.constant 32 : index
    %c0_59 = arith.constant 0 : index
    %131 = vector.load %arg7[%c32_58, %c0_59] : memref<144x384xf32, #tpu.memory_space<vmem>>, vector<8x384xf32>
    tpu.vector_store %arg7[%c32_58, %c0_59], %130 {strides = array<i32>} : memref<144x384xf32, #tpu.memory_space<vmem>>, vector<8x384xf32>,
    %c364_i32_60 = arith.constant 364 : i32
    %132 = tpu.dynamic_rotate %121 by %c364_i32_60 dim 1 : vector<8x384xf32>, i32 -> vector<8x384xf32>
    %c40_61 = arith.constant 40 : index
    %c0_62 = arith.constant 0 : index
    %133 = vector.load %arg7[%c40_61, %c0_62] : memref<144x384xf32, #tpu.memory_space<vmem>>, vector<8x384xf32>
    tpu.vector_store %arg7[%c40_61, %c0_62], %132 {strides = array<i32>} : memref<144x384xf32, #tpu.memory_space<vmem>>, vector<8x384xf32>,
    %c348_i32_63 = arith.constant 348 : i32
    %134 = tpu.dynamic_rotate %121 by %c348_i32_63 dim 1 : vector<8x384xf32>, i32 -> vector<8x384xf32>
    %c48_64 = arith.constant 48 : index
    %c0_65 = arith.constant 0 : index
    %135 = vector.load %arg7[%c48_64, %c0_65] : memref<144x384xf32, #tpu.memory_space<vmem>>, vector<8x384xf32>
    tpu.vector_store %arg7[%c48_64, %c0_65], %134 {strides = array<i32>} : memref<144x384xf32, #tpu.memory_space<vmem>>, vector<8x384xf32>,
    %c347_i32_66 = arith.constant 347 : i32
    %136 = tpu.dynamic_rotate %121 by %c347_i32_66 dim 1 : vector<8x384xf32>, i32 -> vector<8x384xf32>
    %c56_67 = arith.constant 56 : index
    %c0_68 = arith.constant 0 : index
    %137 = vector.load %arg7[%c56_67, %c0_68] : memref<144x384xf32, #tpu.memory_space<vmem>>, vector<8x384xf32>
    tpu.vector_store %arg7[%c56_67, %c0_68], %136 {strides = array<i32>} : memref<144x384xf32, #tpu.memory_space<vmem>>, vector<8x384xf32>,
    %c346_i32_69 = arith.constant 346 : i32
    %138 = tpu.dynamic_rotate %121 by %c346_i32_69 dim 1 : vector<8x384xf32>, i32 -> vector<8x384xf32>
    %c64_70 = arith.constant 64 : index
    %c0_71 = arith.constant 0 : index
    %139 = vector.load %arg7[%c64_70, %c0_71] : memref<144x384xf32, #tpu.memory_space<vmem>>, vector<8x384xf32>
    tpu.vector_store %arg7[%c64_70, %c0_71], %138 {strides = array<i32>} : memref<144x384xf32, #tpu.memory_space<vmem>>, vector<8x384xf32>,
    %c0_72 = arith.constant 0 : index
    %c0_73 = arith.constant 0 : index
    %140 = vector.load %arg7[%c0_72, %c0_73] : memref<144x384xf32, #tpu.memory_space<vmem>>, vector<72x384xf32>
    %cst_74 = arith.constant dense<0.000000e+00> : vector<16x384xf32>
    %141 = tpu.matmul %122, %140, %cst_74 {dimension_numbers = #tpu.dot_dimension_numbers<[1], [0], [0], [1], [0, 0, 1, 1], [], []>, precision = #tpu.contract_precision<fp32>} : vector<16x72xf32>, vector<72x384xf32>, vector<16x384xf32> -> vector<16x384xf32>
    %cst_75 = arith.constant 0.000000e+00 : f32
    %142 = vector.shape_cast %7 : vector<1x384xi1> to vector<1x384xi1>
    %143 = vector.broadcast %142 : vector<1x384xi1> to vector<16x384xi1>
    %144 = vector.broadcast %cst_75 : f32 to vector<16x384xf32>
    %145 = arith.select %143, %141, %144 : vector<16x384xi1>, vector<16x384xf32>
    %cst_76 = arith.constant dense<0.000000e+00> : vector<16xf32>
    %146 = vector.multi_reduction <add>, %145, %cst_76 [1] : vector<16x384xf32> to vector<16xf32>
    %147 = vector.shape_cast %146 : vector<16xf32> to vector<16x1xf32>
    %cst_77 = arith.constant 3.906250e-03 : f32
    %148 = vector.broadcast %cst_77 : f32 to vector<16x1xf32>
    %149 = arith.mulf %147, %148 : vector<16x1xf32>
    %150 = arith.mulf %145, %145 : vector<16x384xf32>
    %cst_78 = arith.constant dense<0.000000e+00> : vector<16xf32>
    %151 = vector.multi_reduction <add>, %150, %cst_78 [1] : vector<16x384xf32> to vector<16xf32>
    %152 = vector.shape_cast %151 : vector<16xf32> to vector<16x1xf32>
    %cst_79 = arith.constant 3.906250e-03 : f32
    %153 = vector.broadcast %cst_79 : f32 to vector<16x1xf32>
    %154 = arith.mulf %152, %153 : vector<16x1xf32>
    %155 = arith.mulf %149, %149 : vector<16x1xf32>
    %156 = arith.subf %154, %155 : vector<16x1xf32>
    %157 = vector.broadcast %149 : vector<16x1xf32> to vector<16x384xf32>
    %158 = arith.subf %141, %157 : vector<16x384xf32>
    %cst_80 = arith.constant 9.99999974E-6 : f32
    %159 = vector.broadcast %cst_80 : f32 to vector<16x1xf32>
    %160 = arith.addf %156, %159 : vector<16x1xf32>
    %161 = math.rsqrt %160 : vector<16x1xf32>
    %162 = vector.broadcast %161 : vector<16x1xf32> to vector<16x384xf32>
    %163 = arith.mulf %158, %162 : vector<16x384xf32>
    %cst_81 = arith.constant 5.000000e-01 : f32
    %164 = vector.broadcast %cst_81 : f32 to vector<16x384xf32>
    %165 = arith.mulf %164, %163 : vector<16x384xf32>
    %cst_82 = arith.constant 0.707106769 : f32
    %166 = vector.broadcast %cst_82 : f32 to vector<16x384xf32>
    %167 = arith.mulf %163, %166 : vector<16x384xf32>
    %168 = math.absf %167 : vector<16x384xf32>
    %cst_83 = arith.constant 0.327591091 : f32
    %169 = vector.broadcast %cst_83 : f32 to vector<16x384xf32>
    %170 = arith.mulf %169, %168 : vector<16x384xf32>
    %cst_84 = arith.constant 1.000000e+00 : f32
    %171 = vector.broadcast %cst_84 : f32 to vector<16x384xf32>
    %172 = arith.addf %171, %170 : vector<16x384xf32>
    %cst_85 = arith.constant 1.000000e+00 : f32
    %173 = vector.broadcast %cst_85 : f32 to vector<16x384xf32>
    %174 = arith.divf %173, %172 : vector<16x384xf32>
    %cst_86 = arith.constant 1.06140542 : f32
    %175 = vector.broadcast %cst_86 : f32 to vector<16x384xf32>
    %176 = arith.mulf %174, %175 : vector<16x384xf32>
    %cst_87 = arith.constant -1.45315206 : f32
    %177 = vector.broadcast %cst_87 : f32 to vector<16x384xf32>
    %178 = arith.addf %177, %176 : vector<16x384xf32>
    %179 = arith.mulf %174, %178 : vector<16x384xf32>
    %cst_88 = arith.constant 1.42141378 : f32
    %180 = vector.broadcast %cst_88 : f32 to vector<16x384xf32>
    %181 = arith.addf %180, %179 : vector<16x384xf32>
    %182 = arith.mulf %174, %181 : vector<16x384xf32>
    %cst_89 = arith.constant -0.284496725 : f32
    %183 = vector.broadcast %cst_89 : f32 to vector<16x384xf32>
    %184 = arith.addf %183, %182 : vector<16x384xf32>
    %185 = arith.mulf %174, %184 : vector<16x384xf32>
    %cst_90 = arith.constant 0.254829586 : f32
    %186 = vector.broadcast %cst_90 : f32 to vector<16x384xf32>
    %187 = arith.addf %186, %185 : vector<16x384xf32>
    %188 = arith.mulf %174, %187 : vector<16x384xf32>
    %cst_91 = arith.constant 0.000000e+00 : f32
    %189 = vector.broadcast %cst_91 : f32 to vector<16x384xf32>
    %190 = arith.subf %189, %168 : vector<16x384xf32>
    %191 = arith.mulf %190, %168 : vector<16x384xf32>
    %192 = math.exp %191 : vector<16x384xf32>
    %193 = arith.mulf %188, %192 : vector<16x384xf32>
    %cst_92 = arith.constant 1.000000e+00 : f32
    %194 = vector.broadcast %cst_92 : f32 to vector<16x384xf32>
    %195 = arith.subf %194, %193 : vector<16x384xf32>
    %cst_93 = arith.constant 0.000000e+00 : f32
    %196 = vector.broadcast %cst_93 : f32 to vector<16x384xf32>
    %197 = arith.cmpf oge, %167, %196 : vector<16x384xf32>
    %cst_94 = arith.constant 0.000000e+00 : f32
    %198 = vector.broadcast %cst_94 : f32 to vector<16x384xf32>
    %199 = arith.subf %198, %195 : vector<16x384xf32>
    %200 = arith.select %197, %195, %199 : vector<16x384xi1>, vector<16x384xf32>
    %cst_95 = arith.constant 1.000000e+00 : f32
    %201 = vector.broadcast %cst_95 : f32 to vector<16x384xf32>
    %202 = arith.addf %201, %200 : vector<16x384xf32>
    %203 = arith.mulf %165, %202 : vector<16x384xf32>
    %c1_i32_96 = arith.constant 1 : i32
    %204 = tpu.dynamic_rotate %203 by %c1_i32_96 dim 1 : vector<16x384xf32>, i32 -> vector<16x384xf32>
    %c2_i32_97 = arith.constant 2 : i32
    %205 = tpu.dynamic_rotate %203 by %c2_i32_97 dim 1 : vector<16x384xf32>, i32 -> vector<16x384xf32>
    %c0_i32_98 = arith.constant 0 : i32
    %206 = vector.broadcast %c0_i32_98 : i32 to vector<1x384xi32>
    %207 = arith.cmpi eq, %2, %206 : vector<1x384xi32>
    %c17_i32_99 = arith.constant 17 : i32
    %208 = vector.broadcast %c17_i32_99 : i32 to vector<1x384xi32>
    %209 = arith.cmpi eq, %2, %208 : vector<1x384xi32>
    %210 = vector.shape_cast %209 : vector<1x384xi1> to vector<1x384xi1>
    %211 = vector.broadcast %210 : vector<1x384xi1> to vector<16x384xi1>
    %212 = arith.select %211, %205, %204 : vector<16x384xi1>, vector<16x384xf32>
    %213 = vector.shape_cast %207 : vector<1x384xi1> to vector<1x384xi1>
    %214 = vector.broadcast %213 : vector<1x384xi1> to vector<16x384xi1>
    %215 = arith.select %214, %203, %212 : vector<16x384xi1>, vector<16x384xf32>
    %c18_i32_100 = arith.constant 18 : i32
    %216 = tpu.dynamic_rotate %215 by %c18_i32_100 dim 1 : vector<16x384xf32>, i32 -> vector<16x384xf32>
    %c36_i32_101 = arith.constant 36 : i32
    %217 = tpu.dynamic_rotate %215 by %c36_i32_101 dim 1 : vector<16x384xf32>, i32 -> vector<16x384xf32>
    %c0_i32_102 = arith.constant 0 : i32
    %218 = vector.broadcast %c0_i32_102 : i32 to vector<1x384xi32>
    %219 = arith.cmpi eq, %1, %218 : vector<1x384xi32>
    %c17_i32_103 = arith.constant 17 : i32
    %220 = vector.broadcast %c17_i32_103 : i32 to vector<1x384xi32>
    %221 = arith.cmpi eq, %1, %220 : vector<1x384xi32>
    %222 = vector.shape_cast %221 : vector<1x384xi1> to vector<1x384xi1>
    %223 = vector.broadcast %222 : vector<1x384xi1> to vector<16x384xi1>
    %224 = arith.select %223, %217, %216 : vector<16x384xi1>, vector<16x384xf32>
    %225 = vector.shape_cast %219 : vector<1x384xi1> to vector<1x384xi1>
    %226 = vector.broadcast %225 : vector<1x384xi1> to vector<16x384xi1>
    %227 = arith.select %226, %215, %224 : vector<16x384xi1>, vector<16x384xf32>
    %cst_104 = arith.constant 0.000000e+00 : f32
    %228 = vector.shape_cast %9 : vector<1x384xi1> to vector<1x384xi1>
    %229 = vector.broadcast %228 : vector<1x384xi1> to vector<16x384xi1>
    %230 = vector.broadcast %cst_104 : f32 to vector<16x384xf32>
    %231 = arith.select %229, %227, %230 : vector<16x384xi1>, vector<16x384xf32>
    %c0_105 = arith.constant 0 : index
    %c0_106 = arith.constant 0 : index
    %232 = vector.load %arg5[%c0_105, %c0_106] : memref<32x144xf32, #tpu.memory_space<vmem>>, vector<32x144xf32>
    %c0_107 = arith.constant 0 : index
    %c0_108 = arith.constant 0 : index
    %233 = vector.load %arg7[%c0_107, %c0_108] : memref<144x384xf32, #tpu.memory_space<vmem>>, vector<16x384xf32>
    tpu.vector_store %arg7[%c0_107, %c0_108], %231 {strides = array<i32>} : memref<144x384xf32, #tpu.memory_space<vmem>>, vector<16x384xf32>,
    %c383_i32_109 = arith.constant 383 : i32
    %234 = tpu.dynamic_rotate %231 by %c383_i32_109 dim 1 : vector<16x384xf32>, i32 -> vector<16x384xf32>
    %c16_110 = arith.constant 16 : index
    %c0_111 = arith.constant 0 : index
    %235 = vector.load %arg7[%c16_110, %c0_111] : memref<144x384xf32, #tpu.memory_space<vmem>>, vector<16x384xf32>
    tpu.vector_store %arg7[%c16_110, %c0_111], %234 {strides = array<i32>} : memref<144x384xf32, #tpu.memory_space<vmem>>, vector<16x384xf32>,
    %c382_i32_112 = arith.constant 382 : i32
    %236 = tpu.dynamic_rotate %231 by %c382_i32_112 dim 1 : vector<16x384xf32>, i32 -> vector<16x384xf32>
    %c32_113 = arith.constant 32 : index
    %c0_114 = arith.constant 0 : index
    %237 = vector.load %arg7[%c32_113, %c0_114] : memref<144x384xf32, #tpu.memory_space<vmem>>, vector<16x384xf32>
    tpu.vector_store %arg7[%c32_113, %c0_114], %236 {strides = array<i32>} : memref<144x384xf32, #tpu.memory_space<vmem>>, vector<16x384xf32>,
    %c366_i32_115 = arith.constant 366 : i32
    %238 = tpu.dynamic_rotate %231 by %c366_i32_115 dim 1 : vector<16x384xf32>, i32 -> vector<16x384xf32>
    %c48_116 = arith.constant 48 : index
    %c0_117 = arith.constant 0 : index
    %239 = vector.load %arg7[%c48_116, %c0_117] : memref<144x384xf32, #tpu.memory_space<vmem>>, vector<16x384xf32>
    tpu.vector_store %arg7[%c48_116, %c0_117], %238 {strides = array<i32>} : memref<144x384xf32, #tpu.memory_space<vmem>>, vector<16x384xf32>,
    %c365_i32_118 = arith.constant 365 : i32
    %240 = tpu.dynamic_rotate %231 by %c365_i32_118 dim 1 : vector<16x384xf32>, i32 -> vector<16x384xf32>
    %c64_119 = arith.constant 64 : index
    %c0_120 = arith.constant 0 : index
    %241 = vector.load %arg7[%c64_119, %c0_120] : memref<144x384xf32, #tpu.memory_space<vmem>>, vector<16x384xf32>
    tpu.vector_store %arg7[%c64_119, %c0_120], %240 {strides = array<i32>} : memref<144x384xf32, #tpu.memory_space<vmem>>, vector<16x384xf32>,
    %c364_i32_121 = arith.constant 364 : i32
    %242 = tpu.dynamic_rotate %231 by %c364_i32_121 dim 1 : vector<16x384xf32>, i32 -> vector<16x384xf32>
    %c80 = arith.constant 80 : index
    %c0_122 = arith.constant 0 : index
    %243 = vector.load %arg7[%c80, %c0_122] : memref<144x384xf32, #tpu.memory_space<vmem>>, vector<16x384xf32>
    tpu.vector_store %arg7[%c80, %c0_122], %242 {strides = array<i32>} : memref<144x384xf32, #tpu.memory_space<vmem>>, vector<16x384xf32>,
    %c348_i32_123 = arith.constant 348 : i32
    %244 = tpu.dynamic_rotate %231 by %c348_i32_123 dim 1 : vector<16x384xf32>, i32 -> vector<16x384xf32>
    %c96 = arith.constant 96 : index
    %c0_124 = arith.constant 0 : index
    %245 = vector.load %arg7[%c96, %c0_124] : memref<144x384xf32, #tpu.memory_space<vmem>>, vector<16x384xf32>
    tpu.vector_store %arg7[%c96, %c0_124], %244 {strides = array<i32>} : memref<144x384xf32, #tpu.memory_space<vmem>>, vector<16x384xf32>,
    %c347_i32_125 = arith.constant 347 : i32
    %246 = tpu.dynamic_rotate %231 by %c347_i32_125 dim 1 : vector<16x384xf32>, i32 -> vector<16x384xf32>
    %c112 = arith.constant 112 : index
    %c0_126 = arith.constant 0 : index
    %247 = vector.load %arg7[%c112, %c0_126] : memref<144x384xf32, #tpu.memory_space<vmem>>, vector<16x384xf32>
    tpu.vector_store %arg7[%c112, %c0_126], %246 {strides = array<i32>} : memref<144x384xf32, #tpu.memory_space<vmem>>, vector<16x384xf32>,
    %c346_i32_127 = arith.constant 346 : i32
    %248 = tpu.dynamic_rotate %231 by %c346_i32_127 dim 1 : vector<16x384xf32>, i32 -> vector<16x384xf32>
    %c128 = arith.constant 128 : index
    %c0_128 = arith.constant 0 : index
    %249 = vector.load %arg7[%c128, %c0_128] : memref<144x384xf32, #tpu.memory_space<vmem>>, vector<16x384xf32>
    tpu.vector_store %arg7[%c128, %c0_128], %248 {strides = array<i32>} : memref<144x384xf32, #tpu.memory_space<vmem>>, vector<16x384xf32>,
    %c0_129 = arith.constant 0 : index
    %c0_130 = arith.constant 0 : index
    %250 = vector.load %arg7[%c0_129, %c0_130] : memref<144x384xf32, #tpu.memory_space<vmem>>, vector<144x384xf32>
    %cst_131 = arith.constant dense<0.000000e+00> : vector<32x384xf32>
    %251 = tpu.matmul %232, %250, %cst_131 {dimension_numbers = #tpu.dot_dimension_numbers<[1], [0], [0], [1], [0, 0, 1, 1], [], []>, precision = #tpu.contract_precision<fp32>} : vector<32x144xf32>, vector<144x384xf32>, vector<32x384xf32> -> vector<32x384xf32>
    %cst_132 = arith.constant 0.000000e+00 : f32
    %252 = vector.shape_cast %7 : vector<1x384xi1> to vector<1x384xi1>
    %253 = vector.broadcast %252 : vector<1x384xi1> to vector<32x384xi1>
    %254 = vector.broadcast %cst_132 : f32 to vector<32x384xf32>
    %255 = arith.select %253, %251, %254 : vector<32x384xi1>, vector<32x384xf32>
    %cst_133 = arith.constant dense<0.000000e+00> : vector<32xf32>
    %256 = vector.multi_reduction <add>, %255, %cst_133 [1] : vector<32x384xf32> to vector<32xf32>
    %257 = vector.shape_cast %256 : vector<32xf32> to vector<32x1xf32>
    %cst_134 = arith.constant 3.906250e-03 : f32
    %258 = vector.broadcast %cst_134 : f32 to vector<32x1xf32>
    %259 = arith.mulf %257, %258 : vector<32x1xf32>
    %260 = arith.mulf %255, %255 : vector<32x384xf32>
    %cst_135 = arith.constant dense<0.000000e+00> : vector<32xf32>
    %261 = vector.multi_reduction <add>, %260, %cst_135 [1] : vector<32x384xf32> to vector<32xf32>
    %262 = vector.shape_cast %261 : vector<32xf32> to vector<32x1xf32>
    %cst_136 = arith.constant 3.906250e-03 : f32
    %263 = vector.broadcast %cst_136 : f32 to vector<32x1xf32>
    %264 = arith.mulf %262, %263 : vector<32x1xf32>
    %265 = arith.mulf %259, %259 : vector<32x1xf32>
    %266 = arith.subf %264, %265 : vector<32x1xf32>
    %267 = vector.broadcast %259 : vector<32x1xf32> to vector<32x384xf32>
    %268 = arith.subf %251, %267 : vector<32x384xf32>
    %cst_137 = arith.constant 9.99999974E-6 : f32
    %269 = vector.broadcast %cst_137 : f32 to vector<32x1xf32>
    %270 = arith.addf %266, %269 : vector<32x1xf32>
    %271 = math.rsqrt %270 : vector<32x1xf32>
    %272 = vector.broadcast %271 : vector<32x1xf32> to vector<32x384xf32>
    %273 = arith.mulf %268, %272 : vector<32x384xf32>
    %cst_138 = arith.constant 5.000000e-01 : f32
    %274 = vector.broadcast %cst_138 : f32 to vector<32x384xf32>
    %275 = arith.mulf %274, %273 : vector<32x384xf32>
    %cst_139 = arith.constant 0.707106769 : f32
    %276 = vector.broadcast %cst_139 : f32 to vector<32x384xf32>
    %277 = arith.mulf %273, %276 : vector<32x384xf32>
    %278 = math.absf %277 : vector<32x384xf32>
    %cst_140 = arith.constant 0.327591091 : f32
    %279 = vector.broadcast %cst_140 : f32 to vector<32x384xf32>
    %280 = arith.mulf %279, %278 : vector<32x384xf32>
    %cst_141 = arith.constant 1.000000e+00 : f32
    %281 = vector.broadcast %cst_141 : f32 to vector<32x384xf32>
    %282 = arith.addf %281, %280 : vector<32x384xf32>
    %cst_142 = arith.constant 1.000000e+00 : f32
    %283 = vector.broadcast %cst_142 : f32 to vector<32x384xf32>
    %284 = arith.divf %283, %282 : vector<32x384xf32>
    %cst_143 = arith.constant 1.06140542 : f32
    %285 = vector.broadcast %cst_143 : f32 to vector<32x384xf32>
    %286 = arith.mulf %284, %285 : vector<32x384xf32>
    %cst_144 = arith.constant -1.45315206 : f32
    %287 = vector.broadcast %cst_144 : f32 to vector<32x384xf32>
    %288 = arith.addf %287, %286 : vector<32x384xf32>
    %289 = arith.mulf %284, %288 : vector<32x384xf32>
    %cst_145 = arith.constant 1.42141378 : f32
    %290 = vector.broadcast %cst_145 : f32 to vector<32x384xf32>
    %291 = arith.addf %290, %289 : vector<32x384xf32>
    %292 = arith.mulf %284, %291 : vector<32x384xf32>
    %cst_146 = arith.constant -0.284496725 : f32
    %293 = vector.broadcast %cst_146 : f32 to vector<32x384xf32>
    %294 = arith.addf %293, %292 : vector<32x384xf32>
    %295 = arith.mulf %284, %294 : vector<32x384xf32>
    %cst_147 = arith.constant 0.254829586 : f32
    %296 = vector.broadcast %cst_147 : f32 to vector<32x384xf32>
    %297 = arith.addf %296, %295 : vector<32x384xf32>
    %298 = arith.mulf %284, %297 : vector<32x384xf32>
    %cst_148 = arith.constant 0.000000e+00 : f32
    %299 = vector.broadcast %cst_148 : f32 to vector<32x384xf32>
    %300 = arith.subf %299, %278 : vector<32x384xf32>
    %301 = arith.mulf %300, %278 : vector<32x384xf32>
    %302 = math.exp %301 : vector<32x384xf32>
    %303 = arith.mulf %298, %302 : vector<32x384xf32>
    %cst_149 = arith.constant 1.000000e+00 : f32
    %304 = vector.broadcast %cst_149 : f32 to vector<32x384xf32>
    %305 = arith.subf %304, %303 : vector<32x384xf32>
    %cst_150 = arith.constant 0.000000e+00 : f32
    %306 = vector.broadcast %cst_150 : f32 to vector<32x384xf32>
    %307 = arith.cmpf oge, %277, %306 : vector<32x384xf32>
    %cst_151 = arith.constant 0.000000e+00 : f32
    %308 = vector.broadcast %cst_151 : f32 to vector<32x384xf32>
    %309 = arith.subf %308, %305 : vector<32x384xf32>
    %310 = arith.select %307, %305, %309 : vector<32x384xi1>, vector<32x384xf32>
    %cst_152 = arith.constant 1.000000e+00 : f32
    %311 = vector.broadcast %cst_152 : f32 to vector<32x384xf32>
    %312 = arith.addf %311, %310 : vector<32x384xf32>
    %313 = arith.mulf %275, %312 : vector<32x384xf32>
    %c0_153 = arith.constant 0 : index
    %c0_154 = arith.constant 0 : index
    %c0_155 = arith.constant 0 : index
    %314 = vector.load %arg6[%c0_153, %c0_154, %c0_155] : memref<1x32x384xf32, #tpu.memory_space<vmem>>, vector<1x32x384xf32>
    %315 = vector.shape_cast %314 : vector<1x32x384xf32> to vector<32x384xf32>
    %316 = vector.shape_cast %313 : vector<32x384xf32> to vector<1x32x384xf32>
    tpu.vector_store %arg6[%c0_153, %c0_154, %c0_155], %316 {strides = array<i32>} : memref<1x32x384xf32, #tpu.memory_space<vmem>>, vector<1x32x384xf32>,
    return
  }
  func.func @transform_0(%arg0: i32) -> (i32, i32) {
    %c0_i32 = arith.constant 0 : i32
    %c0_i32_0 = arith.constant 0 : i32
    %c0_i32_1 = arith.constant 0 : i32
    return %c0_i32, %c0_i32_0 : i32, i32
  }
  func.func @transform_1(%arg0: i32) -> (i32, i32, i32) {
    %c0_i32 = arith.constant 0 : i32
    %c0_i32_0 = arith.constant 0 : i32
    %c0_i32_1 = arith.constant 0 : i32
    return %arg0, %c0_i32, %c0_i32_0 : i32, i32, i32
  }
  func.func @transform_2(%arg0: i32) -> (i32, i32) {
    %c0_i32 = arith.constant 0 : i32
    %c0_i32_0 = arith.constant 0 : i32
    %c0_i32_1 = arith.constant 0 : i32
    return %c0_i32, %c0_i32_0 : i32, i32
  }
  func.func @transform_3(%arg0: i32) -> (i32, i32) {
    %c0_i32 = arith.constant 0 : i32
    %c0_i32_0 = arith.constant 0 : i32
    %c0_i32_1 = arith.constant 0 : i32
    return %c0_i32, %c0_i32_0 : i32, i32
  }
  func.func @transform_4(%arg0: i32) -> (i32, i32) {
    %c0_i32 = arith.constant 0 : i32
    %c0_i32_0 = arith.constant 0 : i32
    %c0_i32_1 = arith.constant 0 : i32
    return %c0_i32, %c0_i32_0 : i32, i32
  }
  func.func @transform_5(%arg0: i32) -> (i32, i32, i32) {
    %c0_i32 = arith.constant 0 : i32
    %c0_i32_0 = arith.constant 0 : i32
    %c0_i32_1 = arith.constant 0 : i32
    return %arg0, %c0_i32, %c0_i32_0 : i32, i32, i32
  }
}

</mosaic_0001>

<llo_original>
// kernel: input_conv_forward.1
$region0: #{input_conv_forward.1}
  #allocation0 [shape = 'u32[]', space=smem, size = 0x4, offset = 0x4, fixed_abs, tag = 'smem constant byte address 0x4 - core index']
  #allocation1 [shape = 'u32[144,128]{1,0:T(1,128)}', space=vmem, size = 0x12000, scoped, tag = 'internal scratch']
  #allocation2 [shape = 'f32[144,384]{1,0:T(8,128)}', space=vmem, size = 0x36000, scoped, tag = 'scratch operand']
  %s0 = inlined_call_operand.vmem [shape: s32[2,384], index: 0, kind: input, shape index: {}]
  %s1 = inlined_call_operand.vmem [shape: f32[2,8,384], index: 1, kind: input, shape index: {}]
  %s2 = inlined_call_operand.vmem [shape: f32[8,72], index: 2, kind: input, shape index: {}]
  %s3 = inlined_call_operand.vmem [shape: f32[16,72], index: 3, kind: input, shape index: {}]
  %s4 = inlined_call_operand.vmem [shape: f32[32,144], index: 4, kind: input, shape index: {}]
  %s5 = inlined_call_operand.vmem [shape: f32[2,32,384], index: 5, kind: output, shape index: {}]
  %s6 = sld [smem:[#allocation0]]
  $region53: #{input_conv_forward.1} parent=0
    _
  %s8 = ssub.s32 1, %s6
  %s9 = scalar_select 0, %s8, %s6
  loop: start=0, step=1, limit=4
  $region2: #{input_conv_forward.1} parent=0 // loop_pre_header
    _
  $region3: #{input_conv_forward.1} parent=0 // loop_header
    %s11 = sphi 0, %s15
    %p12 = scmp.ge.s32.totalorder %s11, 4
    %s19 = sphi 0, %s19
    %s21 = sphi 0, %s19
    %s22 = sphi 0, %s21
    %s36 = sphi 0, %s22
    %s42 = sphi 0, %s44
    %s45 = sphi 0, %s42
    %s46 = sphi 0, %s45
    %s62 = sphi 0, %s46
    %s66 = sphi 0, %s66
    %s68 = sphi 0, %s66
    %s69 = sphi 0, %s68
    %s83 = sphi 0, %s69
    %s87 = sphi 0, %s87
    %s89 = sphi 0, %s87
    %s90 = sphi 0, %s89
    %s104 = sphi 0, %s90
    %s108 = sphi 0, %s108
    %s110 = sphi 0, %s108
    %s111 = sphi 0, %s110
    %s125 = sphi 0, %s111
    %s131 = sphi 0, %s133
    %s134 = sphi 0, %s131
    %s135 = sphi 0, %s134
    %s151 = sphi 0, %s135
  $region4: #{input_conv_forward.1} parent=0 // loop_header_branch
    %14 = sbr.rel (%p12) target = $region8
  $region5: #{input_conv_forward.1} parent=0 // loop_body
    %s16 = ssub.s32 %s11, 1
    %s17 = ssub.s32 %s11, 2
    %s18 = sadd.s32 %s11, 1
    %s20 = sadd.s32 %s19, 1
    %p23 = scmp.eq.s32.totalorder %s11, 1
    %p24 = scmp.ne.s32.totalorder %s19, %s21
    %p25 = scmp.eq.s32.totalorder %s11, 0
    %p26 = por %p24, %p25
    %p27 = scmp.ne.s32.totalorder %s19, %s21
    %p28 = scmp.eq.s32.totalorder %s16, 1
    %p29 = por %p27, %p28
    %p30 = scmp.ne.s32.totalorder %s21, %s22
    %p31 = scmp.eq.s32.totalorder %s16, 0
    %p32 = por %p30, %p31
    %p33 = scmp.ne.s32.totalorder %s21, %s22
    %p34 = scmp.eq.s32.totalorder %s17, 1
    %p35 = por %p33, %p34
    %p37 = scmp.ne.s32.totalorder %s22, %s36
    %p38 = scmp.eq.s32.totalorder %s17, 0
    %p39 = por %p37, %p38
    %s40 = ssub.s32 %s11, %s18
    %p41 = scmp.eq.s32.totalorder %s40, 0
    %s43 = sadd.s32 %s42, 1
    %s44 = scalar_select %p41, %s42, %s43
    %p47 = pneg %p41
    %p48 = scmp.eq.s32.totalorder %s11, 1
    %p49 = por %p47, %p48
    %p50 = scmp.ne.s32.totalorder %s42, %s45
    %p51 = scmp.eq.s32.totalorder %s11, 0
    %p52 = por %p50, %p51
    %p53 = scmp.ne.s32.totalorder %s42, %s45
    %p54 = scmp.eq.s32.totalorder %s16, 1
    %p55 = por %p53, %p54
    %p56 = scmp.ne.s32.totalorder %s45, %s46
    %p57 = scmp.eq.s32.totalorder %s16, 0
    %p58 = por %p56, %p57
    %p59 = scmp.ne.s32.totalorder %s45, %s46
    %p60 = scmp.eq.s32.totalorder %s17, 1
    %p61 = por %p59, %p60
    %p63 = scmp.ne.s32.totalorder %s46, %s62
    %p64 = scmp.eq.s32.totalorder %s17, 0
    %p65 = por %p63, %p64
    %s67 = sadd.s32 %s66, 1
    %p70 = scmp.eq.s32.totalorder %s11, 1
    %p71 = scmp.ne.s32.totalorder %s66, %s68
    %p72 = scmp.eq.s32.totalorder %s11, 0
    %p73 = por %p71, %p72
    %p74 = scmp.ne.s32.totalorder %s66, %s68
    %p75 = scmp.eq.s32.totalorder %s16, 1
    %p76 = por %p74, %p75
    %p77 = scmp.ne.s32.totalorder %s68, %s69
    %p78 = scmp.eq.s32.totalorder %s16, 0
    %p79 = por %p77, %p78
    %p80 = scmp.ne.s32.totalorder %s68, %s69
    %p81 = scmp.eq.s32.totalorder %s17, 1
    %p82 = por %p80, %p81
    %p84 = scmp.ne.s32.totalorder %s69, %s83
    %p85 = scmp.eq.s32.totalorder %s17, 0
    %p86 = por %p84, %p85
    %s88 = sadd.s32 %s87, 1
    %p91 = scmp.eq.s32.totalorder %s11, 1
    %p92 = scmp.ne.s32.totalorder %s87, %s89
    %p93 = scmp.eq.s32.totalorder %s11, 0
    %p94 = por %p92, %p93
    %p95 = scmp.ne.s32.totalorder %s87, %s89
    %p96 = scmp.eq.s32.totalorder %s16, 1
    %p97 = por %p95, %p96
    %p98 = scmp.ne.s32.totalorder %s89, %s90
    %p99 = scmp.eq.s32.totalorder %s16, 0
    %p100 = por %p98, %p99
    %p101 = scmp.ne.s32.totalorder %s89, %s90
    %p102 = scmp.eq.s32.totalorder %s17, 1
    %p103 = por %p101, %p102
    %p105 = scmp.ne.s32.totalorder %s90, %s104
    %p106 = scmp.eq.s32.totalorder %s17, 0
    %p107 = por %p105, %p106
    %s109 = sadd.s32 %s108, 1
    %p112 = scmp.eq.s32.totalorder %s11, 1
    %p113 = scmp.ne.s32.totalorder %s108, %s110
    %p114 = scmp.eq.s32.totalorder %s11, 0
    %p115 = por %p113, %p114
    %p116 = scmp.ne.s32.totalorder %s108, %s110
    %p117 = scmp.eq.s32.totalorder %s16, 1
    %p118 = por %p116, %p117
    %p119 = scmp.ne.s32.totalorder %s110, %s111
    %p120 = scmp.eq.s32.totalorder %s16, 0
    %p121 = por %p119, %p120
    %p122 = scmp.ne.s32.totalorder %s110, %s111
    %p123 = scmp.eq.s32.totalorder %s17, 1
    %p124 = por %p122, %p123
    %p126 = scmp.ne.s32.totalorder %s111, %s125
    %p127 = scmp.eq.s32.totalorder %s17, 0
    %p128 = por %p126, %p127
    %s129 = ssub.s32 %s11, %s18
    %p130 = scmp.eq.s32.totalorder %s129, 0
    %s132 = sadd.s32 %s131, 1
    %s133 = scalar_select %p130, %s131, %s132
    %p136 = pneg %p130
    %p137 = scmp.eq.s32.totalorder %s11, 1
    %p138 = por %p136, %p137
    %p139 = scmp.ne.s32.totalorder %s131, %s134
    %p140 = scmp.eq.s32.totalorder %s11, 0
    %p141 = por %p139, %p140
    %p142 = scmp.ne.s32.totalorder %s131, %s134
    %p143 = scmp.eq.s32.totalorder %s16, 1
    %p144 = por %p142, %p143
    %p145 = scmp.ne.s32.totalorder %s134, %s135
    %p146 = scmp.eq.s32.totalorder %s16, 0
    %p147 = por %p145, %p146
    %p148 = scmp.ne.s32.totalorder %s134, %s135
    %p149 = scmp.eq.s32.totalorder %s17, 1
    %p150 = por %p148, %p149
    %p152 = scmp.ne.s32.totalorder %s135, %s151
    %p153 = scmp.eq.s32.totalorder %s17, 0
    %p154 = por %p152, %p153
    %p155 = scmp.le.s32.totalorder 1, %s11
    %p156 = scmp.lt.s32.totalorder %s11, 3
    %p157 = pnand %p155, %p156
    %p158 = pneg %p157
    // Predicated region
    $region9: #{input_conv_forward.1} parent=5 // pred_check
      _
    $region10: #{input_conv_forward.1} parent=5 // pred_check_branch
      %160 = sbr.rel (%p157) target = $region12
    $region11: #{input_conv_forward.1} parent=5 // pred_region
      %s161 = ssub.s32 %s11, 1
      // Predicated region
      $region13: #{input_conv_forward.1} parent=11 // pred_check
        %p162 = pneg %p32
      $region14: #{input_conv_forward.1} parent=11 // pred_check_branch
        %164 = sbr.rel (%p162) target = $region16
      $region15: #{input_conv_forward.1} parent=11 // pred_region
        _
      $region16: #{input_conv_forward.1} parent=11 // pred_fallthru
        _
      // Predicated region
      $region17: #{input_conv_forward.1} parent=11 // pred_check
        %p165 = pneg %p79
      $region18: #{input_conv_forward.1} parent=11 // pred_check_branch
        %167 = sbr.rel (%p165) target = $region20
      $region19: #{input_conv_forward.1} parent=11 // pred_region
        _
      $region20: #{input_conv_forward.1} parent=11 // pred_fallthru
        _
      // Predicated region
      $region21: #{input_conv_forward.1} parent=11 // pred_check
        %p168 = pneg %p100
      $region22: #{input_conv_forward.1} parent=11 // pred_check_branch
        %170 = sbr.rel (%p168) target = $region24
      $region23: #{input_conv_forward.1} parent=11 // pred_region
        _
      $region24: #{input_conv_forward.1} parent=11 // pred_fallthru
        _
      // Predicated region
      $region25: #{input_conv_forward.1} parent=11 // pred_check
        %p171 = pneg %p121
      $region26: #{input_conv_forward.1} parent=11 // pred_check_branch
        %173 = sbr.rel (%p171) target = $region28
      $region27: #{input_conv_forward.1} parent=11 // pred_region
        _
      $region28: #{input_conv_forward.1} parent=11 // pred_fallthru
        _
    $region12: #{input_conv_forward.1} parent=5 // pred_fallthru
      _
    %p174 = scmp.lt.s32.totalorder %s11, 2
    // Predicated region
    $region29: #{input_conv_forward.1} parent=5 // pred_check
      %p175 = pneg %p174
    $region30: #{input_conv_forward.1} parent=5 // pred_check_branch
      %177 = sbr.rel (%p175) target = $region32
    $region31: #{input_conv_forward.1} parent=5 // pred_region
      // Predicated region
      $region33: #{input_conv_forward.1} parent=31 // pred_check
        %p178 = pneg %p52
      $region34: #{input_conv_forward.1} parent=31 // pred_check_branch
        %180 = sbr.rel (%p178) target = $region36
      $region35: #{input_conv_forward.1} parent=31 // pred_region
        %p181 = scmp.lt.s32.totalorder %s11, 1
        %s182 = scalar_select %p181, %s11, 1
        %s183 = smul.addr %s182, 3
        %s184 = smul.addr %s183, 8
        %s185 = scalar_lea.vmem %s1, %s184
      $region36: #{input_conv_forward.1} parent=31 // pred_fallthru
        _
    $region32: #{input_conv_forward.1} parent=5 // pred_fallthru
      _
    %p186 = scmp.le.s32.totalorder 1, %s11
    %p187 = scmp.lt.s32.totalorder %s11, 3
    %p188 = pnand %p186, %p187
    %p189 = pneg %p188
    // Predicated region
    $region37: #{input_conv_forward.1} parent=5 // pred_check
      _
    $region38: #{input_conv_forward.1} parent=5 // pred_check_branch
      %191 = sbr.rel (%p188) target = $region40
    $region39: #{input_conv_forward.1} parent=5 // pred_region
      %s192 = ssub.s32 %s11, 1
      %p193 = pneg %p32
      %p194 = pneg %p29
      %p195 = scmp.lt.s32.totalorder %s16, 1
      %s196 = scalar_select %p195, %s16, 1
      %s197 = smul.addr %s196, 3
      %s198 = smul.addr %s197, 8
      %s199 = scalar_lea.vmem %s1, %s198
      %p200 = pneg %p58
      %p201 = pneg %p55
      %p202 = pneg %p79
      %p203 = pneg %p76
      %p204 = pneg %p100
      %p205 = pneg %p97
      %p206 = pneg %p121
      %p207 = pneg %p118
      %p208 = pneg %p147
      %p209 = pneg %p144
      %p210 = scmp.lt.s32.totalorder %s16, 1
      %s211 = scalar_select %p210, %s16, 1
      %s212 = smul.addr %s211, 12
      %s213 = smul.addr %s212, 8
      %s214 = scalar_lea.vmem %s5, %s213
      %p215 = scmp.lt.s32.totalorder %s16, 1
      %s216 = scalar_select %p215, %s16, 1
      %s217 = smul.addr %s216, 3
      %s218 = smul.addr %s217, 8
      %s219 = scalar_lea.vmem %s1, %s218
      %p220 = scmp.lt.s32.totalorder %s16, 1
      %s221 = scalar_select %p220, %s16, 1
      %s222 = smul.addr %s221, 12
      %s223 = smul.addr %s222, 8
      %s224 = scalar_lea.vmem %s5, %s223
      %v225 = vld [vmem:[%s0] sm:$0x3f]
      %vm226 = vcmp.lt.s32.totalorder %v225, 16
      %v227 = vsel %vm226, 1, 0
      %v228 = vrot.slane %v227, 7
      %v229 = vrot.slane %v228, 2
      %vm230 = vcmp.ne.s32.totalorder %v229, 0
      %vm231 = vmand %vm226, %vm230
      %vm232 = vcmp.lt.s32.totalorder %v225, 18
      %v233 = vld [vmem:[%s219] sm:$0xff]
      %v234 = vld [vmem:[%s219 + $0x8] sm:$0xff]
      %v235 = vld [vmem:[%s219 + $0x10] sm:$0xff]
      %v236 = vld [vmem:[%s2] sm:$0xff]
      %237 = vst [vmem:[#allocation2] sm:$0xff] %v233
      %238 = vst [vmem:[#allocation2 + $0x8] sm:$0xff] %v234
      %239 = vst [vmem:[#allocation2 + $0x10] sm:$0xff] %v235
      %240 = vrot.lane.b32.xlu0 %v233, 127
      %v241 = vpop.permute.xlu0 %240
      %242 = vrot.lane.b32.xlu0 %v234, 127
      %v243 = vpop.permute.xlu0 %242
      %244 = vrot.lane.b32.xlu0 %v235, 127
      %v245 = vpop.permute.xlu0 %244
      %v246 = vlaneseq
      %v247 = vand.u32 %v246, 127
      %vm248 = vcmp.lt.s32.totalorder %v247, 127
      %v249 = vsel %vm248, %v243, %v245
      %v250 = vsel %vm248, %v241, %v243
      %v251 = vsel %vm248, %v245, %v241
      %252 = vst [vmem:[#allocation2 + $0x18] sm:$0xff] %v250
      %253 = vst [vmem:[#allocation2 + $0x20] sm:$0xff] %v249
      %254 = vst [vmem:[#allocation2 + $0x28] sm:$0xff] %v251
      %255 = vrot.lane.b32.xlu0 %v233, 126
      %v256 = vpop.permute.xlu0 %255
      %257 = vrot.lane.b32.xlu0 %v234, 126
      %v258 = vpop.permute.xlu0 %257
      %259 = vrot.lane.b32.xlu0 %v235, 126
      %v260 = vpop.permute.xlu0 %259
      %vm261 = vcmp.lt.s32.totalorder %v247, 126
      %v262 = vsel %vm261, %v258, %v260
      %v263 = vsel %vm261, %v256, %v258
      %v264 = vsel %vm261, %v260, %v256
      %265 = vst [vmem:[#allocation2 + $0x30] sm:$0xff] %v263
      %266 = vst [vmem:[#allocation2 + $0x38] sm:$0xff] %v262
      %267 = vst [vmem:[#allocation2 + $0x40] sm:$0xff] %v264
      %268 = vrot.lane.b32.xlu0 %v233, 110
      %v269 = vpop.permute.xlu0 %268
      %270 = vrot.lane.b32.xlu0 %v234, 110
      %v271 = vpop.permute.xlu0 %270
      %272 = vrot.lane.b32.xlu0 %v235, 110
      %v273 = vpop.permute.xlu0 %272
      %vm274 = vcmp.lt.s32.totalorder %v247, 110
      %v275 = vsel %vm274, %v271, %v273
      %v276 = vsel %vm274, %v269, %v271
      %v277 = vsel %vm274, %v273, %v269
      %278 = vst [vmem:[#allocation2 + $0x48] sm:$0xff] %v276
      %279 = vst [vmem:[#allocation2 + $0x50] sm:$0xff] %v275
      %280 = vst [vmem:[#allocation2 + $0x58] sm:$0xff] %v277
      %281 = vrot.lane.b32.xlu0 %v233, 109
      %v282 = vpop.permute.xlu0 %281
      %283 = vrot.lane.b32.xlu0 %v234, 109
      %v284 = vpop.permute.xlu0 %283
      %285 = vrot.lane.b32.xlu0 %v235, 109
      %v286 = vpop.permute.xlu0 %285
      %vm287 = vcmp.lt.s32.totalorder %v247, 109
      %v288 = vsel %vm287, %v284, %v286
      %v289 = vsel %vm287, %v282, %v284
      %v290 = vsel %vm287, %v286, %v282
      %291 = vst [vmem:[#allocation2 + $0x60] sm:$0xff] %v289
      %292 = vst [vmem:[#allocation2 + $0x68] sm:$0xff] %v288
      %293 = vst [vmem:[#allocation2 + $0x70] sm:$0xff] %v290
      %294 = vrot.lane.b32.xlu0 %v233, 108
      %v295 = vpop.permute.xlu0 %294
      %296 = vrot.lane.b32.xlu0 %v234, 108
      %v297 = vpop.permute.xlu0 %296
      %298 = vrot.lane.b32.xlu0 %v235, 108
      %v299 = vpop.permute.xlu0 %298
      %vm300 = vcmp.lt.s32.totalorder %v247, 108
      %v301 = vsel %vm300, %v297, %v299
      %v302 = vsel %vm300, %v295, %v297
      %v303 = vsel %vm300, %v299, %v295
      %304 = vst [vmem:[#allocation2 + $0x78] sm:$0xff] %v302
      %305 = vst [vmem:[#allocation2 + $0x80] sm:$0xff] %v301
      %306 = vst [vmem:[#allocation2 + $0x88] sm:$0xff] %v303
      %307 = vrot.lane.b32.xlu0 %v233, 92
      %v308 = vpop.permute.xlu0 %307
      %309 = vrot.lane.b32.xlu0 %v234, 92
      %v310 = vpop.permute.xlu0 %309
      %311 = vrot.lane.b32.xlu0 %v235, 92
      %v312 = vpop.permute.xlu0 %311
      %vm313 = vcmp.lt.s32.totalorder %v247, 92
      %v314 = vsel %vm313, %v310, %v312
      %v315 = vsel %vm313, %v308, %v310
      %v316 = vsel %vm313, %v312, %v308
      %317 = vst [vmem:[#allocation2 + $0x90] sm:$0xff] %v315
      %318 = vst [vmem:[#allocation2 + $0x98] sm:$0xff] %v314
      %319 = vst [vmem:[#allocation2 + $0xa0] sm:$0xff] %v316
      %320 = vrot.lane.b32.xlu0 %v233, 91
      %v321 = vpop.permute.xlu0 %320
      %322 = vrot.lane.b32.xlu0 %v234, 91
      %v323 = vpop.permute.xlu0 %322
      %324 = vrot.lane.b32.xlu0 %v235, 91
      %v325 = vpop.permute.xlu0 %324
      %vm326 = vcmp.lt.s32.totalorder %v247, 91
      %v327 = vsel %vm326, %v323, %v325
      %v328 = vsel %vm326, %v321, %v323
      %v329 = vsel %vm326, %v325, %v321
      %330 = vst [vmem:[#allocation2 + $0xa8] sm:$0xff] %v328
      %331 = vst [vmem:[#allocation2 + $0xb0] sm:$0xff] %v327
      %332 = vst [vmem:[#allocation2 + $0xb8] sm:$0xff] %v329
      %333 = vrot.lane.b32.xlu0 %v233, 90
      %v334 = vpop.permute.xlu0 %333
      %335 = vrot.lane.b32.xlu0 %v234, 90
      %v336 = vpop.permute.xlu0 %335
      %337 = vrot.lane.b32.xlu0 %v235, 90
      %v338 = vpop.permute.xlu0 %337
      %vm339 = vcmp.lt.s32.totalorder %v247, 90
      %v340 = vsel %vm339, %v336, %v338
      %v341 = vsel %vm339, %v334, %v336
      %v342 = vsel %vm339, %v338, %v334
      %343 = vst [vmem:[#allocation2 + $0xc0] sm:$0xff] %v341
      %344 = vst [vmem:[#allocation2 + $0xc8] sm:$0xff] %v340
      %345 = vst [vmem:[#allocation2 + $0xd0] sm:$0xff] %v342
      %v346 = vld [vmem:[#allocation2] sm:$0xff]
      %v347 = vld [vmem:[#allocation2 + $0x8] sm:$0xff]
      %v348 = vld [vmem:[#allocation2 + $0x10] sm:$0xff]
      %v349 = vld [vmem:[#allocation2 + $0x18] sm:$0xff]
      %v350 = vld [vmem:[#allocation2 + $0x20] sm:$0xff]
      %v351 = vld [vmem:[#allocation2 + $0x28] sm:$0xff]
      %v352 = vld [vmem:[#allocation2 + $0x30] sm:$0xff]
      %v353 = vld [vmem:[#allocation2 + $0x38] sm:$0xff]
      %v354 = vld [vmem:[#allocation2 + $0x40] sm:$0xff]
      %v355 = vld [vmem:[#allocation2 + $0x48] sm:$0xff]
      %v356 = vld [vmem:[#allocation2 + $0x50] sm:$0xff]
      %v357 = vld [vmem:[#allocation2 + $0x58] sm:$0xff]
      %v358 = vld [vmem:[#allocation2 + $0x60] sm:$0xff]
      %v359 = vld [vmem:[#allocation2 + $0x68] sm:$0xff]
      %v360 = vld [vmem:[#allocation2 + $0x70] sm:$0xff]
      %v361 = vld [vmem:[#allocation2 + $0x78] sm:$0xff]
      %v362 = vld [vmem:[#allocation2 + $0x80] sm:$0xff]
      %v363 = vld [vmem:[#allocation2 + $0x88] sm:$0xff]
      %v364 = vld [vmem:[#allocation2 + $0x90] sm:$0xff]
      %v365 = vld [vmem:[#allocation2 + $0x98] sm:$0xff]
      %v366 = vld [vmem:[#allocation2 + $0xa0] sm:$0xff]
      %v367 = vld [vmem:[#allocation2 + $0xa8] sm:$0xff]
      %v368 = vld [vmem:[#allocation2 + $0xb0] sm:$0xff]
      %v369 = vld [vmem:[#allocation2 + $0xb8] sm:$0xff]
      %v370 = vld [vmem:[#allocation2 + $0xc0] sm:$0xff]
      %v371 = vld [vmem:[#allocation2 + $0xc8] sm:$0xff]
      %v372 = vld [vmem:[#allocation2 + $0xd0] sm:$0xff]
      %vm373 = vcmask 588800
      %v375 = vsel %vm373, %v236, 0
      %377 = vmatprep.subr.mxu0 0.0
      %378 = vmatpush1.msra.mxu0 0.0
      %379 = vmatprep.subr.mxu0 0.0
      %380 = vmatpush1.msra.mxu0 0.0
      %381 = vmatprep.subr.mxu0 0.0
      %382 = vmatpush1.msra.mxu0 0.0
      %383 = vmatprep.subr.mxu0 0.0
      %384 = vmatpush1.msra.mxu0 0.0
      %385 = vmatprep.subr.mxu0 0.0
      %386 = vmatpush1.msra.mxu0 0.0
      %387 = vmatprep.subr.mxu0 0.0
      %388 = vmatpush1.msra.mxu0 0.0
      %389 = vmatprep.subr.mxu0 0.0
      %390 = vmatpush1.msra.mxu0 0.0
      %v391 = vand.u32 %v371, 4294901760
      %392 = vmatprep.subr.mxu0 %v391
      %v393 = vand.u32 %v370, 4294901760
      %394 = vmatpush1.msra.mxu0 %v393
      %v395 = vand.u32 %v368, 4294901760
      %396 = vmatprep.subr.mxu0 %v395
      %v397 = vand.u32 %v367, 4294901760
      %398 = vmatpush1.msra.mxu0 %v397
      %v399 = vand.u32 %v365, 4294901760
      %400 = vmatprep.subr.mxu0 %v399
      %v401 = vand.u32 %v364, 4294901760
      %402 = vmatpush1.msra.mxu0 %v401
      %v403 = vand.u32 %v362, 4294901760
      %404 = vmatprep.subr.mxu0 %v403
      %v405 = vand.u32 %v361, 4294901760
      %406 = vmatpush1.msra.mxu0 %v405
      %v407 = vand.u32 %v359, 4294901760
      %408 = vmatprep.subr.mxu0 %v407
      %v409 = vand.u32 %v358, 4294901760
      %410 = vmatpush1.msra.mxu0 %v409
      %v411 = vand.u32 %v356, 4294901760
      %412 = vmatprep.subr.mxu0 %v411
      %v413 = vand.u32 %v355, 4294901760
      %414 = vmatpush1.msra.mxu0 %v413
      %v415 = vand.u32 %v353, 4294901760
      %416 = vmatprep.subr.mxu0 %v415
      %v417 = vand.u32 %v352, 4294901760
      %418 = vmatpush1.msra.mxu0 %v417
      %v419 = vand.u32 %v350, 4294901760
      %420 = vmatprep.subr.mxu0 %v419
      %v421 = vand.u32 %v349, 4294901760
      %422 = vmatpush1.msra.mxu0 %v421
      %v423 = vand.u32 %v347, 4294901760
      %424 = vmatprep.subr.mxu0 %v423
      %v425 = vand.u32 %v346, 4294901760
      %426 = vmatpush1.msra.mxu0 %v425
      %427 = vmatprep.subr.mxu0 0.0
      %428 = vmatpush2.msra.mxu0 0.0
      %429 = vmatprep.subr.mxu0 0.0
      %430 = vmatpush2.msra.mxu0 0.0
      %431 = vmatprep.subr.mxu0 0.0
      %432 = vmatpush2.msra.mxu0 0.0
      %433 = vmatprep.subr.mxu0 0.0
      %434 = vmatpush2.msra.mxu0 0.0
      %435 = vmatprep.subr.mxu0 0.0
      %436 = vmatpush2.msra.mxu0 0.0
      %437 = vmatprep.subr.mxu0 0.0
      %438 = vmatpush2.msra.mxu0 0.0
      %439 = vmatprep.subr.mxu0 0.0
      %440 = vmatpush2.msra.mxu0 0.0
      %441 = vmatprep.subr.mxu0 0.0
      %442 = vmatpush2.msra.mxu0 0.0
      %443 = vmatprep.subr.mxu0 0.0
      %444 = vmatpush2.msra.mxu0 0.0
      %445 = vmatprep.subr.mxu0 0.0
      %446 = vmatpush2.msra.mxu0 0.0
      %447 = vmatprep.subr.mxu0 0.0
      %448 = vmatpush2.msra.mxu0 0.0
      %449 = vmatprep.subr.mxu0 0.0
      %450 = vmatpush2.msra.mxu0 0.0
      %451 = vmatprep.subr.mxu0 0.0
      %452 = vmatpush2.msra.mxu0 0.0
      %453 = vmatprep.subr.mxu0 0.0
      %454 = vmatpush2.msra.mxu0 0.0
      %455 = vmatprep.subr.mxu0 0.0
      %456 = vmatpush2.msra.mxu0 0.0
      %457 = vmatprep.subr.mxu0 0.0
      %458 = vmatpush2.msra.mxu0 0.0
      %459 = vmatprep.mubr.f32.mxu0 0.0
      %v460 = vand.u32 %v375, 4294901760
      %v461 = vsub.f32 %v375, %v460
      %v462 = vand.u32 %v461, 4294901760
      %v463 = vsub.f32 %v461, %v462
      %v464 = vand.u32 %v463, 4294901760
      %465 = vmatmul.mubr.f32.gmra.mxu0 %v464
      %v466 = vpop.f32.mrf.mxu0
      %v467 = vadd.f32 0.0, %v466
      %v468 = vpop.f32.mrf.mxu0
      %v469 = vadd.f32 0.0, %v468
      %470 = vdwg.mxu0
      %471 = vmatprep.subr.mxu0 0.0
      %472 = vmatpush1.msra.mxu0 0.0
      %473 = vmatprep.subr.mxu0 0.0
      %474 = vmatpush1.msra.mxu0 0.0
      %475 = vmatprep.subr.mxu0 0.0
      %476 = vmatpush1.msra.mxu0 0.0
      %477 = vmatprep.subr.mxu0 0.0
      %478 = vmatpush1.msra.mxu0 0.0
      %479 = vmatprep.subr.mxu0 0.0
      %480 = vmatpush1.msra.mxu0 0.0
      %481 = vmatprep.subr.mxu0 0.0
      %482 = vmatpush1.msra.mxu0 0.0
      %483 = vmatprep.subr.mxu0 0.0
      %484 = vmatpush1.msra.mxu0 0.0
      %v485 = vand.u32 %v371, 4294901760
      %v486 = vsub.f32 %v371, %v485
      %v487 = vand.u32 %v486, 4294901760
      %v488 = vsub.f32 %v486, %v487
      %v489 = vand.u32 %v488, 4294901760
      %490 = vmatprep.subr.mxu0 %v489
      %v491 = vand.u32 %v370, 4294901760
      %v492 = vsub.f32 %v370, %v491
      %v493 = vand.u32 %v492, 4294901760
      %v494 = vsub.f32 %v492, %v493
      %v495 = vand.u32 %v494, 4294901760
      %496 = vmatpush1.msra.mxu0 %v495
      %v497 = vand.u32 %v368, 4294901760
      %v498 = vsub.f32 %v368, %v497
      %v499 = vand.u32 %v498, 4294901760
      %v500 = vsub.f32 %v498, %v499
      %v501 = vand.u32 %v500, 4294901760
      %502 = vmatprep.subr.mxu0 %v501
      %v503 = vand.u32 %v367, 4294901760
      %v504 = vsub.f32 %v367, %v503
      %v505 = vand.u32 %v504, 4294901760
      %v506 = vsub.f32 %v504, %v505
      %v507 = vand.u32 %v506, 4294901760
      %508 = vmatpush1.msra.mxu0 %v507
      %v509 = vand.u32 %v365, 4294901760
      %v510 = vsub.f32 %v365, %v509
      %v511 = vand.u32 %v510, 4294901760
      %v512 = vsub.f32 %v510, %v511
      %v513 = vand.u32 %v512, 4294901760
      %514 = vmatprep.subr.mxu0 %v513
      %v515 = vand.u32 %v364, 4294901760
      %v516 = vsub.f32 %v364, %v515
      %v517 = vand.u32 %v516, 4294901760
      %v518 = vsub.f32 %v516, %v517
      %v519 = vand.u32 %v518, 4294901760
      %520 = vmatpush1.msra.mxu0 %v519
      %v521 = vand.u32 %v362, 4294901760
      %v522 = vsub.f32 %v362, %v521
      %v523 = vand.u32 %v522, 4294901760
      %v524 = vsub.f32 %v522, %v523
      %v525 = vand.u32 %v524, 4294901760
      %526 = vmatprep.subr.mxu0 %v525
      %v527 = vand.u32 %v361, 4294901760
      %v528 = vsub.f32 %v361, %v527
      %v529 = vand.u32 %v528, 4294901760
      %v530 = vsub.f32 %v528, %v529
      %v531 = vand.u32 %v530, 4294901760
      %532 = vmatpush1.msra.mxu0 %v531
      %v533 = vand.u32 %v359, 4294901760
      %v534 = vsub.f32 %v359, %v533
      %v535 = vand.u32 %v534, 4294901760
      %v536 = vsub.f32 %v534, %v535
      %v537 = vand.u32 %v536, 4294901760
      %538 = vmatprep.subr.mxu0 %v537
      %v539 = vand.u32 %v358, 4294901760
      %v540 = vsub.f32 %v358, %v539
      %v541 = vand.u32 %v540, 4294901760
      %v542 = vsub.f32 %v540, %v541
      %v543 = vand.u32 %v542, 4294901760
      %544 = vmatpush1.msra.mxu0 %v543
      %v545 = vand.u32 %v356, 4294901760
      %v546 = vsub.f32 %v356, %v545
      %v547 = vand.u32 %v546, 4294901760
      %v548 = vsub.f32 %v546, %v547
      %v549 = vand.u32 %v548, 4294901760
      %550 = vmatprep.subr.mxu0 %v549
      %v551 = vand.u32 %v355, 4294901760
      %v552 = vsub.f32 %v355, %v551
      %v553 = vand.u32 %v552, 4294901760
      %v554 = vsub.f32 %v552, %v553
      %v555 = vand.u32 %v554, 4294901760
      %556 = vmatpush1.msra.mxu0 %v555
      %v557 = vand.u32 %v353, 4294901760
      %v558 = vsub.f32 %v353, %v557
      %v559 = vand.u32 %v558, 4294901760
      %v560 = vsub.f32 %v558, %v559
      %v561 = vand.u32 %v560, 4294901760
      %562 = vmatprep.subr.mxu0 %v561
      %v563 = vand.u32 %v352, 4294901760
      %v564 = vsub.f32 %v352, %v563
      %v565 = vand.u32 %v564, 4294901760
      %v566 = vsub.f32 %v564, %v565
      %v567 = vand.u32 %v566, 4294901760
      %568 = vmatpush1.msra.mxu0 %v567
      %v569 = vand.u32 %v350, 4294901760
      %v570 = vsub.f32 %v350, %v569
      %v571 = vand.u32 %v570, 4294901760
      %v572 = vsub.f32 %v570, %v571
      %v573 = vand.u32 %v572, 4294901760
      %574 = vmatprep.subr.mxu0 %v573
      %v575 = vand.u32 %v349, 4294901760
      %v576 = vsub.f32 %v349, %v575
      %v577 = vand.u32 %v576, 4294901760
      %v578 = vsub.f32 %v576, %v577
      %v579 = vand.u32 %v578, 4294901760
      %580 = vmatpush1.msra.mxu0 %v579
      %v581 = vand.u32 %v347, 4294901760
      %v582 = vsub.f32 %v347, %v581
      %v583 = vand.u32 %v582, 4294901760
      %v584 = vsub.f32 %v582, %v583
      %v585 = vand.u32 %v584, 4294901760
      %586 = vmatprep.subr.mxu0 %v585
      %v587 = vand.u32 %v346, 4294901760
      %v588 = vsub.f32 %v346, %v587
      %v589 = vand.u32 %v588, 4294901760
      %v590 = vsub.f32 %v588, %v589
      %v591 = vand.u32 %v590, 4294901760
      %592 = vmatpush1.msra.mxu0 %v591
      %593 = vmatprep.subr.mxu0 0.0
      %594 = vmatpush2.msra.mxu0 0.0
      %595 = vmatprep.subr.mxu0 0.0
      %596 = vmatpush2.msra.mxu0 0.0
      %597 = vmatprep.subr.mxu0 0.0
      %598 = vmatpush2.msra.mxu0 0.0
      %599 = vmatprep.subr.mxu0 0.0
      %600 = vmatpush2.msra.mxu0 0.0
      %601 = vmatprep.subr.mxu0 0.0
      %602 = vmatpush2.msra.mxu0 0.0
      %603 = vmatprep.subr.mxu0 0.0
      %604 = vmatpush2.msra.mxu0 0.0
      %605 = vmatprep.subr.mxu0 0.0
      %606 = vmatpush2.msra.mxu0 0.0
      %607 = vmatprep.subr.mxu0 0.0
      %608 = vmatpush2.msra.mxu0 0.0
      %609 = vmatprep.subr.mxu0 0.0
      %610 = vmatpush2.msra.mxu0 0.0
      %611 = vmatprep.subr.mxu0 0.0
      %612 = vmatpush2.msra.mxu0 0.0
      %613 = vmatprep.subr.mxu0 0.0
      %614 = vmatpush2.msra.mxu0 0.0
      %615 = vmatprep.subr.mxu0 0.0
      %616 = vmatpush2.msra.mxu0 0.0
      %617 = vmatprep.subr.mxu0 0.0
      %618 = vmatpush2.msra.mxu0 0.0
      %619 = vmatprep.subr.mxu0 0.0
      %620 = vmatpush2.msra.mxu0 0.0
      %621 = vmatprep.subr.mxu0 0.0
      %622 = vmatpush2.msra.mxu0 0.0
      %623 = vmatprep.subr.mxu0 0.0
      %624 = vmatpush2.msra.mxu0 0.0
      %625 = vmatprep.mubr.f32.mxu0 0.0
      %v626 = vand.u32 %v375, 4294901760
      %627 = vmatmul.mubr.f32.gmra.mxu0 %v626
      %v628 = vpop.f32.mrf.mxu0
      %v629 = vadd.f32 %v467, %v628
      %v630 = vpop.f32.mrf.mxu0
      %v631 = vadd.f32 %v469, %v630
      %632 = vdwg.mxu0
      %633 = vmatprep.subr.mxu0 0.0
      %634 = vmatpush1.msra.mxu0 0.0
      %635 = vmatprep.subr.mxu0 0.0
      %636 = vmatpush1.msra.mxu0 0.0
      %637 = vmatprep.subr.mxu0 0.0
      %638 = vmatpush1.msra.mxu0 0.0
      %639 = vmatprep.subr.mxu0 0.0
      %640 = vmatpush1.msra.mxu0 0.0
      %641 = vmatprep.subr.mxu0 0.0
      %642 = vmatpush1.msra.mxu0 0.0
      %643 = vmatprep.subr.mxu0 0.0
      %644 = vmatpush1.msra.mxu0 0.0
      %645 = vmatprep.subr.mxu0 0.0
      %646 = vmatpush1.msra.mxu0 0.0
      %v647 = vand.u32 %v371, 4294901760
      %v648 = vsub.f32 %v371, %v647
      %649 = vmatprep.subr.mxu0 %v648
      %v650 = vand.u32 %v370, 4294901760
      %v651 = vsub.f32 %v370, %v650
      %652 = vmatpush1.msra.mxu0 %v651
      %v653 = vand.u32 %v368, 4294901760
      %v654 = vsub.f32 %v368, %v653
      %655 = vmatprep.subr.mxu0 %v654
      %v656 = vand.u32 %v367, 4294901760
      %v657 = vsub.f32 %v367, %v656
      %658 = vmatpush1.msra.mxu0 %v657
      %v659 = vand.u32 %v365, 4294901760
      %v660 = vsub.f32 %v365, %v659
      %661 = vmatprep.subr.mxu0 %v660
      %v662 = vand.u32 %v364, 4294901760
      %v663 = vsub.f32 %v364, %v662
      %664 = vmatpush1.msra.mxu0 %v663
      %v665 = vand.u32 %v362, 4294901760
      %v666 = vsub.f32 %v362, %v665
      %667 = vmatprep.subr.mxu0 %v666
      %v668 = vand.u32 %v361, 4294901760
      %v669 = vsub.f32 %v361, %v668
      %670 = vmatpush1.msra.mxu0 %v669
      %v671 = vand.u32 %v359, 4294901760
      %v672 = vsub.f32 %v359, %v671
      %673 = vmatprep.subr.mxu0 %v672
      %v674 = vand.u32 %v358, 4294901760
      %v675 = vsub.f32 %v358, %v674
      %676 = vmatpush1.msra.mxu0 %v675
      %v677 = vand.u32 %v356, 4294901760
      %v678 = vsub.f32 %v356, %v677
      %679 = vmatprep.subr.mxu0 %v678
      %v680 = vand.u32 %v355, 4294901760
      %v681 = vsub.f32 %v355, %v680
      %682 = vmatpush1.msra.mxu0 %v681
      %v683 = vand.u32 %v353, 4294901760
      %v684 = vsub.f32 %v353, %v683
      %685 = vmatprep.subr.mxu0 %v684
      %v686 = vand.u32 %v352, 4294901760
      %v687 = vsub.f32 %v352, %v686
      %688 = vmatpush1.msra.mxu0 %v687
      %v689 = vand.u32 %v350, 4294901760
      %v690 = vsub.f32 %v350, %v689
      %691 = vmatprep.subr.mxu0 %v690
      %v692 = vand.u32 %v349, 4294901760
      %v693 = vsub.f32 %v349, %v692
      %694 = vmatpush1.msra.mxu0 %v693
      %v695 = vand.u32 %v347, 4294901760
      %v696 = vsub.f32 %v347, %v695
      %697 = vmatprep.subr.mxu0 %v696
      %v698 = vand.u32 %v346, 4294901760
      %v699 = vsub.f32 %v346, %v698
      %700 = vmatpush1.msra.mxu0 %v699
      %701 = vmatprep.subr.mxu0 0.0
      %702 = vmatpush2.msra.mxu0 0.0
      %703 = vmatprep.subr.mxu0 0.0
      %704 = vmatpush2.msra.mxu0 0.0
      %705 = vmatprep.subr.mxu0 0.0
      %706 = vmatpush2.msra.mxu0 0.0
      %707 = vmatprep.subr.mxu0 0.0
      %708 = vmatpush2.msra.mxu0 0.0
      %709 = vmatprep.subr.mxu0 0.0
      %710 = vmatpush2.msra.mxu0 0.0
      %711 = vmatprep.subr.mxu0 0.0
      %712 = vmatpush2.msra.mxu0 0.0
      %713 = vmatprep.subr.mxu0 0.0
      %714 = vmatpush2.msra.mxu0 0.0
      %715 = vmatprep.subr.mxu0 0.0
      %716 = vmatpush2.msra.mxu0 0.0
      %717 = vmatprep.subr.mxu0 0.0
      %718 = vmatpush2.msra.mxu0 0.0
      %719 = vmatprep.subr.mxu0 0.0
      %720 = vmatpush2.msra.mxu0 0.0
      %721 = vmatprep.subr.mxu0 0.0
      %722 = vmatpush2.msra.mxu0 0.0
      %723 = vmatprep.subr.mxu0 0.0
      %724 = vmatpush2.msra.mxu0 0.0
      %725 = vmatprep.subr.mxu0 0.0
      %726 = vmatpush2.msra.mxu0 0.0
      %727 = vmatprep.subr.mxu0 0.0
      %728 = vmatpush2.msra.mxu0 0.0
      %729 = vmatprep.subr.mxu0 0.0
      %730 = vmatpush2.msra.mxu0 0.0
      %731 = vmatprep.subr.mxu0 0.0
      %732 = vmatpush2.msra.mxu0 0.0
      %733 = vmatprep.mubr.f32.mxu0 0.0
      %v734 = vand.u32 %v375, 4294901760
      %v735 = vsub.f32 %v375, %v734
      %736 = vmatmul.mubr.f32.gmra.mxu0 %v735
      %v737 = vpop.f32.mrf.mxu0
      %v738 = vadd.f32 %v629, %v737
      %v739 = vpop.f32.mrf.mxu0
      %v740 = vadd.f32 %v631, %v739
      %741 = vdwg.mxu0
      %742 = vmatprep.subr.mxu0 0.0
      %743 = vmatpush1.msra.mxu0 0.0
      %744 = vmatprep.subr.mxu0 0.0
      %745 = vmatpush1.msra.mxu0 0.0
      %746 = vmatprep.subr.mxu0 0.0
      %747 = vmatpush1.msra.mxu0 0.0
      %748 = vmatprep.subr.mxu0 0.0
      %749 = vmatpush1.msra.mxu0 0.0
      %750 = vmatprep.subr.mxu0 0.0
      %751 = vmatpush1.msra.mxu0 0.0
      %752 = vmatprep.subr.mxu0 0.0
      %753 = vmatpush1.msra.mxu0 0.0
      %754 = vmatprep.subr.mxu0 0.0
      %755 = vmatpush1.msra.mxu0 0.0
      %v756 = vand.u32 %v371, 4294901760
      %757 = vmatprep.subr.mxu0 %v756
      %v758 = vand.u32 %v370, 4294901760
      %759 = vmatpush1.msra.mxu0 %v758
      %v760 = vand.u32 %v368, 4294901760
      %761 = vmatprep.subr.mxu0 %v760
      %v762 = vand.u32 %v367, 4294901760
      %763 = vmatpush1.msra.mxu0 %v762
      %v764 = vand.u32 %v365, 4294901760
      %765 = vmatprep.subr.mxu0 %v764
      %v766 = vand.u32 %v364, 4294901760
      %767 = vmatpush1.msra.mxu0 %v766
      %v768 = vand.u32 %v362, 4294901760
      %769 = vmatprep.subr.mxu0 %v768
      %v770 = vand.u32 %v361, 4294901760
      %771 = vmatpush1.msra.mxu0 %v770
      %v772 = vand.u32 %v359, 4294901760
      %773 = vmatprep.subr.mxu0 %v772
      %v774 = vand.u32 %v358, 4294901760
      %775 = vmatpush1.msra.mxu0 %v774
      %v776 = vand.u32 %v356, 4294901760
      %777 = vmatprep.subr.mxu0 %v776
      %v778 = vand.u32 %v355, 4294901760
      %779 = vmatpush1.msra.mxu0 %v778
      %v780 = vand.u32 %v353, 4294901760
      %781 = vmatprep.subr.mxu0 %v780
      %v782 = vand.u32 %v352, 4294901760
      %783 = vmatpush1.msra.mxu0 %v782
      %v784 = vand.u32 %v350, 4294901760
      %785 = vmatprep.subr.mxu0 %v784
      %v786 = vand.u32 %v349, 4294901760
      %787 = vmatpush1.msra.mxu0 %v786
      %v788 = vand.u32 %v347, 4294901760
      %789 = vmatprep.subr.mxu0 %v788
      %v790 = vand.u32 %v346, 4294901760
      %791 = vmatpush1.msra.mxu0 %v790
      %792 = vmatprep.subr.mxu0 0.0
      %793 = vmatpush2.msra.mxu0 0.0
      %794 = vmatprep.subr.mxu0 0.0
      %795 = vmatpush2.msra.mxu0 0.0
      %796 = vmatprep.subr.mxu0 0.0
      %797 = vmatpush2.msra.mxu0 0.0
      %798 = vmatprep.subr.mxu0 0.0
      %799 = vmatpush2.msra.mxu0 0.0
      %800 = vmatprep.subr.mxu0 0.0
      %801 = vmatpush2.msra.mxu0 0.0
      %802 = vmatprep.subr.mxu0 0.0
      %803 = vmatpush2.msra.mxu0 0.0
      %804 = vmatprep.subr.mxu0 0.0
      %805 = vmatpush2.msra.mxu0 0.0
      %806 = vmatprep.subr.mxu0 0.0
      %807 = vmatpush2.msra.mxu0 0.0
      %808 = vmatprep.subr.mxu0 0.0
      %809 = vmatpush2.msra.mxu0 0.0
      %810 = vmatprep.subr.mxu0 0.0
      %811 = vmatpush2.msra.mxu0 0.0
      %812 = vmatprep.subr.mxu0 0.0
      %813 = vmatpush2.msra.mxu0 0.0
      %814 = vmatprep.subr.mxu0 0.0
      %815 = vmatpush2.msra.mxu0 0.0
      %816 = vmatprep.subr.mxu0 0.0
      %817 = vmatpush2.msra.mxu0 0.0
      %818 = vmatprep.subr.mxu0 0.0
      %819 = vmatpush2.msra.mxu0 0.0
      %820 = vmatprep.subr.mxu0 0.0
      %821 = vmatpush2.msra.mxu0 0.0
      %822 = vmatprep.subr.mxu0 0.0
      %823 = vmatpush2.msra.mxu0 0.0
      %824 = vmatprep.mubr.f32.mxu0 0.0
      %v825 = vand.u32 %v375, 4294901760
      %v826 = vsub.f32 %v375, %v825
      %v827 = vand.u32 %v826, 4294901760
      %828 = vmatmul.mubr.f32.gmra.mxu0 %v827
      %v829 = vpop.f32.mrf.mxu0
      %v830 = vadd.f32 %v738, %v829
      %v831 = vpop.f32.mrf.mxu0
      %v832 = vadd.f32 %v740, %v831
      %833 = vdwg.mxu0
      %834 = vmatprep.subr.mxu0 0.0
      %835 = vmatpush1.msra.mxu0 0.0
      %836 = vmatprep.subr.mxu0 0.0
      %837 = vmatpush1.msra.mxu0 0.0
      %838 = vmatprep.subr.mxu0 0.0
      %839 = vmatpush1.msra.mxu0 0.0
      %840 = vmatprep.subr.mxu0 0.0
      %841 = vmatpush1.msra.mxu0 0.0
      %842 = vmatprep.subr.mxu0 0.0
      %843 = vmatpush1.msra.mxu0 0.0
      %844 = vmatprep.subr.mxu0 0.0
      %845 = vmatpush1.msra.mxu0 0.0
      %846 = vmatprep.subr.mxu0 0.0
      %847 = vmatpush1.msra.mxu0 0.0
      %v848 = vand.u32 %v371, 4294901760
      %v849 = vsub.f32 %v371, %v848
      %v850 = vand.u32 %v849, 4294901760
      %851 = vmatprep.subr.mxu0 %v850
      %v852 = vand.u32 %v370, 4294901760
      %v853 = vsub.f32 %v370, %v852
      %v854 = vand.u32 %v853, 4294901760
      %855 = vmatpush1.msra.mxu0 %v854
      %v856 = vand.u32 %v368, 4294901760
      %v857 = vsub.f32 %v368, %v856
      %v858 = vand.u32 %v857, 4294901760
      %859 = vmatprep.subr.mxu0 %v858
      %v860 = vand.u32 %v367, 4294901760
      %v861 = vsub.f32 %v367, %v860
      %v862 = vand.u32 %v861, 4294901760
      %863 = vmatpush1.msra.mxu0 %v862
      %v864 = vand.u32 %v365, 4294901760
      %v865 = vsub.f32 %v365, %v864
      %v866 = vand.u32 %v865, 4294901760
      %867 = vmatprep.subr.mxu0 %v866
      %v868 = vand.u32 %v364, 4294901760
      %v869 = vsub.f32 %v364, %v868
      %v870 = vand.u32 %v869, 4294901760
      %871 = vmatpush1.msra.mxu0 %v870
      %v872 = vand.u32 %v362, 4294901760
      %v873 = vsub.f32 %v362, %v872
      %v874 = vand.u32 %v873, 4294901760
      %875 = vmatprep.subr.mxu0 %v874
      %v876 = vand.u32 %v361, 4294901760
      %v877 = vsub.f32 %v361, %v876
      %v878 = vand.u32 %v877, 4294901760
      %879 = vmatpush1.msra.mxu0 %v878
      %v880 = vand.u32 %v359, 4294901760
      %v881 = vsub.f32 %v359, %v880
      %v882 = vand.u32 %v881, 4294901760
      %883 = vmatprep.subr.mxu0 %v882
      %v884 = vand.u32 %v358, 4294901760
      %v885 = vsub.f32 %v358, %v884
      %v886 = vand.u32 %v885, 4294901760
      %887 = vmatpush1.msra.mxu0 %v886
      %v888 = vand.u32 %v356, 4294901760
      %v889 = vsub.f32 %v356, %v888
      %v890 = vand.u32 %v889, 4294901760
      %891 = vmatprep.subr.mxu0 %v890
      %v892 = vand.u32 %v355, 4294901760
      %v893 = vsub.f32 %v355, %v892
      %v894 = vand.u32 %v893, 4294901760
      %895 = vmatpush1.msra.mxu0 %v894
      %v896 = vand.u32 %v353, 4294901760
      %v897 = vsub.f32 %v353, %v896
      %v898 = vand.u32 %v897, 4294901760
      %899 = vmatprep.subr.mxu0 %v898
      %v900 = vand.u32 %v352, 4294901760
      %v901 = vsub.f32 %v352, %v900
      %v902 = vand.u32 %v901, 4294901760
      %903 = vmatpush1.msra.mxu0 %v902
      %v904 = vand.u32 %v350, 4294901760
      %v905 = vsub.f32 %v350, %v904
      %v906 = vand.u32 %v905, 4294901760
      %907 = vmatprep.subr.mxu0 %v906
      %v908 = vand.u32 %v349, 4294901760
      %v909 = vsub.f32 %v349, %v908
      %v910 = vand.u32 %v909, 4294901760
      %911 = vmatpush1.msra.mxu0 %v910
      %v912 = vand.u32 %v347, 4294901760
      %v913 = vsub.f32 %v347, %v912
      %v914 = vand.u32 %v913, 4294901760
      %915 = vmatprep.subr.mxu0 %v914
      %v916 = vand.u32 %v346, 4294901760
      %v917 = vsub.f32 %v346, %v916
      %v918 = vand.u32 %v917, 4294901760
      %919 = vmatpush1.msra.mxu0 %v918
      %920 = vmatprep.subr.mxu0 0.0
      %921 = vmatpush2.msra.mxu0 0.0
      %922 = vmatprep.subr.mxu0 0.0
      %923 = vmatpush2.msra.mxu0 0.0
      %924 = vmatprep.subr.mxu0 0.0
      %925 = vmatpush2.msra.mxu0 0.0
      %926 = vmatprep.subr.mxu0 0.0
      %927 = vmatpush2.msra.mxu0 0.0
      %928 = vmatprep.subr.mxu0 0.0
      %929 = vmatpush2.msra.mxu0 0.0
      %930 = vmatprep.subr.mxu0 0.0
      %931 = vmatpush2.msra.mxu0 0.0
      %932 = vmatprep.subr.mxu0 0.0
      %933 = vmatpush2.msra.mxu0 0.0
      %934 = vmatprep.subr.mxu0 0.0
      %935 = vmatpush2.msra.mxu0 0.0
      %936 = vmatprep.subr.mxu0 0.0
      %937 = vmatpush2.msra.mxu0 0.0
      %938 = vmatprep.subr.mxu0 0.0
      %939 = vmatpush2.msra.mxu0 0.0
      %940 = vmatprep.subr.mxu0 0.0
      %941 = vmatpush2.msra.mxu0 0.0
      %942 = vmatprep.subr.mxu0 0.0
      %943 = vmatpush2.msra.mxu0 0.0
      %944 = vmatprep.subr.mxu0 0.0
      %945 = vmatpush2.msra.mxu0 0.0
      %946 = vmatprep.subr.mxu0 0.0
      %947 = vmatpush2.msra.mxu0 0.0
      %948 = vmatprep.subr.mxu0 0.0
      %949 = vmatpush2.msra.mxu0 0.0
      %950 = vmatprep.subr.mxu0 0.0
      %951 = vmatpush2.msra.mxu0 0.0
      %952 = vmatprep.mubr.f32.mxu0 0.0
      %v953 = vand.u32 %v375, 4294901760
      %954 = vmatmul.mubr.f32.gmra.mxu0 %v953
      %v955 = vpop.f32.mrf.mxu0
      %v956 = vadd.f32 %v830, %v955
      %v957 = vpop.f32.mrf.mxu0
      %v958 = vadd.f32 %v832, %v957
      %959 = vdwg.mxu0
      %960 = vmatprep.subr.mxu0 0.0
      %961 = vmatpush1.msra.mxu0 0.0
      %962 = vmatprep.subr.mxu0 0.0
      %963 = vmatpush1.msra.mxu0 0.0
      %964 = vmatprep.subr.mxu0 0.0
      %965 = vmatpush1.msra.mxu0 0.0
      %966 = vmatprep.subr.mxu0 0.0
      %967 = vmatpush1.msra.mxu0 0.0
      %968 = vmatprep.subr.mxu0 0.0
      %969 = vmatpush1.msra.mxu0 0.0
      %970 = vmatprep.subr.mxu0 0.0
      %971 = vmatpush1.msra.mxu0 0.0
      %972 = vmatprep.subr.mxu0 0.0
      %973 = vmatpush1.msra.mxu0 0.0
      %v974 = vand.u32 %v371, 4294901760
      %975 = vmatprep.subr.mxu0 %v974
      %v976 = vand.u32 %v370, 4294901760
      %977 = vmatpush1.msra.mxu0 %v976
      %v978 = vand.u32 %v368, 4294901760
      %979 = vmatprep.subr.mxu0 %v978
      %v980 = vand.u32 %v367, 4294901760
      %981 = vmatpush1.msra.mxu0 %v980
      %v982 = vand.u32 %v365, 4294901760
      %983 = vmatprep.subr.mxu0 %v982
      %v984 = vand.u32 %v364, 4294901760
      %985 = vmatpush1.msra.mxu0 %v984
      %v986 = vand.u32 %v362, 4294901760
      %987 = vmatprep.subr.mxu0 %v986
      %v988 = vand.u32 %v361, 4294901760
      %989 = vmatpush1.msra.mxu0 %v988
      %v990 = vand.u32 %v359, 4294901760
      %991 = vmatprep.subr.mxu0 %v990
      %v992 = vand.u32 %v358, 4294901760
      %993 = vmatpush1.msra.mxu0 %v992
      %v994 = vand.u32 %v356, 4294901760
      %995 = vmatprep.subr.mxu0 %v994
      %v996 = vand.u32 %v355, 4294901760
      %997 = vmatpush1.msra.mxu0 %v996
      %v998 = vand.u32 %v353, 4294901760
      %999 = vmatprep.subr.mxu0 %v998
      %v1000 = vand.u32 %v352, 4294901760
      %1001 = vmatpush1.msra.mxu0 %v1000
      %v1002 = vand.u32 %v350, 4294901760
      %1003 = vmatprep.subr.mxu0 %v1002
      %v1004 = vand.u32 %v349, 4294901760
      %1005 = vmatpush1.msra.mxu0 %v1004
      %v1006 = vand.u32 %v347, 4294901760
      %1007 = vmatprep.subr.mxu0 %v1006
      %v1008 = vand.u32 %v346, 4294901760
      %1009 = vmatpush1.msra.mxu0 %v1008
      %1010 = vmatprep.subr.mxu0 0.0
      %1011 = vmatpush2.msra.mxu0 0.0
      %1012 = vmatprep.subr.mxu0 0.0
      %1013 = vmatpush2.msra.mxu0 0.0
      %1014 = vmatprep.subr.mxu0 0.0
      %1015 = vmatpush2.msra.mxu0 0.0
      %1016 = vmatprep.subr.mxu0 0.0
      %1017 = vmatpush2.msra.mxu0 0.0
      %1018 = vmatprep.subr.mxu0 0.0
      %1019 = vmatpush2.msra.mxu0 0.0
      %1020 = vmatprep.subr.mxu0 0.0
      %1021 = vmatpush2.msra.mxu0 0.0
      %1022 = vmatprep.subr.mxu0 0.0
      %1023 = vmatpush2.msra.mxu0 0.0
      %1024 = vmatprep.subr.mxu0 0.0
      %1025 = vmatpush2.msra.mxu0 0.0
      %1026 = vmatprep.subr.mxu0 0.0
      %1027 = vmatpush2.msra.mxu0 0.0
      %1028 = vmatprep.subr.mxu0 0.0
      %1029 = vmatpush2.msra.mxu0 0.0
      %1030 = vmatprep.subr.mxu0 0.0
      %1031 = vmatpush2.msra.mxu0 0.0
      %1032 = vmatprep.subr.mxu0 0.0
      %1033 = vmatpush2.msra.mxu0 0.0
      %1034 = vmatprep.subr.mxu0 0.0
      %1035 = vmatpush2.msra.mxu0 0.0
      %1036 = vmatprep.subr.mxu0 0.0
      %1037 = vmatpush2.msra.mxu0 0.0
      %1038 = vmatprep.subr.mxu0 0.0
      %1039 = vmatpush2.msra.mxu0 0.0
      %1040 = vmatprep.subr.mxu0 0.0
      %1041 = vmatpush2.msra.mxu0 0.0
      %1042 = vmatprep.mubr.f32.mxu0 0.0
      %v1043 = vand.u32 %v375, 4294901760
      %1044 = vmatmul.mubr.f32.gmra.mxu0 %v1043
      %v1045 = vpop.f32.mrf.mxu0
      %v1046 = vadd.f32 %v956, %v1045
      %v1047 = vpop.f32.mrf.mxu0
      %v1048 = vadd.f32 %v958, %v1047
      %1049 = vdwg.mxu0
      %1050 = vmatprep.subr.mxu0 0.0
      %1051 = vmatpush1.msra.mxu0 0.0
      %1052 = vmatprep.subr.mxu0 0.0
      %1053 = vmatpush1.msra.mxu0 0.0
      %1054 = vmatprep.subr.mxu0 0.0
      %1055 = vmatpush1.msra.mxu0 0.0
      %1056 = vmatprep.subr.mxu0 0.0
      %1057 = vmatpush1.msra.mxu0 0.0
      %1058 = vmatprep.subr.mxu0 0.0
      %1059 = vmatpush1.msra.mxu0 0.0
      %1060 = vmatprep.subr.mxu0 0.0
      %1061 = vmatpush1.msra.mxu0 0.0
      %1062 = vmatprep.subr.mxu0 0.0
      %1063 = vmatpush1.msra.mxu0 0.0
      %1064 = vmatprep.subr.mxu0 0.0
      %v1065 = vand.u32 %v372, 4294901760
      %1066 = vmatpush1.msra.mxu0 %v1065
      %1067 = vmatprep.subr.mxu0 0.0
      %v1068 = vand.u32 %v369, 4294901760
      %1069 = vmatpush1.msra.mxu0 %v1068
      %1070 = vmatprep.subr.mxu0 0.0
      %v1071 = vand.u32 %v366, 4294901760
      %1072 = vmatpush1.msra.mxu0 %v1071
      %1073 = vmatprep.subr.mxu0 0.0
      %v1074 = vand.u32 %v363, 4294901760
      %1075 = vmatpush1.msra.mxu0 %v1074
      %1076 = vmatprep.subr.mxu0 0.0
      %v1077 = vand.u32 %v360, 4294901760
      %1078 = vmatpush1.msra.mxu0 %v1077
      %1079 = vmatprep.subr.mxu0 0.0
      %v1080 = vand.u32 %v357, 4294901760
      %1081 = vmatpush1.msra.mxu0 %v1080
      %1082 = vmatprep.subr.mxu0 0.0
      %v1083 = vand.u32 %v354, 4294901760
      %1084 = vmatpush1.msra.mxu0 %v1083
      %1085 = vmatprep.subr.mxu0 0.0
      %v1086 = vand.u32 %v351, 4294901760
      %1087 = vmatpush1.msra.mxu0 %v1086
      %1088 = vmatprep.subr.mxu0 0.0
      %v1089 = vand.u32 %v348, 4294901760
      %1090 = vmatpush1.msra.mxu0 %v1089
      %1091 = vmatprep.subr.mxu0 0.0
      %1092 = vmatpush2.msra.mxu0 0.0
      %1093 = vmatprep.subr.mxu0 0.0
      %1094 = vmatpush2.msra.mxu0 0.0
      %1095 = vmatprep.subr.mxu0 0.0
      %1096 = vmatpush2.msra.mxu0 0.0
      %1097 = vmatprep.subr.mxu0 0.0
      %1098 = vmatpush2.msra.mxu0 0.0
      %1099 = vmatprep.subr.mxu0 0.0
      %1100 = vmatpush2.msra.mxu0 0.0
      %1101 = vmatprep.subr.mxu0 0.0
      %1102 = vmatpush2.msra.mxu0 0.0
      %1103 = vmatprep.subr.mxu0 0.0
      %1104 = vmatpush2.msra.mxu0 0.0
      %1105 = vmatprep.subr.mxu0 0.0
      %1106 = vmatpush2.msra.mxu0 0.0
      %1107 = vmatprep.subr.mxu0 0.0
      %1108 = vmatpush2.msra.mxu0 0.0
      %1109 = vmatprep.subr.mxu0 0.0
      %1110 = vmatpush2.msra.mxu0 0.0
      %1111 = vmatprep.subr.mxu0 0.0
      %1112 = vmatpush2.msra.mxu0 0.0
      %1113 = vmatprep.subr.mxu0 0.0
      %1114 = vmatpush2.msra.mxu0 0.0
      %1115 = vmatprep.subr.mxu0 0.0
      %1116 = vmatpush2.msra.mxu0 0.0
      %1117 = vmatprep.subr.mxu0 0.0
      %1118 = vmatpush2.msra.mxu0 0.0
      %1119 = vmatprep.subr.mxu0 0.0
      %1120 = vmatpush2.msra.mxu0 0.0
      %1121 = vmatprep.subr.mxu0 0.0
      %1122 = vmatpush2.msra.mxu0 0.0
      %1123 = vmatprep.mubr.f32.mxu0 0.0
      %v1124 = vand.u32 %v375, 4294901760
      %v1125 = vsub.f32 %v375, %v1124
      %v1126 = vand.u32 %v1125, 4294901760
      %v1127 = vsub.f32 %v1125, %v1126
      %v1128 = vand.u32 %v1127, 4294901760
      %1129 = vmatmul.mubr.f32.gmra.mxu0 %v1128
      %v1130 = vpop.f32.mrf.mxu0
      %v1131 = vadd.f32 0.0, %v1130
      %v1132 = vpop.f32.mrf.mxu0
      %1133 = vdwg.mxu0
      %1134 = vmatprep.subr.mxu0 0.0
      %1135 = vmatpush1.msra.mxu0 0.0
      %1136 = vmatprep.subr.mxu0 0.0
      %1137 = vmatpush1.msra.mxu0 0.0
      %1138 = vmatprep.subr.mxu0 0.0
      %1139 = vmatpush1.msra.mxu0 0.0
      %1140 = vmatprep.subr.mxu0 0.0
      %1141 = vmatpush1.msra.mxu0 0.0
      %1142 = vmatprep.subr.mxu0 0.0
      %1143 = vmatpush1.msra.mxu0 0.0
      %1144 = vmatprep.subr.mxu0 0.0
      %1145 = vmatpush1.msra.mxu0 0.0
      %1146 = vmatprep.subr.mxu0 0.0
      %1147 = vmatpush1.msra.mxu0 0.0
      %1148 = vmatprep.subr.mxu0 0.0
      %v1149 = vand.u32 %v372, 4294901760
      %v1150 = vsub.f32 %v372, %v1149
      %v1151 = vand.u32 %v1150, 4294901760
      %v1152 = vsub.f32 %v1150, %v1151
      %v1153 = vand.u32 %v1152, 4294901760
      %1154 = vmatpush1.msra.mxu0 %v1153
      %1155 = vmatprep.subr.mxu0 0.0
      %v1156 = vand.u32 %v369, 4294901760
      %v1157 = vsub.f32 %v369, %v1156
      %v1158 = vand.u32 %v1157, 4294901760
      %v1159 = vsub.f32 %v1157, %v1158
      %v1160 = vand.u32 %v1159, 4294901760
      %1161 = vmatpush1.msra.mxu0 %v1160
      %1162 = vmatprep.subr.mxu0 0.0
      %v1163 = vand.u32 %v366, 4294901760
      %v1164 = vsub.f32 %v366, %v1163
      %v1165 = vand.u32 %v1164, 4294901760
      %v1166 = vsub.f32 %v1164, %v1165
      %v1167 = vand.u32 %v1166, 4294901760
      %1168 = vmatpush1.msra.mxu0 %v1167
      %1169 = vmatprep.subr.mxu0 0.0
      %v1170 = vand.u32 %v363, 4294901760
      %v1171 = vsub.f32 %v363, %v1170
      %v1172 = vand.u32 %v1171, 4294901760
      %v1173 = vsub.f32 %v1171, %v1172
      %v1174 = vand.u32 %v1173, 4294901760
      %1175 = vmatpush1.msra.mxu0 %v1174
      %1176 = vmatprep.subr.mxu0 0.0
      %v1177 = vand.u32 %v360, 4294901760
      %v1178 = vsub.f32 %v360, %v1177
      %v1179 = vand.u32 %v1178, 4294901760
      %v1180 = vsub.f32 %v1178, %v1179
      %v1181 = vand.u32 %v1180, 4294901760
      %1182 = vmatpush1.msra.mxu0 %v1181
      %1183 = vmatprep.subr.mxu0 0.0
      %v1184 = vand.u32 %v357, 4294901760
      %v1185 = vsub.f32 %v357, %v1184
      %v1186 = vand.u32 %v1185, 4294901760
      %v1187 = vsub.f32 %v1185, %v1186
      %v1188 = vand.u32 %v1187, 4294901760
      %1189 = vmatpush1.msra.mxu0 %v1188
      %1190 = vmatprep.subr.mxu0 0.0
      %v1191 = vand.u32 %v354, 4294901760
      %v1192 = vsub.f32 %v354, %v1191
      %v1193 = vand.u32 %v1192, 4294901760
      %v1194 = vsub.f32 %v1192, %v1193
      %v1195 = vand.u32 %v1194, 4294901760
      %1196 = vmatpush1.msra.mxu0 %v1195
      %1197 = vmatprep.subr.mxu0 0.0
      %v1198 = vand.u32 %v351, 4294901760
      %v1199 = vsub.f32 %v351, %v1198
      %v1200 = vand.u32 %v1199, 4294901760
      %v1201 = vsub.f32 %v1199, %v1200
      %v1202 = vand.u32 %v1201, 4294901760
      %1203 = vmatpush1.msra.mxu0 %v1202
      %1204 = vmatprep.subr.mxu0 0.0
      %v1205 = vand.u32 %v348, 4294901760
      %v1206 = vsub.f32 %v348, %v1205
      %v1207 = vand.u32 %v1206, 4294901760
      %v1208 = vsub.f32 %v1206, %v1207
      %v1209 = vand.u32 %v1208, 4294901760
      %1210 = vmatpush1.msra.mxu0 %v1209
      %1211 = vmatprep.subr.mxu0 0.0
      %1212 = vmatpush2.msra.mxu0 0.0
      %1213 = vmatprep.subr.mxu0 0.0
      %1214 = vmatpush2.msra.mxu0 0.0
      %1215 = vmatprep.subr.mxu0 0.0
      %1216 = vmatpush2.msra.mxu0 0.0
      %1217 = vmatprep.subr.mxu0 0.0
      %1218 = vmatpush2.msra.mxu0 0.0
      %1219 = vmatprep.subr.mxu0 0.0
      %1220 = vmatpush2.msra.mxu0 0.0
      %1221 = vmatprep.subr.mxu0 0.0
      %1222 = vmatpush2.msra.mxu0 0.0
      %1223 = vmatprep.subr.mxu0 0.0
      %1224 = vmatpush2.msra.mxu0 0.0
      %1225 = vmatprep.subr.mxu0 0.0
      %1226 = vmatpush2.msra.mxu0 0.0
      %1227 = vmatprep.subr.mxu0 0.0
      %1228 = vmatpush2.msra.mxu0 0.0
      %1229 = vmatprep.subr.mxu0 0.0
      %1230 = vmatpush2.msra.mxu0 0.0
      %1231 = vmatprep.subr.mxu0 0.0
      %1232 = vmatpush2.msra.mxu0 0.0
      %1233 = vmatprep.subr.mxu0 0.0
      %1234 = vmatpush2.msra.mxu0 0.0
      %1235 = vmatprep.subr.mxu0 0.0
      %1236 = vmatpush2.msra.mxu0 0.0
      %1237 = vmatprep.subr.mxu0 0.0
      %1238 = vmatpush2.msra.mxu0 0.0
      %1239 = vmatprep.subr.mxu0 0.0
      %1240 = vmatpush2.msra.mxu0 0.0
      %1241 = vmatprep.subr.mxu0 0.0
      %1242 = vmatpush2.msra.mxu0 0.0
      %1243 = vmatprep.mubr.f32.mxu0 0.0
      %v1244 = vand.u32 %v375, 4294901760
      %1245 = vmatmul.mubr.f32.gmra.mxu0 %v1244
      %v1246 = vpop.f32.mrf.mxu0
      %v1247 = vadd.f32 %v1131, %v1246
      %v1248 = vpop.f32.mrf.mxu0
      %1249 = vdwg.mxu0
      %1250 = vmatprep.subr.mxu0 0.0
      %1251 = vmatpush1.msra.mxu0 0.0
      %1252 = vmatprep.subr.mxu0 0.0
      %1253 = vmatpush1.msra.mxu0 0.0
      %1254 = vmatprep.subr.mxu0 0.0
      %1255 = vmatpush1.msra.mxu0 0.0
      %1256 = vmatprep.subr.mxu0 0.0
      %1257 = vmatpush1.msra.mxu0 0.0
      %1258 = vmatprep.subr.mxu0 0.0
      %1259 = vmatpush1.msra.mxu0 0.0
      %1260 = vmatprep.subr.mxu0 0.0
      %1261 = vmatpush1.msra.mxu0 0.0
      %1262 = vmatprep.subr.mxu0 0.0
      %1263 = vmatpush1.msra.mxu0 0.0
      %1264 = vmatprep.subr.mxu0 0.0
      %v1265 = vand.u32 %v372, 4294901760
      %v1266 = vsub.f32 %v372, %v1265
      %1267 = vmatpush1.msra.mxu0 %v1266
      %1268 = vmatprep.subr.mxu0 0.0
      %v1269 = vand.u32 %v369, 4294901760
      %v1270 = vsub.f32 %v369, %v1269
      %1271 = vmatpush1.msra.mxu0 %v1270
      %1272 = vmatprep.subr.mxu0 0.0
      %v1273 = vand.u32 %v366, 4294901760
      %v1274 = vsub.f32 %v366, %v1273
      %1275 = vmatpush1.msra.mxu0 %v1274
      %1276 = vmatprep.subr.mxu0 0.0
      %v1277 = vand.u32 %v363, 4294901760
      %v1278 = vsub.f32 %v363, %v1277
      %1279 = vmatpush1.msra.mxu0 %v1278
      %1280 = vmatprep.subr.mxu0 0.0
      %v1281 = vand.u32 %v360, 4294901760
      %v1282 = vsub.f32 %v360, %v1281
      %1283 = vmatpush1.msra.mxu0 %v1282
      %1284 = vmatprep.subr.mxu0 0.0
      %v1285 = vand.u32 %v357, 4294901760
      %v1286 = vsub.f32 %v357, %v1285
      %1287 = vmatpush1.msra.mxu0 %v1286
      %1288 = vmatprep.subr.mxu0 0.0
      %v1289 = vand.u32 %v354, 4294901760
      %v1290 = vsub.f32 %v354, %v1289
      %1291 = vmatpush1.msra.mxu0 %v1290
      %1292 = vmatprep.subr.mxu0 0.0
      %v1293 = vand.u32 %v351, 4294901760
      %v1294 = vsub.f32 %v351, %v1293
      %1295 = vmatpush1.msra.mxu0 %v1294
      %1296 = vmatprep.subr.mxu0 0.0
      %v1297 = vand.u32 %v348, 4294901760
      %v1298 = vsub.f32 %v348, %v1297
      %1299 = vmatpush1.msra.mxu0 %v1298
      %1300 = vmatprep.subr.mxu0 0.0
      %1301 = vmatpush2.msra.mxu0 0.0
      %1302 = vmatprep.subr.mxu0 0.0
      %1303 = vmatpush2.msra.mxu0 0.0
      %1304 = vmatprep.subr.mxu0 0.0
      %1305 = vmatpush2.msra.mxu0 0.0
      %1306 = vmatprep.subr.mxu0 0.0
      %1307 = vmatpush2.msra.mxu0 0.0
      %1308 = vmatprep.subr.mxu0 0.0
      %1309 = vmatpush2.msra.mxu0 0.0
      %1310 = vmatprep.subr.mxu0 0.0
      %1311 = vmatpush2.msra.mxu0 0.0
      %1312 = vmatprep.subr.mxu0 0.0
      %1313 = vmatpush2.msra.mxu0 0.0
      %1314 = vmatprep.subr.mxu0 0.0
      %1315 = vmatpush2.msra.mxu0 0.0
      %1316 = vmatprep.subr.mxu0 0.0
      %1317 = vmatpush2.msra.mxu0 0.0
      %1318 = vmatprep.subr.mxu0 0.0
      %1319 = vmatpush2.msra.mxu0 0.0
      %1320 = vmatprep.subr.mxu0 0.0
      %1321 = vmatpush2.msra.mxu0 0.0
      %1322 = vmatprep.subr.mxu0 0.0
      %1323 = vmatpush2.msra.mxu0 0.0
      %1324 = vmatprep.subr.mxu0 0.0
      %1325 = vmatpush2.msra.mxu0 0.0
      %1326 = vmatprep.subr.mxu0 0.0
      %1327 = vmatpush2.msra.mxu0 0.0
      %1328 = vmatprep.subr.mxu0 0.0
      %1329 = vmatpush2.msra.mxu0 0.0
      %1330 = vmatprep.subr.mxu0 0.0
      %1331 = vmatpush2.msra.mxu0 0.0
      %1332 = vmatprep.mubr.f32.mxu0 0.0
      %v1333 = vand.u32 %v375, 4294901760
      %v1334 = vsub.f32 %v375, %v1333
      %1335 = vmatmul.mubr.f32.gmra.mxu0 %v1334
      %v1336 = vpop.f32.mrf.mxu0
      %v1337 = vadd.f32 %v1247, %v1336
      %v1338 = vpop.f32.mrf.mxu0
      %1339 = vdwg.mxu0
      %1340 = vmatprep.subr.mxu0 0.0
      %1341 = vmatpush1.msra.mxu0 0.0
      %1342 = vmatprep.subr.mxu0 0.0
      %1343 = vmatpush1.msra.mxu0 0.0
      %1344 = vmatprep.subr.mxu0 0.0
      %1345 = vmatpush1.msra.mxu0 0.0
      %1346 = vmatprep.subr.mxu0 0.0
      %1347 = vmatpush1.msra.mxu0 0.0
      %1348 = vmatprep.subr.mxu0 0.0
      %1349 = vmatpush1.msra.mxu0 0.0
      %1350 = vmatprep.subr.mxu0 0.0
      %1351 = vmatpush1.msra.mxu0 0.0
      %1352 = vmatprep.subr.mxu0 0.0
      %1353 = vmatpush1.msra.mxu0 0.0
      %1354 = vmatprep.subr.mxu0 0.0
      %v1355 = vand.u32 %v372, 4294901760
      %1356 = vmatpush1.msra.mxu0 %v1355
      %1357 = vmatprep.subr.mxu0 0.0
      %v1358 = vand.u32 %v369, 4294901760
      %1359 = vmatpush1.msra.mxu0 %v1358
      %1360 = vmatprep.subr.mxu0 0.0
      %v1361 = vand.u32 %v366, 4294901760
      %1362 = vmatpush1.msra.mxu0 %v1361
      %1363 = vmatprep.subr.mxu0 0.0
      %v1364 = vand.u32 %v363, 4294901760
      %1365 = vmatpush1.msra.mxu0 %v1364
      %1366 = vmatprep.subr.mxu0 0.0
      %v1367 = vand.u32 %v360, 4294901760
      %1368 = vmatpush1.msra.mxu0 %v1367
      %1369 = vmatprep.subr.mxu0 0.0
      %v1370 = vand.u32 %v357, 4294901760
      %1371 = vmatpush1.msra.mxu0 %v1370
      %1372 = vmatprep.subr.mxu0 0.0
      %v1373 = vand.u32 %v354, 4294901760
      %1374 = vmatpush1.msra.mxu0 %v1373
      %1375 = vmatprep.subr.mxu0 0.0
      %v1376 = vand.u32 %v351, 4294901760
      %1377 = vmatpush1.msra.mxu0 %v1376
      %1378 = vmatprep.subr.mxu0 0.0
      %v1379 = vand.u32 %v348, 4294901760
      %1380 = vmatpush1.msra.mxu0 %v1379
      %1381 = vmatprep.subr.mxu0 0.0
      %1382 = vmatpush2.msra.mxu0 0.0
      %1383 = vmatprep.subr.mxu0 0.0
      %1384 = vmatpush2.msra.mxu0 0.0
      %1385 = vmatprep.subr.mxu0 0.0
      %1386 = vmatpush2.msra.mxu0 0.0
      %1387 = vmatprep.subr.mxu0 0.0
      %1388 = vmatpush2.msra.mxu0 0.0
      %1389 = vmatprep.subr.mxu0 0.0
      %1390 = vmatpush2.msra.mxu0 0.0
      %1391 = vmatprep.subr.mxu0 0.0
      %1392 = vmatpush2.msra.mxu0 0.0
      %1393 = vmatprep.subr.mxu0 0.0
      %1394 = vmatpush2.msra.mxu0 0.0
      %1395 = vmatprep.subr.mxu0 0.0
      %1396 = vmatpush2.msra.mxu0 0.0
      %1397 = vmatprep.subr.mxu0 0.0
      %1398 = vmatpush2.msra.mxu0 0.0
      %1399 = vmatprep.subr.mxu0 0.0
      %1400 = vmatpush2.msra.mxu0 0.0
      %1401 = vmatprep.subr.mxu0 0.0
      %1402 = vmatpush2.msra.mxu0 0.0
      %1403 = vmatprep.subr.mxu0 0.0
      %1404 = vmatpush2.msra.mxu0 0.0
      %1405 = vmatprep.subr.mxu0 0.0
      %1406 = vmatpush2.msra.mxu0 0.0
      %1407 = vmatprep.subr.mxu0 0.0
      %1408 = vmatpush2.msra.mxu0 0.0
      %1409 = vmatprep.subr.mxu0 0.0
      %1410 = vmatpush2.msra.mxu0 0.0
      %1411 = vmatprep.subr.mxu0 0.0
      %1412 = vmatpush2.msra.mxu0 0.0
      %1413 = vmatprep.mubr.f32.mxu0 0.0
      %v1414 = vand.u32 %v375, 4294901760
      %v1415 = vsub.f32 %v375, %v1414
      %v1416 = vand.u32 %v1415, 4294901760
      %1417 = vmatmul.mubr.f32.gmra.mxu0 %v1416
      %v1418 = vpop.f32.mrf.mxu0
      %v1419 = vadd.f32 %v1337, %v1418
      %v1420 = vpop.f32.mrf.mxu0
      %1421 = vdwg.mxu0
      %1422 = vmatprep.subr.mxu0 0.0
      %1423 = vmatpush1.msra.mxu0 0.0
      %1424 = vmatprep.subr.mxu0 0.0
      %1425 = vmatpush1.msra.mxu0 0.0
      %1426 = vmatprep.subr.mxu0 0.0
      %1427 = vmatpush1.msra.mxu0 0.0
      %1428 = vmatprep.subr.mxu0 0.0
      %1429 = vmatpush1.msra.mxu0 0.0
      %1430 = vmatprep.subr.mxu0 0.0
      %1431 = vmatpush1.msra.mxu0 0.0
      %1432 = vmatprep.subr.mxu0 0.0
      %1433 = vmatpush1.msra.mxu0 0.0
      %1434 = vmatprep.subr.mxu0 0.0
      %1435 = vmatpush1.msra.mxu0 0.0
      %1436 = vmatprep.subr.mxu0 0.0
      %v1437 = vand.u32 %v372, 4294901760
      %v1438 = vsub.f32 %v372, %v1437
      %v1439 = vand.u32 %v1438, 4294901760
      %1440 = vmatpush1.msra.mxu0 %v1439
      %1441 = vmatprep.subr.mxu0 0.0
      %v1442 = vand.u32 %v369, 4294901760
      %v1443 = vsub.f32 %v369, %v1442
      %v1444 = vand.u32 %v1443, 4294901760
      %1445 = vmatpush1.msra.mxu0 %v1444
      %1446 = vmatprep.subr.mxu0 0.0
      %v1447 = vand.u32 %v366, 4294901760
      %v1448 = vsub.f32 %v366, %v1447
      %v1449 = vand.u32 %v1448, 4294901760
      %1450 = vmatpush1.msra.mxu0 %v1449
      %1451 = vmatprep.subr.mxu0 0.0
      %v1452 = vand.u32 %v363, 4294901760
      %v1453 = vsub.f32 %v363, %v1452
      %v1454 = vand.u32 %v1453, 4294901760
      %1455 = vmatpush1.msra.mxu0 %v1454
      %1456 = vmatprep.subr.mxu0 0.0
      %v1457 = vand.u32 %v360, 4294901760
      %v1458 = vsub.f32 %v360, %v1457
      %v1459 = vand.u32 %v1458, 4294901760
      %1460 = vmatpush1.msra.mxu0 %v1459
      %1461 = vmatprep.subr.mxu0 0.0
      %v1462 = vand.u32 %v357, 4294901760
      %v1463 = vsub.f32 %v357, %v1462
      %v1464 = vand.u32 %v1463, 4294901760
      %1465 = vmatpush1.msra.mxu0 %v1464
      %1466 = vmatprep.subr.mxu0 0.0
      %v1467 = vand.u32 %v354, 4294901760
      %v1468 = vsub.f32 %v354, %v1467
      %v1469 = vand.u32 %v1468, 4294901760
      %1470 = vmatpush1.msra.mxu0 %v1469
      %1471 = vmatprep.subr.mxu0 0.0
      %v1472 = vand.u32 %v351, 4294901760
      %v1473 = vsub.f32 %v351, %v1472
      %v1474 = vand.u32 %v1473, 4294901760
      %1475 = vmatpush1.msra.mxu0 %v1474
      %1476 = vmatprep.subr.mxu0 0.0
      %v1477 = vand.u32 %v348, 4294901760
      %v1478 = vsub.f32 %v348, %v1477
      %v1479 = vand.u32 %v1478, 4294901760
      %1480 = vmatpush1.msra.mxu0 %v1479
      %1481 = vmatprep.subr.mxu0 0.0
      %1482 = vmatpush2.msra.mxu0 0.0
      %1483 = vmatprep.subr.mxu0 0.0
      %1484 = vmatpush2.msra.mxu0 0.0
      %1485 = vmatprep.subr.mxu0 0.0
      %1486 = vmatpush2.msra.mxu0 0.0
      %1487 = vmatprep.subr.mxu0 0.0
      %1488 = vmatpush2.msra.mxu0 0.0
      %1489 = vmatprep.subr.mxu0 0.0
      %1490 = vmatpush2.msra.mxu0 0.0
      %1491 = vmatprep.subr.mxu0 0.0
      %1492 = vmatpush2.msra.mxu0 0.0
      %1493 = vmatprep.subr.mxu0 0.0
      %1494 = vmatpush2.msra.mxu0 0.0
      %1495 = vmatprep.subr.mxu0 0.0
      %1496 = vmatpush2.msra.mxu0 0.0
      %1497 = vmatprep.subr.mxu0 0.0
      %1498 = vmatpush2.msra.mxu0 0.0
      %1499 = vmatprep.subr.mxu0 0.0
      %1500 = vmatpush2.msra.mxu0 0.0
      %1501 = vmatprep.subr.mxu0 0.0
      %1502 = vmatpush2.msra.mxu0 0.0
      %1503 = vmatprep.subr.mxu0 0.0
      %1504 = vmatpush2.msra.mxu0 0.0
      %1505 = vmatprep.subr.mxu0 0.0
      %1506 = vmatpush2.msra.mxu0 0.0
      %1507 = vmatprep.subr.mxu0 0.0
      %1508 = vmatpush2.msra.mxu0 0.0
      %1509 = vmatprep.subr.mxu0 0.0
      %1510 = vmatpush2.msra.mxu0 0.0
      %1511 = vmatprep.subr.mxu0 0.0
      %1512 = vmatpush2.msra.mxu0 0.0
      %1513 = vmatprep.mubr.f32.mxu0 0.0
      %v1514 = vand.u32 %v375, 4294901760
      %1515 = vmatmul.mubr.f32.gmra.mxu0 %v1514
      %v1516 = vpop.f32.mrf.mxu0
      %v1517 = vadd.f32 %v1419, %v1516
      %v1518 = vpop.f32.mrf.mxu0
      %1519 = vdwg.mxu0
      %1520 = vmatprep.subr.mxu0 0.0
      %1521 = vmatpush1.msra.mxu0 0.0
      %1522 = vmatprep.subr.mxu0 0.0
      %1523 = vmatpush1.msra.mxu0 0.0
      %1524 = vmatprep.subr.mxu0 0.0
      %1525 = vmatpush1.msra.mxu0 0.0
      %1526 = vmatprep.subr.mxu0 0.0
      %1527 = vmatpush1.msra.mxu0 0.0
      %1528 = vmatprep.subr.mxu0 0.0
      %1529 = vmatpush1.msra.mxu0 0.0
      %1530 = vmatprep.subr.mxu0 0.0
      %1531 = vmatpush1.msra.mxu0 0.0
      %1532 = vmatprep.subr.mxu0 0.0
      %1533 = vmatpush1.msra.mxu0 0.0
      %1534 = vmatprep.subr.mxu0 0.0
      %v1535 = vand.u32 %v372, 4294901760
      %1536 = vmatpush1.msra.mxu0 %v1535
      %1537 = vmatprep.subr.mxu0 0.0
      %v1538 = vand.u32 %v369, 4294901760
      %1539 = vmatpush1.msra.mxu0 %v1538
      %1540 = vmatprep.subr.mxu0 0.0
      %v1541 = vand.u32 %v366, 4294901760
      %1542 = vmatpush1.msra.mxu0 %v1541
      %1543 = vmatprep.subr.mxu0 0.0
      %v1544 = vand.u32 %v363, 4294901760
      %1545 = vmatpush1.msra.mxu0 %v1544
      %1546 = vmatprep.subr.mxu0 0.0
      %v1547 = vand.u32 %v360, 4294901760
      %1548 = vmatpush1.msra.mxu0 %v1547
      %1549 = vmatprep.subr.mxu0 0.0
      %v1550 = vand.u32 %v357, 4294901760
      %1551 = vmatpush1.msra.mxu0 %v1550
      %1552 = vmatprep.subr.mxu0 0.0
      %v1553 = vand.u32 %v354, 4294901760
      %1554 = vmatpush1.msra.mxu0 %v1553
      %1555 = vmatprep.subr.mxu0 0.0
      %v1556 = vand.u32 %v351, 4294901760
      %1557 = vmatpush1.msra.mxu0 %v1556
      %1558 = vmatprep.subr.mxu0 0.0
      %v1559 = vand.u32 %v348, 4294901760
      %1560 = vmatpush1.msra.mxu0 %v1559
      %1561 = vmatprep.subr.mxu0 0.0
      %1562 = vmatpush2.msra.mxu0 0.0
      %1563 = vmatprep.subr.mxu0 0.0
      %1564 = vmatpush2.msra.mxu0 0.0
      %1565 = vmatprep.subr.mxu0 0.0
      %1566 = vmatpush2.msra.mxu0 0.0
      %1567 = vmatprep.subr.mxu0 0.0
      %1568 = vmatpush2.msra.mxu0 0.0
      %1569 = vmatprep.subr.mxu0 0.0
      %1570 = vmatpush2.msra.mxu0 0.0
      %1571 = vmatprep.subr.mxu0 0.0
      %1572 = vmatpush2.msra.mxu0 0.0
      %1573 = vmatprep.subr.mxu0 0.0
      %1574 = vmatpush2.msra.mxu0 0.0
      %1575 = vmatprep.subr.mxu0 0.0
      %1576 = vmatpush2.msra.mxu0 0.0
      %1577 = vmatprep.subr.mxu0 0.0
      %1578 = vmatpush2.msra.mxu0 0.0
      %1579 = vmatprep.subr.mxu0 0.0
      %1580 = vmatpush2.msra.mxu0 0.0
      %1581 = vmatprep.subr.mxu0 0.0
      %1582 = vmatpush2.msra.mxu0 0.0
      %1583 = vmatprep.subr.mxu0 0.0
      %1584 = vmatpush2.msra.mxu0 0.0
      %1585 = vmatprep.subr.mxu0 0.0
      %1586 = vmatpush2.msra.mxu0 0.0
      %1587 = vmatprep.subr.mxu0 0.0
      %1588 = vmatpush2.msra.mxu0 0.0
      %1589 = vmatprep.subr.mxu0 0.0
      %1590 = vmatpush2.msra.mxu0 0.0
      %1591 = vmatprep.subr.mxu0 0.0
      %1592 = vmatpush2.msra.mxu0 0.0
      %1593 = vmatprep.mubr.f32.mxu0 0.0
      %v1594 = vand.u32 %v375, 4294901760
      %1595 = vmatmul.mubr.f32.gmra.mxu0 %v1594
      %v1596 = vpop.f32.mrf.mxu0
      %v1597 = vadd.f32 %v1517, %v1596
      %v1598 = vpop.f32.mrf.mxu0
      %1599 = vdwg.mxu0
      %v1600 = vsel %vm231, 1, 0
      %v1601 = vlaneseq
      %v1602 = vshrl.u32 %v1601, 7
      %v1603 = vsub.s32 0, %v1602
      %v1604 = vrot.slane %v1600, %v1603
      %v1605 = vlaneseq
      %v1606 = vshrl.u32 %v1605, 7
      %v1607 = vsub.s32 2, %v1606
      %v1608 = vrot.slane %v1600, %v1607
      %v1609 = vlaneseq
      %v1610 = vshrl.u32 %v1609, 7
      %v1611 = vsub.s32 4, %v1610
      %v1612 = vrot.slane %v1600, %v1611
      %v1613 = vlaneseq
      %v1614 = vshrl.u32 %v1613, 7
      %v1615 = vsub.s32 0, %v1614
      %v1616 = vrot.slane %v1604, %v1615
      %v1617 = vlaneseq
      %v1618 = vshrl.u32 %v1617, 7
      %v1619 = vsub.s32 0, %v1618
      %v1620 = vrot.slane %v1608, %v1619
      %v1621 = vlaneseq
      %v1622 = vshrl.u32 %v1621, 7
      %v1623 = vsub.s32 0, %v1622
      %v1624 = vrot.slane %v1612, %v1623
      %vm1625 = vcmp.eq.s32.totalorder %v1616, 1
      %vm1626 = vcmp.eq.s32.totalorder %v1620, 1
      %vm1627 = vcmp.eq.s32.totalorder %v1624, 1
      %v1628 = vsel %vm1625, %v1046, 0.0
      %v1629 = vsel %vm1626, %v1048, 0.0
      %v1630 = vsel %vm1627, %v1597, 0.0
      %v1631 = vadd.f32 %v1628, %v1629
      %v1632 = vadd.f32 %v1631, %v1630
      %1633 = vadd.xlane.f32.xlu0 %v1632
      %v1634 = vpop.xlane.xlu0 %1633
      %v1635 = vmul.f32 %v1634, 0.00390625
      %v1636 = vmul.f32 %v1628, %v1628
      %v1637 = vmul.f32 %v1629, %v1629
      %v1638 = vmul.f32 %v1630, %v1630
      %v1639 = vadd.f32 %v1636, %v1637
      %v1640 = vadd.f32 %v1639, %v1638
      %1641 = vadd.xlane.f32.xlu0 %v1640
      %v1642 = vpop.xlane.xlu0 %1641
      %v1643 = vmul.f32 %v1642, 0.00390625
      %v1644 = vmul.f32 %v1635, %v1635
      %v1645 = vsub.f32 %v1643, %v1644
      %v1646 = vsub.f32 %v1046, %v1635
      %v1647 = vsub.f32 %v1048, %v1635
      %v1648 = vsub.f32 %v1597, %v1635
      %v1649 = vadd.f32 %v1645, 1e-05
      %v1650 = vrsqrt.pop %v1649
      %v1651 = vmul.f32 %v1646, %v1650
      %v1652 = vmul.f32 %v1647, %v1650
      %v1653 = vmul.f32 %v1648, %v1650
      %v1654 = vmul.f32 %v1651, 0.5
      %v1655 = vmul.f32 %v1652, 0.5
      %v1656 = vmul.f32 %v1653, 0.5
      %v1657 = vmul.f32 %v1651, 0.70710677
      %v1658 = vmul.f32 %v1652, 0.70710677
      %v1659 = vmul.f32 %v1653, 0.70710677
      %v1660 = vand.u32 2147483647, %v1657
      %v1661 = vand.u32 2147483647, %v1658
      %v1662 = vand.u32 2147483647, %v1659
      %v1663 = vmul.f32 %v1660, 0.3275911
      %v1664 = vmul.f32 %v1661, 0.3275911
      %v1665 = vmul.f32 %v1662, 0.3275911
      %v1666 = vadd.f32 %v1663, 1.0
      %v1667 = vadd.f32 %v1664, 1.0
      %v1668 = vadd.f32 %v1665, 1.0
      %v1669 = vrcp.pop %v1666
      %v1670 = vmul.f32 1.0, %v1669
      %v1671 = vrcp.pop %v1667
      %v1672 = vmul.f32 1.0, %v1671
      %v1673 = vrcp.pop %v1668
      %v1674 = vmul.f32 1.0, %v1673
      %v1675 = vmul.f32 %v1670, 1.0614054
      %v1676 = vmul.f32 %v1672, 1.0614054
      %v1677 = vmul.f32 %v1674, 1.0614054
      %v1678 = vadd.f32 %v1675, -1.4531521
      %v1679 = vadd.f32 %v1676, -1.4531521
      %v1680 = vadd.f32 %v1677, -1.4531521
      %v1681 = vmul.f32 %v1670, %v1678
      %v1682 = vmul.f32 %v1672, %v1679
      %v1683 = vmul.f32 %v1674, %v1680
      %v1684 = vadd.f32 %v1681, 1.4214138
      %v1685 = vadd.f32 %v1682, 1.4214138
      %v1686 = vadd.f32 %v1683, 1.4214138
      %v1687 = vmul.f32 %v1670, %v1684
      %v1688 = vmul.f32 %v1672, %v1685
      %v1689 = vmul.f32 %v1674, %v1686
      %v1690 = vadd.f32 %v1687, -0.28449672
      %v1691 = vadd.f32 %v1688, -0.28449672
      %v1692 = vadd.f32 %v1689, -0.28449672
      %v1693 = vmul.f32 %v1670, %v1690
      %v1694 = vmul.f32 %v1672, %v1691
      %v1695 = vmul.f32 %v1674, %v1692
      %v1696 = vadd.f32 %v1693, 0.2548296
      %v1697 = vadd.f32 %v1694, 0.2548296
      %v1698 = vadd.f32 %v1695, 0.2548296
      %v1699 = vmul.f32 %v1670, %v1696
      %v1700 = vmul.f32 %v1672, %v1697
      %v1701 = vmul.f32 %v1674, %v1698
      %v1702 = vsub.f32 0.0, %v1660
      %v1703 = vsub.f32 0.0, %v1661
      %v1704 = vsub.f32 0.0, %v1662
      %v1705 = vmul.f32 %v1702, %v1660
      %v1706 = vmul.f32 %v1703, %v1661
      %v1707 = vmul.f32 %v1704, %v1662
      %v1708 = vmul.f32 %v1705, 1.442695
      %v1709 = vpow.pop %v1708
      %v1710 = vmul.f32 %v1706, 1.442695
      %v1711 = vpow.pop %v1710
      %v1712 = vmul.f32 %v1707, 1.442695
      %v1713 = vpow.pop %v1712
      %v1714 = vmul.f32 %v1699, %v1709
      %v1715 = vmul.f32 %v1700, %v1711
      %v1716 = vmul.f32 %v1701, %v1713
      %v1717 = vsub.f32 1.0, %v1714
      %v1718 = vsub.f32 1.0, %v1715
      %v1719 = vsub.f32 1.0, %v1716
      %vm1720 = vcmp.ge.f32.partialorder %v1657, 0.0
      %vm1721 = vcmp.ge.f32.partialorder %v1658, 0.0
      %vm1722 = vcmp.ge.f32.partialorder %v1659, 0.0
      %v1723 = vsub.f32 0.0, %v1717
      %v1724 = vsub.f32 0.0, %v1718
      %v1725 = vsub.f32 0.0, %v1719
      %v1726 = vsel %vm1720, %v1717, %v1723
      %v1727 = vsel %vm1721, %v1718, %v1724
      %v1728 = vsel %vm1722, %v1719, %v1725
      %v1729 = vadd.f32 %v1726, 1.0
      %v1730 = vadd.f32 %v1727, 1.0
      %v1731 = vadd.f32 %v1728, 1.0
      %v1732 = vmul.f32 %v1654, %v1729
      %v1733 = vmul.f32 %v1655, %v1730
      %v1734 = vmul.f32 %v1656, %v1731
      %1735 = vrot.lane.b32.xlu0 %v1732, 1
      %v1736 = vpop.permute.xlu0 %1735
      %1737 = vrot.lane.b32.xlu0 %v1733, 1
      %v1738 = vpop.permute.xlu0 %1737
      %1739 = vrot.lane.b32.xlu0 %v1734, 1
      %v1740 = vpop.permute.xlu0 %1739
      %vm1741 = vcmp.lt.s32.totalorder %v247, 1
      %v1742 = vsel %vm1741, %v1738, %v1740
      %v1743 = vsel %vm1741, %v1736, %v1738
      %v1744 = vsel %vm1741, %v1740, %v1736
      %1745 = vrot.lane.b32.xlu0 %v1732, 2
      %v1746 = vpop.permute.xlu0 %1745
      %1747 = vrot.lane.b32.xlu0 %v1733, 2
      %v1748 = vpop.permute.xlu0 %1747
      %1749 = vrot.lane.b32.xlu0 %v1734, 2
      %v1750 = vpop.permute.xlu0 %1749
      %vm1751 = vcmp.lt.s32.totalorder %v247, 2
      %v1752 = vsel %vm1751, %v1748, %v1750
      %v1753 = vsel %vm1751, %v1746, %v1748
      %v1754 = vsel %vm1751, %v1750, %v1746
      %vm1755 = vcmp.eq.s32.totalorder %v225, 0
      %vm1756 = vcmp.eq.s32.totalorder %v225, 17
      %v1757 = vsel %vm1756, 1, 0
      %v1758 = vlaneseq
      %v1759 = vshrl.u32 %v1758, 7
      %v1760 = vsub.s32 1, %v1759
      %v1761 = vrot.slane %v1757, %v1760
      %v1762 = vlaneseq
      %v1763 = vshrl.u32 %v1762, 7
      %v1764 = vsub.s32 3, %v1763
      %v1765 = vrot.slane %v1757, %v1764
      %v1766 = vlaneseq
      %v1767 = vshrl.u32 %v1766, 7
      %v1768 = vsub.s32 5, %v1767
      %v1769 = vrot.slane %v1757, %v1768
      %v1770 = vlaneseq
      %v1771 = vshrl.u32 %v1770, 7
      %v1772 = vsub.s32 1, %v1771
      %v1773 = vrot.slane %v1761, %v1772
      %v1774 = vlaneseq
      %v1775 = vshrl.u32 %v1774, 7
      %v1776 = vsub.s32 1, %v1775
      %v1777 = vrot.slane %v1765, %v1776
      %v1778 = vlaneseq
      %v1779 = vshrl.u32 %v1778, 7
      %v1780 = vsub.s32 1, %v1779
      %v1781 = vrot.slane %v1769, %v1780
      %vm1782 = vcmp.eq.s32.totalorder %v1773, 1
      %vm1783 = vcmp.eq.s32.totalorder %v1777, 1
      %vm1784 = vcmp.eq.s32.totalorder %v1781, 1
      %v1785 = vsel %vm1782, %v1754, %v1744
      %v1786 = vsel %vm1783, %v1753, %v1743
      %v1787 = vsel %vm1784, %v1752, %v1742
      %v1788 = vsel %vm1755, 1, 0
      %v1789 = vlaneseq
      %v1790 = vshrl.u32 %v1789, 7
      %v1791 = vsub.s32 1, %v1790
      %v1792 = vrot.slane %v1788, %v1791
      %v1793 = vlaneseq
      %v1794 = vshrl.u32 %v1793, 7
      %v1795 = vsub.s32 3, %v1794
      %v1796 = vrot.slane %v1788, %v1795
      %v1797 = vlaneseq
      %v1798 = vshrl.u32 %v1797, 7
      %v1799 = vsub.s32 5, %v1798
      %v1800 = vrot.slane %v1788, %v1799
      %v1801 = vlaneseq
      %v1802 = vshrl.u32 %v1801, 7
      %v1803 = vsub.s32 1, %v1802
      %v1804 = vrot.slane %v1792, %v1803
      %v1805 = vlaneseq
      %v1806 = vshrl.u32 %v1805, 7
      %v1807 = vsub.s32 1, %v1806
      %v1808 = vrot.slane %v1796, %v1807
      %v1809 = vlaneseq
      %v1810 = vshrl.u32 %v1809, 7
      %v1811 = vsub.s32 1, %v1810
      %v1812 = vrot.slane %v1800, %v1811
      %vm1813 = vcmp.eq.s32.totalorder %v1804, 1
      %vm1814 = vcmp.eq.s32.totalorder %v1808, 1
      %vm1815 = vcmp.eq.s32.totalorder %v1812, 1
      %v1816 = vsel %vm1813, %v1732, %v1785
      %v1817 = vsel %vm1814, %v1733, %v1786
      %v1818 = vsel %vm1815, %v1734, %v1787
      %1819 = vrot.lane.b32.xlu0 %v1816, 18
      %v1820 = vpop.permute.xlu0 %1819
      %1821 = vrot.lane.b32.xlu0 %v1817, 18
      %v1822 = vpop.permute.xlu0 %1821
      %1823 = vrot.lane.b32.xlu0 %v1818, 18
      %v1824 = vpop.permute.xlu0 %1823
      %vm1825 = vcmp.lt.s32.totalorder %v247, 18
      %v1826 = vsel %vm1825, %v1822, %v1824
      %v1827 = vsel %vm1825, %v1820, %v1822
      %v1828 = vsel %vm1825, %v1824, %v1820
      %1829 = vrot.lane.b32.xlu0 %v1816, 36
      %v1830 = vpop.permute.xlu0 %1829
      %1831 = vrot.lane.b32.xlu0 %v1817, 36
      %v1832 = vpop.permute.xlu0 %1831
      %1833 = vrot.lane.b32.xlu0 %v1818, 36
      %v1834 = vpop.permute.xlu0 %1833
      %vm1835 = vcmp.lt.s32.totalorder %v247, 36
      %v1836 = vsel %vm1835, %v1832, %v1834
      %v1837 = vsel %vm1835, %v1830, %v1832
      %v1838 = vsel %vm1835, %v1834, %v1830
      %v1839 = vlaneseq
      %v1840 = vshrl.u32 %v1839, 7
      %v1841 = vsub.s32 0, %v1840
      %v1842 = vrot.slane %v1757, %v1841
      %v1843 = vlaneseq
      %v1844 = vshrl.u32 %v1843, 7
      %v1845 = vsub.s32 2, %v1844
      %v1846 = vrot.slane %v1757, %v1845
      %v1847 = vlaneseq
      %v1848 = vshrl.u32 %v1847, 7
      %v1849 = vsub.s32 4, %v1848
      %v1850 = vrot.slane %v1757, %v1849
      %v1851 = vlaneseq
      %v1852 = vshrl.u32 %v1851, 7
      %v1853 = vsub.s32 0, %v1852
      %v1854 = vrot.slane %v1842, %v1853
      %v1855 = vlaneseq
      %v1856 = vshrl.u32 %v1855, 7
      %v1857 = vsub.s32 0, %v1856
      %v1858 = vrot.slane %v1846, %v1857
      %v1859 = vlaneseq
      %v1860 = vshrl.u32 %v1859, 7
      %v1861 = vsub.s32 0, %v1860
      %v1862 = vrot.slane %v1850, %v1861
      %vm1863 = vcmp.eq.s32.totalorder %v1854, 1
      %vm1864 = vcmp.eq.s32.totalorder %v1858, 1
      %vm1865 = vcmp.eq.s32.totalorder %v1862, 1
      %v1866 = vsel %vm1863, %v1838, %v1828
      %v1867 = vsel %vm1864, %v1837, %v1827
      %v1868 = vsel %vm1865, %v1836, %v1826
      %v1869 = vlaneseq
      %v1870 = vshrl.u32 %v1869, 7
      %v1871 = vsub.s32 0, %v1870
      %v1872 = vrot.slane %v1788, %v1871
      %v1873 = vlaneseq
      %v1874 = vshrl.u32 %v1873, 7
      %v1875 = vsub.s32 2, %v1874
      %v1876 = vrot.slane %v1788, %v1875
      %v1877 = vlaneseq
      %v1878 = vshrl.u32 %v1877, 7
      %v1879 = vsub.s32 4, %v1878
      %v1880 = vrot.slane %v1788, %v1879
      %v1881 = vlaneseq
      %v1882 = vshrl.u32 %v1881, 7
      %v1883 = vsub.s32 0, %v1882
      %v1884 = vrot.slane %v1872, %v1883
      %v1885 = vlaneseq
      %v1886 = vshrl.u32 %v1885, 7
      %v1887 = vsub.s32 0, %v1886
      %v1888 = vrot.slane %v1876, %v1887
      %v1889 = vlaneseq
      %v1890 = vshrl.u32 %v1889, 7
      %v1891 = vsub.s32 0, %v1890
      %v1892 = vrot.slane %v1880, %v1891
      %vm1893 = vcmp.eq.s32.totalorder %v1884, 1
      %vm1894 = vcmp.eq.s32.totalorder %v1888, 1
      %vm1895 = vcmp.eq.s32.totalorder %v1892, 1
      %v1896 = vsel %vm1893, %v1816, %v1866
      %v1897 = vsel %vm1894, %v1817, %v1867
      %v1898 = vsel %vm1895, %v1818, %v1868
      %v1899 = vsel %vm232, 1, 0
      %v1900 = vlaneseq
      %v1901 = vshrl.u32 %v1900, 7
      %v1902 = vsub.s32 0, %v1901
      %v1903 = vrot.slane %v1899, %v1902
      %v1904 = vlaneseq
      %v1905 = vshrl.u32 %v1904, 7
      %v1906 = vsub.s32 2, %v1905
      %v1907 = vrot.slane %v1899, %v1906
      %v1908 = vlaneseq
      %v1909 = vshrl.u32 %v1908, 7
      %v1910 = vsub.s32 4, %v1909
      %v1911 = vrot.slane %v1899, %v1910
      %v1912 = vlaneseq
      %v1913 = vshrl.u32 %v1912, 7
      %v1914 = vsub.s32 0, %v1913
      %v1915 = vrot.slane %v1903, %v1914
      %v1916 = vlaneseq
      %v1917 = vshrl.u32 %v1916, 7
      %v1918 = vsub.s32 0, %v1917
      %v1919 = vrot.slane %v1907, %v1918
      %v1920 = vlaneseq
      %v1921 = vshrl.u32 %v1920, 7
      %v1922 = vsub.s32 0, %v1921
      %v1923 = vrot.slane %v1911, %v1922
      %vm1924 = vcmp.eq.s32.totalorder %v1915, 1
      %vm1925 = vcmp.eq.s32.totalorder %v1919, 1
      %vm1926 = vcmp.eq.s32.totalorder %v1923, 1
      %v1927 = vsel %vm1924, %v1896, 0.0
      %v1928 = vsel %vm1925, %v1897, 0.0
      %v1929 = vsel %vm1926, %v1898, 0.0
      %v1930 = vld [vmem:[%s3] sm:$0xff]
      %v1931 = vld [vmem:[%s3 + $0x8] sm:$0xff]
      %1932 = vst [vmem:[#allocation2] sm:$0xff] %v1927
      %1933 = vst [vmem:[#allocation2 + $0x8] sm:$0xff] %v1928
      %1934 = vst [vmem:[#allocation2 + $0x10] sm:$0xff] %v1929
      %1935 = vrot.lane.b32.xlu0 %v1927, 127
      %v1936 = vpop.permute.xlu0 %1935
      %1937 = vrot.lane.b32.xlu0 %v1928, 127
      %v1938 = vpop.permute.xlu0 %1937
      %1939 = vrot.lane.b32.xlu0 %v1929, 127
      %v1940 = vpop.permute.xlu0 %1939
      %v1941 = vsel %vm248, %v1938, %v1940
      %v1942 = vsel %vm248, %v1936, %v1938
      %v1943 = vsel %vm248, %v1940, %v1936
      %1944 = vst [vmem:[#allocation2 + $0x18] sm:$0xff] %v1942
      %1945 = vst [vmem:[#allocation2 + $0x20] sm:$0xff] %v1941
      %1946 = vst [vmem:[#allocation2 + $0x28] sm:$0xff] %v1943
      %1947 = vrot.lane.b32.xlu0 %v1927, 126
      %v1948 = vpop.permute.xlu0 %1947
      %1949 = vrot.lane.b32.xlu0 %v1928, 126
      %v1950 = vpop.permute.xlu0 %1949
      %1951 = vrot.lane.b32.xlu0 %v1929, 126
      %v1952 = vpop.permute.xlu0 %1951
      %v1953 = vsel %vm261, %v1950, %v1952
      %v1954 = vsel %vm261, %v1948, %v1950
      %v1955 = vsel %vm261, %v1952, %v1948
      %1956 = vst [vmem:[#allocation2 + $0x30] sm:$0xff] %v1954
      %1957 = vst [vmem:[#allocation2 + $0x38] sm:$0xff] %v1953
      %1958 = vst [vmem:[#allocation2 + $0x40] sm:$0xff] %v1955
      %1959 = vrot.lane.b32.xlu0 %v1927, 110
      %v1960 = vpop.permute.xlu0 %1959
      %1961 = vrot.lane.b32.xlu0 %v1928, 110
      %v1962 = vpop.permute.xlu0 %1961
      %1963 = vrot.lane.b32.xlu0 %v1929, 110
      %v1964 = vpop.permute.xlu0 %1963
      %v1965 = vsel %vm274, %v1962, %v1964
      %v1966 = vsel %vm274, %v1960, %v1962
      %v1967 = vsel %vm274, %v1964, %v1960
      %1968 = vst [vmem:[#allocation2 + $0x48] sm:$0xff] %v1966
      %1969 = vst [vmem:[#allocation2 + $0x50] sm:$0xff] %v1965
      %1970 = vst [vmem:[#allocation2 + $0x58] sm:$0xff] %v1967
      %1971 = vrot.lane.b32.xlu0 %v1927, 109
      %v1972 = vpop.permute.xlu0 %1971
      %1973 = vrot.lane.b32.xlu0 %v1928, 109
      %v1974 = vpop.permute.xlu0 %1973
      %1975 = vrot.lane.b32.xlu0 %v1929, 109
      %v1976 = vpop.permute.xlu0 %1975
      %v1977 = vsel %vm287, %v1974, %v1976
      %v1978 = vsel %vm287, %v1972, %v1974
      %v1979 = vsel %vm287, %v1976, %v1972
      %1980 = vst [vmem:[#allocation2 + $0x60] sm:$0xff] %v1978
      %1981 = vst [vmem:[#allocation2 + $0x68] sm:$0xff] %v1977
      %1982 = vst [vmem:[#allocation2 + $0x70] sm:$0xff] %v1979
      %1983 = vrot.lane.b32.xlu0 %v1927, 108
      %v1984 = vpop.permute.xlu0 %1983
      %1985 = vrot.lane.b32.xlu0 %v1928, 108
      %v1986 = vpop.permute.xlu0 %1985
      %1987 = vrot.lane.b32.xlu0 %v1929, 108
      %v1988 = vpop.permute.xlu0 %1987
      %v1989 = vsel %vm300, %v1986, %v1988
      %v1990 = vsel %vm300, %v1984, %v1986
      %v1991 = vsel %vm300, %v1988, %v1984
      %1992 = vst [vmem:[#allocation2 + $0x78] sm:$0xff] %v1990
      %1993 = vst [vmem:[#allocation2 + $0x80] sm:$0xff] %v1989
      %1994 = vst [vmem:[#allocation2 + $0x88] sm:$0xff] %v1991
      %1995 = vrot.lane.b32.xlu0 %v1927, 92
      %v1996 = vpop.permute.xlu0 %1995
      %1997 = vrot.lane.b32.xlu0 %v1928, 92
      %v1998 = vpop.permute.xlu0 %1997
      %1999 = vrot.lane.b32.xlu0 %v1929, 92
      %v2000 = vpop.permute.xlu0 %1999
      %v2001 = vsel %vm313, %v1998, %v2000
      %v2002 = vsel %vm313, %v1996, %v1998
      %v2003 = vsel %vm313, %v2000, %v1996
      %2004 = vst [vmem:[#allocation2 + $0x90] sm:$0xff] %v2002
      %2005 = vst [vmem:[#allocation2 + $0x98] sm:$0xff] %v2001
      %2006 = vst [vmem:[#allocation2 + $0xa0] sm:$0xff] %v2003
      %2007 = vrot.lane.b32.xlu0 %v1927, 91
      %v2008 = vpop.permute.xlu0 %2007
      %2009 = vrot.lane.b32.xlu0 %v1928, 91
      %v2010 = vpop.permute.xlu0 %2009
      %2011 = vrot.lane.b32.xlu0 %v1929, 91
      %v2012 = vpop.permute.xlu0 %2011
      %v2013 = vsel %vm326, %v2010, %v2012
      %v2014 = vsel %vm326, %v2008, %v2010
      %v2015 = vsel %vm326, %v2012, %v2008
      %2016 = vst [vmem:[#allocation2 + $0xa8] sm:$0xff] %v2014
      %2017 = vst [vmem:[#allocation2 + $0xb0] sm:$0xff] %v2013
      %2018 = vst [vmem:[#allocation2 + $0xb8] sm:$0xff] %v2015
      %2019 = vrot.lane.b32.xlu0 %v1927, 90
      %v2020 = vpop.permute.xlu0 %2019
      %2021 = vrot.lane.b32.xlu0 %v1928, 90
      %v2022 = vpop.permute.xlu0 %2021
      %2023 = vrot.lane.b32.xlu0 %v1929, 90
      %v2024 = vpop.permute.xlu0 %2023
      %v2025 = vsel %vm339, %v2022, %v2024
      %v2026 = vsel %vm339, %v2020, %v2022
      %v2027 = vsel %vm339, %v2024, %v2020
      %2028 = vst [vmem:[#allocation2 + $0xc0] sm:$0xff] %v2026
      %2029 = vst [vmem:[#allocation2 + $0xc8] sm:$0xff] %v2025
      %2030 = vst [vmem:[#allocation2 + $0xd0] sm:$0xff] %v2027
      %v2031 = vld [vmem:[#allocation2] sm:$0xff]
      %v2032 = vld [vmem:[#allocation2 + $0x8] sm:$0xff]
      %v2033 = vld [vmem:[#allocation2 + $0x10] sm:$0xff]
      %v2034 = vld [vmem:[#allocation2 + $0x18] sm:$0xff]
      %v2035 = vld [vmem:[#allocation2 + $0x20] sm:$0xff]
      %v2036 = vld [vmem:[#allocation2 + $0x28] sm:$0xff]
      %v2037 = vld [vmem:[#allocation2 + $0x30] sm:$0xff]
      %v2038 = vld [vmem:[#allocation2 + $0x38] sm:$0xff]
      %v2039 = vld [vmem:[#allocation2 + $0x40] sm:$0xff]
      %v2040 = vld [vmem:[#allocation2 + $0x48] sm:$0xff]
      %v2041 = vld [vmem:[#allocation2 + $0x50] sm:$0xff]
      %v2042 = vld [vmem:[#allocation2 + $0x58] sm:$0xff]
      %v2043 = vld [vmem:[#allocation2 + $0x60] sm:$0xff]
      %v2044 = vld [vmem:[#allocation2 + $0x68] sm:$0xff]
      %v2045 = vld [vmem:[#allocation2 + $0x70] sm:$0xff]
      %v2046 = vld [vmem:[#allocation2 + $0x78] sm:$0xff]
      %v2047 = vld [vmem:[#allocation2 + $0x80] sm:$0xff]
      %v2048 = vld [vmem:[#allocation2 + $0x88] sm:$0xff]
      %v2049 = vld [vmem:[#allocation2 + $0x90] sm:$0xff]
      %v2050 = vld [vmem:[#allocation2 + $0x98] sm:$0xff]
      %v2051 = vld [vmem:[#allocation2 + $0xa0] sm:$0xff]
      %v2052 = vld [vmem:[#allocation2 + $0xa8] sm:$0xff]
      %v2053 = vld [vmem:[#allocation2 + $0xb0] sm:$0xff]
      %v2054 = vld [vmem:[#allocation2 + $0xb8] sm:$0xff]
      %v2055 = vld [vmem:[#allocation2 + $0xc0] sm:$0xff]
      %v2056 = vld [vmem:[#allocation2 + $0xc8] sm:$0xff]
      %v2057 = vld [vmem:[#allocation2 + $0xd0] sm:$0xff]
      %v2059 = vsel %vm373, %v1930, 0
      %v2062 = vsel %vm373, %v1931, 0
      %2064 = vmatprep.subr.mxu0 0.0
      %2065 = vmatpush1.msra.mxu0 0.0
      %2066 = vmatprep.subr.mxu0 0.0
      %2067 = vmatpush1.msra.mxu0 0.0
      %2068 = vmatprep.subr.mxu0 0.0
      %2069 = vmatpush1.msra.mxu0 0.0
      %2070 = vmatprep.subr.mxu0 0.0
      %2071 = vmatpush1.msra.mxu0 0.0
      %2072 = vmatprep.subr.mxu0 0.0
      %2073 = vmatpush1.msra.mxu0 0.0
      %2074 = vmatprep.subr.mxu0 0.0
      %2075 = vmatpush1.msra.mxu0 0.0
      %2076 = vmatprep.subr.mxu0 0.0
      %2077 = vmatpush1.msra.mxu0 0.0
      %v2078 = vand.u32 %v2056, 4294901760
      %2079 = vmatprep.subr.mxu0 %v2078
      %v2080 = vand.u32 %v2055, 4294901760
      %2081 = vmatpush1.msra.mxu0 %v2080
      %v2082 = vand.u32 %v2053, 4294901760
      %2083 = vmatprep.subr.mxu0 %v2082
      %v2084 = vand.u32 %v2052, 4294901760
      %2085 = vmatpush1.msra.mxu0 %v2084
      %v2086 = vand.u32 %v2050, 4294901760
      %2087 = vmatprep.subr.mxu0 %v2086
      %v2088 = vand.u32 %v2049, 4294901760
      %2089 = vmatpush1.msra.mxu0 %v2088
      %v2090 = vand.u32 %v2047, 4294901760
      %2091 = vmatprep.subr.mxu0 %v2090
      %v2092 = vand.u32 %v2046, 4294901760
      %2093 = vmatpush1.msra.mxu0 %v2092
      %v2094 = vand.u32 %v2044, 4294901760
      %2095 = vmatprep.subr.mxu0 %v2094
      %v2096 = vand.u32 %v2043, 4294901760
      %2097 = vmatpush1.msra.mxu0 %v2096
      %v2098 = vand.u32 %v2041, 4294901760
      %2099 = vmatprep.subr.mxu0 %v2098
      %v2100 = vand.u32 %v2040, 4294901760
      %2101 = vmatpush1.msra.mxu0 %v2100
      %v2102 = vand.u32 %v2038, 4294901760
      %2103 = vmatprep.subr.mxu0 %v2102
      %v2104 = vand.u32 %v2037, 4294901760
      %2105 = vmatpush1.msra.mxu0 %v2104
      %v2106 = vand.u32 %v2035, 4294901760
      %2107 = vmatprep.subr.mxu0 %v2106
      %v2108 = vand.u32 %v2034, 4294901760
      %2109 = vmatpush1.msra.mxu0 %v2108
      %v2110 = vand.u32 %v2032, 4294901760
      %2111 = vmatprep.subr.mxu0 %v2110
      %v2112 = vand.u32 %v2031, 4294901760
      %2113 = vmatpush1.msra.mxu0 %v2112
      %2114 = vmatprep.subr.mxu0 0.0
      %2115 = vmatpush2.msra.mxu0 0.0
      %2116 = vmatprep.subr.mxu0 0.0
      %2117 = vmatpush2.msra.mxu0 0.0
      %2118 = vmatprep.subr.mxu0 0.0
      %2119 = vmatpush2.msra.mxu0 0.0
      %2120 = vmatprep.subr.mxu0 0.0
      %2121 = vmatpush2.msra.mxu0 0.0
      %2122 = vmatprep.subr.mxu0 0.0
      %2123 = vmatpush2.msra.mxu0 0.0
      %2124 = vmatprep.subr.mxu0 0.0
      %2125 = vmatpush2.msra.mxu0 0.0
      %2126 = vmatprep.subr.mxu0 0.0
      %2127 = vmatpush2.msra.mxu0 0.0
      %2128 = vmatprep.subr.mxu0 0.0
      %2129 = vmatpush2.msra.mxu0 0.0
      %2130 = vmatprep.subr.mxu0 0.0
      %2131 = vmatpush2.msra.mxu0 0.0
      %2132 = vmatprep.subr.mxu0 0.0
      %2133 = vmatpush2.msra.mxu0 0.0
      %2134 = vmatprep.subr.mxu0 0.0
      %2135 = vmatpush2.msra.mxu0 0.0
      %2136 = vmatprep.subr.mxu0 0.0
      %2137 = vmatpush2.msra.mxu0 0.0
      %2138 = vmatprep.subr.mxu0 0.0
      %2139 = vmatpush2.msra.mxu0 0.0
      %2140 = vmatprep.subr.mxu0 0.0
      %2141 = vmatpush2.msra.mxu0 0.0
      %2142 = vmatprep.subr.mxu0 0.0
      %2143 = vmatpush2.msra.mxu0 0.0
      %2144 = vmatprep.subr.mxu0 0.0
      %2145 = vmatpush2.msra.mxu0 0.0
      %2146 = vmatprep.mubr.f32.mxu0 0.0
      %v2147 = vand.u32 %v2059, 4294901760
      %v2148 = vsub.f32 %v2059, %v2147
      %v2149 = vand.u32 %v2148, 4294901760
      %v2150 = vsub.f32 %v2148, %v2149
      %v2151 = vand.u32 %v2150, 4294901760
      %2152 = vmatmul.mubr.f32.gmra.mxu0 %v2151
      %v2153 = vpop.f32.mrf.mxu0
      %v2154 = vadd.f32 0.0, %v2153
      %v2155 = vpop.f32.mrf.mxu0
      %v2156 = vadd.f32 0.0, %v2155
      %2157 = vmatprep.mubr.f32.mxu0 0.0
      %v2158 = vand.u32 %v2062, 4294901760
      %v2159 = vsub.f32 %v2062, %v2158
      %v2160 = vand.u32 %v2159, 4294901760
      %v2161 = vsub.f32 %v2159, %v2160
      %v2162 = vand.u32 %v2161, 4294901760
      %2163 = vmatmul.mubr.f32.gmra.mxu0 %v2162
      %v2164 = vpop.f32.mrf.mxu0
      %v2165 = vadd.f32 0.0, %v2164
      %v2166 = vpop.f32.mrf.mxu0
      %v2167 = vadd.f32 0.0, %v2166
      %2168 = vdwg.mxu0
      %2169 = vmatprep.subr.mxu0 0.0
      %2170 = vmatpush1.msra.mxu0 0.0
      %2171 = vmatprep.subr.mxu0 0.0
      %2172 = vmatpush1.msra.mxu0 0.0
      %2173 = vmatprep.subr.mxu0 0.0
      %2174 = vmatpush1.msra.mxu0 0.0
      %2175 = vmatprep.subr.mxu0 0.0
      %2176 = vmatpush1.msra.mxu0 0.0
      %2177 = vmatprep.subr.mxu0 0.0
      %2178 = vmatpush1.msra.mxu0 0.0
      %2179 = vmatprep.subr.mxu0 0.0
      %2180 = vmatpush1.msra.mxu0 0.0
      %2181 = vmatprep.subr.mxu0 0.0
      %2182 = vmatpush1.msra.mxu0 0.0
      %v2183 = vand.u32 %v2056, 4294901760
      %v2184 = vsub.f32 %v2056, %v2183
      %v2185 = vand.u32 %v2184, 4294901760
      %v2186 = vsub.f32 %v2184, %v2185
      %v2187 = vand.u32 %v2186, 4294901760
      %2188 = vmatprep.subr.mxu0 %v2187
      %v2189 = vand.u32 %v2055, 4294901760
      %v2190 = vsub.f32 %v2055, %v2189
      %v2191 = vand.u32 %v2190, 4294901760
      %v2192 = vsub.f32 %v2190, %v2191
      %v2193 = vand.u32 %v2192, 4294901760
      %2194 = vmatpush1.msra.mxu0 %v2193
      %v2195 = vand.u32 %v2053, 4294901760
      %v2196 = vsub.f32 %v2053, %v2195
      %v2197 = vand.u32 %v2196, 4294901760
      %v2198 = vsub.f32 %v2196, %v2197
      %v2199 = vand.u32 %v2198, 4294901760
      %2200 = vmatprep.subr.mxu0 %v2199
      %v2201 = vand.u32 %v2052, 4294901760
      %v2202 = vsub.f32 %v2052, %v2201
      %v2203 = vand.u32 %v2202, 4294901760
      %v2204 = vsub.f32 %v2202, %v2203
      %v2205 = vand.u32 %v2204, 4294901760
      %2206 = vmatpush1.msra.mxu0 %v2205
      %v2207 = vand.u32 %v2050, 4294901760
      %v2208 = vsub.f32 %v2050, %v2207
      %v2209 = vand.u32 %v2208, 4294901760
      %v2210 = vsub.f32 %v2208, %v2209
      %v2211 = vand.u32 %v2210, 4294901760
      %2212 = vmatprep.subr.mxu0 %v2211
      %v2213 = vand.u32 %v2049, 4294901760
      %v2214 = vsub.f32 %v2049, %v2213
      %v2215 = vand.u32 %v2214, 4294901760
      %v2216 = vsub.f32 %v2214, %v2215
      %v2217 = vand.u32 %v2216, 4294901760
      %2218 = vmatpush1.msra.mxu0 %v2217
      %v2219 = vand.u32 %v2047, 4294901760
      %v2220 = vsub.f32 %v2047, %v2219
      %v2221 = vand.u32 %v2220, 4294901760
      %v2222 = vsub.f32 %v2220, %v2221
      %v2223 = vand.u32 %v2222, 4294901760
      %2224 = vmatprep.subr.mxu0 %v2223
      %v2225 = vand.u32 %v2046, 4294901760
      %v2226 = vsub.f32 %v2046, %v2225
      %v2227 = vand.u32 %v2226, 4294901760
      %v2228 = vsub.f32 %v2226, %v2227
      %v2229 = vand.u32 %v2228, 4294901760
      %2230 = vmatpush1.msra.mxu0 %v2229
      %v2231 = vand.u32 %v2044, 4294901760
      %v2232 = vsub.f32 %v2044, %v2231
      %v2233 = vand.u32 %v2232, 4294901760
      %v2234 = vsub.f32 %v2232, %v2233
      %v2235 = vand.u32 %v2234, 4294901760
      %2236 = vmatprep.subr.mxu0 %v2235
      %v2237 = vand.u32 %v2043, 4294901760
      %v2238 = vsub.f32 %v2043, %v2237
      %v2239 = vand.u32 %v2238, 4294901760
      %v2240 = vsub.f32 %v2238, %v2239
      %v2241 = vand.u32 %v2240, 4294901760
      %2242 = vmatpush1.msra.mxu0 %v2241
      %v2243 = vand.u32 %v2041, 4294901760
      %v2244 = vsub.f32 %v2041, %v2243
      %v2245 = vand.u32 %v2244, 4294901760
      %v2246 = vsub.f32 %v2244, %v2245
      %v2247 = vand.u32 %v2246, 4294901760
      %2248 = vmatprep.subr.mxu0 %v2247
      %v2249 = vand.u32 %v2040, 4294901760
      %v2250 = vsub.f32 %v2040, %v2249
      %v2251 = vand.u32 %v2250, 4294901760
      %v2252 = vsub.f32 %v2250, %v2251
      %v2253 = vand.u32 %v2252, 4294901760
      %2254 = vmatpush1.msra.mxu0 %v2253
      %v2255 = vand.u32 %v2038, 4294901760
      %v2256 = vsub.f32 %v2038, %v2255
      %v2257 = vand.u32 %v2256, 4294901760
      %v2258 = vsub.f32 %v2256, %v2257
      %v2259 = vand.u32 %v2258, 4294901760
      %2260 = vmatprep.subr.mxu0 %v2259
      %v2261 = vand.u32 %v2037, 4294901760
      %v2262 = vsub.f32 %v2037, %v2261
      %v2263 = vand.u32 %v2262, 4294901760
      %v2264 = vsub.f32 %v2262, %v2263
      %v2265 = vand.u32 %v2264, 4294901760
      %2266 = vmatpush1.msra.mxu0 %v2265
      %v2267 = vand.u32 %v2035, 4294901760
      %v2268 = vsub.f32 %v2035, %v2267
      %v2269 = vand.u32 %v2268, 4294901760
      %v2270 = vsub.f32 %v2268, %v2269
      %v2271 = vand.u32 %v2270, 4294901760
      %2272 = vmatprep.subr.mxu0 %v2271
      %v2273 = vand.u32 %v2034, 4294901760
      %v2274 = vsub.f32 %v2034, %v2273
      %v2275 = vand.u32 %v2274, 4294901760
      %v2276 = vsub.f32 %v2274, %v2275
      %v2277 = vand.u32 %v2276, 4294901760
      %2278 = vmatpush1.msra.mxu0 %v2277
      %v2279 = vand.u32 %v2032, 4294901760
      %v2280 = vsub.f32 %v2032, %v2279
      %v2281 = vand.u32 %v2280, 4294901760
      %v2282 = vsub.f32 %v2280, %v2281
      %v2283 = vand.u32 %v2282, 4294901760
      %2284 = vmatprep.subr.mxu0 %v2283
      %v2285 = vand.u32 %v2031, 4294901760
      %v2286 = vsub.f32 %v2031, %v2285
      %v2287 = vand.u32 %v2286, 4294901760
      %v2288 = vsub.f32 %v2286, %v2287
      %v2289 = vand.u32 %v2288, 4294901760
      %2290 = vmatpush1.msra.mxu0 %v2289
      %2291 = vmatprep.subr.mxu0 0.0
      %2292 = vmatpush2.msra.mxu0 0.0
      %2293 = vmatprep.subr.mxu0 0.0
      %2294 = vmatpush2.msra.mxu0 0.0
      %2295 = vmatprep.subr.mxu0 0.0
      %2296 = vmatpush2.msra.mxu0 0.0
      %2297 = vmatprep.subr.mxu0 0.0
      %2298 = vmatpush2.msra.mxu0 0.0
      %2299 = vmatprep.subr.mxu0 0.0
      %2300 = vmatpush2.msra.mxu0 0.0
      %2301 = vmatprep.subr.mxu0 0.0
      %2302 = vmatpush2.msra.mxu0 0.0
      %2303 = vmatprep.subr.mxu0 0.0
      %2304 = vmatpush2.msra.mxu0 0.0
      %2305 = vmatprep.subr.mxu0 0.0
      %2306 = vmatpush2.msra.mxu0 0.0
      %2307 = vmatprep.subr.mxu0 0.0
      %2308 = vmatpush2.msra.mxu0 0.0
      %2309 = vmatprep.subr.mxu0 0.0
      %2310 = vmatpush2.msra.mxu0 0.0
      %2311 = vmatprep.subr.mxu0 0.0
      %2312 = vmatpush2.msra.mxu0 0.0
      %2313 = vmatprep.subr.mxu0 0.0
      %2314 = vmatpush2.msra.mxu0 0.0
      %2315 = vmatprep.subr.mxu0 0.0
      %2316 = vmatpush2.msra.mxu0 0.0
      %2317 = vmatprep.subr.mxu0 0.0
      %2318 = vmatpush2.msra.mxu0 0.0
      %2319 = vmatprep.subr.mxu0 0.0
      %2320 = vmatpush2.msra.mxu0 0.0
      %2321 = vmatprep.subr.mxu0 0.0
      %2322 = vmatpush2.msra.mxu0 0.0
      %2323 = vmatprep.mubr.f32.mxu0 0.0
      %v2324 = vand.u32 %v2059, 4294901760
      %2325 = vmatmul.mubr.f32.gmra.mxu0 %v2324
      %v2326 = vpop.f32.mrf.mxu0
      %v2327 = vadd.f32 %v2154, %v2326
      %v2328 = vpop.f32.mrf.mxu0
      %v2329 = vadd.f32 %v2156, %v2328
      %2330 = vmatprep.mubr.f32.mxu0 0.0
      %v2331 = vand.u32 %v2062, 4294901760
      %2332 = vmatmul.mubr.f32.gmra.mxu0 %v2331
      %v2333 = vpop.f32.mrf.mxu0
      %v2334 = vadd.f32 %v2165, %v2333
      %v2335 = vpop.f32.mrf.mxu0
      %v2336 = vadd.f32 %v2167, %v2335
      %2337 = vdwg.mxu0
      %2338 = vmatprep.subr.mxu0 0.0
      %2339 = vmatpush1.msra.mxu0 0.0
      %2340 = vmatprep.subr.mxu0 0.0
      %2341 = vmatpush1.msra.mxu0 0.0
      %2342 = vmatprep.subr.mxu0 0.0
      %2343 = vmatpush1.msra.mxu0 0.0
      %2344 = vmatprep.subr.mxu0 0.0
      %2345 = vmatpush1.msra.mxu0 0.0
      %2346 = vmatprep.subr.mxu0 0.0
      %2347 = vmatpush1.msra.mxu0 0.0
      %2348 = vmatprep.subr.mxu0 0.0
      %2349 = vmatpush1.msra.mxu0 0.0
      %2350 = vmatprep.subr.mxu0 0.0
      %2351 = vmatpush1.msra.mxu0 0.0
      %v2352 = vand.u32 %v2056, 4294901760
      %v2353 = vsub.f32 %v2056, %v2352
      %2354 = vmatprep.subr.mxu0 %v2353
      %v2355 = vand.u32 %v2055, 4294901760
      %v2356 = vsub.f32 %v2055, %v2355
      %2357 = vmatpush1.msra.mxu0 %v2356
      %v2358 = vand.u32 %v2053, 4294901760
      %v2359 = vsub.f32 %v2053, %v2358
      %2360 = vmatprep.subr.mxu0 %v2359
      %v2361 = vand.u32 %v2052, 4294901760
      %v2362 = vsub.f32 %v2052, %v2361
      %2363 = vmatpush1.msra.mxu0 %v2362
      %v2364 = vand.u32 %v2050, 4294901760
      %v2365 = vsub.f32 %v2050, %v2364
      %2366 = vmatprep.subr.mxu0 %v2365
      %v2367 = vand.u32 %v2049, 4294901760
      %v2368 = vsub.f32 %v2049, %v2367
      %2369 = vmatpush1.msra.mxu0 %v2368
      %v2370 = vand.u32 %v2047, 4294901760
      %v2371 = vsub.f32 %v2047, %v2370
      %2372 = vmatprep.subr.mxu0 %v2371
      %v2373 = vand.u32 %v2046, 4294901760
      %v2374 = vsub.f32 %v2046, %v2373
      %2375 = vmatpush1.msra.mxu0 %v2374
      %v2376 = vand.u32 %v2044, 4294901760
      %v2377 = vsub.f32 %v2044, %v2376
      %2378 = vmatprep.subr.mxu0 %v2377
      %v2379 = vand.u32 %v2043, 4294901760
      %v2380 = vsub.f32 %v2043, %v2379
      %2381 = vmatpush1.msra.mxu0 %v2380
      %v2382 = vand.u32 %v2041, 4294901760
      %v2383 = vsub.f32 %v2041, %v2382
      %2384 = vmatprep.subr.mxu0 %v2383
      %v2385 = vand.u32 %v2040, 4294901760
      %v2386 = vsub.f32 %v2040, %v2385
      %2387 = vmatpush1.msra.mxu0 %v2386
      %v2388 = vand.u32 %v2038, 4294901760
      %v2389 = vsub.f32 %v2038, %v2388
      %2390 = vmatprep.subr.mxu0 %v2389
      %v2391 = vand.u32 %v2037, 4294901760
      %v2392 = vsub.f32 %v2037, %v2391
      %2393 = vmatpush1.msra.mxu0 %v2392
      %v2394 = vand.u32 %v2035, 4294901760
      %v2395 = vsub.f32 %v2035, %v2394
      %2396 = vmatprep.subr.mxu0 %v2395
      %v2397 = vand.u32 %v2034, 4294901760
      %v2398 = vsub.f32 %v2034, %v2397
      %2399 = vmatpush1.msra.mxu0 %v2398
      %v2400 = vand.u32 %v2032, 4294901760
      %v2401 = vsub.f32 %v2032, %v2400
      %2402 = vmatprep.subr.mxu0 %v2401
      %v2403 = vand.u32 %v2031, 4294901760
      %v2404 = vsub.f32 %v2031, %v2403
      %2405 = vmatpush1.msra.mxu0 %v2404
      %2406 = vmatprep.subr.mxu0 0.0
      %2407 = vmatpush2.msra.mxu0 0.0
      %2408 = vmatprep.subr.mxu0 0.0
      %2409 = vmatpush2.msra.mxu0 0.0
      %2410 = vmatprep.subr.mxu0 0.0
      %2411 = vmatpush2.msra.mxu0 0.0
      %2412 = vmatprep.subr.mxu0 0.0
      %2413 = vmatpush2.msra.mxu0 0.0
      %2414 = vmatprep.subr.mxu0 0.0
      %2415 = vmatpush2.msra.mxu0 0.0
      %2416 = vmatprep.subr.mxu0 0.0
      %2417 = vmatpush2.msra.mxu0 0.0
      %2418 = vmatprep.subr.mxu0 0.0
      %2419 = vmatpush2.msra.mxu0 0.0
      %2420 = vmatprep.subr.mxu0 0.0
      %2421 = vmatpush2.msra.mxu0 0.0
      %2422 = vmatprep.subr.mxu0 0.0
      %2423 = vmatpush2.msra.mxu0 0.0
      %2424 = vmatprep.subr.mxu0 0.0
      %2425 = vmatpush2.msra.mxu0 0.0
      %2426 = vmatprep.subr.mxu0 0.0
      %2427 = vmatpush2.msra.mxu0 0.0
      %2428 = vmatprep.subr.mxu0 0.0
      %2429 = vmatpush2.msra.mxu0 0.0
      %2430 = vmatprep.subr.mxu0 0.0
      %2431 = vmatpush2.msra.mxu0 0.0
      %2432 = vmatprep.subr.mxu0 0.0
      %2433 = vmatpush2.msra.mxu0 0.0
      %2434 = vmatprep.subr.mxu0 0.0
      %2435 = vmatpush2.msra.mxu0 0.0
      %2436 = vmatprep.subr.mxu0 0.0
      %2437 = vmatpush2.msra.mxu0 0.0
      %2438 = vmatprep.mubr.f32.mxu0 0.0
      %v2439 = vand.u32 %v2059, 4294901760
      %v2440 = vsub.f32 %v2059, %v2439
      %2441 = vmatmul.mubr.f32.gmra.mxu0 %v2440
      %v2442 = vpop.f32.mrf.mxu0
      %v2443 = vadd.f32 %v2327, %v2442
      %v2444 = vpop.f32.mrf.mxu0
      %v2445 = vadd.f32 %v2329, %v2444
      %2446 = vmatprep.mubr.f32.mxu0 0.0
      %v2447 = vand.u32 %v2062, 4294901760
      %v2448 = vsub.f32 %v2062, %v2447
      %2449 = vmatmul.mubr.f32.gmra.mxu0 %v2448
      %v2450 = vpop.f32.mrf.mxu0
      %v2451 = vadd.f32 %v2334, %v2450
      %v2452 = vpop.f32.mrf.mxu0
      %v2453 = vadd.f32 %v2336, %v2452
      %2454 = vdwg.mxu0
      %2455 = vmatprep.subr.mxu0 0.0
      %2456 = vmatpush1.msra.mxu0 0.0
      %2457 = vmatprep.subr.mxu0 0.0
      %2458 = vmatpush1.msra.mxu0 0.0
      %2459 = vmatprep.subr.mxu0 0.0
      %2460 = vmatpush1.msra.mxu0 0.0
      %2461 = vmatprep.subr.mxu0 0.0
      %2462 = vmatpush1.msra.mxu0 0.0
      %2463 = vmatprep.subr.mxu0 0.0
      %2464 = vmatpush1.msra.mxu0 0.0
      %2465 = vmatprep.subr.mxu0 0.0
      %2466 = vmatpush1.msra.mxu0 0.0
      %2467 = vmatprep.subr.mxu0 0.0
      %2468 = vmatpush1.msra.mxu0 0.0
      %v2469 = vand.u32 %v2056, 4294901760
      %2470 = vmatprep.subr.mxu0 %v2469
      %v2471 = vand.u32 %v2055, 4294901760
      %2472 = vmatpush1.msra.mxu0 %v2471
      %v2473 = vand.u32 %v2053, 4294901760
      %2474 = vmatprep.subr.mxu0 %v2473
      %v2475 = vand.u32 %v2052, 4294901760
      %2476 = vmatpush1.msra.mxu0 %v2475
      %v2477 = vand.u32 %v2050, 4294901760
      %2478 = vmatprep.subr.mxu0 %v2477
      %v2479 = vand.u32 %v2049, 4294901760
      %2480 = vmatpush1.msra.mxu0 %v2479
      %v2481 = vand.u32 %v2047, 4294901760
      %2482 = vmatprep.subr.mxu0 %v2481
      %v2483 = vand.u32 %v2046, 4294901760
      %2484 = vmatpush1.msra.mxu0 %v2483
      %v2485 = vand.u32 %v2044, 4294901760
      %2486 = vmatprep.subr.mxu0 %v2485
      %v2487 = vand.u32 %v2043, 4294901760
      %2488 = vmatpush1.msra.mxu0 %v2487
      %v2489 = vand.u32 %v2041, 4294901760
      %2490 = vmatprep.subr.mxu0 %v2489
      %v2491 = vand.u32 %v2040, 4294901760
      %2492 = vmatpush1.msra.mxu0 %v2491
      %v2493 = vand.u32 %v2038, 4294901760
      %2494 = vmatprep.subr.mxu0 %v2493
      %v2495 = vand.u32 %v2037, 4294901760
      %2496 = vmatpush1.msra.mxu0 %v2495
      %v2497 = vand.u32 %v2035, 4294901760
      %2498 = vmatprep.subr.mxu0 %v2497
      %v2499 = vand.u32 %v2034, 4294901760
      %2500 = vmatpush1.msra.mxu0 %v2499
      %v2501 = vand.u32 %v2032, 4294901760
      %2502 = vmatprep.subr.mxu0 %v2501
      %v2503 = vand.u32 %v2031, 4294901760
      %2504 = vmatpush1.msra.mxu0 %v2503
      %2505 = vmatprep.subr.mxu0 0.0
      %2506 = vmatpush2.msra.mxu0 0.0
      %2507 = vmatprep.subr.mxu0 0.0
      %2508 = vmatpush2.msra.mxu0 0.0
      %2509 = vmatprep.subr.mxu0 0.0
      %2510 = vmatpush2.msra.mxu0 0.0
      %2511 = vmatprep.subr.mxu0 0.0
      %2512 = vmatpush2.msra.mxu0 0.0
      %2513 = vmatprep.subr.mxu0 0.0
      %2514 = vmatpush2.msra.mxu0 0.0
      %2515 = vmatprep.subr.mxu0 0.0
      %2516 = vmatpush2.msra.mxu0 0.0
      %2517 = vmatprep.subr.mxu0 0.0
      %2518 = vmatpush2.msra.mxu0 0.0
      %2519 = vmatprep.subr.mxu0 0.0
      %2520 = vmatpush2.msra.mxu0 0.0
      %2521 = vmatprep.subr.mxu0 0.0
      %2522 = vmatpush2.msra.mxu0 0.0
      %2523 = vmatprep.subr.mxu0 0.0
      %2524 = vmatpush2.msra.mxu0 0.0
      %2525 = vmatprep.subr.mxu0 0.0
      %2526 = vmatpush2.msra.mxu0 0.0
      %2527 = vmatprep.subr.mxu0 0.0
      %2528 = vmatpush2.msra.mxu0 0.0
      %2529 = vmatprep.subr.mxu0 0.0
      %2530 = vmatpush2.msra.mxu0 0.0
      %2531 = vmatprep.subr.mxu0 0.0
      %2532 = vmatpush2.msra.mxu0 0.0
      %2533 = vmatprep.subr.mxu0 0.0
      %2534 = vmatpush2.msra.mxu0 0.0
      %2535 = vmatprep.subr.mxu0 0.0
      %2536 = vmatpush2.msra.mxu0 0.0
      %2537 = vmatprep.mubr.f32.mxu0 0.0
      %v2538 = vand.u32 %v2059, 4294901760
      %v2539 = vsub.f32 %v2059, %v2538
      %v2540 = vand.u32 %v2539, 4294901760
      %2541 = vmatmul.mubr.f32.gmra.mxu0 %v2540
      %v2542 = vpop.f32.mrf.mxu0
      %v2543 = vadd.f32 %v2443, %v2542
      %v2544 = vpop.f32.mrf.mxu0
      %v2545 = vadd.f32 %v2445, %v2544
      %2546 = vmatprep.mubr.f32.mxu0 0.0
      %v2547 = vand.u32 %v2062, 4294901760
      %v2548 = vsub.f32 %v2062, %v2547
      %v2549 = vand.u32 %v2548, 4294901760
      %2550 = vmatmul.mubr.f32.gmra.mxu0 %v2549
      %v2551 = vpop.f32.mrf.mxu0
      %v2552 = vadd.f32 %v2451, %v2551
      %v2553 = vpop.f32.mrf.mxu0
      %v2554 = vadd.f32 %v2453, %v2553
      %2555 = vdwg.mxu0
      %2556 = vmatprep.subr.mxu0 0.0
      %2557 = vmatpush1.msra.mxu0 0.0
      %2558 = vmatprep.subr.mxu0 0.0
      %2559 = vmatpush1.msra.mxu0 0.0
      %2560 = vmatprep.subr.mxu0 0.0
      %2561 = vmatpush1.msra.mxu0 0.0
      %2562 = vmatprep.subr.mxu0 0.0
      %2563 = vmatpush1.msra.mxu0 0.0
      %2564 = vmatprep.subr.mxu0 0.0
      %2565 = vmatpush1.msra.mxu0 0.0
      %2566 = vmatprep.subr.mxu0 0.0
      %2567 = vmatpush1.msra.mxu0 0.0
      %2568 = vmatprep.subr.mxu0 0.0
      %2569 = vmatpush1.msra.mxu0 0.0
      %v2570 = vand.u32 %v2056, 4294901760
      %v2571 = vsub.f32 %v2056, %v2570
      %v2572 = vand.u32 %v2571, 4294901760
      %2573 = vmatprep.subr.mxu0 %v2572
      %v2574 = vand.u32 %v2055, 4294901760
      %v2575 = vsub.f32 %v2055, %v2574
      %v2576 = vand.u32 %v2575, 4294901760
      %2577 = vmatpush1.msra.mxu0 %v2576
      %v2578 = vand.u32 %v2053, 4294901760
      %v2579 = vsub.f32 %v2053, %v2578
      %v2580 = vand.u32 %v2579, 4294901760
      %2581 = vmatprep.subr.mxu0 %v2580
      %v2582 = vand.u32 %v2052, 4294901760
      %v2583 = vsub.f32 %v2052, %v2582
      %v2584 = vand.u32 %v2583, 4294901760
      %2585 = vmatpush1.msra.mxu0 %v2584
      %v2586 = vand.u32 %v2050, 4294901760
      %v2587 = vsub.f32 %v2050, %v2586
      %v2588 = vand.u32 %v2587, 4294901760
      %2589 = vmatprep.subr.mxu0 %v2588
      %v2590 = vand.u32 %v2049, 4294901760
      %v2591 = vsub.f32 %v2049, %v2590
      %v2592 = vand.u32 %v2591, 4294901760
      %2593 = vmatpush1.msra.mxu0 %v2592
      %v2594 = vand.u32 %v2047, 4294901760
      %v2595 = vsub.f32 %v2047, %v2594
      %v2596 = vand.u32 %v2595, 4294901760
      %2597 = vmatprep.subr.mxu0 %v2596
      %v2598 = vand.u32 %v2046, 4294901760
      %v2599 = vsub.f32 %v2046, %v2598
      %v2600 = vand.u32 %v2599, 4294901760
      %2601 = vmatpush1.msra.mxu0 %v2600
      %v2602 = vand.u32 %v2044, 4294901760
      %v2603 = vsub.f32 %v2044, %v2602
      %v2604 = vand.u32 %v2603, 4294901760
      %2605 = vmatprep.subr.mxu0 %v2604
      %v2606 = vand.u32 %v2043, 4294901760
      %v2607 = vsub.f32 %v2043, %v2606
      %v2608 = vand.u32 %v2607, 4294901760
      %2609 = vmatpush1.msra.mxu0 %v2608
      %v2610 = vand.u32 %v2041, 4294901760
      %v2611 = vsub.f32 %v2041, %v2610
      %v2612 = vand.u32 %v2611, 4294901760
      %2613 = vmatprep.subr.mxu0 %v2612
      %v2614 = vand.u32 %v2040, 4294901760
      %v2615 = vsub.f32 %v2040, %v2614
      %v2616 = vand.u32 %v2615, 4294901760
      %2617 = vmatpush1.msra.mxu0 %v2616
      %v2618 = vand.u32 %v2038, 4294901760
      %v2619 = vsub.f32 %v2038, %v2618
      %v2620 = vand.u32 %v2619, 4294901760
      %2621 = vmatprep.subr.mxu0 %v2620
      %v2622 = vand.u32 %v2037, 4294901760
      %v2623 = vsub.f32 %v2037, %v2622
      %v2624 = vand.u32 %v2623, 4294901760
      %2625 = vmatpush1.msra.mxu0 %v2624
      %v2626 = vand.u32 %v2035, 4294901760
      %v2627 = vsub.f32 %v2035, %v2626
      %v2628 = vand.u32 %v2627, 4294901760
      %2629 = vmatprep.subr.mxu0 %v2628
      %v2630 = vand.u32 %v2034, 4294901760
      %v2631 = vsub.f32 %v2034, %v2630
      %v2632 = vand.u32 %v2631, 4294901760
      %2633 = vmatpush1.msra.mxu0 %v2632
      %v2634 = vand.u32 %v2032, 4294901760
      %v2635 = vsub.f32 %v2032, %v2634
      %v2636 = vand.u32 %v2635, 4294901760
      %2637 = vmatprep.subr.mxu0 %v2636
      %v2638 = vand.u32 %v2031, 4294901760
      %v2639 = vsub.f32 %v2031, %v2638
      %v2640 = vand.u32 %v2639, 4294901760
      %2641 = vmatpush1.msra.mxu0 %v2640
      %2642 = vmatprep.subr.mxu0 0.0
      %2643 = vmatpush2.msra.mxu0 0.0
      %2644 = vmatprep.subr.mxu0 0.0
      %2645 = vmatpush2.msra.mxu0 0.0
      %2646 = vmatprep.subr.mxu0 0.0
      %2647 = vmatpush2.msra.mxu0 0.0
      %2648 = vmatprep.subr.mxu0 0.0
      %2649 = vmatpush2.msra.mxu0 0.0
      %2650 = vmatprep.subr.mxu0 0.0
      %2651 = vmatpush2.msra.mxu0 0.0
      %2652 = vmatprep.subr.mxu0 0.0
      %2653 = vmatpush2.msra.mxu0 0.0
      %2654 = vmatprep.subr.mxu0 0.0
      %2655 = vmatpush2.msra.mxu0 0.0
      %2656 = vmatprep.subr.mxu0 0.0
      %2657 = vmatpush2.msra.mxu0 0.0
      %2658 = vmatprep.subr.mxu0 0.0
      %2659 = vmatpush2.msra.mxu0 0.0
      %2660 = vmatprep.subr.mxu0 0.0
      %2661 = vmatpush2.msra.mxu0 0.0
      %2662 = vmatprep.subr.mxu0 0.0
      %2663 = vmatpush2.msra.mxu0 0.0
      %2664 = vmatprep.subr.mxu0 0.0
      %2665 = vmatpush2.msra.mxu0 0.0
      %2666 = vmatprep.subr.mxu0 0.0
      %2667 = vmatpush2.msra.mxu0 0.0
      %2668 = vmatprep.subr.mxu0 0.0
      %2669 = vmatpush2.msra.mxu0 0.0
      %2670 = vmatprep.subr.mxu0 0.0
      %2671 = vmatpush2.msra.mxu0 0.0
      %2672 = vmatprep.subr.mxu0 0.0
      %2673 = vmatpush2.msra.mxu0 0.0
      %2674 = vmatprep.mubr.f32.mxu0 0.0
      %v2675 = vand.u32 %v2059, 4294901760
      %2676 = vmatmul.mubr.f32.gmra.mxu0 %v2675
      %v2677 = vpop.f32.mrf.mxu0
      %v2678 = vadd.f32 %v2543, %v2677
      %v2679 = vpop.f32.mrf.mxu0
      %v2680 = vadd.f32 %v2545, %v2679
      %2681 = vmatprep.mubr.f32.mxu0 0.0
      %v2682 = vand.u32 %v2062, 4294901760
      %2683 = vmatmul.mubr.f32.gmra.mxu0 %v2682
      %v2684 = vpop.f32.mrf.mxu0
      %v2685 = vadd.f32 %v2552, %v2684
      %v2686 = vpop.f32.mrf.mxu0
      %v2687 = vadd.f32 %v2554, %v2686
      %2688 = vdwg.mxu0
      %2689 = vmatprep.subr.mxu0 0.0
      %2690 = vmatpush1.msra.mxu0 0.0
      %2691 = vmatprep.subr.mxu0 0.0
      %2692 = vmatpush1.msra.mxu0 0.0
      %2693 = vmatprep.subr.mxu0 0.0
      %2694 = vmatpush1.msra.mxu0 0.0
      %2695 = vmatprep.subr.mxu0 0.0
      %2696 = vmatpush1.msra.mxu0 0.0
      %2697 = vmatprep.subr.mxu0 0.0
      %2698 = vmatpush1.msra.mxu0 0.0
      %2699 = vmatprep.subr.mxu0 0.0
      %2700 = vmatpush1.msra.mxu0 0.0
      %2701 = vmatprep.subr.mxu0 0.0
      %2702 = vmatpush1.msra.mxu0 0.0
      %v2703 = vand.u32 %v2056, 4294901760
      %2704 = vmatprep.subr.mxu0 %v2703
      %v2705 = vand.u32 %v2055, 4294901760
      %2706 = vmatpush1.msra.mxu0 %v2705
      %v2707 = vand.u32 %v2053, 4294901760
      %2708 = vmatprep.subr.mxu0 %v2707
      %v2709 = vand.u32 %v2052, 4294901760
      %2710 = vmatpush1.msra.mxu0 %v2709
      %v2711 = vand.u32 %v2050, 4294901760
      %2712 = vmatprep.subr.mxu0 %v2711
      %v2713 = vand.u32 %v2049, 4294901760
      %2714 = vmatpush1.msra.mxu0 %v2713
      %v2715 = vand.u32 %v2047, 4294901760
      %2716 = vmatprep.subr.mxu0 %v2715
      %v2717 = vand.u32 %v2046, 4294901760
      %2718 = vmatpush1.msra.mxu0 %v2717
      %v2719 = vand.u32 %v2044, 4294901760
      %2720 = vmatprep.subr.mxu0 %v2719
      %v2721 = vand.u32 %v2043, 4294901760
      %2722 = vmatpush1.msra.mxu0 %v2721
      %v2723 = vand.u32 %v2041, 4294901760
      %2724 = vmatprep.subr.mxu0 %v2723
      %v2725 = vand.u32 %v2040, 4294901760
      %2726 = vmatpush1.msra.mxu0 %v2725
      %v2727 = vand.u32 %v2038, 4294901760
      %2728 = vmatprep.subr.mxu0 %v2727
      %v2729 = vand.u32 %v2037, 4294901760
      %2730 = vmatpush1.msra.mxu0 %v2729
      %v2731 = vand.u32 %v2035, 4294901760
      %2732 = vmatprep.subr.mxu0 %v2731
      %v2733 = vand.u32 %v2034, 4294901760
      %2734 = vmatpush1.msra.mxu0 %v2733
      %v2735 = vand.u32 %v2032, 4294901760
      %2736 = vmatprep.subr.mxu0 %v2735
      %v2737 = vand.u32 %v2031, 4294901760
      %2738 = vmatpush1.msra.mxu0 %v2737
      %2739 = vmatprep.subr.mxu0 0.0
      %2740 = vmatpush2.msra.mxu0 0.0
      %2741 = vmatprep.subr.mxu0 0.0
      %2742 = vmatpush2.msra.mxu0 0.0
      %2743 = vmatprep.subr.mxu0 0.0
      %2744 = vmatpush2.msra.mxu0 0.0
      %2745 = vmatprep.subr.mxu0 0.0
      %2746 = vmatpush2.msra.mxu0 0.0
      %2747 = vmatprep.subr.mxu0 0.0
      %2748 = vmatpush2.msra.mxu0 0.0
      %2749 = vmatprep.subr.mxu0 0.0
      %2750 = vmatpush2.msra.mxu0 0.0
      %2751 = vmatprep.subr.mxu0 0.0
      %2752 = vmatpush2.msra.mxu0 0.0
      %2753 = vmatprep.subr.mxu0 0.0
      %2754 = vmatpush2.msra.mxu0 0.0
      %2755 = vmatprep.subr.mxu0 0.0
      %2756 = vmatpush2.msra.mxu0 0.0
      %2757 = vmatprep.subr.mxu0 0.0
      %2758 = vmatpush2.msra.mxu0 0.0
      %2759 = vmatprep.subr.mxu0 0.0
      %2760 = vmatpush2.msra.mxu0 0.0
      %2761 = vmatprep.subr.mxu0 0.0
      %2762 = vmatpush2.msra.mxu0 0.0
      %2763 = vmatprep.subr.mxu0 0.0
      %2764 = vmatpush2.msra.mxu0 0.0
      %2765 = vmatprep.subr.mxu0 0.0
      %2766 = vmatpush2.msra.mxu0 0.0
      %2767 = vmatprep.subr.mxu0 0.0
      %2768 = vmatpush2.msra.mxu0 0.0
      %2769 = vmatprep.subr.mxu0 0.0
      %2770 = vmatpush2.msra.mxu0 0.0
      %2771 = vmatprep.mubr.f32.mxu0 0.0
      %v2772 = vand.u32 %v2059, 4294901760
      %2773 = vmatmul.mubr.f32.gmra.mxu0 %v2772
      %v2774 = vpop.f32.mrf.mxu0
      %v2775 = vadd.f32 %v2678, %v2774
      %v2776 = vpop.f32.mrf.mxu0
      %v2777 = vadd.f32 %v2680, %v2776
      %2778 = vmatprep.mubr.f32.mxu0 0.0
      %v2779 = vand.u32 %v2062, 4294901760
      %2780 = vmatmul.mubr.f32.gmra.mxu0 %v2779
      %v2781 = vpop.f32.mrf.mxu0
      %v2782 = vadd.f32 %v2685, %v2781
      %v2783 = vpop.f32.mrf.mxu0
      %v2784 = vadd.f32 %v2687, %v2783
      %2785 = vdwg.mxu0
      %2786 = vmatprep.subr.mxu0 0.0
      %2787 = vmatpush1.msra.mxu0 0.0
      %2788 = vmatprep.subr.mxu0 0.0
      %2789 = vmatpush1.msra.mxu0 0.0
      %2790 = vmatprep.subr.mxu0 0.0
      %2791 = vmatpush1.msra.mxu0 0.0
      %2792 = vmatprep.subr.mxu0 0.0
      %2793 = vmatpush1.msra.mxu0 0.0
      %2794 = vmatprep.subr.mxu0 0.0
      %2795 = vmatpush1.msra.mxu0 0.0
      %2796 = vmatprep.subr.mxu0 0.0
      %2797 = vmatpush1.msra.mxu0 0.0
      %2798 = vmatprep.subr.mxu0 0.0
      %2799 = vmatpush1.msra.mxu0 0.0
      %2800 = vmatprep.subr.mxu0 0.0
      %v2801 = vand.u32 %v2057, 4294901760
      %2802 = vmatpush1.msra.mxu0 %v2801
      %2803 = vmatprep.subr.mxu0 0.0
      %v2804 = vand.u32 %v2054, 4294901760
      %2805 = vmatpush1.msra.mxu0 %v2804
      %2806 = vmatprep.subr.mxu0 0.0
      %v2807 = vand.u32 %v2051, 4294901760
      %2808 = vmatpush1.msra.mxu0 %v2807
      %2809 = vmatprep.subr.mxu0 0.0
      %v2810 = vand.u32 %v2048, 4294901760
      %2811 = vmatpush1.msra.mxu0 %v2810
      %2812 = vmatprep.subr.mxu0 0.0
      %v2813 = vand.u32 %v2045, 4294901760
      %2814 = vmatpush1.msra.mxu0 %v2813
      %2815 = vmatprep.subr.mxu0 0.0
      %v2816 = vand.u32 %v2042, 4294901760
      %2817 = vmatpush1.msra.mxu0 %v2816
      %2818 = vmatprep.subr.mxu0 0.0
      %v2819 = vand.u32 %v2039, 4294901760
      %2820 = vmatpush1.msra.mxu0 %v2819
      %2821 = vmatprep.subr.mxu0 0.0
      %v2822 = vand.u32 %v2036, 4294901760
      %2823 = vmatpush1.msra.mxu0 %v2822
      %2824 = vmatprep.subr.mxu0 0.0
      %v2825 = vand.u32 %v2033, 4294901760
      %2826 = vmatpush1.msra.mxu0 %v2825
      %2827 = vmatprep.subr.mxu0 0.0
      %2828 = vmatpush2.msra.mxu0 0.0
      %2829 = vmatprep.subr.mxu0 0.0
      %2830 = vmatpush2.msra.mxu0 0.0
      %2831 = vmatprep.subr.mxu0 0.0
      %2832 = vmatpush2.msra.mxu0 0.0
      %2833 = vmatprep.subr.mxu0 0.0
      %2834 = vmatpush2.msra.mxu0 0.0
      %2835 = vmatprep.subr.mxu0 0.0
      %2836 = vmatpush2.msra.mxu0 0.0
      %2837 = vmatprep.subr.mxu0 0.0
      %2838 = vmatpush2.msra.mxu0 0.0
      %2839 = vmatprep.subr.mxu0 0.0
      %2840 = vmatpush2.msra.mxu0 0.0
      %2841 = vmatprep.subr.mxu0 0.0
      %2842 = vmatpush2.msra.mxu0 0.0
      %2843 = vmatprep.subr.mxu0 0.0
      %2844 = vmatpush2.msra.mxu0 0.0
      %2845 = vmatprep.subr.mxu0 0.0
      %2846 = vmatpush2.msra.mxu0 0.0
      %2847 = vmatprep.subr.mxu0 0.0
      %2848 = vmatpush2.msra.mxu0 0.0
      %2849 = vmatprep.subr.mxu0 0.0
      %2850 = vmatpush2.msra.mxu0 0.0
      %2851 = vmatprep.subr.mxu0 0.0
      %2852 = vmatpush2.msra.mxu0 0.0
      %2853 = vmatprep.subr.mxu0 0.0
      %2854 = vmatpush2.msra.mxu0 0.0
      %2855 = vmatprep.subr.mxu0 0.0
      %2856 = vmatpush2.msra.mxu0 0.0
      %2857 = vmatprep.subr.mxu0 0.0
      %2858 = vmatpush2.msra.mxu0 0.0
      %2859 = vmatprep.mubr.f32.mxu0 0.0
      %v2860 = vand.u32 %v2059, 4294901760
      %v2861 = vsub.f32 %v2059, %v2860
      %v2862 = vand.u32 %v2861, 4294901760
      %v2863 = vsub.f32 %v2861, %v2862
      %v2864 = vand.u32 %v2863, 4294901760
      %2865 = vmatmul.mubr.f32.gmra.mxu0 %v2864
      %v2866 = vpop.f32.mrf.mxu0
      %v2867 = vadd.f32 0.0, %v2866
      %v2868 = vpop.f32.mrf.mxu0
      %2869 = vmatprep.mubr.f32.mxu0 0.0
      %v2870 = vand.u32 %v2062, 4294901760
      %v2871 = vsub.f32 %v2062, %v2870
      %v2872 = vand.u32 %v2871, 4294901760
      %v2873 = vsub.f32 %v2871, %v2872
      %v2874 = vand.u32 %v2873, 4294901760
      %2875 = vmatmul.mubr.f32.gmra.mxu0 %v2874
      %v2876 = vpop.f32.mrf.mxu0
      %v2877 = vadd.f32 0.0, %v2876
      %v2878 = vpop.f32.mrf.mxu0
      %2879 = vdwg.mxu0
      %2880 = vmatprep.subr.mxu0 0.0
      %2881 = vmatpush1.msra.mxu0 0.0
      %2882 = vmatprep.subr.mxu0 0.0
      %2883 = vmatpush1.msra.mxu0 0.0
      %2884 = vmatprep.subr.mxu0 0.0
      %2885 = vmatpush1.msra.mxu0 0.0
      %2886 = vmatprep.subr.mxu0 0.0
      %2887 = vmatpush1.msra.mxu0 0.0
      %2888 = vmatprep.subr.mxu0 0.0
      %2889 = vmatpush1.msra.mxu0 0.0
      %2890 = vmatprep.subr.mxu0 0.0
      %2891 = vmatpush1.msra.mxu0 0.0
      %2892 = vmatprep.subr.mxu0 0.0
      %2893 = vmatpush1.msra.mxu0 0.0
      %2894 = vmatprep.subr.mxu0 0.0
      %v2895 = vand.u32 %v2057, 4294901760
      %v2896 = vsub.f32 %v2057, %v2895
      %v2897 = vand.u32 %v2896, 4294901760
      %v2898 = vsub.f32 %v2896, %v2897
      %v2899 = vand.u32 %v2898, 4294901760
      %2900 = vmatpush1.msra.mxu0 %v2899
      %2901 = vmatprep.subr.mxu0 0.0
      %v2902 = vand.u32 %v2054, 4294901760
      %v2903 = vsub.f32 %v2054, %v2902
      %v2904 = vand.u32 %v2903, 4294901760
      %v2905 = vsub.f32 %v2903, %v2904
      %v2906 = vand.u32 %v2905, 4294901760
      %2907 = vmatpush1.msra.mxu0 %v2906
      %2908 = vmatprep.subr.mxu0 0.0
      %v2909 = vand.u32 %v2051, 4294901760
      %v2910 = vsub.f32 %v2051, %v2909
      %v2911 = vand.u32 %v2910, 4294901760
      %v2912 = vsub.f32 %v2910, %v2911
      %v2913 = vand.u32 %v2912, 4294901760
      %2914 = vmatpush1.msra.mxu0 %v2913
      %2915 = vmatprep.subr.mxu0 0.0
      %v2916 = vand.u32 %v2048, 4294901760
      %v2917 = vsub.f32 %v2048, %v2916
      %v2918 = vand.u32 %v2917, 4294901760
      %v2919 = vsub.f32 %v2917, %v2918
      %v2920 = vand.u32 %v2919, 4294901760
      %2921 = vmatpush1.msra.mxu0 %v2920
      %2922 = vmatprep.subr.mxu0 0.0
      %v2923 = vand.u32 %v2045, 4294901760
      %v2924 = vsub.f32 %v2045, %v2923
      %v2925 = vand.u32 %v2924, 4294901760
      %v2926 = vsub.f32 %v2924, %v2925
      %v2927 = vand.u32 %v2926, 4294901760
      %2928 = vmatpush1.msra.mxu0 %v2927
      %2929 = vmatprep.subr.mxu0 0.0
      %v2930 = vand.u32 %v2042, 4294901760
      %v2931 = vsub.f32 %v2042, %v2930
      %v2932 = vand.u32 %v2931, 4294901760
      %v2933 = vsub.f32 %v2931, %v2932
      %v2934 = vand.u32 %v2933, 4294901760
      %2935 = vmatpush1.msra.mxu0 %v2934
      %2936 = vmatprep.subr.mxu0 0.0
      %v2937 = vand.u32 %v2039, 4294901760
      %v2938 = vsub.f32 %v2039, %v2937
      %v2939 = vand.u32 %v2938, 4294901760
      %v2940 = vsub.f32 %v2938, %v2939
      %v2941 = vand.u32 %v2940, 4294901760
      %2942 = vmatpush1.msra.mxu0 %v2941
      %2943 = vmatprep.subr.mxu0 0.0
      %v2944 = vand.u32 %v2036, 4294901760
      %v2945 = vsub.f32 %v2036, %v2944
      %v2946 = vand.u32 %v2945, 4294901760
      %v2947 = vsub.f32 %v2945, %v2946
      %v2948 = vand.u32 %v2947, 4294901760
      %2949 = vmatpush1.msra.mxu0 %v2948
      %2950 = vmatprep.subr.mxu0 0.0
      %v2951 = vand.u32 %v2033, 4294901760
      %v2952 = vsub.f32 %v2033, %v2951
      %v2953 = vand.u32 %v2952, 4294901760
      %v2954 = vsub.f32 %v2952, %v2953
      %v2955 = vand.u32 %v2954, 4294901760
      %2956 = vmatpush1.msra.mxu0 %v2955
      %2957 = vmatprep.subr.mxu0 0.0
      %2958 = vmatpush2.msra.mxu0 0.0
      %2959 = vmatprep.subr.mxu0 0.0
      %2960 = vmatpush2.msra.mxu0 0.0
      %2961 = vmatprep.subr.mxu0 0.0
      %2962 = vmatpush2.msra.mxu0 0.0
      %2963 = vmatprep.subr.mxu0 0.0
      %2964 = vmatpush2.msra.mxu0 0.0
      %2965 = vmatprep.subr.mxu0 0.0
      %2966 = vmatpush2.msra.mxu0 0.0
      %2967 = vmatprep.subr.mxu0 0.0
      %2968 = vmatpush2.msra.mxu0 0.0
      %2969 = vmatprep.subr.mxu0 0.0
      %2970 = vmatpush2.msra.mxu0 0.0
      %2971 = vmatprep.subr.mxu0 0.0
      %2972 = vmatpush2.msra.mxu0 0.0
      %2973 = vmatprep.subr.mxu0 0.0
      %2974 = vmatpush2.msra.mxu0 0.0
      %2975 = vmatprep.subr.mxu0 0.0
      %2976 = vmatpush2.msra.mxu0 0.0
      %2977 = vmatprep.subr.mxu0 0.0
      %2978 = vmatpush2.msra.mxu0 0.0
      %2979 = vmatprep.subr.mxu0 0.0
      %2980 = vmatpush2.msra.mxu0 0.0
      %2981 = vmatprep.subr.mxu0 0.0
      %2982 = vmatpush2.msra.mxu0 0.0
      %2983 = vmatprep.subr.mxu0 0.0
      %2984 = vmatpush2.msra.mxu0 0.0
      %2985 = vmatprep.subr.mxu0 0.0
      %2986 = vmatpush2.msra.mxu0 0.0
      %2987 = vmatprep.subr.mxu0 0.0
      %2988 = vmatpush2.msra.mxu0 0.0
      %2989 = vmatprep.mubr.f32.mxu0 0.0
      %v2990 = vand.u32 %v2059, 4294901760
      %2991 = vmatmul.mubr.f32.gmra.mxu0 %v2990
      %v2992 = vpop.f32.mrf.mxu0
      %v2993 = vadd.f32 %v2867, %v2992
      %v2994 = vpop.f32.mrf.mxu0
      %2995 = vmatprep.mubr.f32.mxu0 0.0
      %v2996 = vand.u32 %v2062, 4294901760
      %2997 = vmatmul.mubr.f32.gmra.mxu0 %v2996
      %v2998 = vpop.f32.mrf.mxu0
      %v2999 = vadd.f32 %v2877, %v2998
      %v3000 = vpop.f32.mrf.mxu0
      %3001 = vdwg.mxu0
      %3002 = vmatprep.subr.mxu0 0.0
      %3003 = vmatpush1.msra.mxu0 0.0
      %3004 = vmatprep.subr.mxu0 0.0
      %3005 = vmatpush1.msra.mxu0 0.0
      %3006 = vmatprep.subr.mxu0 0.0
      %3007 = vmatpush1.msra.mxu0 0.0
      %3008 = vmatprep.subr.mxu0 0.0
      %3009 = vmatpush1.msra.mxu0 0.0
      %3010 = vmatprep.subr.mxu0 0.0
      %3011 = vmatpush1.msra.mxu0 0.0
      %3012 = vmatprep.subr.mxu0 0.0
      %3013 = vmatpush1.msra.mxu0 0.0
      %3014 = vmatprep.subr.mxu0 0.0
      %3015 = vmatpush1.msra.mxu0 0.0
      %3016 = vmatprep.subr.mxu0 0.0
      %v3017 = vand.u32 %v2057, 4294901760
      %v3018 = vsub.f32 %v2057, %v3017
      %3019 = vmatpush1.msra.mxu0 %v3018
      %3020 = vmatprep.subr.mxu0 0.0
      %v3021 = vand.u32 %v2054, 4294901760
      %v3022 = vsub.f32 %v2054, %v3021
      %3023 = vmatpush1.msra.mxu0 %v3022
      %3024 = vmatprep.subr.mxu0 0.0
      %v3025 = vand.u32 %v2051, 4294901760
      %v3026 = vsub.f32 %v2051, %v3025
      %3027 = vmatpush1.msra.mxu0 %v3026
      %3028 = vmatprep.subr.mxu0 0.0
      %v3029 = vand.u32 %v2048, 4294901760
      %v3030 = vsub.f32 %v2048, %v3029
      %3031 = vmatpush1.msra.mxu0 %v3030
      %3032 = vmatprep.subr.mxu0 0.0
      %v3033 = vand.u32 %v2045, 4294901760
      %v3034 = vsub.f32 %v2045, %v3033
      %3035 = vmatpush1.msra.mxu0 %v3034
      %3036 = vmatprep.subr.mxu0 0.0
      %v3037 = vand.u32 %v2042, 4294901760
      %v3038 = vsub.f32 %v2042, %v3037
      %3039 = vmatpush1.msra.mxu0 %v3038
      %3040 = vmatprep.subr.mxu0 0.0
      %v3041 = vand.u32 %v2039, 4294901760
      %v3042 = vsub.f32 %v2039, %v3041
      %3043 = vmatpush1.msra.mxu0 %v3042
      %3044 = vmatprep.subr.mxu0 0.0
      %v3045 = vand.u32 %v2036, 4294901760
      %v3046 = vsub.f32 %v2036, %v3045
      %3047 = vmatpush1.msra.mxu0 %v3046
      %3048 = vmatprep.subr.mxu0 0.0
      %v3049 = vand.u32 %v2033, 4294901760
      %v3050 = vsub.f32 %v2033, %v3049
      %3051 = vmatpush1.msra.mxu0 %v3050
      %3052 = vmatprep.subr.mxu0 0.0
      %3053 = vmatpush2.msra.mxu0 0.0
      %3054 = vmatprep.subr.mxu0 0.0
      %3055 = vmatpush2.msra.mxu0 0.0
      %3056 = vmatprep.subr.mxu0 0.0
      %3057 = vmatpush2.msra.mxu0 0.0
      %3058 = vmatprep.subr.mxu0 0.0
      %3059 = vmatpush2.msra.mxu0 0.0
      %3060 = vmatprep.subr.mxu0 0.0
      %3061 = vmatpush2.msra.mxu0 0.0
      %3062 = vmatprep.subr.mxu0 0.0
      %3063 = vmatpush2.msra.mxu0 0.0
      %3064 = vmatprep.subr.mxu0 0.0
      %3065 = vmatpush2.msra.mxu0 0.0
      %3066 = vmatprep.subr.mxu0 0.0
      %3067 = vmatpush2.msra.mxu0 0.0
      %3068 = vmatprep.subr.mxu0 0.0
      %3069 = vmatpush2.msra.mxu0 0.0
      %3070 = vmatprep.subr.mxu0 0.0
      %3071 = vmatpush2.msra.mxu0 0.0
      %3072 = vmatprep.subr.mxu0 0.0
      %3073 = vmatpush2.msra.mxu0 0.0
      %3074 = vmatprep.subr.mxu0 0.0
      %3075 = vmatpush2.msra.mxu0 0.0
      %3076 = vmatprep.subr.mxu0 0.0
      %3077 = vmatpush2.msra.mxu0 0.0
      %3078 = vmatprep.subr.mxu0 0.0
      %3079 = vmatpush2.msra.mxu0 0.0
      %3080 = vmatprep.subr.mxu0 0.0
      %3081 = vmatpush2.msra.mxu0 0.0
      %3082 = vmatprep.subr.mxu0 0.0
      %3083 = vmatpush2.msra.mxu0 0.0
      %3084 = vmatprep.mubr.f32.mxu0 0.0
      %v3085 = vand.u32 %v2059, 4294901760
      %v3086 = vsub.f32 %v2059, %v3085
      %3087 = vmatmul.mubr.f32.gmra.mxu0 %v3086
      %v3088 = vpop.f32.mrf.mxu0
      %v3089 = vadd.f32 %v2993, %v3088
      %v3090 = vpop.f32.mrf.mxu0
      %3091 = vmatprep.mubr.f32.mxu0 0.0
      %v3092 = vand.u32 %v2062, 4294901760
      %v3093 = vsub.f32 %v2062, %v3092
      %3094 = vmatmul.mubr.f32.gmra.mxu0 %v3093
      %v3095 = vpop.f32.mrf.mxu0
      %v3096 = vadd.f32 %v2999, %v3095
      %v3097 = vpop.f32.mrf.mxu0
      %3098 = vdwg.mxu0
      %3099 = vmatprep.subr.mxu0 0.0
      %3100 = vmatpush1.msra.mxu0 0.0
      %3101 = vmatprep.subr.mxu0 0.0
      %3102 = vmatpush1.msra.mxu0 0.0
      %3103 = vmatprep.subr.mxu0 0.0
      %3104 = vmatpush1.msra.mxu0 0.0
      %3105 = vmatprep.subr.mxu0 0.0
      %3106 = vmatpush1.msra.mxu0 0.0
      %3107 = vmatprep.subr.mxu0 0.0
      %3108 = vmatpush1.msra.mxu0 0.0
      %3109 = vmatprep.subr.mxu0 0.0
      %3110 = vmatpush1.msra.mxu0 0.0
      %3111 = vmatprep.subr.mxu0 0.0
      %3112 = vmatpush1.msra.mxu0 0.0
      %3113 = vmatprep.subr.mxu0 0.0
      %v3114 = vand.u32 %v2057, 4294901760
      %3115 = vmatpush1.msra.mxu0 %v3114
      %3116 = vmatprep.subr.mxu0 0.0
      %v3117 = vand.u32 %v2054, 4294901760
      %3118 = vmatpush1.msra.mxu0 %v3117
      %3119 = vmatprep.subr.mxu0 0.0
      %v3120 = vand.u32 %v2051, 4294901760
      %3121 = vmatpush1.msra.mxu0 %v3120
      %3122 = vmatprep.subr.mxu0 0.0
      %v3123 = vand.u32 %v2048, 4294901760
      %3124 = vmatpush1.msra.mxu0 %v3123
      %3125 = vmatprep.subr.mxu0 0.0
      %v3126 = vand.u32 %v2045, 4294901760
      %3127 = vmatpush1.msra.mxu0 %v3126
      %3128 = vmatprep.subr.mxu0 0.0
      %v3129 = vand.u32 %v2042, 4294901760
      %3130 = vmatpush1.msra.mxu0 %v3129
      %3131 = vmatprep.subr.mxu0 0.0
      %v3132 = vand.u32 %v2039, 4294901760
      %3133 = vmatpush1.msra.mxu0 %v3132
      %3134 = vmatprep.subr.mxu0 0.0
      %v3135 = vand.u32 %v2036, 4294901760
      %3136 = vmatpush1.msra.mxu0 %v3135
      %3137 = vmatprep.subr.mxu0 0.0
      %v3138 = vand.u32 %v2033, 4294901760
      %3139 = vmatpush1.msra.mxu0 %v3138
      %3140 = vmatprep.subr.mxu0 0.0
      %3141 = vmatpush2.msra.mxu0 0.0
      %3142 = vmatprep.subr.mxu0 0.0
      %3143 = vmatpush2.msra.mxu0 0.0
      %3144 = vmatprep.subr.mxu0 0.0
      %3145 = vmatpush2.msra.mxu0 0.0
      %3146 = vmatprep.subr.mxu0 0.0
      %3147 = vmatpush2.msra.mxu0 0.0
      %3148 = vmatprep.subr.mxu0 0.0
      %3149 = vmatpush2.msra.mxu0 0.0
      %3150 = vmatprep.subr.mxu0 0.0
      %3151 = vmatpush2.msra.mxu0 0.0
      %3152 = vmatprep.subr.mxu0 0.0
      %3153 = vmatpush2.msra.mxu0 0.0
      %3154 = vmatprep.subr.mxu0 0.0
      %3155 = vmatpush2.msra.mxu0 0.0
      %3156 = vmatprep.subr.mxu0 0.0
      %3157 = vmatpush2.msra.mxu0 0.0
      %3158 = vmatprep.subr.mxu0 0.0
      %3159 = vmatpush2.msra.mxu0 0.0
      %3160 = vmatprep.subr.mxu0 0.0
      %3161 = vmatpush2.msra.mxu0 0.0
      %3162 = vmatprep.subr.mxu0 0.0
      %3163 = vmatpush2.msra.mxu0 0.0
      %3164 = vmatprep.subr.mxu0 0.0
      %3165 = vmatpush2.msra.mxu0 0.0
      %3166 = vmatprep.subr.mxu0 0.0
      %3167 = vmatpush2.msra.mxu0 0.0
      %3168 = vmatprep.subr.mxu0 0.0
      %3169 = vmatpush2.msra.mxu0 0.0
      %3170 = vmatprep.subr.mxu0 0.0
      %3171 = vmatpush2.msra.mxu0 0.0
      %3172 = vmatprep.mubr.f32.mxu0 0.0
      %v3173 = vand.u32 %v2059, 4294901760
      %v3174 = vsub.f32 %v2059, %v3173
      %v3175 = vand.u32 %v3174, 4294901760
      %3176 = vmatmul.mubr.f32.gmra.mxu0 %v3175
      %v3177 = vpop.f32.mrf.mxu0
      %v3178 = vadd.f32 %v3089, %v3177
      %v3179 = vpop.f32.mrf.mxu0
      %3180 = vmatprep.mubr.f32.mxu0 0.0
      %v3181 = vand.u32 %v2062, 4294901760
      %v3182 = vsub.f32 %v2062, %v3181
      %v3183 = vand.u32 %v3182, 4294901760
      %3184 = vmatmul.mubr.f32.gmra.mxu0 %v3183
      %v3185 = vpop.f32.mrf.mxu0
      %v3186 = vadd.f32 %v3096, %v3185
      %v3187 = vpop.f32.mrf.mxu0
      %3188 = vdwg.mxu0
      %3189 = vmatprep.subr.mxu0 0.0
      %3190 = vmatpush1.msra.mxu0 0.0
      %3191 = vmatprep.subr.mxu0 0.0
      %3192 = vmatpush1.msra.mxu0 0.0
      %3193 = vmatprep.subr.mxu0 0.0
      %3194 = vmatpush1.msra.mxu0 0.0
      %3195 = vmatprep.subr.mxu0 0.0
      %3196 = vmatpush1.msra.mxu0 0.0
      %3197 = vmatprep.subr.mxu0 0.0
      %3198 = vmatpush1.msra.mxu0 0.0
      %3199 = vmatprep.subr.mxu0 0.0
      %3200 = vmatpush1.msra.mxu0 0.0
      %3201 = vmatprep.subr.mxu0 0.0
      %3202 = vmatpush1.msra.mxu0 0.0
      %3203 = vmatprep.subr.mxu0 0.0
      %v3204 = vand.u32 %v2057, 4294901760
      %v3205 = vsub.f32 %v2057, %v3204
      %v3206 = vand.u32 %v3205, 4294901760
      %3207 = vmatpush1.msra.mxu0 %v3206
      %3208 = vmatprep.subr.mxu0 0.0
      %v3209 = vand.u32 %v2054, 4294901760
      %v3210 = vsub.f32 %v2054, %v3209
      %v3211 = vand.u32 %v3210, 4294901760
      %3212 = vmatpush1.msra.mxu0 %v3211
      %3213 = vmatprep.subr.mxu0 0.0
      %v3214 = vand.u32 %v2051, 4294901760
      %v3215 = vsub.f32 %v2051, %v3214
      %v3216 = vand.u32 %v3215, 4294901760
      %3217 = vmatpush1.msra.mxu0 %v3216
      %3218 = vmatprep.subr.mxu0 0.0
      %v3219 = vand.u32 %v2048, 4294901760
      %v3220 = vsub.f32 %v2048, %v3219
      %v3221 = vand.u32 %v3220, 4294901760
      %3222 = vmatpush1.msra.mxu0 %v3221
      %3223 = vmatprep.subr.mxu0 0.0
      %v3224 = vand.u32 %v2045, 4294901760
      %v3225 = vsub.f32 %v2045, %v3224
      %v3226 = vand.u32 %v3225, 4294901760
      %3227 = vmatpush1.msra.mxu0 %v3226
      %3228 = vmatprep.subr.mxu0 0.0
      %v3229 = vand.u32 %v2042, 4294901760
      %v3230 = vsub.f32 %v2042, %v3229
      %v3231 = vand.u32 %v3230, 4294901760
      %3232 = vmatpush1.msra.mxu0 %v3231
      %3233 = vmatprep.subr.mxu0 0.0
      %v3234 = vand.u32 %v2039, 4294901760
      %v3235 = vsub.f32 %v2039, %v3234
      %v3236 = vand.u32 %v3235, 4294901760
      %3237 = vmatpush1.msra.mxu0 %v3236
      %3238 = vmatprep.subr.mxu0 0.0
      %v3239 = vand.u32 %v2036, 4294901760
      %v3240 = vsub.f32 %v2036, %v3239
      %v3241 = vand.u32 %v3240, 4294901760
      %3242 = vmatpush1.msra.mxu0 %v3241
      %3243 = vmatprep.subr.mxu0 0.0
      %v3244 = vand.u32 %v2033, 4294901760
      %v3245 = vsub.f32 %v2033, %v3244
      %v3246 = vand.u32 %v3245, 4294901760
      %3247 = vmatpush1.msra.mxu0 %v3246
      %3248 = vmatprep.subr.mxu0 0.0
      %3249 = vmatpush2.msra.mxu0 0.0
      %3250 = vmatprep.subr.mxu0 0.0
      %3251 = vmatpush2.msra.mxu0 0.0
      %3252 = vmatprep.subr.mxu0 0.0
      %3253 = vmatpush2.msra.mxu0 0.0
      %3254 = vmatprep.subr.mxu0 0.0
      %3255 = vmatpush2.msra.mxu0 0.0
      %3256 = vmatprep.subr.mxu0 0.0
      %3257 = vmatpush2.msra.mxu0 0.0
      %3258 = vmatprep.subr.mxu0 0.0
      %3259 = vmatpush2.msra.mxu0 0.0
      %3260 = vmatprep.subr.mxu0 0.0
      %3261 = vmatpush2.msra.mxu0 0.0
      %3262 = vmatprep.subr.mxu0 0.0
      %3263 = vmatpush2.msra.mxu0 0.0
      %3264 = vmatprep.subr.mxu0 0.0
      %3265 = vmatpush2.msra.mxu0 0.0
      %3266 = vmatprep.subr.mxu0 0.0
      %3267 = vmatpush2.msra.mxu0 0.0
      %3268 = vmatprep.subr.mxu0 0.0
      %3269 = vmatpush2.msra.mxu0 0.0
      %3270 = vmatprep.subr.mxu0 0.0
      %3271 = vmatpush2.msra.mxu0 0.0
      %3272 = vmatprep.subr.mxu0 0.0
      %3273 = vmatpush2.msra.mxu0 0.0
      %3274 = vmatprep.subr.mxu0 0.0
      %3275 = vmatpush2.msra.mxu0 0.0
      %3276 = vmatprep.subr.mxu0 0.0
      %3277 = vmatpush2.msra.mxu0 0.0
      %3278 = vmatprep.subr.mxu0 0.0
      %3279 = vmatpush2.msra.mxu0 0.0
      %3280 = vmatprep.mubr.f32.mxu0 0.0
      %v3281 = vand.u32 %v2059, 4294901760
      %3282 = vmatmul.mubr.f32.gmra.mxu0 %v3281
      %v3283 = vpop.f32.mrf.mxu0
      %v3284 = vadd.f32 %v3178, %v3283
      %v3285 = vpop.f32.mrf.mxu0
      %3286 = vmatprep.mubr.f32.mxu0 0.0
      %v3287 = vand.u32 %v2062, 4294901760
      %3288 = vmatmul.mubr.f32.gmra.mxu0 %v3287
      %v3289 = vpop.f32.mrf.mxu0
      %v3290 = vadd.f32 %v3186, %v3289
      %v3291 = vpop.f32.mrf.mxu0
      %3292 = vdwg.mxu0
      %3293 = vmatprep.subr.mxu0 0.0
      %3294 = vmatpush1.msra.mxu0 0.0
      %3295 = vmatprep.subr.mxu0 0.0
      %3296 = vmatpush1.msra.mxu0 0.0
      %3297 = vmatprep.subr.mxu0 0.0
      %3298 = vmatpush1.msra.mxu0 0.0
      %3299 = vmatprep.subr.mxu0 0.0
      %3300 = vmatpush1.msra.mxu0 0.0
      %3301 = vmatprep.subr.mxu0 0.0
      %3302 = vmatpush1.msra.mxu0 0.0
      %3303 = vmatprep.subr.mxu0 0.0
      %3304 = vmatpush1.msra.mxu0 0.0
      %3305 = vmatprep.subr.mxu0 0.0
      %3306 = vmatpush1.msra.mxu0 0.0
      %3307 = vmatprep.subr.mxu0 0.0
      %v3308 = vand.u32 %v2057, 4294901760
      %3309 = vmatpush1.msra.mxu0 %v3308
      %3310 = vmatprep.subr.mxu0 0.0
      %v3311 = vand.u32 %v2054, 4294901760
      %3312 = vmatpush1.msra.mxu0 %v3311
      %3313 = vmatprep.subr.mxu0 0.0
      %v3314 = vand.u32 %v2051, 4294901760
      %3315 = vmatpush1.msra.mxu0 %v3314
      %3316 = vmatprep.subr.mxu0 0.0
      %v3317 = vand.u32 %v2048, 4294901760
      %3318 = vmatpush1.msra.mxu0 %v3317
      %3319 = vmatprep.subr.mxu0 0.0
      %v3320 = vand.u32 %v2045, 4294901760
      %3321 = vmatpush1.msra.mxu0 %v3320
      %3322 = vmatprep.subr.mxu0 0.0
      %v3323 = vand.u32 %v2042, 4294901760
      %3324 = vmatpush1.msra.mxu0 %v3323
      %3325 = vmatprep.subr.mxu0 0.0
      %v3326 = vand.u32 %v2039, 4294901760
      %3327 = vmatpush1.msra.mxu0 %v3326
      %3328 = vmatprep.subr.mxu0 0.0
      %v3329 = vand.u32 %v2036, 4294901760
      %3330 = vmatpush1.msra.mxu0 %v3329
      %3331 = vmatprep.subr.mxu0 0.0
      %v3332 = vand.u32 %v2033, 4294901760
      %3333 = vmatpush1.msra.mxu0 %v3332
      %3334 = vmatprep.subr.mxu0 0.0
      %3335 = vmatpush2.msra.mxu0 0.0
      %3336 = vmatprep.subr.mxu0 0.0
      %3337 = vmatpush2.msra.mxu0 0.0
      %3338 = vmatprep.subr.mxu0 0.0
      %3339 = vmatpush2.msra.mxu0 0.0
      %3340 = vmatprep.subr.mxu0 0.0
      %3341 = vmatpush2.msra.mxu0 0.0
      %3342 = vmatprep.subr.mxu0 0.0
      %3343 = vmatpush2.msra.mxu0 0.0
      %3344 = vmatprep.subr.mxu0 0.0
      %3345 = vmatpush2.msra.mxu0 0.0
      %3346 = vmatprep.subr.mxu0 0.0
      %3347 = vmatpush2.msra.mxu0 0.0
      %3348 = vmatprep.subr.mxu0 0.0
      %3349 = vmatpush2.msra.mxu0 0.0
      %3350 = vmatprep.subr.mxu0 0.0
      %3351 = vmatpush2.msra.mxu0 0.0
      %3352 = vmatprep.subr.mxu0 0.0
      %3353 = vmatpush2.msra.mxu0 0.0
      %3354 = vmatprep.subr.mxu0 0.0
      %3355 = vmatpush2.msra.mxu0 0.0
      %3356 = vmatprep.subr.mxu0 0.0
      %3357 = vmatpush2.msra.mxu0 0.0
      %3358 = vmatprep.subr.mxu0 0.0
      %3359 = vmatpush2.msra.mxu0 0.0
      %3360 = vmatprep.subr.mxu0 0.0
      %3361 = vmatpush2.msra.mxu0 0.0
      %3362 = vmatprep.subr.mxu0 0.0
      %3363 = vmatpush2.msra.mxu0 0.0
      %3364 = vmatprep.subr.mxu0 0.0
      %3365 = vmatpush2.msra.mxu0 0.0
      %3366 = vmatprep.mubr.f32.mxu0 0.0
      %v3367 = vand.u32 %v2059, 4294901760
      %3368 = vmatmul.mubr.f32.gmra.mxu0 %v3367
      %v3369 = vpop.f32.mrf.mxu0
      %v3370 = vadd.f32 %v3284, %v3369
      %v3371 = vpop.f32.mrf.mxu0
      %3372 = vmatprep.mubr.f32.mxu0 0.0
      %v3373 = vand.u32 %v2062, 4294901760
      %3374 = vmatmul.mubr.f32.gmra.mxu0 %v3373
      %v3375 = vpop.f32.mrf.mxu0
      %v3376 = vadd.f32 %v3290, %v3375
      %v3377 = vpop.f32.mrf.mxu0
      %3378 = vdwg.mxu0
      %v3379 = vsel %vm1625, %v2775, 0.0
      %v3380 = vsel %vm1626, %v2777, 0.0
      %v3381 = vsel %vm1627, %v3370, 0.0
      %v3382 = vsel %vm1625, %v2782, 0.0
      %v3383 = vsel %vm1626, %v2784, 0.0
      %v3384 = vsel %vm1627, %v3376, 0.0
      %v3385 = vadd.f32 %v3379, %v3380
      %v3386 = vadd.f32 %v3385, %v3381
      %3387 = vadd.xlane.f32.xlu0 %v3386
      %v3388 = vpop.xlane.xlu0 %3387
      %v3389 = vadd.f32 %v3382, %v3383
      %v3390 = vadd.f32 %v3389, %v3384
      %3391 = vadd.xlane.f32.xlu0 %v3390
      %v3392 = vpop.xlane.xlu0 %3391
      %v3393 = vmul.f32 %v3388, 0.00390625
      %v3394 = vmul.f32 %v3392, 0.00390625
      %v3395 = vmul.f32 %v3379, %v3379
      %v3396 = vmul.f32 %v3380, %v3380
      %v3397 = vmul.f32 %v3381, %v3381
      %v3398 = vmul.f32 %v3382, %v3382
      %v3399 = vmul.f32 %v3383, %v3383
      %v3400 = vmul.f32 %v3384, %v3384
      %v3401 = vadd.f32 %v3395, %v3396
      %v3402 = vadd.f32 %v3401, %v3397
      %3403 = vadd.xlane.f32.xlu0 %v3402
      %v3404 = vpop.xlane.xlu0 %3403
      %v3405 = vadd.f32 %v3398, %v3399
      %v3406 = vadd.f32 %v3405, %v3400
      %3407 = vadd.xlane.f32.xlu0 %v3406
      %v3408 = vpop.xlane.xlu0 %3407
      %v3409 = vmul.f32 %v3404, 0.00390625
      %v3410 = vmul.f32 %v3408, 0.00390625
      %v3411 = vmul.f32 %v3393, %v3393
      %v3412 = vmul.f32 %v3394, %v3394
      %v3413 = vsub.f32 %v3409, %v3411
      %v3414 = vsub.f32 %v3410, %v3412
      %v3415 = vsub.f32 %v2775, %v3393
      %v3416 = vsub.f32 %v2777, %v3393
      %v3417 = vsub.f32 %v3370, %v3393
      %v3418 = vsub.f32 %v2782, %v3394
      %v3419 = vsub.f32 %v2784, %v3394
      %v3420 = vsub.f32 %v3376, %v3394
      %v3421 = vadd.f32 %v3413, 1e-05
      %v3422 = vadd.f32 %v3414, 1e-05
      %v3423 = vrsqrt.pop %v3421
      %v3424 = vrsqrt.pop %v3422
      %v3425 = vmul.f32 %v3415, %v3423
      %v3426 = vmul.f32 %v3416, %v3423
      %v3427 = vmul.f32 %v3417, %v3423
      %v3428 = vmul.f32 %v3418, %v3424
      %v3429 = vmul.f32 %v3419, %v3424
      %v3430 = vmul.f32 %v3420, %v3424
      %v3431 = vmul.f32 %v3425, 0.5
      %v3432 = vmul.f32 %v3426, 0.5
      %v3433 = vmul.f32 %v3427, 0.5
      %v3434 = vmul.f32 %v3428, 0.5
      %v3435 = vmul.f32 %v3429, 0.5
      %v3436 = vmul.f32 %v3430, 0.5
      %v3437 = vmul.f32 %v3425, 0.70710677
      %v3438 = vmul.f32 %v3426, 0.70710677
      %v3439 = vmul.f32 %v3427, 0.70710677
      %v3440 = vmul.f32 %v3428, 0.70710677
      %v3441 = vmul.f32 %v3429, 0.70710677
      %v3442 = vmul.f32 %v3430, 0.70710677
      %v3443 = vand.u32 2147483647, %v3437
      %v3444 = vand.u32 2147483647, %v3438
      %v3445 = vand.u32 2147483647, %v3439
      %v3446 = vand.u32 2147483647, %v3440
      %v3447 = vand.u32 2147483647, %v3441
      %v3448 = vand.u32 2147483647, %v3442
      %v3449 = vmul.f32 %v3443, 0.3275911
      %v3450 = vmul.f32 %v3444, 0.3275911
      %v3451 = vmul.f32 %v3445, 0.3275911
      %v3452 = vmul.f32 %v3446, 0.3275911
      %v3453 = vmul.f32 %v3447, 0.3275911
      %v3454 = vmul.f32 %v3448, 0.3275911
      %v3455 = vadd.f32 %v3449, 1.0
      %v3456 = vadd.f32 %v3450, 1.0
      %v3457 = vadd.f32 %v3451, 1.0
      %v3458 = vadd.f32 %v3452, 1.0
      %v3459 = vadd.f32 %v3453, 1.0
      %v3460 = vadd.f32 %v3454, 1.0
      %v3461 = vrcp.pop %v3455
      %v3462 = vmul.f32 1.0, %v3461
      %v3463 = vrcp.pop %v3456
      %v3464 = vmul.f32 1.0, %v3463
      %v3465 = vrcp.pop %v3457
      %v3466 = vmul.f32 1.0, %v3465
      %v3467 = vrcp.pop %v3458
      %v3468 = vmul.f32 1.0, %v3467
      %v3469 = vrcp.pop %v3459
      %v3470 = vmul.f32 1.0, %v3469
      %v3471 = vrcp.pop %v3460
      %v3472 = vmul.f32 1.0, %v3471
      %v3473 = vmul.f32 %v3462, 1.0614054
      %v3474 = vmul.f32 %v3464, 1.0614054
      %v3475 = vmul.f32 %v3466, 1.0614054
      %v3476 = vmul.f32 %v3468, 1.0614054
      %v3477 = vmul.f32 %v3470, 1.0614054
      %v3478 = vmul.f32 %v3472, 1.0614054
      %v3479 = vadd.f32 %v3473, -1.4531521
      %v3480 = vadd.f32 %v3474, -1.4531521
      %v3481 = vadd.f32 %v3475, -1.4531521
      %v3482 = vadd.f32 %v3476, -1.4531521
      %v3483 = vadd.f32 %v3477, -1.4531521
      %v3484 = vadd.f32 %v3478, -1.4531521
      %v3485 = vmul.f32 %v3462, %v3479
      %v3486 = vmul.f32 %v3464, %v3480
      %v3487 = vmul.f32 %v3466, %v3481
      %v3488 = vmul.f32 %v3468, %v3482
      %v3489 = vmul.f32 %v3470, %v3483
      %v3490 = vmul.f32 %v3472, %v3484
      %v3491 = vadd.f32 %v3485, 1.4214138
      %v3492 = vadd.f32 %v3486, 1.4214138
      %v3493 = vadd.f32 %v3487, 1.4214138
      %v3494 = vadd.f32 %v3488, 1.4214138
      %v3495 = vadd.f32 %v3489, 1.4214138
      %v3496 = vadd.f32 %v3490, 1.4214138
      %v3497 = vmul.f32 %v3462, %v3491
      %v3498 = vmul.f32 %v3464, %v3492
      %v3499 = vmul.f32 %v3466, %v3493
      %v3500 = vmul.f32 %v3468, %v3494
      %v3501 = vmul.f32 %v3470, %v3495
      %v3502 = vmul.f32 %v3472, %v3496
      %v3503 = vadd.f32 %v3497, -0.28449672
      %v3504 = vadd.f32 %v3498, -0.28449672
      %v3505 = vadd.f32 %v3499, -0.28449672
      %v3506 = vadd.f32 %v3500, -0.28449672
      %v3507 = vadd.f32 %v3501, -0.28449672
      %v3508 = vadd.f32 %v3502, -0.28449672
      %v3509 = vmul.f32 %v3462, %v3503
      %v3510 = vmul.f32 %v3464, %v3504
      %v3511 = vmul.f32 %v3466, %v3505
      %v3512 = vmul.f32 %v3468, %v3506
      %v3513 = vmul.f32 %v3470, %v3507
      %v3514 = vmul.f32 %v3472, %v3508
      %v3515 = vadd.f32 %v3509, 0.2548296
      %v3516 = vadd.f32 %v3510, 0.2548296
      %v3517 = vadd.f32 %v3511, 0.2548296
      %v3518 = vadd.f32 %v3512, 0.2548296
      %v3519 = vadd.f32 %v3513, 0.2548296
      %v3520 = vadd.f32 %v3514, 0.2548296
      %v3521 = vmul.f32 %v3462, %v3515
      %v3522 = vmul.f32 %v3464, %v3516
      %v3523 = vmul.f32 %v3466, %v3517
      %v3524 = vmul.f32 %v3468, %v3518
      %v3525 = vmul.f32 %v3470, %v3519
      %v3526 = vmul.f32 %v3472, %v3520
      %v3527 = vsub.f32 0.0, %v3443
      %v3528 = vsub.f32 0.0, %v3444
      %v3529 = vsub.f32 0.0, %v3445
      %v3530 = vsub.f32 0.0, %v3446
      %v3531 = vsub.f32 0.0, %v3447
      %v3532 = vsub.f32 0.0, %v3448
      %v3533 = vmul.f32 %v3527, %v3443
      %v3534 = vmul.f32 %v3528, %v3444
      %v3535 = vmul.f32 %v3529, %v3445
      %v3536 = vmul.f32 %v3530, %v3446
      %v3537 = vmul.f32 %v3531, %v3447
      %v3538 = vmul.f32 %v3532, %v3448
      %v3539 = vmul.f32 %v3533, 1.442695
      %v3540 = vpow.pop %v3539
      %v3541 = vmul.f32 %v3534, 1.442695
      %v3542 = vpow.pop %v3541
      %v3543 = vmul.f32 %v3535, 1.442695
      %v3544 = vpow.pop %v3543
      %v3545 = vmul.f32 %v3536, 1.442695
      %v3546 = vpow.pop %v3545
      %v3547 = vmul.f32 %v3537, 1.442695
      %v3548 = vpow.pop %v3547
      %v3549 = vmul.f32 %v3538, 1.442695
      %v3550 = vpow.pop %v3549
      %v3551 = vmul.f32 %v3521, %v3540
      %v3552 = vmul.f32 %v3522, %v3542
      %v3553 = vmul.f32 %v3523, %v3544
      %v3554 = vmul.f32 %v3524, %v3546
      %v3555 = vmul.f32 %v3525, %v3548
      %v3556 = vmul.f32 %v3526, %v3550
      %v3557 = vsub.f32 1.0, %v3551
      %v3558 = vsub.f32 1.0, %v3552
      %v3559 = vsub.f32 1.0, %v3553
      %v3560 = vsub.f32 1.0, %v3554
      %v3561 = vsub.f32 1.0, %v3555
      %v3562 = vsub.f32 1.0, %v3556
      %vm3563 = vcmp.ge.f32.partialorder %v3437, 0.0
      %vm3564 = vcmp.ge.f32.partialorder %v3438, 0.0
      %vm3565 = vcmp.ge.f32.partialorder %v3439, 0.0
      %vm3566 = vcmp.ge.f32.partialorder %v3440, 0.0
      %vm3567 = vcmp.ge.f32.partialorder %v3441, 0.0
      %vm3568 = vcmp.ge.f32.partialorder %v3442, 0.0
      %v3569 = vsub.f32 0.0, %v3557
      %v3570 = vsub.f32 0.0, %v3558
      %v3571 = vsub.f32 0.0, %v3559
      %v3572 = vsub.f32 0.0, %v3560
      %v3573 = vsub.f32 0.0, %v3561
      %v3574 = vsub.f32 0.0, %v3562
      %v3575 = vsel %vm3563, %v3557, %v3569
      %v3576 = vsel %vm3564, %v3558, %v3570
      %v3577 = vsel %vm3565, %v3559, %v3571
      %v3578 = vsel %vm3566, %v3560, %v3572
      %v3579 = vsel %vm3567, %v3561, %v3573
      %v3580 = vsel %vm3568, %v3562, %v3574
      %v3581 = vadd.f32 %v3575, 1.0
      %v3582 = vadd.f32 %v3576, 1.0
      %v3583 = vadd.f32 %v3577, 1.0
      %v3584 = vadd.f32 %v3578, 1.0
      %v3585 = vadd.f32 %v3579, 1.0
      %v3586 = vadd.f32 %v3580, 1.0
      %v3587 = vmul.f32 %v3431, %v3581
      %v3588 = vmul.f32 %v3432, %v3582
      %v3589 = vmul.f32 %v3433, %v3583
      %v3590 = vmul.f32 %v3434, %v3584
      %v3591 = vmul.f32 %v3435, %v3585
      %v3592 = vmul.f32 %v3436, %v3586
      %3593 = vrot.lane.b32.xlu0 %v3587, 1
      %v3594 = vpop.permute.xlu0 %3593
      %3595 = vrot.lane.b32.xlu0 %v3590, 1
      %v3596 = vpop.permute.xlu0 %3595
      %3597 = vrot.lane.b32.xlu0 %v3588, 1
      %v3598 = vpop.permute.xlu0 %3597
      %3599 = vrot.lane.b32.xlu0 %v3591, 1
      %v3600 = vpop.permute.xlu0 %3599
      %3601 = vrot.lane.b32.xlu0 %v3589, 1
      %v3602 = vpop.permute.xlu0 %3601
      %3603 = vrot.lane.b32.xlu0 %v3592, 1
      %v3604 = vpop.permute.xlu0 %3603
      %v3605 = vsel %vm1741, %v3598, %v3602
      %v3606 = vsel %vm1741, %v3600, %v3604
      %v3607 = vsel %vm1741, %v3594, %v3598
      %v3608 = vsel %vm1741, %v3596, %v3600
      %v3609 = vsel %vm1741, %v3602, %v3594
      %v3610 = vsel %vm1741, %v3604, %v3596
      %3611 = vrot.lane.b32.xlu0 %v3587, 2
      %v3612 = vpop.permute.xlu0 %3611
      %3613 = vrot.lane.b32.xlu0 %v3590, 2
      %v3614 = vpop.permute.xlu0 %3613
      %3615 = vrot.lane.b32.xlu0 %v3588, 2
      %v3616 = vpop.permute.xlu0 %3615
      %3617 = vrot.lane.b32.xlu0 %v3591, 2
      %v3618 = vpop.permute.xlu0 %3617
      %3619 = vrot.lane.b32.xlu0 %v3589, 2
      %v3620 = vpop.permute.xlu0 %3619
      %3621 = vrot.lane.b32.xlu0 %v3592, 2
      %v3622 = vpop.permute.xlu0 %3621
      %v3623 = vsel %vm1751, %v3616, %v3620
      %v3624 = vsel %vm1751, %v3618, %v3622
      %v3625 = vsel %vm1751, %v3612, %v3616
      %v3626 = vsel %vm1751, %v3614, %v3618
      %v3627 = vsel %vm1751, %v3620, %v3612
      %v3628 = vsel %vm1751, %v3622, %v3614
      %v3629 = vsel %vm1782, %v3627, %v3609
      %v3630 = vsel %vm1783, %v3625, %v3607
      %v3631 = vsel %vm1784, %v3623, %v3605
      %v3632 = vsel %vm1782, %v3628, %v3610
      %v3633 = vsel %vm1783, %v3626, %v3608
      %v3634 = vsel %vm1784, %v3624, %v3606
      %v3635 = vsel %vm1813, %v3587, %v3629
      %v3636 = vsel %vm1814, %v3588, %v3630
      %v3637 = vsel %vm1815, %v3589, %v3631
      %v3638 = vsel %vm1813, %v3590, %v3632
      %v3639 = vsel %vm1814, %v3591, %v3633
      %v3640 = vsel %vm1815, %v3592, %v3634
      %3641 = vrot.lane.b32.xlu0 %v3635, 18
      %v3642 = vpop.permute.xlu0 %3641
      %3643 = vrot.lane.b32.xlu0 %v3638, 18
      %v3644 = vpop.permute.xlu0 %3643
      %3645 = vrot.lane.b32.xlu0 %v3636, 18
      %v3646 = vpop.permute.xlu0 %3645
      %3647 = vrot.lane.b32.xlu0 %v3639, 18
      %v3648 = vpop.permute.xlu0 %3647
      %3649 = vrot.lane.b32.xlu0 %v3637, 18
      %v3650 = vpop.permute.xlu0 %3649
      %3651 = vrot.lane.b32.xlu0 %v3640, 18
      %v3652 = vpop.permute.xlu0 %3651
      %v3653 = vsel %vm1825, %v3646, %v3650
      %v3654 = vsel %vm1825, %v3648, %v3652
      %v3655 = vsel %vm1825, %v3642, %v3646
      %v3656 = vsel %vm1825, %v3644, %v3648
      %v3657 = vsel %vm1825, %v3650, %v3642
      %v3658 = vsel %vm1825, %v3652, %v3644
      %3659 = vrot.lane.b32.xlu0 %v3635, 36
      %v3660 = vpop.permute.xlu0 %3659
      %3661 = vrot.lane.b32.xlu0 %v3638, 36
      %v3662 = vpop.permute.xlu0 %3661
      %3663 = vrot.lane.b32.xlu0 %v3636, 36
      %v3664 = vpop.permute.xlu0 %3663
      %3665 = vrot.lane.b32.xlu0 %v3639, 36
      %v3666 = vpop.permute.xlu0 %3665
      %3667 = vrot.lane.b32.xlu0 %v3637, 36
      %v3668 = vpop.permute.xlu0 %3667
      %3669 = vrot.lane.b32.xlu0 %v3640, 36
      %v3670 = vpop.permute.xlu0 %3669
      %v3671 = vsel %vm1835, %v3664, %v3668
      %v3672 = vsel %vm1835, %v3666, %v3670
      %v3673 = vsel %vm1835, %v3660, %v3664
      %v3674 = vsel %vm1835, %v3662, %v3666
      %v3675 = vsel %vm1835, %v3668, %v3660
      %v3676 = vsel %vm1835, %v3670, %v3662
      %v3677 = vsel %vm1863, %v3675, %v3657
      %v3678 = vsel %vm1864, %v3673, %v3655
      %v3679 = vsel %vm1865, %v3671, %v3653
      %v3680 = vsel %vm1863, %v3676, %v3658
      %v3681 = vsel %vm1864, %v3674, %v3656
      %v3682 = vsel %vm1865, %v3672, %v3654
      %v3683 = vsel %vm1893, %v3635, %v3677
      %v3684 = vsel %vm1894, %v3636, %v3678
      %v3685 = vsel %vm1895, %v3637, %v3679
      %v3686 = vsel %vm1893, %v3638, %v3680
      %v3687 = vsel %vm1894, %v3639, %v3681
      %v3688 = vsel %vm1895, %v3640, %v3682
      %v3689 = vsel %vm1924, %v3683, 0.0
      %v3690 = vsel %vm1925, %v3684, 0.0
      %v3691 = vsel %vm1926, %v3685, 0.0
      %v3692 = vsel %vm1924, %v3686, 0.0
      %v3693 = vsel %vm1925, %v3687, 0.0
      %v3694 = vsel %vm1926, %v3688, 0.0
      %v3695 = vld [vmem:[%s4] sm:$0xff]
      %v3696 = vld [vmem:[%s4 + $0x8] sm:$0xff]
      %v3697 = vld [vmem:[%s4 + $0x10] sm:$0xff]
      %v3698 = vld [vmem:[%s4 + $0x18] sm:$0xff]
      %v3699 = vld [vmem:[%s4 + $0x20] sm:$0xff]
      %v3700 = vld [vmem:[%s4 + $0x28] sm:$0xff]
      %v3701 = vld [vmem:[%s4 + $0x30] sm:$0xff]
      %v3702 = vld [vmem:[%s4 + $0x38] sm:$0xff]
      %3703 = vst [vmem:[#allocation2] sm:$0xff] %v3689
      %3704 = vst [vmem:[#allocation2 + $0x8] sm:$0xff] %v3690
      %3705 = vst [vmem:[#allocation2 + $0x10] sm:$0xff] %v3691
      %3706 = vst [vmem:[#allocation2 + $0x18] sm:$0xff] %v3692
      %3707 = vst [vmem:[#allocation2 + $0x20] sm:$0xff] %v3693
      %3708 = vst [vmem:[#allocation2 + $0x28] sm:$0xff] %v3694
      %3709 = vrot.lane.b32.xlu0 %v3689, 127
      %v3710 = vpop.permute.xlu0 %3709
      %3711 = vrot.lane.b32.xlu0 %v3692, 127
      %v3712 = vpop.permute.xlu0 %3711
      %3713 = vrot.lane.b32.xlu0 %v3690, 127
      %v3714 = vpop.permute.xlu0 %3713
      %3715 = vrot.lane.b32.xlu0 %v3693, 127
      %v3716 = vpop.permute.xlu0 %3715
      %3717 = vrot.lane.b32.xlu0 %v3691, 127
      %v3718 = vpop.permute.xlu0 %3717
      %3719 = vrot.lane.b32.xlu0 %v3694, 127
      %v3720 = vpop.permute.xlu0 %3719
      %v3721 = vsel %vm248, %v3714, %v3718
      %v3722 = vsel %vm248, %v3716, %v3720
      %v3723 = vsel %vm248, %v3710, %v3714
      %v3724 = vsel %vm248, %v3712, %v3716
      %v3725 = vsel %vm248, %v3718, %v3710
      %v3726 = vsel %vm248, %v3720, %v3712
      %3727 = vst [vmem:[#allocation2 + $0x30] sm:$0xff] %v3723
      %3728 = vst [vmem:[#allocation2 + $0x38] sm:$0xff] %v3721
      %3729 = vst [vmem:[#allocation2 + $0x40] sm:$0xff] %v3725
      %3730 = vst [vmem:[#allocation2 + $0x48] sm:$0xff] %v3724
      %3731 = vst [vmem:[#allocation2 + $0x50] sm:$0xff] %v3722
      %3732 = vst [vmem:[#allocation2 + $0x58] sm:$0xff] %v3726
      %3733 = vrot.lane.b32.xlu0 %v3689, 126
      %v3734 = vpop.permute.xlu0 %3733
      %3735 = vrot.lane.b32.xlu0 %v3692, 126
      %v3736 = vpop.permute.xlu0 %3735
      %3737 = vrot.lane.b32.xlu0 %v3690, 126
      %v3738 = vpop.permute.xlu0 %3737
      %3739 = vrot.lane.b32.xlu0 %v3693, 126
      %v3740 = vpop.permute.xlu0 %3739
      %3741 = vrot.lane.b32.xlu0 %v3691, 126
      %v3742 = vpop.permute.xlu0 %3741
      %3743 = vrot.lane.b32.xlu0 %v3694, 126
      %v3744 = vpop.permute.xlu0 %3743
      %v3745 = vsel %vm261, %v3738, %v3742
      %v3746 = vsel %vm261, %v3740, %v3744
      %v3747 = vsel %vm261, %v3734, %v3738
      %v3748 = vsel %vm261, %v3736, %v3740
      %v3749 = vsel %vm261, %v3742, %v3734
      %v3750 = vsel %vm261, %v3744, %v3736
      %3751 = vst [vmem:[#allocation2 + $0x60] sm:$0xff] %v3747
      %3752 = vst [vmem:[#allocation2 + $0x68] sm:$0xff] %v3745
      %3753 = vst [vmem:[#allocation2 + $0x70] sm:$0xff] %v3749
      %3754 = vst [vmem:[#allocation2 + $0x78] sm:$0xff] %v3748
      %3755 = vst [vmem:[#allocation2 + $0x80] sm:$0xff] %v3746
      %3756 = vst [vmem:[#allocation2 + $0x88] sm:$0xff] %v3750
      %3757 = vrot.lane.b32.xlu0 %v3689, 110
      %v3758 = vpop.permute.xlu0 %3757
      %3759 = vrot.lane.b32.xlu0 %v3692, 110
      %v3760 = vpop.permute.xlu0 %3759
      %3761 = vrot.lane.b32.xlu0 %v3690, 110
      %v3762 = vpop.permute.xlu0 %3761
      %3763 = vrot.lane.b32.xlu0 %v3693, 110
      %v3764 = vpop.permute.xlu0 %3763
      %3765 = vrot.lane.b32.xlu0 %v3691, 110
      %v3766 = vpop.permute.xlu0 %3765
      %3767 = vrot.lane.b32.xlu0 %v3694, 110
      %v3768 = vpop.permute.xlu0 %3767
      %v3769 = vsel %vm274, %v3762, %v3766
      %v3770 = vsel %vm274, %v3764, %v3768
      %v3771 = vsel %vm274, %v3758, %v3762
      %v3772 = vsel %vm274, %v3760, %v3764
      %v3773 = vsel %vm274, %v3766, %v3758
      %v3774 = vsel %vm274, %v3768, %v3760
      %3775 = vst [vmem:[#allocation2 + $0x90] sm:$0xff] %v3771
      %3776 = vst [vmem:[#allocation2 + $0x98] sm:$0xff] %v3769
      %3777 = vst [vmem:[#allocation2 + $0xa0] sm:$0xff] %v3773
      %3778 = vst [vmem:[#allocation2 + $0xa8] sm:$0xff] %v3772
      %3779 = vst [vmem:[#allocation2 + $0xb0] sm:$0xff] %v3770
      %3780 = vst [vmem:[#allocation2 + $0xb8] sm:$0xff] %v3774
      %3781 = vrot.lane.b32.xlu0 %v3689, 109
      %v3782 = vpop.permute.xlu0 %3781
      %3783 = vrot.lane.b32.xlu0 %v3692, 109
      %v3784 = vpop.permute.xlu0 %3783
      %3785 = vrot.lane.b32.xlu0 %v3690, 109
      %v3786 = vpop.permute.xlu0 %3785
      %3787 = vrot.lane.b32.xlu0 %v3693, 109
      %v3788 = vpop.permute.xlu0 %3787
      %3789 = vrot.lane.b32.xlu0 %v3691, 109
      %v3790 = vpop.permute.xlu0 %3789
      %3791 = vrot.lane.b32.xlu0 %v3694, 109
      %v3792 = vpop.permute.xlu0 %3791
      %v3793 = vsel %vm287, %v3786, %v3790
      %v3794 = vsel %vm287, %v3788, %v3792
      %v3795 = vsel %vm287, %v3782, %v3786
      %v3796 = vsel %vm287, %v3784, %v3788
      %v3797 = vsel %vm287, %v3790, %v3782
      %v3798 = vsel %vm287, %v3792, %v3784
      %3799 = vst [vmem:[#allocation2 + $0xc0] sm:$0xff] %v3795
      %3800 = vst [vmem:[#allocation2 + $0xc8] sm:$0xff] %v3793
      %3801 = vst [vmem:[#allocation2 + $0xd0] sm:$0xff] %v3797
      %3802 = vst [vmem:[#allocation2 + $0xd8] sm:$0xff] %v3796
      %3803 = vst [vmem:[#allocation2 + $0xe0] sm:$0xff] %v3794
      %3804 = vst [vmem:[#allocation2 + $0xe8] sm:$0xff] %v3798
      %3805 = vrot.lane.b32.xlu0 %v3689, 108
      %v3806 = vpop.permute.xlu0 %3805
      %3807 = vrot.lane.b32.xlu0 %v3692, 108
      %v3808 = vpop.permute.xlu0 %3807
      %3809 = vrot.lane.b32.xlu0 %v3690, 108
      %v3810 = vpop.permute.xlu0 %3809
      %3811 = vrot.lane.b32.xlu0 %v3693, 108
      %v3812 = vpop.permute.xlu0 %3811
      %3813 = vrot.lane.b32.xlu0 %v3691, 108
      %v3814 = vpop.permute.xlu0 %3813
      %3815 = vrot.lane.b32.xlu0 %v3694, 108
      %v3816 = vpop.permute.xlu0 %3815
      %v3817 = vsel %vm300, %v3810, %v3814
      %v3818 = vsel %vm300, %v3812, %v3816
      %v3819 = vsel %vm300, %v3806, %v3810
      %v3820 = vsel %vm300, %v3808, %v3812
      %v3821 = vsel %vm300, %v3814, %v3806
      %v3822 = vsel %vm300, %v3816, %v3808
      %3823 = vst [vmem:[#allocation2 + $0xf0] sm:$0xff] %v3819
      %3824 = vst [vmem:[#allocation2 + $0xf8] sm:$0xff] %v3817
      %3825 = vst [vmem:[#allocation2 + $0x100] sm:$0xff] %v3821
      %3826 = vst [vmem:[#allocation2 + $0x108] sm:$0xff] %v3820
      %3827 = vst [vmem:[#allocation2 + $0x110] sm:$0xff] %v3818
      %3828 = vst [vmem:[#allocation2 + $0x118] sm:$0xff] %v3822
      %3829 = vrot.lane.b32.xlu0 %v3689, 92
      %v3830 = vpop.permute.xlu0 %3829
      %3831 = vrot.lane.b32.xlu0 %v3692, 92
      %v3832 = vpop.permute.xlu0 %3831
      %3833 = vrot.lane.b32.xlu0 %v3690, 92
      %v3834 = vpop.permute.xlu0 %3833
      %3835 = vrot.lane.b32.xlu0 %v3693, 92
      %v3836 = vpop.permute.xlu0 %3835
      %3837 = vrot.lane.b32.xlu0 %v3691, 92
      %v3838 = vpop.permute.xlu0 %3837
      %3839 = vrot.lane.b32.xlu0 %v3694, 92
      %v3840 = vpop.permute.xlu0 %3839
      %v3841 = vsel %vm313, %v3834, %v3838
      %v3842 = vsel %vm313, %v3836, %v3840
      %v3843 = vsel %vm313, %v3830, %v3834
      %v3844 = vsel %vm313, %v3832, %v3836
      %v3845 = vsel %vm313, %v3838, %v3830
      %v3846 = vsel %vm313, %v3840, %v3832
      %3847 = vst [vmem:[#allocation2 + $0x120] sm:$0xff] %v3843
      %3848 = vst [vmem:[#allocation2 + $0x128] sm:$0xff] %v3841
      %3849 = vst [vmem:[#allocation2 + $0x130] sm:$0xff] %v3845
      %3850 = vst [vmem:[#allocation2 + $0x138] sm:$0xff] %v3844
      %3851 = vst [vmem:[#allocation2 + $0x140] sm:$0xff] %v3842
      %3852 = vst [vmem:[#allocation2 + $0x148] sm:$0xff] %v3846
      %3853 = vrot.lane.b32.xlu0 %v3689, 91
      %v3854 = vpop.permute.xlu0 %3853
      %3855 = vrot.lane.b32.xlu0 %v3692, 91
      %v3856 = vpop.permute.xlu0 %3855
      %3857 = vrot.lane.b32.xlu0 %v3690, 91
      %v3858 = vpop.permute.xlu0 %3857
      %3859 = vrot.lane.b32.xlu0 %v3693, 91
      %v3860 = vpop.permute.xlu0 %3859
      %3861 = vrot.lane.b32.xlu0 %v3691, 91
      %v3862 = vpop.permute.xlu0 %3861
      %3863 = vrot.lane.b32.xlu0 %v3694, 91
      %v3864 = vpop.permute.xlu0 %3863
      %v3865 = vsel %vm326, %v3858, %v3862
      %v3866 = vsel %vm326, %v3860, %v3864
      %v3867 = vsel %vm326, %v3854, %v3858
      %v3868 = vsel %vm326, %v3856, %v3860
      %v3869 = vsel %vm326, %v3862, %v3854
      %v3870 = vsel %vm326, %v3864, %v3856
      %3871 = vst [vmem:[#allocation2 + $0x150] sm:$0xff] %v3867
      %3872 = vst [vmem:[#allocation2 + $0x158] sm:$0xff] %v3865
      %3873 = vst [vmem:[#allocation2 + $0x160] sm:$0xff] %v3869
      %3874 = vst [vmem:[#allocation2 + $0x168] sm:$0xff] %v3868
      %3875 = vst [vmem:[#allocation2 + $0x170] sm:$0xff] %v3866
      %3876 = vst [vmem:[#allocation2 + $0x178] sm:$0xff] %v3870
      %3877 = vrot.lane.b32.xlu0 %v3689, 90
      %v3878 = vpop.permute.xlu0 %3877
      %3879 = vrot.lane.b32.xlu0 %v3692, 90
      %v3880 = vpop.permute.xlu0 %3879
      %3881 = vrot.lane.b32.xlu0 %v3690, 90
      %v3882 = vpop.permute.xlu0 %3881
      %3883 = vrot.lane.b32.xlu0 %v3693, 90
      %v3884 = vpop.permute.xlu0 %3883
      %3885 = vrot.lane.b32.xlu0 %v3691, 90
      %v3886 = vpop.permute.xlu0 %3885
      %3887 = vrot.lane.b32.xlu0 %v3694, 90
      %v3888 = vpop.permute.xlu0 %3887
      %v3889 = vsel %vm339, %v3882, %v3886
      %v3890 = vsel %vm339, %v3884, %v3888
      %v3891 = vsel %vm339, %v3878, %v3882
      %v3892 = vsel %vm339, %v3880, %v3884
      %v3893 = vsel %vm339, %v3886, %v3878
      %v3894 = vsel %vm339, %v3888, %v3880
      %3895 = vst [vmem:[#allocation2 + $0x180] sm:$0xff] %v3891
      %3896 = vst [vmem:[#allocation2 + $0x188] sm:$0xff] %v3889
      %3897 = vst [vmem:[#allocation2 + $0x190] sm:$0xff] %v3893
      %3898 = vst [vmem:[#allocation2 + $0x198] sm:$0xff] %v3892
      %3899 = vst [vmem:[#allocation2 + $0x1a0] sm:$0xff] %v3890
      %3900 = vst [vmem:[#allocation2 + $0x1a8] sm:$0xff] %v3894
      %v3901 = vld [vmem:[#allocation2] sm:$0xff]
      %v3902 = vld [vmem:[#allocation2 + $0x8] sm:$0xff]
      %v3903 = vld [vmem:[#allocation2 + $0x10] sm:$0xff]
      %v3904 = vld [vmem:[#allocation2 + $0x18] sm:$0xff]
      %v3905 = vld [vmem:[#allocation2 + $0x20] sm:$0xff]
      %v3906 = vld [vmem:[#allocation2 + $0x28] sm:$0xff]
      %v3907 = vld [vmem:[#allocation2 + $0x30] sm:$0xff]
      %v3908 = vld [vmem:[#allocation2 + $0x38] sm:$0xff]
      %v3909 = vld [vmem:[#allocation2 + $0x40] sm:$0xff]
      %v3910 = vld [vmem:[#allocation2 + $0x48] sm:$0xff]
      %v3911 = vld [vmem:[#allocation2 + $0x50] sm:$0xff]
      %v3912 = vld [vmem:[#allocation2 + $0x58] sm:$0xff]
      %v3913 = vld [vmem:[#allocation2 + $0x60] sm:$0xff]
      %v3914 = vld [vmem:[#allocation2 + $0x68] sm:$0xff]
      %v3915 = vld [vmem:[#allocation2 + $0x70] sm:$0xff]
      %v3916 = vld [vmem:[#allocation2 + $0x78] sm:$0xff]
      %v3917 = vld [vmem:[#allocation2 + $0x80] sm:$0xff]
      %v3918 = vld [vmem:[#allocation2 + $0x88] sm:$0xff]
      %v3919 = vld [vmem:[#allocation2 + $0x90] sm:$0xff]
      %v3920 = vld [vmem:[#allocation2 + $0x98] sm:$0xff]
      %v3921 = vld [vmem:[#allocation2 + $0xa0] sm:$0xff]
      %v3922 = vld [vmem:[#allocation2 + $0xa8] sm:$0xff]
      %v3923 = vld [vmem:[#allocation2 + $0xb0] sm:$0xff]
      %v3924 = vld [vmem:[#allocation2 + $0xb8] sm:$0xff]
      %v3925 = vld [vmem:[#allocation2 + $0xc0] sm:$0xff]
      %v3926 = vld [vmem:[#allocation2 + $0xc8] sm:$0xff]
      %v3927 = vld [vmem:[#allocation2 + $0xd0] sm:$0xff]
      %v3928 = vld [vmem:[#allocation2 + $0xd8] sm:$0xff]
      %v3929 = vld [vmem:[#allocation2 + $0xe0] sm:$0xff]
      %v3930 = vld [vmem:[#allocation2 + $0xe8] sm:$0xff]
      %v3931 = vld [vmem:[#allocation2 + $0xf0] sm:$0xff]
      %v3932 = vld [vmem:[#allocation2 + $0xf8] sm:$0xff]
      %v3933 = vld [vmem:[#allocation2 + $0x100] sm:$0xff]
      %v3934 = vld [vmem:[#allocation2 + $0x108] sm:$0xff]
      %v3935 = vld [vmem:[#allocation2 + $0x110] sm:$0xff]
      %v3936 = vld [vmem:[#allocation2 + $0x118] sm:$0xff]
      %v3937 = vld [vmem:[#allocation2 + $0x120] sm:$0xff]
      %v3938 = vld [vmem:[#allocation2 + $0x128] sm:$0xff]
      %v3939 = vld [vmem:[#allocation2 + $0x130] sm:$0xff]
      %v3940 = vld [vmem:[#allocation2 + $0x138] sm:$0xff]
      %v3941 = vld [vmem:[#allocation2 + $0x140] sm:$0xff]
      %v3942 = vld [vmem:[#allocation2 + $0x148] sm:$0xff]
      %v3943 = vld [vmem:[#allocation2 + $0x150] sm:$0xff]
      %v3944 = vld [vmem:[#allocation2 + $0x158] sm:$0xff]
      %v3945 = vld [vmem:[#allocation2 + $0x160] sm:$0xff]
      %v3946 = vld [vmem:[#allocation2 + $0x168] sm:$0xff]
      %v3947 = vld [vmem:[#allocation2 + $0x170] sm:$0xff]
      %v3948 = vld [vmem:[#allocation2 + $0x178] sm:$0xff]
      %v3949 = vld [vmem:[#allocation2 + $0x180] sm:$0xff]
      %v3950 = vld [vmem:[#allocation2 + $0x188] sm:$0xff]
      %v3951 = vld [vmem:[#allocation2 + $0x190] sm:$0xff]
      %v3952 = vld [vmem:[#allocation2 + $0x198] sm:$0xff]
      %v3953 = vld [vmem:[#allocation2 + $0x1a0] sm:$0xff]
      %v3954 = vld [vmem:[#allocation2 + $0x1a8] sm:$0xff]
      %vm3955 = vcmask 130048
      %v3957 = vsel %vm3955, %v3696, 0
      %v3960 = vsel %vm3955, %v3698, 0
      %v3963 = vsel %vm3955, %v3700, 0
      %v3966 = vsel %vm3955, %v3702, 0
      %v3968 = vand.u32 %v3947, 4294901760
      %3969 = vmatprep.subr.mxu0 %v3968
      %v3970 = vand.u32 %v3946, 4294901760
      %3971 = vmatpush1.msra.mxu0 %v3970
      %v3972 = vand.u32 %v3944, 4294901760
      %3973 = vmatprep.subr.mxu0 %v3972
      %v3974 = vand.u32 %v3943, 4294901760
      %3975 = vmatpush1.msra.mxu0 %v3974
      %v3976 = vand.u32 %v3941, 4294901760
      %3977 = vmatprep.subr.mxu0 %v3976
      %v3978 = vand.u32 %v3940, 4294901760
      %3979 = vmatpush1.msra.mxu0 %v3978
      %v3980 = vand.u32 %v3938, 4294901760
      %3981 = vmatprep.subr.mxu0 %v3980
      %v3982 = vand.u32 %v3937, 4294901760
      %3983 = vmatpush1.msra.mxu0 %v3982
      %v3984 = vand.u32 %v3935, 4294901760
      %3985 = vmatprep.subr.mxu0 %v3984
      %v3986 = vand.u32 %v3934, 4294901760
      %3987 = vmatpush1.msra.mxu0 %v3986
      %v3988 = vand.u32 %v3932, 4294901760
      %3989 = vmatprep.subr.mxu0 %v3988
      %v3990 = vand.u32 %v3931, 4294901760
      %3991 = vmatpush1.msra.mxu0 %v3990
      %v3992 = vand.u32 %v3929, 4294901760
      %3993 = vmatprep.subr.mxu0 %v3992
      %v3994 = vand.u32 %v3928, 4294901760
      %3995 = vmatpush1.msra.mxu0 %v3994
      %v3996 = vand.u32 %v3926, 4294901760
      %3997 = vmatprep.subr.mxu0 %v3996
      %v3998 = vand.u32 %v3925, 4294901760
      %3999 = vmatpush1.msra.mxu0 %v3998
      %v4000 = vand.u32 %v3923, 4294901760
      %4001 = vmatprep.subr.mxu0 %v4000
      %v4002 = vand.u32 %v3922, 4294901760
      %4003 = vmatpush1.msra.mxu0 %v4002
      %v4004 = vand.u32 %v3920, 4294901760
      %4005 = vmatprep.subr.mxu0 %v4004
      %v4006 = vand.u32 %v3919, 4294901760
      %4007 = vmatpush1.msra.mxu0 %v4006
      %v4008 = vand.u32 %v3917, 4294901760
      %4009 = vmatprep.subr.mxu0 %v4008
      %v4010 = vand.u32 %v3916, 4294901760
      %4011 = vmatpush1.msra.mxu0 %v4010
      %v4012 = vand.u32 %v3914, 4294901760
      %4013 = vmatprep.subr.mxu0 %v4012
      %v4014 = vand.u32 %v3913, 4294901760
      %4015 = vmatpush1.msra.mxu0 %v4014
      %v4016 = vand.u32 %v3911, 4294901760
      %4017 = vmatprep.subr.mxu0 %v4016
      %v4018 = vand.u32 %v3910, 4294901760
      %4019 = vmatpush1.msra.mxu0 %v4018
      %v4020 = vand.u32 %v3908, 4294901760
      %4021 = vmatprep.subr.mxu0 %v4020
      %v4022 = vand.u32 %v3907, 4294901760
      %4023 = vmatpush1.msra.mxu0 %v4022
      %v4024 = vand.u32 %v3905, 4294901760
      %4025 = vmatprep.subr.mxu0 %v4024
      %v4026 = vand.u32 %v3904, 4294901760
      %4027 = vmatpush1.msra.mxu0 %v4026
      %v4028 = vand.u32 %v3902, 4294901760
      %4029 = vmatprep.subr.mxu0 %v4028
      %v4030 = vand.u32 %v3901, 4294901760
      %4031 = vmatpush1.msra.mxu0 %v4030
      %4032 = vmatprep.subr.mxu0 0.0
      %4033 = vmatpush2.msra.mxu0 0.0
      %4034 = vmatprep.subr.mxu0 0.0
      %4035 = vmatpush2.msra.mxu0 0.0
      %4036 = vmatprep.subr.mxu0 0.0
      %4037 = vmatpush2.msra.mxu0 0.0
      %4038 = vmatprep.subr.mxu0 0.0
      %4039 = vmatpush2.msra.mxu0 0.0
      %4040 = vmatprep.subr.mxu0 0.0
      %4041 = vmatpush2.msra.mxu0 0.0
      %4042 = vmatprep.subr.mxu0 0.0
      %4043 = vmatpush2.msra.mxu0 0.0
      %4044 = vmatprep.subr.mxu0 0.0
      %4045 = vmatpush2.msra.mxu0 0.0
      %4046 = vmatprep.subr.mxu0 0.0
      %4047 = vmatpush2.msra.mxu0 0.0
      %4048 = vmatprep.subr.mxu0 0.0
      %4049 = vmatpush2.msra.mxu0 0.0
      %4050 = vmatprep.subr.mxu0 0.0
      %4051 = vmatpush2.msra.mxu0 0.0
      %4052 = vmatprep.subr.mxu0 0.0
      %4053 = vmatpush2.msra.mxu0 0.0
      %4054 = vmatprep.subr.mxu0 0.0
      %4055 = vmatpush2.msra.mxu0 0.0
      %4056 = vmatprep.subr.mxu0 0.0
      %4057 = vmatpush2.msra.mxu0 0.0
      %4058 = vmatprep.subr.mxu0 0.0
      %4059 = vmatpush2.msra.mxu0 0.0
      %v4060 = vand.u32 %v3953, 4294901760
      %4061 = vmatprep.subr.mxu0 %v4060
      %v4062 = vand.u32 %v3952, 4294901760
      %4063 = vmatpush2.msra.mxu0 %v4062
      %v4064 = vand.u32 %v3950, 4294901760
      %4065 = vmatprep.subr.mxu0 %v4064
      %v4066 = vand.u32 %v3949, 4294901760
      %4067 = vmatpush2.msra.mxu0 %v4066
      %v4068 = vand.u32 %v3957, 4294901760
      %v4069 = vsub.f32 %v3957, %v4068
      %v4070 = vand.u32 %v4069, 4294901760
      %v4071 = vsub.f32 %v4069, %v4070
      %v4072 = vand.u32 %v4071, 4294901760
      %4073 = vmatprep.mubr.f32.mxu0 %v4072
      %v4074 = vand.u32 %v3695, 4294901760
      %v4075 = vsub.f32 %v3695, %v4074
      %v4076 = vand.u32 %v4075, 4294901760
      %v4077 = vsub.f32 %v4075, %v4076
      %v4078 = vand.u32 %v4077, 4294901760
      %4079 = vmatmul.mubr.f32.gmra.mxu0 %v4078
      %v4080 = vpop.f32.mrf.mxu0
      %v4081 = vadd.f32 0.0, %v4080
      %v4082 = vpop.f32.mrf.mxu0
      %v4083 = vadd.f32 0.0, %v4082
      %v4084 = vand.u32 %v3960, 4294901760
      %v4085 = vsub.f32 %v3960, %v4084
      %v4086 = vand.u32 %v4085, 4294901760
      %v4087 = vsub.f32 %v4085, %v4086
      %v4088 = vand.u32 %v4087, 4294901760
      %4089 = vmatprep.mubr.f32.mxu0 %v4088
      %v4090 = vand.u32 %v3697, 4294901760
      %v4091 = vsub.f32 %v3697, %v4090
      %v4092 = vand.u32 %v4091, 4294901760
      %v4093 = vsub.f32 %v4091, %v4092
      %v4094 = vand.u32 %v4093, 4294901760
      %4095 = vmatmul.mubr.f32.gmra.mxu0 %v4094
      %v4096 = vpop.f32.mrf.mxu0
      %v4097 = vadd.f32 0.0, %v4096
      %v4098 = vpop.f32.mrf.mxu0
      %v4099 = vadd.f32 0.0, %v4098
      %v4100 = vand.u32 %v3963, 4294901760
      %v4101 = vsub.f32 %v3963, %v4100
      %v4102 = vand.u32 %v4101, 4294901760
      %v4103 = vsub.f32 %v4101, %v4102
      %v4104 = vand.u32 %v4103, 4294901760
      %4105 = vmatprep.mubr.f32.mxu0 %v4104
      %v4106 = vand.u32 %v3699, 4294901760
      %v4107 = vsub.f32 %v3699, %v4106
      %v4108 = vand.u32 %v4107, 4294901760
      %v4109 = vsub.f32 %v4107, %v4108
      %v4110 = vand.u32 %v4109, 4294901760
      %4111 = vmatmul.mubr.f32.gmra.mxu0 %v4110
      %v4112 = vpop.f32.mrf.mxu0
      %v4113 = vadd.f32 0.0, %v4112
      %v4114 = vpop.f32.mrf.mxu0
      %v4115 = vadd.f32 0.0, %v4114
      %v4116 = vand.u32 %v3966, 4294901760
      %v4117 = vsub.f32 %v3966, %v4116
      %v4118 = vand.u32 %v4117, 4294901760
      %v4119 = vsub.f32 %v4117, %v4118
      %v4120 = vand.u32 %v4119, 4294901760
      %4121 = vmatprep.mubr.f32.mxu0 %v4120
      %v4122 = vand.u32 %v3701, 4294901760
      %v4123 = vsub.f32 %v3701, %v4122
      %v4124 = vand.u32 %v4123, 4294901760
      %v4125 = vsub.f32 %v4123, %v4124
      %v4126 = vand.u32 %v4125, 4294901760
      %4127 = vmatmul.mubr.f32.gmra.mxu0 %v4126
      %v4128 = vpop.f32.mrf.mxu0
      %v4129 = vadd.f32 0.0, %v4128
      %v4130 = vpop.f32.mrf.mxu0
      %v4131 = vadd.f32 0.0, %v4130
      %4132 = vdwg.mxu0
      %v4133 = vand.u32 %v3947, 4294901760
      %v4134 = vsub.f32 %v3947, %v4133
      %v4135 = vand.u32 %v4134, 4294901760
      %v4136 = vsub.f32 %v4134, %v4135
      %v4137 = vand.u32 %v4136, 4294901760
      %4138 = vmatprep.subr.mxu0 %v4137
      %v4139 = vand.u32 %v3946, 4294901760
      %v4140 = vsub.f32 %v3946, %v4139
      %v4141 = vand.u32 %v4140, 4294901760
      %v4142 = vsub.f32 %v4140, %v4141
      %v4143 = vand.u32 %v4142, 4294901760
      %4144 = vmatpush1.msra.mxu0 %v4143
      %v4145 = vand.u32 %v3944, 4294901760
      %v4146 = vsub.f32 %v3944, %v4145
      %v4147 = vand.u32 %v4146, 4294901760
      %v4148 = vsub.f32 %v4146, %v4147
      %v4149 = vand.u32 %v4148, 4294901760
      %4150 = vmatprep.subr.mxu0 %v4149
      %v4151 = vand.u32 %v3943, 4294901760
      %v4152 = vsub.f32 %v3943, %v4151
      %v4153 = vand.u32 %v4152, 4294901760
      %v4154 = vsub.f32 %v4152, %v4153
      %v4155 = vand.u32 %v4154, 4294901760
      %4156 = vmatpush1.msra.mxu0 %v4155
      %v4157 = vand.u32 %v3941, 4294901760
      %v4158 = vsub.f32 %v3941, %v4157
      %v4159 = vand.u32 %v4158, 4294901760
      %v4160 = vsub.f32 %v4158, %v4159
      %v4161 = vand.u32 %v4160, 4294901760
      %4162 = vmatprep.subr.mxu0 %v4161
      %v4163 = vand.u32 %v3940, 4294901760
      %v4164 = vsub.f32 %v3940, %v4163
      %v4165 = vand.u32 %v4164, 4294901760
      %v4166 = vsub.f32 %v4164, %v4165
      %v4167 = vand.u32 %v4166, 4294901760
      %4168 = vmatpush1.msra.mxu0 %v4167
      %v4169 = vand.u32 %v3938, 4294901760
      %v4170 = vsub.f32 %v3938, %v4169
      %v4171 = vand.u32 %v4170, 4294901760
      %v4172 = vsub.f32 %v4170, %v4171
      %v4173 = vand.u32 %v4172, 4294901760
      %4174 = vmatprep.subr.mxu0 %v4173
      %v4175 = vand.u32 %v3937, 4294901760
      %v4176 = vsub.f32 %v3937, %v4175
      %v4177 = vand.u32 %v4176, 4294901760
      %v4178 = vsub.f32 %v4176, %v4177
      %v4179 = vand.u32 %v4178, 4294901760
      %4180 = vmatpush1.msra.mxu0 %v4179
      %v4181 = vand.u32 %v3935, 4294901760
      %v4182 = vsub.f32 %v3935, %v4181
      %v4183 = vand.u32 %v4182, 4294901760
      %v4184 = vsub.f32 %v4182, %v4183
      %v4185 = vand.u32 %v4184, 4294901760
      %4186 = vmatprep.subr.mxu0 %v4185
      %v4187 = vand.u32 %v3934, 4294901760
      %v4188 = vsub.f32 %v3934, %v4187
      %v4189 = vand.u32 %v4188, 4294901760
      %v4190 = vsub.f32 %v4188, %v4189
      %v4191 = vand.u32 %v4190, 4294901760
      %4192 = vmatpush1.msra.mxu0 %v4191
      %v4193 = vand.u32 %v3932, 4294901760
      %v4194 = vsub.f32 %v3932, %v4193
      %v4195 = vand.u32 %v4194, 4294901760
      %v4196 = vsub.f32 %v4194, %v4195
      %v4197 = vand.u32 %v4196, 4294901760
      %4198 = vmatprep.subr.mxu0 %v4197
      %v4199 = vand.u32 %v3931, 4294901760
      %v4200 = vsub.f32 %v3931, %v4199
      %v4201 = vand.u32 %v4200, 4294901760
      %v4202 = vsub.f32 %v4200, %v4201
      %v4203 = vand.u32 %v4202, 4294901760
      %4204 = vmatpush1.msra.mxu0 %v4203
      %v4205 = vand.u32 %v3929, 4294901760
      %v4206 = vsub.f32 %v3929, %v4205
      %v4207 = vand.u32 %v4206, 4294901760
      %v4208 = vsub.f32 %v4206, %v4207
      %v4209 = vand.u32 %v4208, 4294901760
      %4210 = vmatprep.subr.mxu0 %v4209
      %v4211 = vand.u32 %v3928, 4294901760
      %v4212 = vsub.f32 %v3928, %v4211
      %v4213 = vand.u32 %v4212, 4294901760
      %v4214 = vsub.f32 %v4212, %v4213
      %v4215 = vand.u32 %v4214, 4294901760
      %4216 = vmatpush1.msra.mxu0 %v4215
      %v4217 = vand.u32 %v3926, 4294901760
      %v4218 = vsub.f32 %v3926, %v4217
      %v4219 = vand.u32 %v4218, 4294901760
      %v4220 = vsub.f32 %v4218, %v4219
      %v4221 = vand.u32 %v4220, 4294901760
      %4222 = vmatprep.subr.mxu0 %v4221
      %v4223 = vand.u32 %v3925, 4294901760
      %v4224 = vsub.f32 %v3925, %v4223
      %v4225 = vand.u32 %v4224, 4294901760
      %v4226 = vsub.f32 %v4224, %v4225
      %v4227 = vand.u32 %v4226, 4294901760
      %4228 = vmatpush1.msra.mxu0 %v4227
      %v4229 = vand.u32 %v3923, 4294901760
      %v4230 = vsub.f32 %v3923, %v4229
      %v4231 = vand.u32 %v4230, 4294901760
      %v4232 = vsub.f32 %v4230, %v4231
      %v4233 = vand.u32 %v4232, 4294901760
      %4234 = vmatprep.subr.mxu0 %v4233
      %v4235 = vand.u32 %v3922, 4294901760
      %v4236 = vsub.f32 %v3922, %v4235
      %v4237 = vand.u32 %v4236, 4294901760
      %v4238 = vsub.f32 %v4236, %v4237
      %v4239 = vand.u32 %v4238, 4294901760
      %4240 = vmatpush1.msra.mxu0 %v4239
      %v4241 = vand.u32 %v3920, 4294901760
      %v4242 = vsub.f32 %v3920, %v4241
      %v4243 = vand.u32 %v4242, 4294901760
      %v4244 = vsub.f32 %v4242, %v4243
      %v4245 = vand.u32 %v4244, 4294901760
      %4246 = vmatprep.subr.mxu0 %v4245
      %v4247 = vand.u32 %v3919, 4294901760
      %v4248 = vsub.f32 %v3919, %v4247
      %v4249 = vand.u32 %v4248, 4294901760
      %v4250 = vsub.f32 %v4248, %v4249
      %v4251 = vand.u32 %v4250, 4294901760
      %4252 = vmatpush1.msra.mxu0 %v4251
      %v4253 = vand.u32 %v3917, 4294901760
      %v4254 = vsub.f32 %v3917, %v4253
      %v4255 = vand.u32 %v4254, 4294901760
      %v4256 = vsub.f32 %v4254, %v4255
      %v4257 = vand.u32 %v4256, 4294901760
      %4258 = vmatprep.subr.mxu0 %v4257
      %v4259 = vand.u32 %v3916, 4294901760
      %v4260 = vsub.f32 %v3916, %v4259
      %v4261 = vand.u32 %v4260, 4294901760
      %v4262 = vsub.f32 %v4260, %v4261
      %v4263 = vand.u32 %v4262, 4294901760
      %4264 = vmatpush1.msra.mxu0 %v4263
      %v4265 = vand.u32 %v3914, 4294901760
      %v4266 = vsub.f32 %v3914, %v4265
      %v4267 = vand.u32 %v4266, 4294901760
      %v4268 = vsub.f32 %v4266, %v4267
      %v4269 = vand.u32 %v4268, 4294901760
      %4270 = vmatprep.subr.mxu0 %v4269
      %v4271 = vand.u32 %v3913, 4294901760
      %v4272 = vsub.f32 %v3913, %v4271
      %v4273 = vand.u32 %v4272, 4294901760
      %v4274 = vsub.f32 %v4272, %v4273
      %v4275 = vand.u32 %v4274, 4294901760
      %4276 = vmatpush1.msra.mxu0 %v4275
      %v4277 = vand.u32 %v3911, 4294901760
      %v4278 = vsub.f32 %v3911, %v4277
      %v4279 = vand.u32 %v4278, 4294901760
      %v4280 = vsub.f32 %v4278, %v4279
      %v4281 = vand.u32 %v4280, 4294901760
      %4282 = vmatprep.subr.mxu0 %v4281
      %v4283 = vand.u32 %v3910, 4294901760
      %v4284 = vsub.f32 %v3910, %v4283
      %v4285 = vand.u32 %v4284, 4294901760
      %v4286 = vsub.f32 %v4284, %v4285
      %v4287 = vand.u32 %v4286, 4294901760
      %4288 = vmatpush1.msra.mxu0 %v4287
      %v4289 = vand.u32 %v3908, 4294901760
      %v4290 = vsub.f32 %v3908, %v4289
      %v4291 = vand.u32 %v4290, 4294901760
      %v4292 = vsub.f32 %v4290, %v4291
      %v4293 = vand.u32 %v4292, 4294901760
      %4294 = vmatprep.subr.mxu0 %v4293
      %v4295 = vand.u32 %v3907, 4294901760
      %v4296 = vsub.f32 %v3907, %v4295
      %v4297 = vand.u32 %v4296, 4294901760
      %v4298 = vsub.f32 %v4296, %v4297
      %v4299 = vand.u32 %v4298, 4294901760
      %4300 = vmatpush1.msra.mxu0 %v4299
      %v4301 = vand.u32 %v3905, 4294901760
      %v4302 = vsub.f32 %v3905, %v4301
      %v4303 = vand.u32 %v4302, 4294901760
      %v4304 = vsub.f32 %v4302, %v4303
      %v4305 = vand.u32 %v4304, 4294901760
      %4306 = vmatprep.subr.mxu0 %v4305
      %v4307 = vand.u32 %v3904, 4294901760
      %v4308 = vsub.f32 %v3904, %v4307
      %v4309 = vand.u32 %v4308, 4294901760
      %v4310 = vsub.f32 %v4308, %v4309
      %v4311 = vand.u32 %v4310, 4294901760
      %4312 = vmatpush1.msra.mxu0 %v4311
      %v4313 = vand.u32 %v3902, 4294901760
      %v4314 = vsub.f32 %v3902, %v4313
      %v4315 = vand.u32 %v4314, 4294901760
      %v4316 = vsub.f32 %v4314, %v4315
      %v4317 = vand.u32 %v4316, 4294901760
      %4318 = vmatprep.subr.mxu0 %v4317
      %v4319 = vand.u32 %v3901, 4294901760
      %v4320 = vsub.f32 %v3901, %v4319
      %v4321 = vand.u32 %v4320, 4294901760
      %v4322 = vsub.f32 %v4320, %v4321
      %v4323 = vand.u32 %v4322, 4294901760
      %4324 = vmatpush1.msra.mxu0 %v4323
      %4325 = vmatprep.subr.mxu0 0.0
      %4326 = vmatpush2.msra.mxu0 0.0
      %4327 = vmatprep.subr.mxu0 0.0
      %4328 = vmatpush2.msra.mxu0 0.0
      %4329 = vmatprep.subr.mxu0 0.0
      %4330 = vmatpush2.msra.mxu0 0.0
      %4331 = vmatprep.subr.mxu0 0.0
      %4332 = vmatpush2.msra.mxu0 0.0
      %4333 = vmatprep.subr.mxu0 0.0
      %4334 = vmatpush2.msra.mxu0 0.0
      %4335 = vmatprep.subr.mxu0 0.0
      %4336 = vmatpush2.msra.mxu0 0.0
      %4337 = vmatprep.subr.mxu0 0.0
      %4338 = vmatpush2.msra.mxu0 0.0
      %4339 = vmatprep.subr.mxu0 0.0
      %4340 = vmatpush2.msra.mxu0 0.0
      %4341 = vmatprep.subr.mxu0 0.0
      %4342 = vmatpush2.msra.mxu0 0.0
      %4343 = vmatprep.subr.mxu0 0.0
      %4344 = vmatpush2.msra.mxu0 0.0
      %4345 = vmatprep.subr.mxu0 0.0
      %4346 = vmatpush2.msra.mxu0 0.0
      %4347 = vmatprep.subr.mxu0 0.0
      %4348 = vmatpush2.msra.mxu0 0.0
      %4349 = vmatprep.subr.mxu0 0.0
      %4350 = vmatpush2.msra.mxu0 0.0
      %4351 = vmatprep.subr.mxu0 0.0
      %4352 = vmatpush2.msra.mxu0 0.0
      %v4353 = vand.u32 %v3953, 4294901760
      %v4354 = vsub.f32 %v3953, %v4353
      %v4355 = vand.u32 %v4354, 4294901760
      %v4356 = vsub.f32 %v4354, %v4355
      %v4357 = vand.u32 %v4356, 4294901760
      %4358 = vmatprep.subr.mxu0 %v4357
      %v4359 = vand.u32 %v3952, 4294901760
      %v4360 = vsub.f32 %v3952, %v4359
      %v4361 = vand.u32 %v4360, 4294901760
      %v4362 = vsub.f32 %v4360, %v4361
      %v4363 = vand.u32 %v4362, 4294901760
      %4364 = vmatpush2.msra.mxu0 %v4363
      %v4365 = vand.u32 %v3950, 4294901760
      %v4366 = vsub.f32 %v3950, %v4365
      %v4367 = vand.u32 %v4366, 4294901760
      %v4368 = vsub.f32 %v4366, %v4367
      %v4369 = vand.u32 %v4368, 4294901760
      %4370 = vmatprep.subr.mxu0 %v4369
      %v4371 = vand.u32 %v3949, 4294901760
      %v4372 = vsub.f32 %v3949, %v4371
      %v4373 = vand.u32 %v4372, 4294901760
      %v4374 = vsub.f32 %v4372, %v4373
      %v4375 = vand.u32 %v4374, 4294901760
      %4376 = vmatpush2.msra.mxu0 %v4375
      %v4377 = vand.u32 %v3957, 4294901760
      %4378 = vmatprep.mubr.f32.mxu0 %v4377
      %v4379 = vand.u32 %v3695, 4294901760
      %4380 = vmatmul.mubr.f32.gmra.mxu0 %v4379
      %v4381 = vpop.f32.mrf.mxu0
      %v4382 = vadd.f32 %v4081, %v4381
      %v4383 = vpop.f32.mrf.mxu0
      %v4384 = vadd.f32 %v4083, %v4383
      %v4385 = vand.u32 %v3960, 4294901760
      %4386 = vmatprep.mubr.f32.mxu0 %v4385
      %v4387 = vand.u32 %v3697, 4294901760
      %4388 = vmatmul.mubr.f32.gmra.mxu0 %v4387
      %v4389 = vpop.f32.mrf.mxu0
      %v4390 = vadd.f32 %v4097, %v4389
      %v4391 = vpop.f32.mrf.mxu0
      %v4392 = vadd.f32 %v4099, %v4391
      %v4393 = vand.u32 %v3963, 4294901760
      %4394 = vmatprep.mubr.f32.mxu0 %v4393
      %v4395 = vand.u32 %v3699, 4294901760
      %4396 = vmatmul.mubr.f32.gmra.mxu0 %v4395
      %v4397 = vpop.f32.mrf.mxu0
      %v4398 = vadd.f32 %v4113, %v4397
      %v4399 = vpop.f32.mrf.mxu0
      %v4400 = vadd.f32 %v4115, %v4399
      %v4401 = vand.u32 %v3966, 4294901760
      %4402 = vmatprep.mubr.f32.mxu0 %v4401
      %v4403 = vand.u32 %v3701, 4294901760
      %4404 = vmatmul.mubr.f32.gmra.mxu0 %v4403
      %v4405 = vpop.f32.mrf.mxu0
      %v4406 = vadd.f32 %v4129, %v4405
      %v4407 = vpop.f32.mrf.mxu0
      %v4408 = vadd.f32 %v4131, %v4407
      %4409 = vdwg.mxu0
      %v4410 = vand.u32 %v3947, 4294901760
      %v4411 = vsub.f32 %v3947, %v4410
      %4412 = vmatprep.subr.mxu0 %v4411
      %v4413 = vand.u32 %v3946, 4294901760
      %v4414 = vsub.f32 %v3946, %v4413
      %4415 = vmatpush1.msra.mxu0 %v4414
      %v4416 = vand.u32 %v3944, 4294901760
      %v4417 = vsub.f32 %v3944, %v4416
      %4418 = vmatprep.subr.mxu0 %v4417
      %v4419 = vand.u32 %v3943, 4294901760
      %v4420 = vsub.f32 %v3943, %v4419
      %4421 = vmatpush1.msra.mxu0 %v4420
      %v4422 = vand.u32 %v3941, 4294901760
      %v4423 = vsub.f32 %v3941, %v4422
      %4424 = vmatprep.subr.mxu0 %v4423
      %v4425 = vand.u32 %v3940, 4294901760
      %v4426 = vsub.f32 %v3940, %v4425
      %4427 = vmatpush1.msra.mxu0 %v4426
      %v4428 = vand.u32 %v3938, 4294901760
      %v4429 = vsub.f32 %v3938, %v4428
      %4430 = vmatprep.subr.mxu0 %v4429
      %v4431 = vand.u32 %v3937, 4294901760
      %v4432 = vsub.f32 %v3937, %v4431
      %4433 = vmatpush1.msra.mxu0 %v4432
      %v4434 = vand.u32 %v3935, 4294901760
      %v4435 = vsub.f32 %v3935, %v4434
      %4436 = vmatprep.subr.mxu0 %v4435
      %v4437 = vand.u32 %v3934, 4294901760
      %v4438 = vsub.f32 %v3934, %v4437
      %4439 = vmatpush1.msra.mxu0 %v4438
      %v4440 = vand.u32 %v3932, 4294901760
      %v4441 = vsub.f32 %v3932, %v4440
      %4442 = vmatprep.subr.mxu0 %v4441
      %v4443 = vand.u32 %v3931, 4294901760
      %v4444 = vsub.f32 %v3931, %v4443
      %4445 = vmatpush1.msra.mxu0 %v4444
      %v4446 = vand.u32 %v3929, 4294901760
      %v4447 = vsub.f32 %v3929, %v4446
      %4448 = vmatprep.subr.mxu0 %v4447
      %v4449 = vand.u32 %v3928, 4294901760
      %v4450 = vsub.f32 %v3928, %v4449
      %4451 = vmatpush1.msra.mxu0 %v4450
      %v4452 = vand.u32 %v3926, 4294901760
      %v4453 = vsub.f32 %v3926, %v4452
      %4454 = vmatprep.subr.mxu0 %v4453
      %v4455 = vand.u32 %v3925, 4294901760
      %v4456 = vsub.f32 %v3925, %v4455
      %4457 = vmatpush1.msra.mxu0 %v4456
      %v4458 = vand.u32 %v3923, 4294901760
      %v4459 = vsub.f32 %v3923, %v4458
      %4460 = vmatprep.subr.mxu0 %v4459
      %v4461 = vand.u32 %v3922, 4294901760
      %v4462 = vsub.f32 %v3922, %v4461
      %4463 = vmatpush1.msra.mxu0 %v4462
      %v4464 = vand.u32 %v3920, 4294901760
      %v4465 = vsub.f32 %v3920, %v4464
      %4466 = vmatprep.subr.mxu0 %v4465
      %v4467 = vand.u32 %v3919, 4294901760
      %v4468 = vsub.f32 %v3919, %v4467
      %4469 = vmatpush1.msra.mxu0 %v4468
      %v4470 = vand.u32 %v3917, 4294901760
      %v4471 = vsub.f32 %v3917, %v4470
      %4472 = vmatprep.subr.mxu0 %v4471
      %v4473 = vand.u32 %v3916, 4294901760
      %v4474 = vsub.f32 %v3916, %v4473
      %4475 = vmatpush1.msra.mxu0 %v4474
      %v4476 = vand.u32 %v3914, 4294901760
      %v4477 = vsub.f32 %v3914, %v4476
      %4478 = vmatprep.subr.mxu0 %v4477
      %v4479 = vand.u32 %v3913, 4294901760
      %v4480 = vsub.f32 %v3913, %v4479
      %4481 = vmatpush1.msra.mxu0 %v4480
      %v4482 = vand.u32 %v3911, 4294901760
      %v4483 = vsub.f32 %v3911, %v4482
      %4484 = vmatprep.subr.mxu0 %v4483
      %v4485 = vand.u32 %v3910, 4294901760
      %v4486 = vsub.f32 %v3910, %v4485
      %4487 = vmatpush1.msra.mxu0 %v4486
      %v4488 = vand.u32 %v3908, 4294901760
      %v4489 = vsub.f32 %v3908, %v4488
      %4490 = vmatprep.subr.mxu0 %v4489
      %v4491 = vand.u32 %v3907, 4294901760
      %v4492 = vsub.f32 %v3907, %v4491
      %4493 = vmatpush1.msra.mxu0 %v4492
      %v4494 = vand.u32 %v3905, 4294901760
      %v4495 = vsub.f32 %v3905, %v4494
      %4496 = vmatprep.subr.mxu0 %v4495
      %v4497 = vand.u32 %v3904, 4294901760
      %v4498 = vsub.f32 %v3904, %v4497
      %4499 = vmatpush1.msra.mxu0 %v4498
      %v4500 = vand.u32 %v3902, 4294901760
      %v4501 = vsub.f32 %v3902, %v4500
      %4502 = vmatprep.subr.mxu0 %v4501
      %v4503 = vand.u32 %v3901, 4294901760
      %v4504 = vsub.f32 %v3901, %v4503
      %4505 = vmatpush1.msra.mxu0 %v4504
      %4506 = vmatprep.subr.mxu0 0.0
      %4507 = vmatpush2.msra.mxu0 0.0
      %4508 = vmatprep.subr.mxu0 0.0
      %4509 = vmatpush2.msra.mxu0 0.0
      %4510 = vmatprep.subr.mxu0 0.0
      %4511 = vmatpush2.msra.mxu0 0.0
      %4512 = vmatprep.subr.mxu0 0.0
      %4513 = vmatpush2.msra.mxu0 0.0
      %4514 = vmatprep.subr.mxu0 0.0
      %4515 = vmatpush2.msra.mxu0 0.0
      %4516 = vmatprep.subr.mxu0 0.0
      %4517 = vmatpush2.msra.mxu0 0.0
      %4518 = vmatprep.subr.mxu0 0.0
      %4519 = vmatpush2.msra.mxu0 0.0
      %4520 = vmatprep.subr.mxu0 0.0
      %4521 = vmatpush2.msra.mxu0 0.0
      %4522 = vmatprep.subr.mxu0 0.0
      %4523 = vmatpush2.msra.mxu0 0.0
      %4524 = vmatprep.subr.mxu0 0.0
      %4525 = vmatpush2.msra.mxu0 0.0
      %4526 = vmatprep.subr.mxu0 0.0
      %4527 = vmatpush2.msra.mxu0 0.0
      %4528 = vmatprep.subr.mxu0 0.0
      %4529 = vmatpush2.msra.mxu0 0.0
      %4530 = vmatprep.subr.mxu0 0.0
      %4531 = vmatpush2.msra.mxu0 0.0
      %4532 = vmatprep.subr.mxu0 0.0
      %4533 = vmatpush2.msra.mxu0 0.0
      %v4534 = vand.u32 %v3953, 4294901760
      %v4535 = vsub.f32 %v3953, %v4534
      %4536 = vmatprep.subr.mxu0 %v4535
      %v4537 = vand.u32 %v3952, 4294901760
      %v4538 = vsub.f32 %v3952, %v4537
      %4539 = vmatpush2.msra.mxu0 %v4538
      %v4540 = vand.u32 %v3950, 4294901760
      %v4541 = vsub.f32 %v3950, %v4540
      %4542 = vmatprep.subr.mxu0 %v4541
      %v4543 = vand.u32 %v3949, 4294901760
      %v4544 = vsub.f32 %v3949, %v4543
      %4545 = vmatpush2.msra.mxu0 %v4544
      %v4546 = vand.u32 %v3957, 4294901760
      %v4547 = vsub.f32 %v3957, %v4546
      %4548 = vmatprep.mubr.f32.mxu0 %v4547
      %v4549 = vand.u32 %v3695, 4294901760
      %v4550 = vsub.f32 %v3695, %v4549
      %4551 = vmatmul.mubr.f32.gmra.mxu0 %v4550
      %v4552 = vpop.f32.mrf.mxu0
      %v4553 = vadd.f32 %v4382, %v4552
      %v4554 = vpop.f32.mrf.mxu0
      %v4555 = vadd.f32 %v4384, %v4554
      %v4556 = vand.u32 %v3960, 4294901760
      %v4557 = vsub.f32 %v3960, %v4556
      %4558 = vmatprep.mubr.f32.mxu0 %v4557
      %v4559 = vand.u32 %v3697, 4294901760
      %v4560 = vsub.f32 %v3697, %v4559
      %4561 = vmatmul.mubr.f32.gmra.mxu0 %v4560
      %v4562 = vpop.f32.mrf.mxu0
      %v4563 = vadd.f32 %v4390, %v4562
      %v4564 = vpop.f32.mrf.mxu0
      %v4565 = vadd.f32 %v4392, %v4564
      %v4566 = vand.u32 %v3963, 4294901760
      %v4567 = vsub.f32 %v3963, %v4566
      %4568 = vmatprep.mubr.f32.mxu0 %v4567
      %v4569 = vand.u32 %v3699, 4294901760
      %v4570 = vsub.f32 %v3699, %v4569
      %4571 = vmatmul.mubr.f32.gmra.mxu0 %v4570
      %v4572 = vpop.f32.mrf.mxu0
      %v4573 = vadd.f32 %v4398, %v4572
      %v4574 = vpop.f32.mrf.mxu0
      %v4575 = vadd.f32 %v4400, %v4574
      %v4576 = vand.u32 %v3966, 4294901760
      %v4577 = vsub.f32 %v3966, %v4576
      %4578 = vmatprep.mubr.f32.mxu0 %v4577
      %v4579 = vand.u32 %v3701, 4294901760
      %v4580 = vsub.f32 %v3701, %v4579
      %4581 = vmatmul.mubr.f32.gmra.mxu0 %v4580
      %v4582 = vpop.f32.mrf.mxu0
      %v4583 = vadd.f32 %v4406, %v4582
      %v4584 = vpop.f32.mrf.mxu0
      %v4585 = vadd.f32 %v4408, %v4584
      %4586 = vdwg.mxu0
      %v4587 = vand.u32 %v3947, 4294901760
      %4588 = vmatprep.subr.mxu0 %v4587
      %v4589 = vand.u32 %v3946, 4294901760
      %4590 = vmatpush1.msra.mxu0 %v4589
      %v4591 = vand.u32 %v3944, 4294901760
      %4592 = vmatprep.subr.mxu0 %v4591
      %v4593 = vand.u32 %v3943, 4294901760
      %4594 = vmatpush1.msra.mxu0 %v4593
      %v4595 = vand.u32 %v3941, 4294901760
      %4596 = vmatprep.subr.mxu0 %v4595
      %v4597 = vand.u32 %v3940, 4294901760
      %4598 = vmatpush1.msra.mxu0 %v4597
      %v4599 = vand.u32 %v3938, 4294901760
      %4600 = vmatprep.subr.mxu0 %v4599
      %v4601 = vand.u32 %v3937, 4294901760
      %4602 = vmatpush1.msra.mxu0 %v4601
      %v4603 = vand.u32 %v3935, 4294901760
      %4604 = vmatprep.subr.mxu0 %v4603
      %v4605 = vand.u32 %v3934, 4294901760
      %4606 = vmatpush1.msra.mxu0 %v4605
      %v4607 = vand.u32 %v3932, 4294901760
      %4608 = vmatprep.subr.mxu0 %v4607
      %v4609 = vand.u32 %v3931, 4294901760
      %4610 = vmatpush1.msra.mxu0 %v4609
      %v4611 = vand.u32 %v3929, 4294901760
      %4612 = vmatprep.subr.mxu0 %v4611
      %v4613 = vand.u32 %v3928, 4294901760
      %4614 = vmatpush1.msra.mxu0 %v4613
      %v4615 = vand.u32 %v3926, 4294901760
      %4616 = vmatprep.subr.mxu0 %v4615
      %v4617 = vand.u32 %v3925, 4294901760
      %4618 = vmatpush1.msra.mxu0 %v4617
      %v4619 = vand.u32 %v3923, 4294901760
      %4620 = vmatprep.subr.mxu0 %v4619
      %v4621 = vand.u32 %v3922, 4294901760
      %4622 = vmatpush1.msra.mxu0 %v4621
      %v4623 = vand.u32 %v3920, 4294901760
      %4624 = vmatprep.subr.mxu0 %v4623
      %v4625 = vand.u32 %v3919, 4294901760
      %4626 = vmatpush1.msra.mxu0 %v4625
      %v4627 = vand.u32 %v3917, 4294901760
      %4628 = vmatprep.subr.mxu0 %v4627
      %v4629 = vand.u32 %v3916, 4294901760
      %4630 = vmatpush1.msra.mxu0 %v4629
      %v4631 = vand.u32 %v3914, 4294901760
      %4632 = vmatprep.subr.mxu0 %v4631
      %v4633 = vand.u32 %v3913, 4294901760
      %4634 = vmatpush1.msra.mxu0 %v4633
      %v4635 = vand.u32 %v3911, 4294901760
      %4636 = vmatprep.subr.mxu0 %v4635
      %v4637 = vand.u32 %v3910, 4294901760
      %4638 = vmatpush1.msra.mxu0 %v4637
      %v4639 = vand.u32 %v3908, 4294901760
      %4640 = vmatprep.subr.mxu0 %v4639
      %v4641 = vand.u32 %v3907, 4294901760
      %4642 = vmatpush1.msra.mxu0 %v4641
      %v4643 = vand.u32 %v3905, 4294901760
      %4644 = vmatprep.subr.mxu0 %v4643
      %v4645 = vand.u32 %v3904, 4294901760
      %4646 = vmatpush1.msra.mxu0 %v4645
      %v4647 = vand.u32 %v3902, 4294901760
      %4648 = vmatprep.subr.mxu0 %v4647
      %v4649 = vand.u32 %v3901, 4294901760
      %4650 = vmatpush1.msra.mxu0 %v4649
      %4651 = vmatprep.subr.mxu0 0.0
      %4652 = vmatpush2.msra.mxu0 0.0
      %4653 = vmatprep.subr.mxu0 0.0
      %4654 = vmatpush2.msra.mxu0 0.0
      %4655 = vmatprep.subr.mxu0 0.0
      %4656 = vmatpush2.msra.mxu0 0.0
      %4657 = vmatprep.subr.mxu0 0.0
      %4658 = vmatpush2.msra.mxu0 0.0
      %4659 = vmatprep.subr.mxu0 0.0
      %4660 = vmatpush2.msra.mxu0 0.0
      %4661 = vmatprep.subr.mxu0 0.0
      %4662 = vmatpush2.msra.mxu0 0.0
      %4663 = vmatprep.subr.mxu0 0.0
      %4664 = vmatpush2.msra.mxu0 0.0
      %4665 = vmatprep.subr.mxu0 0.0
      %4666 = vmatpush2.msra.mxu0 0.0
      %4667 = vmatprep.subr.mxu0 0.0
      %4668 = vmatpush2.msra.mxu0 0.0
      %4669 = vmatprep.subr.mxu0 0.0
      %4670 = vmatpush2.msra.mxu0 0.0
      %4671 = vmatprep.subr.mxu0 0.0
      %4672 = vmatpush2.msra.mxu0 0.0
      %4673 = vmatprep.subr.mxu0 0.0
      %4674 = vmatpush2.msra.mxu0 0.0
      %4675 = vmatprep.subr.mxu0 0.0
      %4676 = vmatpush2.msra.mxu0 0.0
      %4677 = vmatprep.subr.mxu0 0.0
      %4678 = vmatpush2.msra.mxu0 0.0
      %v4679 = vand.u32 %v3953, 4294901760
      %4680 = vmatprep.subr.mxu0 %v4679
      %v4681 = vand.u32 %v3952, 4294901760
      %4682 = vmatpush2.msra.mxu0 %v4681
      %v4683 = vand.u32 %v3950, 4294901760
      %4684 = vmatprep.subr.mxu0 %v4683
      %v4685 = vand.u32 %v3949, 4294901760
      %4686 = vmatpush2.msra.mxu0 %v4685
      %v4687 = vand.u32 %v3957, 4294901760
      %v4688 = vsub.f32 %v3957, %v4687
      %v4689 = vand.u32 %v4688, 4294901760
      %4690 = vmatprep.mubr.f32.mxu0 %v4689
      %v4691 = vand.u32 %v3695, 4294901760
      %v4692 = vsub.f32 %v3695, %v4691
      %v4693 = vand.u32 %v4692, 4294901760
      %4694 = vmatmul.mubr.f32.gmra.mxu0 %v4693
      %v4695 = vpop.f32.mrf.mxu0
      %v4696 = vadd.f32 %v4553, %v4695
      %v4697 = vpop.f32.mrf.mxu0
      %v4698 = vadd.f32 %v4555, %v4697
      %v4699 = vand.u32 %v3960, 4294901760
      %v4700 = vsub.f32 %v3960, %v4699
      %v4701 = vand.u32 %v4700, 4294901760
      %4702 = vmatprep.mubr.f32.mxu0 %v4701
      %v4703 = vand.u32 %v3697, 4294901760
      %v4704 = vsub.f32 %v3697, %v4703
      %v4705 = vand.u32 %v4704, 4294901760
      %4706 = vmatmul.mubr.f32.gmra.mxu0 %v4705
      %v4707 = vpop.f32.mrf.mxu0
      %v4708 = vadd.f32 %v4563, %v4707
      %v4709 = vpop.f32.mrf.mxu0
      %v4710 = vadd.f32 %v4565, %v4709
      %v4711 = vand.u32 %v3963, 4294901760
      %v4712 = vsub.f32 %v3963, %v4711
      %v4713 = vand.u32 %v4712, 4294901760
      %4714 = vmatprep.mubr.f32.mxu0 %v4713
      %v4715 = vand.u32 %v3699, 4294901760
      %v4716 = vsub.f32 %v3699, %v4715
      %v4717 = vand.u32 %v4716, 4294901760
      %4718 = vmatmul.mubr.f32.gmra.mxu0 %v4717
      %v4719 = vpop.f32.mrf.mxu0
      %v4720 = vadd.f32 %v4573, %v4719
      %v4721 = vpop.f32.mrf.mxu0
      %v4722 = vadd.f32 %v4575, %v4721
      %v4723 = vand.u32 %v3966, 4294901760
      %v4724 = vsub.f32 %v3966, %v4723
      %v4725 = vand.u32 %v4724, 4294901760
      %4726 = vmatprep.mubr.f32.mxu0 %v4725
      %v4727 = vand.u32 %v3701, 4294901760
      %v4728 = vsub.f32 %v3701, %v4727
      %v4729 = vand.u32 %v4728, 4294901760
      %4730 = vmatmul.mubr.f32.gmra.mxu0 %v4729
      %v4731 = vpop.f32.mrf.mxu0
      %v4732 = vadd.f32 %v4583, %v4731
      %v4733 = vpop.f32.mrf.mxu0
      %v4734 = vadd.f32 %v4585, %v4733
      %4735 = vdwg.mxu0
      %v4736 = vand.u32 %v3947, 4294901760
      %v4737 = vsub.f32 %v3947, %v4736
      %v4738 = vand.u32 %v4737, 4294901760
      %4739 = vmatprep.subr.mxu0 %v4738
      %v4740 = vand.u32 %v3946, 4294901760
      %v4741 = vsub.f32 %v3946, %v4740
      %v4742 = vand.u32 %v4741, 4294901760
      %4743 = vmatpush1.msra.mxu0 %v4742
      %v4744 = vand.u32 %v3944, 4294901760
      %v4745 = vsub.f32 %v3944, %v4744
      %v4746 = vand.u32 %v4745, 4294901760
      %4747 = vmatprep.subr.mxu0 %v4746
      %v4748 = vand.u32 %v3943, 4294901760
      %v4749 = vsub.f32 %v3943, %v4748
      %v4750 = vand.u32 %v4749, 4294901760
      %4751 = vmatpush1.msra.mxu0 %v4750
      %v4752 = vand.u32 %v3941, 4294901760
      %v4753 = vsub.f32 %v3941, %v4752
      %v4754 = vand.u32 %v4753, 4294901760
      %4755 = vmatprep.subr.mxu0 %v4754
      %v4756 = vand.u32 %v3940, 4294901760
      %v4757 = vsub.f32 %v3940, %v4756
      %v4758 = vand.u32 %v4757, 4294901760
      %4759 = vmatpush1.msra.mxu0 %v4758
      %v4760 = vand.u32 %v3938, 4294901760
      %v4761 = vsub.f32 %v3938, %v4760
      %v4762 = vand.u32 %v4761, 4294901760
      %4763 = vmatprep.subr.mxu0 %v4762
      %v4764 = vand.u32 %v3937, 4294901760
      %v4765 = vsub.f32 %v3937, %v4764
      %v4766 = vand.u32 %v4765, 4294901760
      %4767 = vmatpush1.msra.mxu0 %v4766
      %v4768 = vand.u32 %v3935, 4294901760
      %v4769 = vsub.f32 %v3935, %v4768
      %v4770 = vand.u32 %v4769, 4294901760
      %4771 = vmatprep.subr.mxu0 %v4770
      %v4772 = vand.u32 %v3934, 4294901760
      %v4773 = vsub.f32 %v3934, %v4772
      %v4774 = vand.u32 %v4773, 4294901760
      %4775 = vmatpush1.msra.mxu0 %v4774
      %v4776 = vand.u32 %v3932, 4294901760
      %v4777 = vsub.f32 %v3932, %v4776
      %v4778 = vand.u32 %v4777, 4294901760
      %4779 = vmatprep.subr.mxu0 %v4778
      %v4780 = vand.u32 %v3931, 4294901760
      %v4781 = vsub.f32 %v3931, %v4780
      %v4782 = vand.u32 %v4781, 4294901760
      %4783 = vmatpush1.msra.mxu0 %v4782
      %v4784 = vand.u32 %v3929, 4294901760
      %v4785 = vsub.f32 %v3929, %v4784
      %v4786 = vand.u32 %v4785, 4294901760
      %4787 = vmatprep.subr.mxu0 %v4786
      %v4788 = vand.u32 %v3928, 4294901760
      %v4789 = vsub.f32 %v3928, %v4788
      %v4790 = vand.u32 %v4789, 4294901760
      %4791 = vmatpush1.msra.mxu0 %v4790
      %v4792 = vand.u32 %v3926, 4294901760
      %v4793 = vsub.f32 %v3926, %v4792
      %v4794 = vand.u32 %v4793, 4294901760
      %4795 = vmatprep.subr.mxu0 %v4794
      %v4796 = vand.u32 %v3925, 4294901760
      %v4797 = vsub.f32 %v3925, %v4796
      %v4798 = vand.u32 %v4797, 4294901760
      %4799 = vmatpush1.msra.mxu0 %v4798
      %v4800 = vand.u32 %v3923, 4294901760
      %v4801 = vsub.f32 %v3923, %v4800
      %v4802 = vand.u32 %v4801, 4294901760
      %4803 = vmatprep.subr.mxu0 %v4802
      %v4804 = vand.u32 %v3922, 4294901760
      %v4805 = vsub.f32 %v3922, %v4804
      %v4806 = vand.u32 %v4805, 4294901760
      %4807 = vmatpush1.msra.mxu0 %v4806
      %v4808 = vand.u32 %v3920, 4294901760
      %v4809 = vsub.f32 %v3920, %v4808
      %v4810 = vand.u32 %v4809, 4294901760
      %4811 = vmatprep.subr.mxu0 %v4810
      %v4812 = vand.u32 %v3919, 4294901760
      %v4813 = vsub.f32 %v3919, %v4812
      %v4814 = vand.u32 %v4813, 4294901760
      %4815 = vmatpush1.msra.mxu0 %v4814
      %v4816 = vand.u32 %v3917, 4294901760
      %v4817 = vsub.f32 %v3917, %v4816
      %v4818 = vand.u32 %v4817, 4294901760
      %4819 = vmatprep.subr.mxu0 %v4818
      %v4820 = vand.u32 %v3916, 4294901760
      %v4821 = vsub.f32 %v3916, %v4820
      %v4822 = vand.u32 %v4821, 4294901760
      %4823 = vmatpush1.msra.mxu0 %v4822
      %v4824 = vand.u32 %v3914, 4294901760
      %v4825 = vsub.f32 %v3914, %v4824
      %v4826 = vand.u32 %v4825, 4294901760
      %4827 = vmatprep.subr.mxu0 %v4826
      %v4828 = vand.u32 %v3913, 4294901760
      %v4829 = vsub.f32 %v3913, %v4828
      %v4830 = vand.u32 %v4829, 4294901760
      %4831 = vmatpush1.msra.mxu0 %v4830
      %v4832 = vand.u32 %v3911, 4294901760
      %v4833 = vsub.f32 %v3911, %v4832
      %v4834 = vand.u32 %v4833, 4294901760
      %4835 = vmatprep.subr.mxu0 %v4834
      %v4836 = vand.u32 %v3910, 4294901760
      %v4837 = vsub.f32 %v3910, %v4836
      %v4838 = vand.u32 %v4837, 4294901760
      %4839 = vmatpush1.msra.mxu0 %v4838
      %v4840 = vand.u32 %v3908, 4294901760
      %v4841 = vsub.f32 %v3908, %v4840
      %v4842 = vand.u32 %v4841, 4294901760
      %4843 = vmatprep.subr.mxu0 %v4842
      %v4844 = vand.u32 %v3907, 4294901760
      %v4845 = vsub.f32 %v3907, %v4844
      %v4846 = vand.u32 %v4845, 4294901760
      %4847 = vmatpush1.msra.mxu0 %v4846
      %v4848 = vand.u32 %v3905, 4294901760
      %v4849 = vsub.f32 %v3905, %v4848
      %v4850 = vand.u32 %v4849, 4294901760
      %4851 = vmatprep.subr.mxu0 %v4850
      %v4852 = vand.u32 %v3904, 4294901760
      %v4853 = vsub.f32 %v3904, %v4852
      %v4854 = vand.u32 %v4853, 4294901760
      %4855 = vmatpush1.msra.mxu0 %v4854
      %v4856 = vand.u32 %v3902, 4294901760
      %v4857 = vsub.f32 %v3902, %v4856
      %v4858 = vand.u32 %v4857, 4294901760
      %4859 = vmatprep.subr.mxu0 %v4858
      %v4860 = vand.u32 %v3901, 4294901760
      %v4861 = vsub.f32 %v3901, %v4860
      %v4862 = vand.u32 %v4861, 4294901760
      %4863 = vmatpush1.msra.mxu0 %v4862
      %4864 = vmatprep.subr.mxu0 0.0
      %4865 = vmatpush2.msra.mxu0 0.0
      %4866 = vmatprep.subr.mxu0 0.0
      %4867 = vmatpush2.msra.mxu0 0.0
      %4868 = vmatprep.subr.mxu0 0.0
      %4869 = vmatpush2.msra.mxu0 0.0
      %4870 = vmatprep.subr.mxu0 0.0
      %4871 = vmatpush2.msra.mxu0 0.0
      %4872 = vmatprep.subr.mxu0 0.0
      %4873 = vmatpush2.msra.mxu0 0.0
      %4874 = vmatprep.subr.mxu0 0.0
      %4875 = vmatpush2.msra.mxu0 0.0
      %4876 = vmatprep.subr.mxu0 0.0
      %4877 = vmatpush2.msra.mxu0 0.0
      %4878 = vmatprep.subr.mxu0 0.0
      %4879 = vmatpush2.msra.mxu0 0.0
      %4880 = vmatprep.subr.mxu0 0.0
      %4881 = vmatpush2.msra.mxu0 0.0
      %4882 = vmatprep.subr.mxu0 0.0
      %4883 = vmatpush2.msra.mxu0 0.0
      %4884 = vmatprep.subr.mxu0 0.0
      %4885 = vmatpush2.msra.mxu0 0.0
      %4886 = vmatprep.subr.mxu0 0.0
      %4887 = vmatpush2.msra.mxu0 0.0
      %4888 = vmatprep.subr.mxu0 0.0
      %4889 = vmatpush2.msra.mxu0 0.0
      %4890 = vmatprep.subr.mxu0 0.0
      %4891 = vmatpush2.msra.mxu0 0.0
      %v4892 = vand.u32 %v3953, 4294901760
      %v4893 = vsub.f32 %v3953, %v4892
      %v4894 = vand.u32 %v4893, 4294901760
      %4895 = vmatprep.subr.mxu0 %v4894
      %v4896 = vand.u32 %v3952, 4294901760
      %v4897 = vsub.f32 %v3952, %v4896
      %v4898 = vand.u32 %v4897, 4294901760
      %4899 = vmatpush2.msra.mxu0 %v4898
      %v4900 = vand.u32 %v3950, 4294901760
      %v4901 = vsub.f32 %v3950, %v4900
      %v4902 = vand.u32 %v4901, 4294901760
      %4903 = vmatprep.subr.mxu0 %v4902
      %v4904 = vand.u32 %v3949, 4294901760
      %v4905 = vsub.f32 %v3949, %v4904
      %v4906 = vand.u32 %v4905, 4294901760
      %4907 = vmatpush2.msra.mxu0 %v4906
      %v4908 = vand.u32 %v3957, 4294901760
      %4909 = vmatprep.mubr.f32.mxu0 %v4908
      %v4910 = vand.u32 %v3695, 4294901760
      %4911 = vmatmul.mubr.f32.gmra.mxu0 %v4910
      %v4912 = vpop.f32.mrf.mxu0
      %v4913 = vadd.f32 %v4696, %v4912
      %v4914 = vpop.f32.mrf.mxu0
      %v4915 = vadd.f32 %v4698, %v4914
      %v4916 = vand.u32 %v3960, 4294901760
      %4917 = vmatprep.mubr.f32.mxu0 %v4916
      %v4918 = vand.u32 %v3697, 4294901760
      %4919 = vmatmul.mubr.f32.gmra.mxu0 %v4918
      %v4920 = vpop.f32.mrf.mxu0
      %v4921 = vadd.f32 %v4708, %v4920
      %v4922 = vpop.f32.mrf.mxu0
      %v4923 = vadd.f32 %v4710, %v4922
      %v4924 = vand.u32 %v3963, 4294901760
      %4925 = vmatprep.mubr.f32.mxu0 %v4924
      %v4926 = vand.u32 %v3699, 4294901760
      %4927 = vmatmul.mubr.f32.gmra.mxu0 %v4926
      %v4928 = vpop.f32.mrf.mxu0
      %v4929 = vadd.f32 %v4720, %v4928
      %v4930 = vpop.f32.mrf.mxu0
      %v4931 = vadd.f32 %v4722, %v4930
      %v4932 = vand.u32 %v3966, 4294901760
      %4933 = vmatprep.mubr.f32.mxu0 %v4932
      %v4934 = vand.u32 %v3701, 4294901760
      %4935 = vmatmul.mubr.f32.gmra.mxu0 %v4934
      %v4936 = vpop.f32.mrf.mxu0
      %v4937 = vadd.f32 %v4732, %v4936
      %v4938 = vpop.f32.mrf.mxu0
      %v4939 = vadd.f32 %v4734, %v4938
      %4940 = vdwg.mxu0
      %v4941 = vand.u32 %v3947, 4294901760
      %4942 = vmatprep.subr.mxu0 %v4941
      %v4943 = vand.u32 %v3946, 4294901760
      %4944 = vmatpush1.msra.mxu0 %v4943
      %v4945 = vand.u32 %v3944, 4294901760
      %4946 = vmatprep.subr.mxu0 %v4945
      %v4947 = vand.u32 %v3943, 4294901760
      %4948 = vmatpush1.msra.mxu0 %v4947
      %v4949 = vand.u32 %v3941, 4294901760
      %4950 = vmatprep.subr.mxu0 %v4949
      %v4951 = vand.u32 %v3940, 4294901760
      %4952 = vmatpush1.msra.mxu0 %v4951
      %v4953 = vand.u32 %v3938, 4294901760
      %4954 = vmatprep.subr.mxu0 %v4953
      %v4955 = vand.u32 %v3937, 4294901760
      %4956 = vmatpush1.msra.mxu0 %v4955
      %v4957 = vand.u32 %v3935, 4294901760
      %4958 = vmatprep.subr.mxu0 %v4957
      %v4959 = vand.u32 %v3934, 4294901760
      %4960 = vmatpush1.msra.mxu0 %v4959
      %v4961 = vand.u32 %v3932, 4294901760
      %4962 = vmatprep.subr.mxu0 %v4961
      %v4963 = vand.u32 %v3931, 4294901760
      %4964 = vmatpush1.msra.mxu0 %v4963
      %v4965 = vand.u32 %v3929, 4294901760
      %4966 = vmatprep.subr.mxu0 %v4965
      %v4967 = vand.u32 %v3928, 4294901760
      %4968 = vmatpush1.msra.mxu0 %v4967
      %v4969 = vand.u32 %v3926, 4294901760
      %4970 = vmatprep.subr.mxu0 %v4969
      %v4971 = vand.u32 %v3925, 4294901760
      %4972 = vmatpush1.msra.mxu0 %v4971
      %v4973 = vand.u32 %v3923, 4294901760
      %4974 = vmatprep.subr.mxu0 %v4973
      %v4975 = vand.u32 %v3922, 4294901760
      %4976 = vmatpush1.msra.mxu0 %v4975
      %v4977 = vand.u32 %v3920, 4294901760
      %4978 = vmatprep.subr.mxu0 %v4977
      %v4979 = vand.u32 %v3919, 4294901760
      %4980 = vmatpush1.msra.mxu0 %v4979
      %v4981 = vand.u32 %v3917, 4294901760
      %4982 = vmatprep.subr.mxu0 %v4981
      %v4983 = vand.u32 %v3916, 4294901760
      %4984 = vmatpush1.msra.mxu0 %v4983
      %v4985 = vand.u32 %v3914, 4294901760
      %4986 = vmatprep.subr.mxu0 %v4985
      %v4987 = vand.u32 %v3913, 4294901760
      %4988 = vmatpush1.msra.mxu0 %v4987
      %v4989 = vand.u32 %v3911, 4294901760
      %4990 = vmatprep.subr.mxu0 %v4989
      %v4991 = vand.u32 %v3910, 4294901760
      %4992 = vmatpush1.msra.mxu0 %v4991
      %v4993 = vand.u32 %v3908, 4294901760
      %4994 = vmatprep.subr.mxu0 %v4993
      %v4995 = vand.u32 %v3907, 4294901760
      %4996 = vmatpush1.msra.mxu0 %v4995
      %v4997 = vand.u32 %v3905, 4294901760
      %4998 = vmatprep.subr.mxu0 %v4997
      %v4999 = vand.u32 %v3904, 4294901760
      %5000 = vmatpush1.msra.mxu0 %v4999
      %v5001 = vand.u32 %v3902, 4294901760
      %5002 = vmatprep.subr.mxu0 %v5001
      %v5003 = vand.u32 %v3901, 4294901760
      %5004 = vmatpush1.msra.mxu0 %v5003
      %5005 = vmatprep.subr.mxu0 0.0
      %5006 = vmatpush2.msra.mxu0 0.0
      %5007 = vmatprep.subr.mxu0 0.0
      %5008 = vmatpush2.msra.mxu0 0.0
      %5009 = vmatprep.subr.mxu0 0.0
      %5010 = vmatpush2.msra.mxu0 0.0
      %5011 = vmatprep.subr.mxu0 0.0
      %5012 = vmatpush2.msra.mxu0 0.0
      %5013 = vmatprep.subr.mxu0 0.0
      %5014 = vmatpush2.msra.mxu0 0.0
      %5015 = vmatprep.subr.mxu0 0.0
      %5016 = vmatpush2.msra.mxu0 0.0
      %5017 = vmatprep.subr.mxu0 0.0
      %5018 = vmatpush2.msra.mxu0 0.0
      %5019 = vmatprep.subr.mxu0 0.0
      %5020 = vmatpush2.msra.mxu0 0.0
      %5021 = vmatprep.subr.mxu0 0.0
      %5022 = vmatpush2.msra.mxu0 0.0
      %5023 = vmatprep.subr.mxu0 0.0
      %5024 = vmatpush2.msra.mxu0 0.0
      %5025 = vmatprep.subr.mxu0 0.0
      %5026 = vmatpush2.msra.mxu0 0.0
      %5027 = vmatprep.subr.mxu0 0.0
      %5028 = vmatpush2.msra.mxu0 0.0
      %5029 = vmatprep.subr.mxu0 0.0
      %5030 = vmatpush2.msra.mxu0 0.0
      %5031 = vmatprep.subr.mxu0 0.0
      %5032 = vmatpush2.msra.mxu0 0.0
      %v5033 = vand.u32 %v3953, 4294901760
      %5034 = vmatprep.subr.mxu0 %v5033
      %v5035 = vand.u32 %v3952, 4294901760
      %5036 = vmatpush2.msra.mxu0 %v5035
      %v5037 = vand.u32 %v3950, 4294901760
      %5038 = vmatprep.subr.mxu0 %v5037
      %v5039 = vand.u32 %v3949, 4294901760
      %5040 = vmatpush2.msra.mxu0 %v5039
      %v5041 = vand.u32 %v3957, 4294901760
      %5042 = vmatprep.mubr.f32.mxu0 %v5041
      %v5043 = vand.u32 %v3695, 4294901760
      %5044 = vmatmul.mubr.f32.gmra.mxu0 %v5043
      %v5045 = vpop.f32.mrf.mxu0
      %v5046 = vadd.f32 %v4913, %v5045
      %v5047 = vpop.f32.mrf.mxu0
      %v5048 = vadd.f32 %v4915, %v5047
      %v5049 = vand.u32 %v3960, 4294901760
      %5050 = vmatprep.mubr.f32.mxu0 %v5049
      %v5051 = vand.u32 %v3697, 4294901760
      %5052 = vmatmul.mubr.f32.gmra.mxu0 %v5051
      %v5053 = vpop.f32.mrf.mxu0
      %v5054 = vadd.f32 %v4921, %v5053
      %v5055 = vpop.f32.mrf.mxu0
      %v5056 = vadd.f32 %v4923, %v5055
      %v5057 = vand.u32 %v3963, 4294901760
      %5058 = vmatprep.mubr.f32.mxu0 %v5057
      %v5059 = vand.u32 %v3699, 4294901760
      %5060 = vmatmul.mubr.f32.gmra.mxu0 %v5059
      %v5061 = vpop.f32.mrf.mxu0
      %v5062 = vadd.f32 %v4929, %v5061
      %v5063 = vpop.f32.mrf.mxu0
      %v5064 = vadd.f32 %v4931, %v5063
      %v5065 = vand.u32 %v3966, 4294901760
      %5066 = vmatprep.mubr.f32.mxu0 %v5065
      %v5067 = vand.u32 %v3701, 4294901760
      %5068 = vmatmul.mubr.f32.gmra.mxu0 %v5067
      %v5069 = vpop.f32.mrf.mxu0
      %v5070 = vadd.f32 %v4937, %v5069
      %v5071 = vpop.f32.mrf.mxu0
      %v5072 = vadd.f32 %v4939, %v5071
      %5073 = vdwg.mxu0
      %5074 = vmatprep.subr.mxu0 0.0
      %v5075 = vand.u32 %v3948, 4294901760
      %5076 = vmatpush1.msra.mxu0 %v5075
      %5077 = vmatprep.subr.mxu0 0.0
      %v5078 = vand.u32 %v3945, 4294901760
      %5079 = vmatpush1.msra.mxu0 %v5078
      %5080 = vmatprep.subr.mxu0 0.0
      %v5081 = vand.u32 %v3942, 4294901760
      %5082 = vmatpush1.msra.mxu0 %v5081
      %5083 = vmatprep.subr.mxu0 0.0
      %v5084 = vand.u32 %v3939, 4294901760
      %5085 = vmatpush1.msra.mxu0 %v5084
      %5086 = vmatprep.subr.mxu0 0.0
      %v5087 = vand.u32 %v3936, 4294901760
      %5088 = vmatpush1.msra.mxu0 %v5087
      %5089 = vmatprep.subr.mxu0 0.0
      %v5090 = vand.u32 %v3933, 4294901760
      %5091 = vmatpush1.msra.mxu0 %v5090
      %5092 = vmatprep.subr.mxu0 0.0
      %v5093 = vand.u32 %v3930, 4294901760
      %5094 = vmatpush1.msra.mxu0 %v5093
      %5095 = vmatprep.subr.mxu0 0.0
      %v5096 = vand.u32 %v3927, 4294901760
      %5097 = vmatpush1.msra.mxu0 %v5096
      %5098 = vmatprep.subr.mxu0 0.0
      %v5099 = vand.u32 %v3924, 4294901760
      %5100 = vmatpush1.msra.mxu0 %v5099
      %5101 = vmatprep.subr.mxu0 0.0
      %v5102 = vand.u32 %v3921, 4294901760
      %5103 = vmatpush1.msra.mxu0 %v5102
      %5104 = vmatprep.subr.mxu0 0.0
      %v5105 = vand.u32 %v3918, 4294901760
      %5106 = vmatpush1.msra.mxu0 %v5105
      %5107 = vmatprep.subr.mxu0 0.0
      %v5108 = vand.u32 %v3915, 4294901760
      %5109 = vmatpush1.msra.mxu0 %v5108
      %5110 = vmatprep.subr.mxu0 0.0
      %v5111 = vand.u32 %v3912, 4294901760
      %5112 = vmatpush1.msra.mxu0 %v5111
      %5113 = vmatprep.subr.mxu0 0.0
      %v5114 = vand.u32 %v3909, 4294901760
      %5115 = vmatpush1.msra.mxu0 %v5114
      %5116 = vmatprep.subr.mxu0 0.0
      %v5117 = vand.u32 %v3906, 4294901760
      %5118 = vmatpush1.msra.mxu0 %v5117
      %5119 = vmatprep.subr.mxu0 0.0
      %v5120 = vand.u32 %v3903, 4294901760
      %5121 = vmatpush1.msra.mxu0 %v5120
      %5122 = vmatprep.subr.mxu0 0.0
      %5123 = vmatpush2.msra.mxu0 0.0
      %5124 = vmatprep.subr.mxu0 0.0
      %5125 = vmatpush2.msra.mxu0 0.0
      %5126 = vmatprep.subr.mxu0 0.0
      %5127 = vmatpush2.msra.mxu0 0.0
      %5128 = vmatprep.subr.mxu0 0.0
      %5129 = vmatpush2.msra.mxu0 0.0
      %5130 = vmatprep.subr.mxu0 0.0
      %5131 = vmatpush2.msra.mxu0 0.0
      %5132 = vmatprep.subr.mxu0 0.0
      %5133 = vmatpush2.msra.mxu0 0.0
      %5134 = vmatprep.subr.mxu0 0.0
      %5135 = vmatpush2.msra.mxu0 0.0
      %5136 = vmatprep.subr.mxu0 0.0
      %5137 = vmatpush2.msra.mxu0 0.0
      %5138 = vmatprep.subr.mxu0 0.0
      %5139 = vmatpush2.msra.mxu0 0.0
      %5140 = vmatprep.subr.mxu0 0.0
      %5141 = vmatpush2.msra.mxu0 0.0
      %5142 = vmatprep.subr.mxu0 0.0
      %5143 = vmatpush2.msra.mxu0 0.0
      %5144 = vmatprep.subr.mxu0 0.0
      %5145 = vmatpush2.msra.mxu0 0.0
      %5146 = vmatprep.subr.mxu0 0.0
      %5147 = vmatpush2.msra.mxu0 0.0
      %5148 = vmatprep.subr.mxu0 0.0
      %5149 = vmatpush2.msra.mxu0 0.0
      %5150 = vmatprep.subr.mxu0 0.0
      %v5151 = vand.u32 %v3954, 4294901760
      %5152 = vmatpush2.msra.mxu0 %v5151
      %5153 = vmatprep.subr.mxu0 0.0
      %v5154 = vand.u32 %v3951, 4294901760
      %5155 = vmatpush2.msra.mxu0 %v5154
      %v5156 = vand.u32 %v3957, 4294901760
      %v5157 = vsub.f32 %v3957, %v5156
      %v5158 = vand.u32 %v5157, 4294901760
      %v5159 = vsub.f32 %v5157, %v5158
      %v5160 = vand.u32 %v5159, 4294901760
      %5161 = vmatprep.mubr.f32.mxu0 %v5160
      %v5162 = vand.u32 %v3695, 4294901760
      %v5163 = vsub.f32 %v3695, %v5162
      %v5164 = vand.u32 %v5163, 4294901760
      %v5165 = vsub.f32 %v5163, %v5164
      %v5166 = vand.u32 %v5165, 4294901760
      %5167 = vmatmul.mubr.f32.gmra.mxu0 %v5166
      %v5168 = vpop.f32.mrf.mxu0
      %v5169 = vadd.f32 0.0, %v5168
      %v5170 = vpop.f32.mrf.mxu0
      %v5171 = vand.u32 %v3960, 4294901760
      %v5172 = vsub.f32 %v3960, %v5171
      %v5173 = vand.u32 %v5172, 4294901760
      %v5174 = vsub.f32 %v5172, %v5173
      %v5175 = vand.u32 %v5174, 4294901760
      %5176 = vmatprep.mubr.f32.mxu0 %v5175
      %v5177 = vand.u32 %v3697, 4294901760
      %v5178 = vsub.f32 %v3697, %v5177
      %v5179 = vand.u32 %v5178, 4294901760
      %v5180 = vsub.f32 %v5178, %v5179
      %v5181 = vand.u32 %v5180, 4294901760
      %5182 = vmatmul.mubr.f32.gmra.mxu0 %v5181
      %v5183 = vpop.f32.mrf.mxu0
      %v5184 = vadd.f32 0.0, %v5183
      %v5185 = vpop.f32.mrf.mxu0
      %v5186 = vand.u32 %v3963, 4294901760
      %v5187 = vsub.f32 %v3963, %v5186
      %v5188 = vand.u32 %v5187, 4294901760
      %v5189 = vsub.f32 %v5187, %v5188
      %v5190 = vand.u32 %v5189, 4294901760
      %5191 = vmatprep.mubr.f32.mxu0 %v5190
      %v5192 = vand.u32 %v3699, 4294901760
      %v5193 = vsub.f32 %v3699, %v5192
      %v5194 = vand.u32 %v5193, 4294901760
      %v5195 = vsub.f32 %v5193, %v5194
      %v5196 = vand.u32 %v5195, 4294901760
      %5197 = vmatmul.mubr.f32.gmra.mxu0 %v5196
      %v5198 = vpop.f32.mrf.mxu0
      %v5199 = vadd.f32 0.0, %v5198
      %v5200 = vpop.f32.mrf.mxu0
      %v5201 = vand.u32 %v3966, 4294901760
      %v5202 = vsub.f32 %v3966, %v5201
      %v5203 = vand.u32 %v5202, 4294901760
      %v5204 = vsub.f32 %v5202, %v5203
      %v5205 = vand.u32 %v5204, 4294901760
      %5206 = vmatprep.mubr.f32.mxu0 %v5205
      %v5207 = vand.u32 %v3701, 4294901760
      %v5208 = vsub.f32 %v3701, %v5207
      %v5209 = vand.u32 %v5208, 4294901760
      %v5210 = vsub.f32 %v5208, %v5209
      %v5211 = vand.u32 %v5210, 4294901760
      %5212 = vmatmul.mubr.f32.gmra.mxu0 %v5211
      %v5213 = vpop.f32.mrf.mxu0
      %v5214 = vadd.f32 0.0, %v5213
      %v5215 = vpop.f32.mrf.mxu0
      %5216 = vdwg.mxu0
      %5217 = vmatprep.subr.mxu0 0.0
      %v5218 = vand.u32 %v3948, 4294901760
      %v5219 = vsub.f32 %v3948, %v5218
      %v5220 = vand.u32 %v5219, 4294901760
      %v5221 = vsub.f32 %v5219, %v5220
      %v5222 = vand.u32 %v5221, 4294901760
      %5223 = vmatpush1.msra.mxu0 %v5222
      %5224 = vmatprep.subr.mxu0 0.0
      %v5225 = vand.u32 %v3945, 4294901760
      %v5226 = vsub.f32 %v3945, %v5225
      %v5227 = vand.u32 %v5226, 4294901760
      %v5228 = vsub.f32 %v5226, %v5227
      %v5229 = vand.u32 %v5228, 4294901760
      %5230 = vmatpush1.msra.mxu0 %v5229
      %5231 = vmatprep.subr.mxu0 0.0
      %v5232 = vand.u32 %v3942, 4294901760
      %v5233 = vsub.f32 %v3942, %v5232
      %v5234 = vand.u32 %v5233, 4294901760
      %v5235 = vsub.f32 %v5233, %v5234
      %v5236 = vand.u32 %v5235, 4294901760
      %5237 = vmatpush1.msra.mxu0 %v5236
      %5238 = vmatprep.subr.mxu0 0.0
      %v5239 = vand.u32 %v3939, 4294901760
      %v5240 = vsub.f32 %v3939, %v5239
      %v5241 = vand.u32 %v5240, 4294901760
      %v5242 = vsub.f32 %v5240, %v5241
      %v5243 = vand.u32 %v5242, 4294901760
      %5244 = vmatpush1.msra.mxu0 %v5243
      %5245 = vmatprep.subr.mxu0 0.0
      %v5246 = vand.u32 %v3936, 4294901760
      %v5247 = vsub.f32 %v3936, %v5246
      %v5248 = vand.u32 %v5247, 4294901760
      %v5249 = vsub.f32 %v5247, %v5248
      %v5250 = vand.u32 %v5249, 4294901760
      %5251 = vmatpush1.msra.mxu0 %v5250
      %5252 = vmatprep.subr.mxu0 0.0
      %v5253 = vand.u32 %v3933, 4294901760
      %v5254 = vsub.f32 %v3933, %v5253
      %v5255 = vand.u32 %v5254, 4294901760
      %v5256 = vsub.f32 %v5254, %v5255
      %v5257 = vand.u32 %v5256, 4294901760
      %5258 = vmatpush1.msra.mxu0 %v5257
      %5259 = vmatprep.subr.mxu0 0.0
      %v5260 = vand.u32 %v3930, 4294901760
      %v5261 = vsub.f32 %v3930, %v5260
      %v5262 = vand.u32 %v5261, 4294901760
      %v5263 = vsub.f32 %v5261, %v5262
      %v5264 = vand.u32 %v5263, 4294901760
      %5265 = vmatpush1.msra.mxu0 %v5264
      %5266 = vmatprep.subr.mxu0 0.0
      %v5267 = vand.u32 %v3927, 4294901760
      %v5268 = vsub.f32 %v3927, %v5267
      %v5269 = vand.u32 %v5268, 4294901760
      %v5270 = vsub.f32 %v5268, %v5269
      %v5271 = vand.u32 %v5270, 4294901760
      %5272 = vmatpush1.msra.mxu0 %v5271
      %5273 = vmatprep.subr.mxu0 0.0
      %v5274 = vand.u32 %v3924, 4294901760
      %v5275 = vsub.f32 %v3924, %v5274
      %v5276 = vand.u32 %v5275, 4294901760
      %v5277 = vsub.f32 %v5275, %v5276
      %v5278 = vand.u32 %v5277, 4294901760
      %5279 = vmatpush1.msra.mxu0 %v5278
      %5280 = vmatprep.subr.mxu0 0.0
      %v5281 = vand.u32 %v3921, 4294901760
      %v5282 = vsub.f32 %v3921, %v5281
      %v5283 = vand.u32 %v5282, 4294901760
      %v5284 = vsub.f32 %v5282, %v5283
      %v5285 = vand.u32 %v5284, 4294901760
      %5286 = vmatpush1.msra.mxu0 %v5285
      %5287 = vmatprep.subr.mxu0 0.0
      %v5288 = vand.u32 %v3918, 4294901760
      %v5289 = vsub.f32 %v3918, %v5288
      %v5290 = vand.u32 %v5289, 4294901760
      %v5291 = vsub.f32 %v5289, %v5290
      %v5292 = vand.u32 %v5291, 4294901760
      %5293 = vmatpush1.msra.mxu0 %v5292
      %5294 = vmatprep.subr.mxu0 0.0
      %v5295 = vand.u32 %v3915, 4294901760
      %v5296 = vsub.f32 %v3915, %v5295
      %v5297 = vand.u32 %v5296, 4294901760
      %v5298 = vsub.f32 %v5296, %v5297
      %v5299 = vand.u32 %v5298, 4294901760
      %5300 = vmatpush1.msra.mxu0 %v5299
      %5301 = vmatprep.subr.mxu0 0.0
      %v5302 = vand.u32 %v3912, 4294901760
      %v5303 = vsub.f32 %v3912, %v5302
      %v5304 = vand.u32 %v5303, 4294901760
      %v5305 = vsub.f32 %v5303, %v5304
      %v5306 = vand.u32 %v5305, 4294901760
      %5307 = vmatpush1.msra.mxu0 %v5306
      %5308 = vmatprep.subr.mxu0 0.0
      %v5309 = vand.u32 %v3909, 4294901760
      %v5310 = vsub.f32 %v3909, %v5309
      %v5311 = vand.u32 %v5310, 4294901760
      %v5312 = vsub.f32 %v5310, %v5311
      %v5313 = vand.u32 %v5312, 4294901760
      %5314 = vmatpush1.msra.mxu0 %v5313
      %5315 = vmatprep.subr.mxu0 0.0
      %v5316 = vand.u32 %v3906, 4294901760
      %v5317 = vsub.f32 %v3906, %v5316
      %v5318 = vand.u32 %v5317, 4294901760
      %v5319 = vsub.f32 %v5317, %v5318
      %v5320 = vand.u32 %v5319, 4294901760
      %5321 = vmatpush1.msra.mxu0 %v5320
      %5322 = vmatprep.subr.mxu0 0.0
      %v5323 = vand.u32 %v3903, 4294901760
      %v5324 = vsub.f32 %v3903, %v5323
      %v5325 = vand.u32 %v5324, 4294901760
      %v5326 = vsub.f32 %v5324, %v5325
      %v5327 = vand.u32 %v5326, 4294901760
      %5328 = vmatpush1.msra.mxu0 %v5327
      %5329 = vmatprep.subr.mxu0 0.0
      %5330 = vmatpush2.msra.mxu0 0.0
      %5331 = vmatprep.subr.mxu0 0.0
      %5332 = vmatpush2.msra.mxu0 0.0
      %5333 = vmatprep.subr.mxu0 0.0
      %5334 = vmatpush2.msra.mxu0 0.0
      %5335 = vmatprep.subr.mxu0 0.0
      %5336 = vmatpush2.msra.mxu0 0.0
      %5337 = vmatprep.subr.mxu0 0.0
      %5338 = vmatpush2.msra.mxu0 0.0
      %5339 = vmatprep.subr.mxu0 0.0
      %5340 = vmatpush2.msra.mxu0 0.0
      %5341 = vmatprep.subr.mxu0 0.0
      %5342 = vmatpush2.msra.mxu0 0.0
      %5343 = vmatprep.subr.mxu0 0.0
      %5344 = vmatpush2.msra.mxu0 0.0
      %5345 = vmatprep.subr.mxu0 0.0
      %5346 = vmatpush2.msra.mxu0 0.0
      %5347 = vmatprep.subr.mxu0 0.0
      %5348 = vmatpush2.msra.mxu0 0.0
      %5349 = vmatprep.subr.mxu0 0.0
      %5350 = vmatpush2.msra.mxu0 0.0
      %5351 = vmatprep.subr.mxu0 0.0
      %5352 = vmatpush2.msra.mxu0 0.0
      %5353 = vmatprep.subr.mxu0 0.0
      %5354 = vmatpush2.msra.mxu0 0.0
      %5355 = vmatprep.subr.mxu0 0.0
      %5356 = vmatpush2.msra.mxu0 0.0
      %5357 = vmatprep.subr.mxu0 0.0
      %v5358 = vand.u32 %v3954, 4294901760
      %v5359 = vsub.f32 %v3954, %v5358
      %v5360 = vand.u32 %v5359, 4294901760
      %v5361 = vsub.f32 %v5359, %v5360
      %v5362 = vand.u32 %v5361, 4294901760
      %5363 = vmatpush2.msra.mxu0 %v5362
      %5364 = vmatprep.subr.mxu0 0.0
      %v5365 = vand.u32 %v3951, 4294901760
      %v5366 = vsub.f32 %v3951, %v5365
      %v5367 = vand.u32 %v5366, 4294901760
      %v5368 = vsub.f32 %v5366, %v5367
      %v5369 = vand.u32 %v5368, 4294901760
      %5370 = vmatpush2.msra.mxu0 %v5369
      %v5371 = vand.u32 %v3957, 4294901760
      %5372 = vmatprep.mubr.f32.mxu0 %v5371
      %v5373 = vand.u32 %v3695, 4294901760
      %5374 = vmatmul.mubr.f32.gmra.mxu0 %v5373
      %v5375 = vpop.f32.mrf.mxu0
      %v5376 = vadd.f32 %v5169, %v5375
      %v5377 = vpop.f32.mrf.mxu0
      %v5378 = vand.u32 %v3960, 4294901760
      %5379 = vmatprep.mubr.f32.mxu0 %v5378
      %v5380 = vand.u32 %v3697, 4294901760
      %5381 = vmatmul.mubr.f32.gmra.mxu0 %v5380
      %v5382 = vpop.f32.mrf.mxu0
      %v5383 = vadd.f32 %v5184, %v5382
      %v5384 = vpop.f32.mrf.mxu0
      %v5385 = vand.u32 %v3963, 4294901760
      %5386 = vmatprep.mubr.f32.mxu0 %v5385
      %v5387 = vand.u32 %v3699, 4294901760
      %5388 = vmatmul.mubr.f32.gmra.mxu0 %v5387
      %v5389 = vpop.f32.mrf.mxu0
      %v5390 = vadd.f32 %v5199, %v5389
      %v5391 = vpop.f32.mrf.mxu0
      %v5392 = vand.u32 %v3966, 4294901760
      %5393 = vmatprep.mubr.f32.mxu0 %v5392
      %v5394 = vand.u32 %v3701, 4294901760
      %5395 = vmatmul.mubr.f32.gmra.mxu0 %v5394
      %v5396 = vpop.f32.mrf.mxu0
      %v5397 = vadd.f32 %v5214, %v5396
      %v5398 = vpop.f32.mrf.mxu0
      %5399 = vdwg.mxu0
      %5400 = vmatprep.subr.mxu0 0.0
      %v5401 = vand.u32 %v3948, 4294901760
      %v5402 = vsub.f32 %v3948, %v5401
      %5403 = vmatpush1.msra.mxu0 %v5402
      %5404 = vmatprep.subr.mxu0 0.0
      %v5405 = vand.u32 %v3945, 4294901760
      %v5406 = vsub.f32 %v3945, %v5405
      %5407 = vmatpush1.msra.mxu0 %v5406
      %5408 = vmatprep.subr.mxu0 0.0
      %v5409 = vand.u32 %v3942, 4294901760
      %v5410 = vsub.f32 %v3942, %v5409
      %5411 = vmatpush1.msra.mxu0 %v5410
      %5412 = vmatprep.subr.mxu0 0.0
      %v5413 = vand.u32 %v3939, 4294901760
      %v5414 = vsub.f32 %v3939, %v5413
      %5415 = vmatpush1.msra.mxu0 %v5414
      %5416 = vmatprep.subr.mxu0 0.0
      %v5417 = vand.u32 %v3936, 4294901760
      %v5418 = vsub.f32 %v3936, %v5417
      %5419 = vmatpush1.msra.mxu0 %v5418
      %5420 = vmatprep.subr.mxu0 0.0
      %v5421 = vand.u32 %v3933, 4294901760
      %v5422 = vsub.f32 %v3933, %v5421
      %5423 = vmatpush1.msra.mxu0 %v5422
      %5424 = vmatprep.subr.mxu0 0.0
      %v5425 = vand.u32 %v3930, 4294901760
      %v5426 = vsub.f32 %v3930, %v5425
      %5427 = vmatpush1.msra.mxu0 %v5426
      %5428 = vmatprep.subr.mxu0 0.0
      %v5429 = vand.u32 %v3927, 4294901760
      %v5430 = vsub.f32 %v3927, %v5429
      %5431 = vmatpush1.msra.mxu0 %v5430
      %5432 = vmatprep.subr.mxu0 0.0
      %v5433 = vand.u32 %v3924, 4294901760
      %v5434 = vsub.f32 %v3924, %v5433
      %5435 = vmatpush1.msra.mxu0 %v5434
      %5436 = vmatprep.subr.mxu0 0.0
      %v5437 = vand.u32 %v3921, 4294901760
      %v5438 = vsub.f32 %v3921, %v5437
      %5439 = vmatpush1.msra.mxu0 %v5438
      %5440 = vmatprep.subr.mxu0 0.0
      %v5441 = vand.u32 %v3918, 4294901760
      %v5442 = vsub.f32 %v3918, %v5441
      %5443 = vmatpush1.msra.mxu0 %v5442
      %5444 = vmatprep.subr.mxu0 0.0
      %v5445 = vand.u32 %v3915, 4294901760
      %v5446 = vsub.f32 %v3915, %v5445
      %5447 = vmatpush1.msra.mxu0 %v5446
      %5448 = vmatprep.subr.mxu0 0.0
      %v5449 = vand.u32 %v3912, 4294901760
      %v5450 = vsub.f32 %v3912, %v5449
      %5451 = vmatpush1.msra.mxu0 %v5450
      %5452 = vmatprep.subr.mxu0 0.0
      %v5453 = vand.u32 %v3909, 4294901760
      %v5454 = vsub.f32 %v3909, %v5453
      %5455 = vmatpush1.msra.mxu0 %v5454
      %5456 = vmatprep.subr.mxu0 0.0
      %v5457 = vand.u32 %v3906, 4294901760
      %v5458 = vsub.f32 %v3906, %v5457
      %5459 = vmatpush1.msra.mxu0 %v5458
      %5460 = vmatprep.subr.mxu0 0.0
      %v5461 = vand.u32 %v3903, 4294901760
      %v5462 = vsub.f32 %v3903, %v5461
      %5463 = vmatpush1.msra.mxu0 %v5462
      %5464 = vmatprep.subr.mxu0 0.0
      %5465 = vmatpush2.msra.mxu0 0.0
      %5466 = vmatprep.subr.mxu0 0.0
      %5467 = vmatpush2.msra.mxu0 0.0
      %5468 = vmatprep.subr.mxu0 0.0
      %5469 = vmatpush2.msra.mxu0 0.0
      %5470 = vmatprep.subr.mxu0 0.0
      %5471 = vmatpush2.msra.mxu0 0.0
      %5472 = vmatprep.subr.mxu0 0.0
      %5473 = vmatpush2.msra.mxu0 0.0
      %5474 = vmatprep.subr.mxu0 0.0
      %5475 = vmatpush2.msra.mxu0 0.0
      %5476 = vmatprep.subr.mxu0 0.0
      %5477 = vmatpush2.msra.mxu0 0.0
      %5478 = vmatprep.subr.mxu0 0.0
      %5479 = vmatpush2.msra.mxu0 0.0
      %5480 = vmatprep.subr.mxu0 0.0
      %5481 = vmatpush2.msra.mxu0 0.0
      %5482 = vmatprep.subr.mxu0 0.0
      %5483 = vmatpush2.msra.mxu0 0.0
      %5484 = vmatprep.subr.mxu0 0.0
      %5485 = vmatpush2.msra.mxu0 0.0
      %5486 = vmatprep.subr.mxu0 0.0
      %5487 = vmatpush2.msra.mxu0 0.0
      %5488 = vmatprep.subr.mxu0 0.0
      %5489 = vmatpush2.msra.mxu0 0.0
      %5490 = vmatprep.subr.mxu0 0.0
      %5491 = vmatpush2.msra.mxu0 0.0
      %5492 = vmatprep.subr.mxu0 0.0
      %v5493 = vand.u32 %v3954, 4294901760
      %v5494 = vsub.f32 %v3954, %v5493
      %5495 = vmatpush2.msra.mxu0 %v5494
      %5496 = vmatprep.subr.mxu0 0.0
      %v5497 = vand.u32 %v3951, 4294901760
      %v5498 = vsub.f32 %v3951, %v5497
      %5499 = vmatpush2.msra.mxu0 %v5498
      %v5500 = vand.u32 %v3957, 4294901760
      %v5501 = vsub.f32 %v3957, %v5500
      %5502 = vmatprep.mubr.f32.mxu0 %v5501
      %v5503 = vand.u32 %v3695, 4294901760
      %v5504 = vsub.f32 %v3695, %v5503
      %5505 = vmatmul.mubr.f32.gmra.mxu0 %v5504
      %v5506 = vpop.f32.mrf.mxu0
      %v5507 = vadd.f32 %v5376, %v5506
      %v5508 = vpop.f32.mrf.mxu0
      %v5509 = vand.u32 %v3960, 4294901760
      %v5510 = vsub.f32 %v3960, %v5509
      %5511 = vmatprep.mubr.f32.mxu0 %v5510
      %v5512 = vand.u32 %v3697, 4294901760
      %v5513 = vsub.f32 %v3697, %v5512
      %5514 = vmatmul.mubr.f32.gmra.mxu0 %v5513
      %v5515 = vpop.f32.mrf.mxu0
      %v5516 = vadd.f32 %v5383, %v5515
      %v5517 = vpop.f32.mrf.mxu0
      %v5518 = vand.u32 %v3963, 4294901760
      %v5519 = vsub.f32 %v3963, %v5518
      %5520 = vmatprep.mubr.f32.mxu0 %v5519
      %v5521 = vand.u32 %v3699, 4294901760
      %v5522 = vsub.f32 %v3699, %v5521
      %5523 = vmatmul.mubr.f32.gmra.mxu0 %v5522
      %v5524 = vpop.f32.mrf.mxu0
      %v5525 = vadd.f32 %v5390, %v5524
      %v5526 = vpop.f32.mrf.mxu0
      %v5527 = vand.u32 %v3966, 4294901760
      %v5528 = vsub.f32 %v3966, %v5527
      %5529 = vmatprep.mubr.f32.mxu0 %v5528
      %v5530 = vand.u32 %v3701, 4294901760
      %v5531 = vsub.f32 %v3701, %v5530
      %5532 = vmatmul.mubr.f32.gmra.mxu0 %v5531
      %v5533 = vpop.f32.mrf.mxu0
      %v5534 = vadd.f32 %v5397, %v5533
      %v5535 = vpop.f32.mrf.mxu0
      %5536 = vdwg.mxu0
      %5537 = vmatprep.subr.mxu0 0.0
      %v5538 = vand.u32 %v3948, 4294901760
      %5539 = vmatpush1.msra.mxu0 %v5538
      %5540 = vmatprep.subr.mxu0 0.0
      %v5541 = vand.u32 %v3945, 4294901760
      %5542 = vmatpush1.msra.mxu0 %v5541
      %5543 = vmatprep.subr.mxu0 0.0
      %v5544 = vand.u32 %v3942, 4294901760
      %5545 = vmatpush1.msra.mxu0 %v5544
      %5546 = vmatprep.subr.mxu0 0.0
      %v5547 = vand.u32 %v3939, 4294901760
      %5548 = vmatpush1.msra.mxu0 %v5547
      %5549 = vmatprep.subr.mxu0 0.0
      %v5550 = vand.u32 %v3936, 4294901760
      %5551 = vmatpush1.msra.mxu0 %v5550
      %5552 = vmatprep.subr.mxu0 0.0
      %v5553 = vand.u32 %v3933, 4294901760
      %5554 = vmatpush1.msra.mxu0 %v5553
      %5555 = vmatprep.subr.mxu0 0.0
      %v5556 = vand.u32 %v3930, 4294901760
      %5557 = vmatpush1.msra.mxu0 %v5556
      %5558 = vmatprep.subr.mxu0 0.0
      %v5559 = vand.u32 %v3927, 4294901760
      %5560 = vmatpush1.msra.mxu0 %v5559
      %5561 = vmatprep.subr.mxu0 0.0
      %v5562 = vand.u32 %v3924, 4294901760
      %5563 = vmatpush1.msra.mxu0 %v5562
      %5564 = vmatprep.subr.mxu0 0.0
      %v5565 = vand.u32 %v3921, 4294901760
      %5566 = vmatpush1.msra.mxu0 %v5565
      %5567 = vmatprep.subr.mxu0 0.0
      %v5568 = vand.u32 %v3918, 4294901760
      %5569 = vmatpush1.msra.mxu0 %v5568
      %5570 = vmatprep.subr.mxu0 0.0
      %v5571 = vand.u32 %v3915, 4294901760
      %5572 = vmatpush1.msra.mxu0 %v5571
      %5573 = vmatprep.subr.mxu0 0.0
      %v5574 = vand.u32 %v3912, 4294901760
      %5575 = vmatpush1.msra.mxu0 %v5574
      %5576 = vmatprep.subr.mxu0 0.0
      %v5577 = vand.u32 %v3909, 4294901760
      %5578 = vmatpush1.msra.mxu0 %v5577
      %5579 = vmatprep.subr.mxu0 0.0
      %v5580 = vand.u32 %v3906, 4294901760
      %5581 = vmatpush1.msra.mxu0 %v5580
      %5582 = vmatprep.subr.mxu0 0.0
      %v5583 = vand.u32 %v3903, 4294901760
      %5584 = vmatpush1.msra.mxu0 %v5583
      %5585 = vmatprep.subr.mxu0 0.0
      %5586 = vmatpush2.msra.mxu0 0.0
      %5587 = vmatprep.subr.mxu0 0.0
      %5588 = vmatpush2.msra.mxu0 0.0
      %5589 = vmatprep.subr.mxu0 0.0
      %5590 = vmatpush2.msra.mxu0 0.0
      %5591 = vmatprep.subr.mxu0 0.0
      %5592 = vmatpush2.msra.mxu0 0.0
      %5593 = vmatprep.subr.mxu0 0.0
      %5594 = vmatpush2.msra.mxu0 0.0
      %5595 = vmatprep.subr.mxu0 0.0
      %5596 = vmatpush2.msra.mxu0 0.0
      %5597 = vmatprep.subr.mxu0 0.0
      %5598 = vmatpush2.msra.mxu0 0.0
      %5599 = vmatprep.subr.mxu0 0.0
      %5600 = vmatpush2.msra.mxu0 0.0
      %5601 = vmatprep.subr.mxu0 0.0
      %5602 = vmatpush2.msra.mxu0 0.0
      %5603 = vmatprep.subr.mxu0 0.0
      %5604 = vmatpush2.msra.mxu0 0.0
      %5605 = vmatprep.subr.mxu0 0.0
      %5606 = vmatpush2.msra.mxu0 0.0
      %5607 = vmatprep.subr.mxu0 0.0
      %5608 = vmatpush2.msra.mxu0 0.0
      %5609 = vmatprep.subr.mxu0 0.0
      %5610 = vmatpush2.msra.mxu0 0.0
      %5611 = vmatprep.subr.mxu0 0.0
      %5612 = vmatpush2.msra.mxu0 0.0
      %5613 = vmatprep.subr.mxu0 0.0
      %v5614 = vand.u32 %v3954, 4294901760
      %5615 = vmatpush2.msra.mxu0 %v5614
      %5616 = vmatprep.subr.mxu0 0.0
      %v5617 = vand.u32 %v3951, 4294901760
      %5618 = vmatpush2.msra.mxu0 %v5617
      %v5619 = vand.u32 %v3957, 4294901760
      %v5620 = vsub.f32 %v3957, %v5619
      %v5621 = vand.u32 %v5620, 4294901760
      %5622 = vmatprep.mubr.f32.mxu0 %v5621
      %v5623 = vand.u32 %v3695, 4294901760
      %v5624 = vsub.f32 %v3695, %v5623
      %v5625 = vand.u32 %v5624, 4294901760
      %5626 = vmatmul.mubr.f32.gmra.mxu0 %v5625
      %v5627 = vpop.f32.mrf.mxu0
      %v5628 = vadd.f32 %v5507, %v5627
      %v5629 = vpop.f32.mrf.mxu0
      %v5630 = vand.u32 %v3960, 4294901760
      %v5631 = vsub.f32 %v3960, %v5630
      %v5632 = vand.u32 %v5631, 4294901760
      %5633 = vmatprep.mubr.f32.mxu0 %v5632
      %v5634 = vand.u32 %v3697, 4294901760
      %v5635 = vsub.f32 %v3697, %v5634
      %v5636 = vand.u32 %v5635, 4294901760
      %5637 = vmatmul.mubr.f32.gmra.mxu0 %v5636
      %v5638 = vpop.f32.mrf.mxu0
      %v5639 = vadd.f32 %v5516, %v5638
      %v5640 = vpop.f32.mrf.mxu0
      %v5641 = vand.u32 %v3963, 4294901760
      %v5642 = vsub.f32 %v3963, %v5641
      %v5643 = vand.u32 %v5642, 4294901760
      %5644 = vmatprep.mubr.f32.mxu0 %v5643
      %v5645 = vand.u32 %v3699, 4294901760
      %v5646 = vsub.f32 %v3699, %v5645
      %v5647 = vand.u32 %v5646, 4294901760
      %5648 = vmatmul.mubr.f32.gmra.mxu0 %v5647
      %v5649 = vpop.f32.mrf.mxu0
      %v5650 = vadd.f32 %v5525, %v5649
      %v5651 = vpop.f32.mrf.mxu0
      %v5652 = vand.u32 %v3966, 4294901760
      %v5653 = vsub.f32 %v3966, %v5652
      %v5654 = vand.u32 %v5653, 4294901760
      %5655 = vmatprep.mubr.f32.mxu0 %v5654
      %v5656 = vand.u32 %v3701, 4294901760
      %v5657 = vsub.f32 %v3701, %v5656
      %v5658 = vand.u32 %v5657, 4294901760
      %5659 = vmatmul.mubr.f32.gmra.mxu0 %v5658
      %v5660 = vpop.f32.mrf.mxu0
      %v5661 = vadd.f32 %v5534, %v5660
      %v5662 = vpop.f32.mrf.mxu0
      %5663 = vdwg.mxu0
      %5664 = vmatprep.subr.mxu0 0.0
      %v5665 = vand.u32 %v3948, 4294901760
      %v5666 = vsub.f32 %v3948, %v5665
      %v5667 = vand.u32 %v5666, 4294901760
      %5668 = vmatpush1.msra.mxu0 %v5667
      %5669 = vmatprep.subr.mxu0 0.0
      %v5670 = vand.u32 %v3945, 4294901760
      %v5671 = vsub.f32 %v3945, %v5670
      %v5672 = vand.u32 %v5671, 4294901760
      %5673 = vmatpush1.msra.mxu0 %v5672
      %5674 = vmatprep.subr.mxu0 0.0
      %v5675 = vand.u32 %v3942, 4294901760
      %v5676 = vsub.f32 %v3942, %v5675
      %v5677 = vand.u32 %v5676, 4294901760
      %5678 = vmatpush1.msra.mxu0 %v5677
      %5679 = vmatprep.subr.mxu0 0.0
      %v5680 = vand.u32 %v3939, 4294901760
      %v5681 = vsub.f32 %v3939, %v5680
      %v5682 = vand.u32 %v5681, 4294901760
      %5683 = vmatpush1.msra.mxu0 %v5682
      %5684 = vmatprep.subr.mxu0 0.0
      %v5685 = vand.u32 %v3936, 4294901760
      %v5686 = vsub.f32 %v3936, %v5685
      %v5687 = vand.u32 %v5686, 4294901760
      %5688 = vmatpush1.msra.mxu0 %v5687
      %5689 = vmatprep.subr.mxu0 0.0
      %v5690 = vand.u32 %v3933, 4294901760
      %v5691 = vsub.f32 %v3933, %v5690
      %v5692 = vand.u32 %v5691, 4294901760
      %5693 = vmatpush1.msra.mxu0 %v5692
      %5694 = vmatprep.subr.mxu0 0.0
      %v5695 = vand.u32 %v3930, 4294901760
      %v5696 = vsub.f32 %v3930, %v5695
      %v5697 = vand.u32 %v5696, 4294901760
      %5698 = vmatpush1.msra.mxu0 %v5697
      %5699 = vmatprep.subr.mxu0 0.0
      %v5700 = vand.u32 %v3927, 4294901760
      %v5701 = vsub.f32 %v3927, %v5700
      %v5702 = vand.u32 %v5701, 4294901760
      %5703 = vmatpush1.msra.mxu0 %v5702
      %5704 = vmatprep.subr.mxu0 0.0
      %v5705 = vand.u32 %v3924, 4294901760
      %v5706 = vsub.f32 %v3924, %v5705
      %v5707 = vand.u32 %v5706, 4294901760
      %5708 = vmatpush1.msra.mxu0 %v5707
      %5709 = vmatprep.subr.mxu0 0.0
      %v5710 = vand.u32 %v3921, 4294901760
      %v5711 = vsub.f32 %v3921, %v5710
      %v5712 = vand.u32 %v5711, 4294901760
      %5713 = vmatpush1.msra.mxu0 %v5712
      %5714 = vmatprep.subr.mxu0 0.0
      %v5715 = vand.u32 %v3918, 4294901760
      %v5716 = vsub.f32 %v3918, %v5715
      %v5717 = vand.u32 %v5716, 4294901760
      %5718 = vmatpush1.msra.mxu0 %v5717
      %5719 = vmatprep.subr.mxu0 0.0
      %v5720 = vand.u32 %v3915, 4294901760
      %v5721 = vsub.f32 %v3915, %v5720
      %v5722 = vand.u32 %v5721, 4294901760
      %5723 = vmatpush1.msra.mxu0 %v5722
      %5724 = vmatprep.subr.mxu0 0.0
      %v5725 = vand.u32 %v3912, 4294901760
      %v5726 = vsub.f32 %v3912, %v5725
      %v5727 = vand.u32 %v5726, 4294901760
      %5728 = vmatpush1.msra.mxu0 %v5727
      %5729 = vmatprep.subr.mxu0 0.0
      %v5730 = vand.u32 %v3909, 4294901760
      %v5731 = vsub.f32 %v3909, %v5730
      %v5732 = vand.u32 %v5731, 4294901760
      %5733 = vmatpush1.msra.mxu0 %v5732
      %5734 = vmatprep.subr.mxu0 0.0
      %v5735 = vand.u32 %v3906, 4294901760
      %v5736 = vsub.f32 %v3906, %v5735
      %v5737 = vand.u32 %v5736, 4294901760
      %5738 = vmatpush1.msra.mxu0 %v5737
      %5739 = vmatprep.subr.mxu0 0.0
      %v5740 = vand.u32 %v3903, 4294901760
      %v5741 = vsub.f32 %v3903, %v5740
      %v5742 = vand.u32 %v5741, 4294901760
      %5743 = vmatpush1.msra.mxu0 %v5742
      %5744 = vmatprep.subr.mxu0 0.0
      %5745 = vmatpush2.msra.mxu0 0.0
      %5746 = vmatprep.subr.mxu0 0.0
      %5747 = vmatpush2.msra.mxu0 0.0
      %5748 = vmatprep.subr.mxu0 0.0
      %5749 = vmatpush2.msra.mxu0 0.0
      %5750 = vmatprep.subr.mxu0 0.0
      %5751 = vmatpush2.msra.mxu0 0.0
      %5752 = vmatprep.subr.mxu0 0.0
      %5753 = vmatpush2.msra.mxu0 0.0
      %5754 = vmatprep.subr.mxu0 0.0
      %5755 = vmatpush2.msra.mxu0 0.0
      %5756 = vmatprep.subr.mxu0 0.0
      %5757 = vmatpush2.msra.mxu0 0.0
      %5758 = vmatprep.subr.mxu0 0.0
      %5759 = vmatpush2.msra.mxu0 0.0
      %5760 = vmatprep.subr.mxu0 0.0
      %5761 = vmatpush2.msra.mxu0 0.0
      %5762 = vmatprep.subr.mxu0 0.0
      %5763 = vmatpush2.msra.mxu0 0.0
      %5764 = vmatprep.subr.mxu0 0.0
      %5765 = vmatpush2.msra.mxu0 0.0
      %5766 = vmatprep.subr.mxu0 0.0
      %5767 = vmatpush2.msra.mxu0 0.0
      %5768 = vmatprep.subr.mxu0 0.0
      %5769 = vmatpush2.msra.mxu0 0.0
      %5770 = vmatprep.subr.mxu0 0.0
      %5771 = vmatpush2.msra.mxu0 0.0
      %5772 = vmatprep.subr.mxu0 0.0
      %v5773 = vand.u32 %v3954, 4294901760
      %v5774 = vsub.f32 %v3954, %v5773
      %v5775 = vand.u32 %v5774, 4294901760
      %5776 = vmatpush2.msra.mxu0 %v5775
      %5777 = vmatprep.subr.mxu0 0.0
      %v5778 = vand.u32 %v3951, 4294901760
      %v5779 = vsub.f32 %v3951, %v5778
      %v5780 = vand.u32 %v5779, 4294901760
      %5781 = vmatpush2.msra.mxu0 %v5780
      %v5782 = vand.u32 %v3957, 4294901760
      %5783 = vmatprep.mubr.f32.mxu0 %v5782
      %v5784 = vand.u32 %v3695, 4294901760
      %5785 = vmatmul.mubr.f32.gmra.mxu0 %v5784
      %v5786 = vpop.f32.mrf.mxu0
      %v5787 = vadd.f32 %v5628, %v5786
      %v5788 = vpop.f32.mrf.mxu0
      %v5789 = vand.u32 %v3960, 4294901760
      %5790 = vmatprep.mubr.f32.mxu0 %v5789
      %v5791 = vand.u32 %v3697, 4294901760
      %5792 = vmatmul.mubr.f32.gmra.mxu0 %v5791
      %v5793 = vpop.f32.mrf.mxu0
      %v5794 = vadd.f32 %v5639, %v5793
      %v5795 = vpop.f32.mrf.mxu0
      %v5796 = vand.u32 %v3963, 4294901760
      %5797 = vmatprep.mubr.f32.mxu0 %v5796
      %v5798 = vand.u32 %v3699, 4294901760
      %5799 = vmatmul.mubr.f32.gmra.mxu0 %v5798
      %v5800 = vpop.f32.mrf.mxu0
      %v5801 = vadd.f32 %v5650, %v5800
      %v5802 = vpop.f32.mrf.mxu0
      %v5803 = vand.u32 %v3966, 4294901760
      %5804 = vmatprep.mubr.f32.mxu0 %v5803
      %v5805 = vand.u32 %v3701, 4294901760
      %5806 = vmatmul.mubr.f32.gmra.mxu0 %v5805
      %v5807 = vpop.f32.mrf.mxu0
      %v5808 = vadd.f32 %v5661, %v5807
      %v5809 = vpop.f32.mrf.mxu0
      %5810 = vdwg.mxu0
      %5811 = vmatprep.subr.mxu0 0.0
      %v5812 = vand.u32 %v3948, 4294901760
      %5813 = vmatpush1.msra.mxu0 %v5812
      %5814 = vmatprep.subr.mxu0 0.0
      %v5815 = vand.u32 %v3945, 4294901760
      %5816 = vmatpush1.msra.mxu0 %v5815
      %5817 = vmatprep.subr.mxu0 0.0
      %v5818 = vand.u32 %v3942, 4294901760
      %5819 = vmatpush1.msra.mxu0 %v5818
      %5820 = vmatprep.subr.mxu0 0.0
      %v5821 = vand.u32 %v3939, 4294901760
      %5822 = vmatpush1.msra.mxu0 %v5821
      %5823 = vmatprep.subr.mxu0 0.0
      %v5824 = vand.u32 %v3936, 4294901760
      %5825 = vmatpush1.msra.mxu0 %v5824
      %5826 = vmatprep.subr.mxu0 0.0
      %v5827 = vand.u32 %v3933, 4294901760
      %5828 = vmatpush1.msra.mxu0 %v5827
      %5829 = vmatprep.subr.mxu0 0.0
      %v5830 = vand.u32 %v3930, 4294901760
      %5831 = vmatpush1.msra.mxu0 %v5830
      %5832 = vmatprep.subr.mxu0 0.0
      %v5833 = vand.u32 %v3927, 4294901760
      %5834 = vmatpush1.msra.mxu0 %v5833
      %5835 = vmatprep.subr.mxu0 0.0
      %v5836 = vand.u32 %v3924, 4294901760
      %5837 = vmatpush1.msra.mxu0 %v5836
      %5838 = vmatprep.subr.mxu0 0.0
      %v5839 = vand.u32 %v3921, 4294901760
      %5840 = vmatpush1.msra.mxu0 %v5839
      %5841 = vmatprep.subr.mxu0 0.0
      %v5842 = vand.u32 %v3918, 4294901760
      %5843 = vmatpush1.msra.mxu0 %v5842
      %5844 = vmatprep.subr.mxu0 0.0
      %v5845 = vand.u32 %v3915, 4294901760
      %5846 = vmatpush1.msra.mxu0 %v5845
      %5847 = vmatprep.subr.mxu0 0.0
      %v5848 = vand.u32 %v3912, 4294901760
      %5849 = vmatpush1.msra.mxu0 %v5848
      %5850 = vmatprep.subr.mxu0 0.0
      %v5851 = vand.u32 %v3909, 4294901760
      %5852 = vmatpush1.msra.mxu0 %v5851
      %5853 = vmatprep.subr.mxu0 0.0
      %v5854 = vand.u32 %v3906, 4294901760
      %5855 = vmatpush1.msra.mxu0 %v5854
      %5856 = vmatprep.subr.mxu0 0.0
      %v5857 = vand.u32 %v3903, 4294901760
      %5858 = vmatpush1.msra.mxu0 %v5857
      %5859 = vmatprep.subr.mxu0 0.0
      %5860 = vmatpush2.msra.mxu0 0.0
      %5861 = vmatprep.subr.mxu0 0.0
      %5862 = vmatpush2.msra.mxu0 0.0
      %5863 = vmatprep.subr.mxu0 0.0
      %5864 = vmatpush2.msra.mxu0 0.0
      %5865 = vmatprep.subr.mxu0 0.0
      %5866 = vmatpush2.msra.mxu0 0.0
      %5867 = vmatprep.subr.mxu0 0.0
      %5868 = vmatpush2.msra.mxu0 0.0
      %5869 = vmatprep.subr.mxu0 0.0
      %5870 = vmatpush2.msra.mxu0 0.0
      %5871 = vmatprep.subr.mxu0 0.0
      %5872 = vmatpush2.msra.mxu0 0.0
      %5873 = vmatprep.subr.mxu0 0.0
      %5874 = vmatpush2.msra.mxu0 0.0
      %5875 = vmatprep.subr.mxu0 0.0
      %5876 = vmatpush2.msra.mxu0 0.0
      %5877 = vmatprep.subr.mxu0 0.0
      %5878 = vmatpush2.msra.mxu0 0.0
      %5879 = vmatprep.subr.mxu0 0.0
      %5880 = vmatpush2.msra.mxu0 0.0
      %5881 = vmatprep.subr.mxu0 0.0
      %5882 = vmatpush2.msra.mxu0 0.0
      %5883 = vmatprep.subr.mxu0 0.0
      %5884 = vmatpush2.msra.mxu0 0.0
      %5885 = vmatprep.subr.mxu0 0.0
      %5886 = vmatpush2.msra.mxu0 0.0
      %5887 = vmatprep.subr.mxu0 0.0
      %v5888 = vand.u32 %v3954, 4294901760
      %5889 = vmatpush2.msra.mxu0 %v5888
      %5890 = vmatprep.subr.mxu0 0.0
      %v5891 = vand.u32 %v3951, 4294901760
      %5892 = vmatpush2.msra.mxu0 %v5891
      %v5893 = vand.u32 %v3957, 4294901760
      %5894 = vmatprep.mubr.f32.mxu0 %v5893
      %v5895 = vand.u32 %v3695, 4294901760
      %5896 = vmatmul.mubr.f32.gmra.mxu0 %v5895
      %v5897 = vpop.f32.mrf.mxu0
      %v5898 = vadd.f32 %v5787, %v5897
      %v5899 = vpop.f32.mrf.mxu0
      %v5900 = vand.u32 %v3960, 4294901760
      %5901 = vmatprep.mubr.f32.mxu0 %v5900
      %v5902 = vand.u32 %v3697, 4294901760
      %5903 = vmatmul.mubr.f32.gmra.mxu0 %v5902
      %v5904 = vpop.f32.mrf.mxu0
      %v5905 = vadd.f32 %v5794, %v5904
      %v5906 = vpop.f32.mrf.mxu0
      %v5907 = vand.u32 %v3963, 4294901760
      %5908 = vmatprep.mubr.f32.mxu0 %v5907
      %v5909 = vand.u32 %v3699, 4294901760
      %5910 = vmatmul.mubr.f32.gmra.mxu0 %v5909
      %v5911 = vpop.f32.mrf.mxu0
      %v5912 = vadd.f32 %v5801, %v5911
      %v5913 = vpop.f32.mrf.mxu0
      %v5914 = vand.u32 %v3966, 4294901760
      %5915 = vmatprep.mubr.f32.mxu0 %v5914
      %v5916 = vand.u32 %v3701, 4294901760
      %5917 = vmatmul.mubr.f32.gmra.mxu0 %v5916
      %v5918 = vpop.f32.mrf.mxu0
      %v5919 = vadd.f32 %v5808, %v5918
      %v5920 = vpop.f32.mrf.mxu0
      %5921 = vdwg.mxu0
      %v5922 = vsel %vm1625, %v5046, 0.0
      %v5923 = vsel %vm1626, %v5048, 0.0
      %v5924 = vsel %vm1627, %v5898, 0.0
      %v5925 = vsel %vm1625, %v5054, 0.0
      %v5926 = vsel %vm1626, %v5056, 0.0
      %v5927 = vsel %vm1627, %v5905, 0.0
      %v5928 = vsel %vm1625, %v5062, 0.0
      %v5929 = vsel %vm1626, %v5064, 0.0
      %v5930 = vsel %vm1627, %v5912, 0.0
      %v5931 = vsel %vm1625, %v5070, 0.0
      %v5932 = vsel %vm1626, %v5072, 0.0
      %v5933 = vsel %vm1627, %v5919, 0.0
      %v5934 = vadd.f32 %v5922, %v5923
      %v5935 = vadd.f32 %v5934, %v5924
      %5936 = vadd.xlane.f32.xlu0 %v5935
      %v5937 = vpop.xlane.xlu0 %5936
      %v5938 = vadd.f32 %v5925, %v5926
      %v5939 = vadd.f32 %v5938, %v5927
      %5940 = vadd.xlane.f32.xlu0 %v5939
      %v5941 = vpop.xlane.xlu0 %5940
      %v5942 = vadd.f32 %v5928, %v5929
      %v5943 = vadd.f32 %v5942, %v5930
      %5944 = vadd.xlane.f32.xlu0 %v5943
      %v5945 = vpop.xlane.xlu0 %5944
      %v5946 = vadd.f32 %v5931, %v5932
      %v5947 = vadd.f32 %v5946, %v5933
      %5948 = vadd.xlane.f32.xlu0 %v5947
      %v5949 = vpop.xlane.xlu0 %5948
      %v5950 = vmul.f32 %v5937, 0.00390625
      %v5951 = vmul.f32 %v5941, 0.00390625
      %v5952 = vmul.f32 %v5945, 0.00390625
      %v5953 = vmul.f32 %v5949, 0.00390625
      %v5954 = vmul.f32 %v5922, %v5922
      %v5955 = vmul.f32 %v5923, %v5923
      %v5956 = vmul.f32 %v5924, %v5924
      %v5957 = vmul.f32 %v5925, %v5925
      %v5958 = vmul.f32 %v5926, %v5926
      %v5959 = vmul.f32 %v5927, %v5927
      %v5960 = vmul.f32 %v5928, %v5928
      %v5961 = vmul.f32 %v5929, %v5929
      %v5962 = vmul.f32 %v5930, %v5930
      %v5963 = vmul.f32 %v5931, %v5931
      %v5964 = vmul.f32 %v5932, %v5932
      %v5965 = vmul.f32 %v5933, %v5933
      %v5966 = vadd.f32 %v5954, %v5955
      %v5967 = vadd.f32 %v5966, %v5956
      %5968 = vadd.xlane.f32.xlu0 %v5967
      %v5969 = vpop.xlane.xlu0 %5968
      %v5970 = vadd.f32 %v5957, %v5958
      %v5971 = vadd.f32 %v5970, %v5959
      %5972 = vadd.xlane.f32.xlu0 %v5971
      %v5973 = vpop.xlane.xlu0 %5972
      %v5974 = vadd.f32 %v5960, %v5961
      %v5975 = vadd.f32 %v5974, %v5962
      %5976 = vadd.xlane.f32.xlu0 %v5975
      %v5977 = vpop.xlane.xlu0 %5976
      %v5978 = vadd.f32 %v5963, %v5964
      %v5979 = vadd.f32 %v5978, %v5965
      %5980 = vadd.xlane.f32.xlu0 %v5979
      %v5981 = vpop.xlane.xlu0 %5980
      %v5982 = vmul.f32 %v5969, 0.00390625
      %v5983 = vmul.f32 %v5973, 0.00390625
      %v5984 = vmul.f32 %v5977, 0.00390625
      %v5985 = vmul.f32 %v5981, 0.00390625
      %v5986 = vmul.f32 %v5950, %v5950
      %v5987 = vmul.f32 %v5951, %v5951
      %v5988 = vmul.f32 %v5952, %v5952
      %v5989 = vmul.f32 %v5953, %v5953
      %v5990 = vsub.f32 %v5982, %v5986
      %v5991 = vsub.f32 %v5983, %v5987
      %v5992 = vsub.f32 %v5984, %v5988
      %v5993 = vsub.f32 %v5985, %v5989
      %v5994 = vsub.f32 %v5046, %v5950
      %v5995 = vsub.f32 %v5048, %v5950
      %v5996 = vsub.f32 %v5898, %v5950
      %v5997 = vsub.f32 %v5054, %v5951
      %v5998 = vsub.f32 %v5056, %v5951
      %v5999 = vsub.f32 %v5905, %v5951
      %v6000 = vsub.f32 %v5062, %v5952
      %v6001 = vsub.f32 %v5064, %v5952
      %v6002 = vsub.f32 %v5912, %v5952
      %v6003 = vsub.f32 %v5070, %v5953
      %v6004 = vsub.f32 %v5072, %v5953
      %v6005 = vsub.f32 %v5919, %v5953
      %v6006 = vadd.f32 %v5990, 1e-05
      %v6007 = vadd.f32 %v5991, 1e-05
      %v6008 = vadd.f32 %v5992, 1e-05
      %v6009 = vadd.f32 %v5993, 1e-05
      %v6010 = vrsqrt.pop %v6006
      %v6011 = vrsqrt.pop %v6007
      %v6012 = vrsqrt.pop %v6008
      %v6013 = vrsqrt.pop %v6009
      %v6014 = vmul.f32 %v5994, %v6010
      %v6015 = vmul.f32 %v5995, %v6010
      %v6016 = vmul.f32 %v5996, %v6010
      %v6017 = vmul.f32 %v5997, %v6011
      %v6018 = vmul.f32 %v5998, %v6011
      %v6019 = vmul.f32 %v5999, %v6011
      %v6020 = vmul.f32 %v6000, %v6012
      %v6021 = vmul.f32 %v6001, %v6012
      %v6022 = vmul.f32 %v6002, %v6012
      %v6023 = vmul.f32 %v6003, %v6013
      %v6024 = vmul.f32 %v6004, %v6013
      %v6025 = vmul.f32 %v6005, %v6013
      %v6026 = vmul.f32 %v6014, 0.5
      %v6027 = vmul.f32 %v6015, 0.5
      %v6028 = vmul.f32 %v6016, 0.5
      %v6029 = vmul.f32 %v6017, 0.5
      %v6030 = vmul.f32 %v6018, 0.5
      %v6031 = vmul.f32 %v6019, 0.5
      %v6032 = vmul.f32 %v6020, 0.5
      %v6033 = vmul.f32 %v6021, 0.5
      %v6034 = vmul.f32 %v6022, 0.5
      %v6035 = vmul.f32 %v6023, 0.5
      %v6036 = vmul.f32 %v6024, 0.5
      %v6037 = vmul.f32 %v6025, 0.5
      %v6038 = vmul.f32 %v6014, 0.70710677
      %v6039 = vmul.f32 %v6015, 0.70710677
      %v6040 = vmul.f32 %v6016, 0.70710677
      %v6041 = vmul.f32 %v6017, 0.70710677
      %v6042 = vmul.f32 %v6018, 0.70710677
      %v6043 = vmul.f32 %v6019, 0.70710677
      %v6044 = vmul.f32 %v6020, 0.70710677
      %v6045 = vmul.f32 %v6021, 0.70710677
      %v6046 = vmul.f32 %v6022, 0.70710677
      %v6047 = vmul.f32 %v6023, 0.70710677
      %v6048 = vmul.f32 %v6024, 0.70710677
      %v6049 = vmul.f32 %v6025, 0.70710677
      %v6050 = vand.u32 2147483647, %v6038
      %v6051 = vand.u32 2147483647, %v6039
      %v6052 = vand.u32 2147483647, %v6040
      %v6053 = vand.u32 2147483647, %v6041
      %v6054 = vand.u32 2147483647, %v6042
      %v6055 = vand.u32 2147483647, %v6043
      %v6056 = vand.u32 2147483647, %v6044
      %v6057 = vand.u32 2147483647, %v6045
      %v6058 = vand.u32 2147483647, %v6046
      %v6059 = vand.u32 2147483647, %v6047
      %v6060 = vand.u32 2147483647, %v6048
      %v6061 = vand.u32 2147483647, %v6049
      %v6062 = vmul.f32 %v6050, 0.3275911
      %v6063 = vmul.f32 %v6051, 0.3275911
      %v6064 = vmul.f32 %v6052, 0.3275911
      %v6065 = vmul.f32 %v6053, 0.3275911
      %v6066 = vmul.f32 %v6054, 0.3275911
      %v6067 = vmul.f32 %v6055, 0.3275911
      %v6068 = vmul.f32 %v6056, 0.3275911
      %v6069 = vmul.f32 %v6057, 0.3275911
      %v6070 = vmul.f32 %v6058, 0.3275911
      %v6071 = vmul.f32 %v6059, 0.3275911
      %v6072 = vmul.f32 %v6060, 0.3275911
      %v6073 = vmul.f32 %v6061, 0.3275911
      %v6074 = vadd.f32 %v6062, 1.0
      %v6075 = vadd.f32 %v6063, 1.0
      %v6076 = vadd.f32 %v6064, 1.0
      %v6077 = vadd.f32 %v6065, 1.0
      %v6078 = vadd.f32 %v6066, 1.0
      %v6079 = vadd.f32 %v6067, 1.0
      %v6080 = vadd.f32 %v6068, 1.0
      %v6081 = vadd.f32 %v6069, 1.0
      %v6082 = vadd.f32 %v6070, 1.0
      %v6083 = vadd.f32 %v6071, 1.0
      %v6084 = vadd.f32 %v6072, 1.0
      %v6085 = vadd.f32 %v6073, 1.0
      %v6086 = vrcp.pop %v6074
      %v6087 = vmul.f32 1.0, %v6086
      %v6088 = vrcp.pop %v6075
      %v6089 = vmul.f32 1.0, %v6088
      %v6090 = vrcp.pop %v6076
      %v6091 = vmul.f32 1.0, %v6090
      %v6092 = vrcp.pop %v6077
      %v6093 = vmul.f32 1.0, %v6092
      %v6094 = vrcp.pop %v6078
      %v6095 = vmul.f32 1.0, %v6094
      %v6096 = vrcp.pop %v6079
      %v6097 = vmul.f32 1.0, %v6096
      %v6098 = vrcp.pop %v6080
      %v6099 = vmul.f32 1.0, %v6098
      %v6100 = vrcp.pop %v6081
      %v6101 = vmul.f32 1.0, %v6100
      %v6102 = vrcp.pop %v6082
      %v6103 = vmul.f32 1.0, %v6102
      %v6104 = vrcp.pop %v6083
      %v6105 = vmul.f32 1.0, %v6104
      %v6106 = vrcp.pop %v6084
      %v6107 = vmul.f32 1.0, %v6106
      %v6108 = vrcp.pop %v6085
      %v6109 = vmul.f32 1.0, %v6108
      %v6110 = vmul.f32 %v6087, 1.0614054
      %v6111 = vmul.f32 %v6089, 1.0614054
      %v6112 = vmul.f32 %v6091, 1.0614054
      %v6113 = vmul.f32 %v6093, 1.0614054
      %v6114 = vmul.f32 %v6095, 1.0614054
      %v6115 = vmul.f32 %v6097, 1.0614054
      %v6116 = vmul.f32 %v6099, 1.0614054
      %v6117 = vmul.f32 %v6101, 1.0614054
      %v6118 = vmul.f32 %v6103, 1.0614054
      %v6119 = vmul.f32 %v6105, 1.0614054
      %v6120 = vmul.f32 %v6107, 1.0614054
      %v6121 = vmul.f32 %v6109, 1.0614054
      %v6122 = vadd.f32 %v6110, -1.4531521
      %v6123 = vadd.f32 %v6111, -1.4531521
      %v6124 = vadd.f32 %v6112, -1.4531521
      %v6125 = vadd.f32 %v6113, -1.4531521
      %v6126 = vadd.f32 %v6114, -1.4531521
      %v6127 = vadd.f32 %v6115, -1.4531521
      %v6128 = vadd.f32 %v6116, -1.4531521
      %v6129 = vadd.f32 %v6117, -1.4531521
      %v6130 = vadd.f32 %v6118, -1.4531521
      %v6131 = vadd.f32 %v6119, -1.4531521
      %v6132 = vadd.f32 %v6120, -1.4531521
      %v6133 = vadd.f32 %v6121, -1.4531521
      %v6134 = vmul.f32 %v6087, %v6122
      %v6135 = vmul.f32 %v6089, %v6123
      %v6136 = vmul.f32 %v6091, %v6124
      %v6137 = vmul.f32 %v6093, %v6125
      %v6138 = vmul.f32 %v6095, %v6126
      %v6139 = vmul.f32 %v6097, %v6127
      %v6140 = vmul.f32 %v6099, %v6128
      %v6141 = vmul.f32 %v6101, %v6129
      %v6142 = vmul.f32 %v6103, %v6130
      %v6143 = vmul.f32 %v6105, %v6131
      %v6144 = vmul.f32 %v6107, %v6132
      %v6145 = vmul.f32 %v6109, %v6133
      %v6146 = vadd.f32 %v6134, 1.4214138
      %v6147 = vadd.f32 %v6135, 1.4214138
      %v6148 = vadd.f32 %v6136, 1.4214138
      %v6149 = vadd.f32 %v6137, 1.4214138
      %v6150 = vadd.f32 %v6138, 1.4214138
      %v6151 = vadd.f32 %v6139, 1.4214138
      %v6152 = vadd.f32 %v6140, 1.4214138
      %v6153 = vadd.f32 %v6141, 1.4214138
      %v6154 = vadd.f32 %v6142, 1.4214138
      %v6155 = vadd.f32 %v6143, 1.4214138
      %v6156 = vadd.f32 %v6144, 1.4214138
      %v6157 = vadd.f32 %v6145, 1.4214138
      %v6158 = vmul.f32 %v6087, %v6146
      %v6159 = vmul.f32 %v6089, %v6147
      %v6160 = vmul.f32 %v6091, %v6148
      %v6161 = vmul.f32 %v6093, %v6149
      %v6162 = vmul.f32 %v6095, %v6150
      %v6163 = vmul.f32 %v6097, %v6151
      %v6164 = vmul.f32 %v6099, %v6152
      %v6165 = vmul.f32 %v6101, %v6153
      %v6166 = vmul.f32 %v6103, %v6154
      %v6167 = vmul.f32 %v6105, %v6155
      %v6168 = vmul.f32 %v6107, %v6156
      %v6169 = vmul.f32 %v6109, %v6157
      %v6170 = vadd.f32 %v6158, -0.28449672
      %v6171 = vadd.f32 %v6159, -0.28449672
      %v6172 = vadd.f32 %v6160, -0.28449672
      %v6173 = vadd.f32 %v6161, -0.28449672
      %v6174 = vadd.f32 %v6162, -0.28449672
      %v6175 = vadd.f32 %v6163, -0.28449672
      %v6176 = vadd.f32 %v6164, -0.28449672
      %v6177 = vadd.f32 %v6165, -0.28449672
      %v6178 = vadd.f32 %v6166, -0.28449672
      %v6179 = vadd.f32 %v6167, -0.28449672
      %v6180 = vadd.f32 %v6168, -0.28449672
      %v6181 = vadd.f32 %v6169, -0.28449672
      %v6182 = vmul.f32 %v6087, %v6170
      %v6183 = vmul.f32 %v6089, %v6171
      %v6184 = vmul.f32 %v6091, %v6172
      %v6185 = vmul.f32 %v6093, %v6173
      %v6186 = vmul.f32 %v6095, %v6174
      %v6187 = vmul.f32 %v6097, %v6175
      %v6188 = vmul.f32 %v6099, %v6176
      %v6189 = vmul.f32 %v6101, %v6177
      %v6190 = vmul.f32 %v6103, %v6178
      %v6191 = vmul.f32 %v6105, %v6179
      %v6192 = vmul.f32 %v6107, %v6180
      %v6193 = vmul.f32 %v6109, %v6181
      %v6194 = vadd.f32 %v6182, 0.2548296
      %v6195 = vadd.f32 %v6183, 0.2548296
      %v6196 = vadd.f32 %v6184, 0.2548296
      %v6197 = vadd.f32 %v6185, 0.2548296
      %v6198 = vadd.f32 %v6186, 0.2548296
      %v6199 = vadd.f32 %v6187, 0.2548296
      %v6200 = vadd.f32 %v6188, 0.2548296
      %v6201 = vadd.f32 %v6189, 0.2548296
      %v6202 = vadd.f32 %v6190, 0.2548296
      %v6203 = vadd.f32 %v6191, 0.2548296
      %v6204 = vadd.f32 %v6192, 0.2548296
      %v6205 = vadd.f32 %v6193, 0.2548296
      %v6206 = vmul.f32 %v6087, %v6194
      %v6207 = vmul.f32 %v6089, %v6195
      %v6208 = vmul.f32 %v6091, %v6196
      %v6209 = vmul.f32 %v6093, %v6197
      %v6210 = vmul.f32 %v6095, %v6198
      %v6211 = vmul.f32 %v6097, %v6199
      %v6212 = vmul.f32 %v6099, %v6200
      %v6213 = vmul.f32 %v6101, %v6201
      %v6214 = vmul.f32 %v6103, %v6202
      %v6215 = vmul.f32 %v6105, %v6203
      %v6216 = vmul.f32 %v6107, %v6204
      %v6217 = vmul.f32 %v6109, %v6205
      %v6218 = vsub.f32 0.0, %v6050
      %v6219 = vsub.f32 0.0, %v6051
      %v6220 = vsub.f32 0.0, %v6052
      %v6221 = vsub.f32 0.0, %v6053
      %v6222 = vsub.f32 0.0, %v6054
      %v6223 = vsub.f32 0.0, %v6055
      %v6224 = vsub.f32 0.0, %v6056
      %v6225 = vsub.f32 0.0, %v6057
      %v6226 = vsub.f32 0.0, %v6058
      %v6227 = vsub.f32 0.0, %v6059
      %v6228 = vsub.f32 0.0, %v6060
      %v6229 = vsub.f32 0.0, %v6061
      %v6230 = vmul.f32 %v6218, %v6050
      %v6231 = vmul.f32 %v6219, %v6051
      %v6232 = vmul.f32 %v6220, %v6052
      %v6233 = vmul.f32 %v6221, %v6053
      %v6234 = vmul.f32 %v6222, %v6054
      %v6235 = vmul.f32 %v6223, %v6055
      %v6236 = vmul.f32 %v6224, %v6056
      %v6237 = vmul.f32 %v6225, %v6057
      %v6238 = vmul.f32 %v6226, %v6058
      %v6239 = vmul.f32 %v6227, %v6059
      %v6240 = vmul.f32 %v6228, %v6060
      %v6241 = vmul.f32 %v6229, %v6061
      %v6242 = vmul.f32 %v6230, 1.442695
      %v6243 = vpow.pop %v6242
      %v6244 = vmul.f32 %v6231, 1.442695
      %v6245 = vpow.pop %v6244
      %v6246 = vmul.f32 %v6232, 1.442695
      %v6247 = vpow.pop %v6246
      %v6248 = vmul.f32 %v6233, 1.442695
      %v6249 = vpow.pop %v6248
      %v6250 = vmul.f32 %v6234, 1.442695
      %v6251 = vpow.pop %v6250
      %v6252 = vmul.f32 %v6235, 1.442695
      %v6253 = vpow.pop %v6252
      %v6254 = vmul.f32 %v6236, 1.442695
      %v6255 = vpow.pop %v6254
      %v6256 = vmul.f32 %v6237, 1.442695
      %v6257 = vpow.pop %v6256
      %v6258 = vmul.f32 %v6238, 1.442695
      %v6259 = vpow.pop %v6258
      %v6260 = vmul.f32 %v6239, 1.442695
      %v6261 = vpow.pop %v6260
      %v6262 = vmul.f32 %v6240, 1.442695
      %v6263 = vpow.pop %v6262
      %v6264 = vmul.f32 %v6241, 1.442695
      %v6265 = vpow.pop %v6264
      %v6266 = vmul.f32 %v6206, %v6243
      %v6267 = vmul.f32 %v6207, %v6245
      %v6268 = vmul.f32 %v6208, %v6247
      %v6269 = vmul.f32 %v6209, %v6249
      %v6270 = vmul.f32 %v6210, %v6251
      %v6271 = vmul.f32 %v6211, %v6253
      %v6272 = vmul.f32 %v6212, %v6255
      %v6273 = vmul.f32 %v6213, %v6257
      %v6274 = vmul.f32 %v6214, %v6259
      %v6275 = vmul.f32 %v6215, %v6261
      %v6276 = vmul.f32 %v6216, %v6263
      %v6277 = vmul.f32 %v6217, %v6265
      %v6278 = vsub.f32 1.0, %v6266
      %v6279 = vsub.f32 1.0, %v6267
      %v6280 = vsub.f32 1.0, %v6268
      %v6281 = vsub.f32 1.0, %v6269
      %v6282 = vsub.f32 1.0, %v6270
      %v6283 = vsub.f32 1.0, %v6271
      %v6284 = vsub.f32 1.0, %v6272
      %v6285 = vsub.f32 1.0, %v6273
      %v6286 = vsub.f32 1.0, %v6274
      %v6287 = vsub.f32 1.0, %v6275
      %v6288 = vsub.f32 1.0, %v6276
      %v6289 = vsub.f32 1.0, %v6277
      %vm6290 = vcmp.ge.f32.partialorder %v6038, 0.0
      %vm6291 = vcmp.ge.f32.partialorder %v6039, 0.0
      %vm6292 = vcmp.ge.f32.partialorder %v6040, 0.0
      %vm6293 = vcmp.ge.f32.partialorder %v6041, 0.0
      %vm6294 = vcmp.ge.f32.partialorder %v6042, 0.0
      %vm6295 = vcmp.ge.f32.partialorder %v6043, 0.0
      %vm6296 = vcmp.ge.f32.partialorder %v6044, 0.0
      %vm6297 = vcmp.ge.f32.partialorder %v6045, 0.0
      %vm6298 = vcmp.ge.f32.partialorder %v6046, 0.0
      %vm6299 = vcmp.ge.f32.partialorder %v6047, 0.0
      %vm6300 = vcmp.ge.f32.partialorder %v6048, 0.0
      %vm6301 = vcmp.ge.f32.partialorder %v6049, 0.0
      %v6302 = vsub.f32 0.0, %v6278
      %v6303 = vsub.f32 0.0, %v6279
      %v6304 = vsub.f32 0.0, %v6280
      %v6305 = vsub.f32 0.0, %v6281
      %v6306 = vsub.f32 0.0, %v6282
      %v6307 = vsub.f32 0.0, %v6283
      %v6308 = vsub.f32 0.0, %v6284
      %v6309 = vsub.f32 0.0, %v6285
      %v6310 = vsub.f32 0.0, %v6286
      %v6311 = vsub.f32 0.0, %v6287
      %v6312 = vsub.f32 0.0, %v6288
      %v6313 = vsub.f32 0.0, %v6289
      %v6314 = vsel %vm6290, %v6278, %v6302
      %v6315 = vsel %vm6291, %v6279, %v6303
      %v6316 = vsel %vm6292, %v6280, %v6304
      %v6317 = vsel %vm6293, %v6281, %v6305
      %v6318 = vsel %vm6294, %v6282, %v6306
      %v6319 = vsel %vm6295, %v6283, %v6307
      %v6320 = vsel %vm6296, %v6284, %v6308
      %v6321 = vsel %vm6297, %v6285, %v6309
      %v6322 = vsel %vm6298, %v6286, %v6310
      %v6323 = vsel %vm6299, %v6287, %v6311
      %v6324 = vsel %vm6300, %v6288, %v6312
      %v6325 = vsel %vm6301, %v6289, %v6313
      %v6326 = vadd.f32 %v6314, 1.0
      %v6327 = vadd.f32 %v6315, 1.0
      %v6328 = vadd.f32 %v6316, 1.0
      %v6329 = vadd.f32 %v6317, 1.0
      %v6330 = vadd.f32 %v6318, 1.0
      %v6331 = vadd.f32 %v6319, 1.0
      %v6332 = vadd.f32 %v6320, 1.0
      %v6333 = vadd.f32 %v6321, 1.0
      %v6334 = vadd.f32 %v6322, 1.0
      %v6335 = vadd.f32 %v6323, 1.0
      %v6336 = vadd.f32 %v6324, 1.0
      %v6337 = vadd.f32 %v6325, 1.0
      %v6338 = vmul.f32 %v6026, %v6326
      %v6339 = vmul.f32 %v6027, %v6327
      %v6340 = vmul.f32 %v6028, %v6328
      %v6341 = vmul.f32 %v6029, %v6329
      %v6342 = vmul.f32 %v6030, %v6330
      %v6343 = vmul.f32 %v6031, %v6331
      %v6344 = vmul.f32 %v6032, %v6332
      %v6345 = vmul.f32 %v6033, %v6333
      %v6346 = vmul.f32 %v6034, %v6334
      %v6347 = vmul.f32 %v6035, %v6335
      %v6348 = vmul.f32 %v6036, %v6336
      %v6349 = vmul.f32 %v6037, %v6337
      %6350 = vst [vmem:[%s224] sm:$0xff] %v6338
      %6351 = vst [vmem:[%s224 + $0x8] sm:$0xff] %v6339
      %6352 = vst [vmem:[%s224 + $0x10] sm:$0xff] %v6340
      %6353 = vst [vmem:[%s224 + $0x18] sm:$0xff] %v6341
      %6354 = vst [vmem:[%s224 + $0x20] sm:$0xff] %v6342
      %6355 = vst [vmem:[%s224 + $0x28] sm:$0xff] %v6343
      %6356 = vst [vmem:[%s224 + $0x30] sm:$0xff] %v6344
      %6357 = vst [vmem:[%s224 + $0x38] sm:$0xff] %v6345
      %6358 = vst [vmem:[%s224 + $0x40] sm:$0xff] %v6346
      %6359 = vst [vmem:[%s224 + $0x48] sm:$0xff] %v6347
      %6360 = vst [vmem:[%s224 + $0x50] sm:$0xff] %v6348
      %6361 = vst [vmem:[%s224 + $0x58] sm:$0xff] %v6349
      %p6362 = scmp.lt.s32.totalorder %s16, 1
      %s6363 = scalar_select %p6362, %s16, 1
      %s6364 = smul.addr %s6363, 12
      %s6365 = smul.addr %s6364, 8
      %s6366 = scalar_lea.vmem %s5, %s6365
      // Predicated region
      $region41: #{input_conv_forward.1} parent=39 // pred_check
        %p6367 = pneg %p144
      $region42: #{input_conv_forward.1} parent=39 // pred_check_branch
        %6369 = sbr.rel (%p6367) target = $region44
      $region43: #{input_conv_forward.1} parent=39 // pred_region
        _
      $region44: #{input_conv_forward.1} parent=39 // pred_fallthru
        _
    $region40: #{input_conv_forward.1} parent=5 // pred_fallthru
      _
    %p6370 = scmp.le.s32.totalorder 2, %s11
    // Predicated region
    $region45: #{input_conv_forward.1} parent=5 // pred_check
      %p6371 = pneg %p6370
    $region46: #{input_conv_forward.1} parent=5 // pred_check_branch
      %6373 = sbr.rel (%p6371) target = $region48
    $region47: #{input_conv_forward.1} parent=5 // pred_region
      %s6374 = ssub.s32 %s11, 2
      // Predicated region
      $region49: #{input_conv_forward.1} parent=47 // pred_check
        %p6375 = pneg %p150
      $region50: #{input_conv_forward.1} parent=47 // pred_check_branch
        %6377 = sbr.rel (%p6375) target = $region52
      $region51: #{input_conv_forward.1} parent=47 // pred_region
        %p6378 = scmp.lt.s32.totalorder %s17, 1
        %s6379 = scalar_select %p6378, %s17, 1
        %s6380 = smul.addr %s6379, 12
        %s6381 = smul.addr %s6380, 8
        %s6382 = scalar_lea.vmem %s5, %s6381
      $region52: #{input_conv_forward.1} parent=47 // pred_fallthru
        _
    $region48: #{input_conv_forward.1} parent=5 // pred_fallthru
      _
  $region6: #{input_conv_forward.1} parent=0 // loop_footer
    %s15 = sadd.s32 1, %s11
  $region7: #{input_conv_forward.1} parent=0 // loop_footer_branch
    %10 = sbr.rel target = $region3
  $region8: #{input_conv_forward.1} parent=0 // loop_exit
    _

</llo_original>
